<compile_context>
chip_gen: v6e
topology: v6e:2x2x1
jax: 0.10.0
libtpu: 0.0.40
codegen_flags: <defaults>
</compile_context>

<pallas_src>
import re
import numpy as np
import jax
import jax.numpy as jnp
from jax import lax
from jax.experimental import pallas as pl
from jax.experimental.pallas import tpu as pltpu


# ----------------------------- host-side string helpers (same as PyTorch) ---
def clean_token(tok):
    return tok.replace('Ġ', '').replace('▁', '').strip()


def is_number(s):
    return bool(re.match('^-?[\\d,]*\\.?\\d+%?$', s))


SPECIAL_TOKENS = {'[CLS]', '[SEP]', '[PAD]', '[UNK]'}


def _round_up(x, m):
    return (x + m - 1) // m * m


# Single-buffer constant-index blocks (weights/biases): halves their VMEM
# footprint (review: this is the difference between fitting and OOM on v7x).
# Can be disabled at runtime if this jax build does not support pipeline_mode.
_SINGLE_BUFFER_WEIGHTS = [True]


def _const_spec(block_shape, index_map):
    if _SINGLE_BUFFER_WEIGHTS[0]:
        try:
            return pl.BlockSpec(block_shape, index_map,
                                pipeline_mode=pl.Buffered(1))
        except (TypeError, AttributeError):
            _SINGLE_BUFFER_WEIGHTS[0] = False
    return pl.BlockSpec(block_shape, index_map)


def _vmem_limit(est_bytes):
    # generous headroom on top of the estimate; floor at the v6e/v7x scoped
    # default (32 MiB), cap well under physical VMEM.
    return int(min(max(2 * est_bytes + (4 << 20), 32 << 20), 100 << 20))


# ----------------------------- Pallas kernel 1: time-chunked fused LSTM -----
def make_lstm_kernel(t_real, t_chunk, h_pad):
    TT = t_chunk
    Hp = h_pad
    apply_t_mask = (t_real % TT) != 0     # padded steps exist only in the last chunk

    def kernel(x_ref, wih_ref, whh_ref, b_ref, h0_ref, c0_ref,
               out_ref, hT_ref, cT_ref, h_scr, c_scr, gx_scr):
        Bg = h0_ref.shape[0]
        chunk = pl.program_id(1)
        n_chunks = pl.num_programs(1)

        @pl.when(chunk == 0)
        def _():
            h_scr[...] = h0_ref[...]
            c_scr[...] = c0_ref[...]

        # ---- hoisted input projection: one wide (TT*Bg,E)x(E,4H) MXU matmul per
        # chunk for all four gates, biases folded in.
        x_flat = x_ref[...].reshape(TT * Bg, x_ref.shape[2]).astype(wih_ref.dtype)
        gx_scr[...] = (jnp.dot(x_flat, wih_ref[...],
                               preferred_element_type=jnp.float32) + b_ref[...])

        whh = whh_ref[...]                       # (Hp, 4*Hp), loaded once per chunk

        def run_chunk(masked):
            def step(tt, carry):
                r0 = pl.multiple_of(tt * Bg, Bg)      # sublane-aligned row offset
                h = h_scr[...]
                c = c_scr[...]
                # fused recurrence: one (Bg,Hp)x(Hp,4Hp) matmul instead of four
                g = gx_scr[pl.ds(r0, Bg), :] + jnp.dot(
                    h.astype(whh.dtype), whh, preferred_element_type=jnp.float32)
                ig = jax.nn.sigmoid(g[:, 0 * Hp:1 * Hp])
                fg = jax.nn.sigmoid(g[:, 1 * Hp:2 * Hp])
                gg = jnp.tanh(g[:, 2 * Hp:3 * Hp])
                og = jax.nn.sigmoid(g[:, 3 * Hp:4 * Hp])
                c_new = fg * c + ig * gg
                h_new = og * jnp.tanh(c_new)
                if masked:
                    # freeze state on padded time steps so hT/cT stay exact
                    valid = (chunk * TT + tt) < t_real
                    c_new = jnp.where(valid, c_new, c)
                    h_new = jnp.where(valid, h_new, h)
                h_scr[...] = h_new
                c_scr[...] = c_new
                out_ref[tt] = h_new.astype(out_ref.dtype)
                return carry
            lax.fori_loop(0, TT, step, 0, unroll=min(4, TT))

        if apply_t_mask:
            # time-mask selects only in the final chunk (off earlier chunks' path)
            @pl.when(chunk != n_chunks - 1)
            def _():
                run_chunk(False)

            @pl.when(chunk == n_chunks - 1)
            def _():
                run_chunk(True)
        else:
            run_chunk(False)

        # final state written exactly once, from the last chunk
        @pl.when(chunk == n_chunks - 1)
        def _():
            hT_ref[...] = h_scr[...]
            cT_ref[...] = c_scr[...]

    return kernel


def lstm_forward(embedded_tbe, wih_packed, whh_packed, b_packed, h0, c0,
                 *, t_real, t_chunk, n_groups, out_dtype):
    # embedded_tbe: (T_pad, B_pad, E); packed weights: (E,4Hp), (Hp,4Hp), (1,4Hp)
    T_pad, B_pad, E = embedded_tbe.shape
    H4 = wih_packed.shape[1]
    Hp = H4 // 4
    TT = t_chunk
    assert T_pad % TT == 0 and B_pad % n_groups == 0
    n_chunks = T_pad // TT
    Bg = B_pad // n_groups

    grid_spec = pltpu.PrefetchScalarGridSpec(
        num_scalar_prefetch=0,
        grid=(n_groups, n_chunks),
        in_specs=[
            pl.BlockSpec((TT, Bg, E), lambda g, c: (c, g, 0)),        # x chunk
            _const_spec((E, H4), lambda g, c: (0, 0)),                # W_ih^T packed
            _const_spec((Hp, H4), lambda g, c: (0, 0)),               # W_hh^T packed
            _const_spec((1, H4), lambda g, c: (0, 0)),                # gate bias
            pl.BlockSpec((Bg, Hp), lambda g, c: (g, 0)),              # h0
            pl.BlockSpec((Bg, Hp), lambda g, c: (g, 0)),              # c0
        ],
        out_specs=(pl.BlockSpec((TT, Bg, Hp), lambda g, c: (c, g, 0)),   # output
                   pl.BlockSpec((Bg, Hp), lambda g, c: (g, 0)),          # hT
                   pl.BlockSpec((Bg, Hp), lambda g, c: (g, 0))),         # cT
        scratch_shapes=[pltpu.VMEM((Bg, Hp), jnp.float32),               # h carry
                        pltpu.VMEM((Bg, Hp), jnp.float32),               # c carry
                        pltpu.VMEM((TT * Bg, H4), jnp.float32)],         # gx scratch
    )

    # explicit VMEM budget for this call (review item)
    w_bytes = (wih_packed.size * wih_packed.dtype.itemsize
               + whh_packed.size * whh_packed.dtype.itemsize
               + b_packed.size * 4)
    est = (w_bytes
           + 2 * TT * Bg * E * embedded_tbe.dtype.itemsize            # x (2 buf)
           + 2 * TT * Bg * Hp * jnp.dtype(out_dtype).itemsize         # out (2 buf)
           + TT * Bg * H4 * 4                                         # gx scratch
           + 2 * Bg * Hp * 4                                          # h/c scratch
           + 8 * Bg * Hp * 4)                                         # h0/c0/hT/cT

    return pl.pallas_call(
        make_lstm_kernel(t_real, TT, Hp),
        out_shape=(jax.ShapeDtypeStruct((T_pad, B_pad, Hp), out_dtype),
                   jax.ShapeDtypeStruct((B_pad, Hp), jnp.float32),
                   jax.ShapeDtypeStruct((B_pad, Hp), jnp.float32)),
        grid_spec=grid_spec,
        compiler_params=pltpu.CompilerParams(
            dimension_semantics=("parallel", "arbitrary"),   # groups || , chunks serial
            vmem_limit_bytes=_vmem_limit(est)),
    )(embedded_tbe, wih_packed, whh_packed, b_packed, h0, c0)


# --------------- Pallas kernel 2: vocab projection (W_vocab streamed once) ---
def vocab_kernel(x_ref, w_ref, b_ref, out_ref):
    out_ref[...] = (jnp.dot(x_ref[...].astype(w_ref.dtype), w_ref[...],
                            preferred_element_type=jnp.float32) + b_ref[...])


def vocab_projection(x_flat, wv_t, bv):
    # x_flat: (B*T, Hp) flattened LSTM output rows; wv_t: (Hp, Vp); bv: (1, Vp)
    M, Hp = x_flat.shape
    Vp = wv_t.shape[1]
    TV = 512 if Vp % 512 == 0 else 128
    assert Vp % TV == 0
    TM = M if M <= 1024 else 512
    M_pad = _round_up(M, TM)
    if M_pad != M:
        x_flat = jnp.pad(x_flat, ((0, M_pad - M), (0, 0)))
    n_m = M_pad // TM
    n_v = Vp // TV

    # x block is constant across the grid when there is a single row tile
    x_spec = (_const_spec((TM, Hp), lambda jv, jm: (jm, 0)) if n_m == 1
              else pl.BlockSpec((TM, Hp), lambda jv, jm: (jm, 0)))

    est = (2 * Hp * TV * wv_t.dtype.itemsize + 2 * TV * 4
           + 2 * TM * Hp * x_flat.dtype.itemsize + 2 * TM * TV * 4)
    out = pl.pallas_call(
        vocab_kernel,
        out_shape=jax.ShapeDtypeStruct((M_pad, Vp), jnp.float32),
        grid_spec=pltpu.PrefetchScalarGridSpec(
            num_scalar_prefetch=0,
            # vocab tiles OUTER, row tiles inner => each W_vocab tile is DMA'd once
            grid=(n_v, n_m),
            in_specs=[x_spec,
                      pl.BlockSpec((Hp, TV), lambda jv, jm: (0, jv)),
                      pl.BlockSpec((1, TV), lambda jv, jm: (0, jv))],
            out_specs=pl.BlockSpec((TM, TV), lambda jv, jm: (jm, jv))),
        compiler_params=pltpu.CompilerParams(
            dimension_semantics=("parallel", "parallel"),
            vmem_limit_bytes=_vmem_limit(est)),
    )(x_flat, wv_t, bv)
    return out[:M]


# --------------- Pallas kernel 3: pointer/copy attention + softmax -----------
def attn_kernel(out_ref, enc_ref, wc_ref, bc_ref, we_ref, be_ref,
                mask_ref, bonus_ref, attn_ref):
    out_b = out_ref[0]                                              # (T, Hp)
    enc_b = enc_ref[0].astype(we_ref.dtype)                         # (S_pad, 768)

    enc_p = (jnp.dot(enc_b, we_ref[...],
                     preferred_element_type=jnp.float32) + be_ref[...])   # (S_pad, Hp)
    copy = (jnp.dot(out_b.astype(wc_ref.dtype), wc_ref[...],
                    preferred_element_type=jnp.float32) + bc_ref[...])    # (T, Hp)
    scores = lax.dot_general(copy, enc_p,
                             dimension_numbers=(((1,), (1,)), ((), ())),
                             preferred_element_type=jnp.float32)          # (T, S_pad)

    # masked_fill(mask == 0, -1e9); padded source positions carry mask == 0
    mask = mask_ref[0]                                              # (1, S_pad)
    scores = jnp.where(mask == 0.0, -1e9, scores)

    # +2.0 numeric-token bonus on decoder step 0 only (applied after masking)
    row0 = lax.broadcasted_iota(jnp.int32, (scores.shape[0], 1), 0) == 0
    scores = scores + jnp.where(row0, bonus_ref[0], 0.0)

    # softmax over source positions; reciprocal on the EUP slot
    m = jnp.max(scores, axis=-1, keepdims=True)
    e = jnp.exp(scores - m)
    denom = jnp.sum(e, axis=-1, keepdims=True)
    attn_ref[0] = e * pl.reciprocal(denom, approx=True)


def pointer_attention(output_bth, enc_output, wc_t, bc, we_t, be,
                      mask_b1s, bonus_b1s):
    # TODO(synk): for very long source sequences, tile S with an online softmax;
    # here S fits VMEM so the whole row is processed per batch element.
    B, T, Hp = output_bth.shape
    S = enc_output.shape[1]
    E_ENC = enc_output.shape[2]

    S_pad = _round_up(S, 128)
    if S_pad != S:
        enc_output = jnp.pad(enc_output, ((0, 0), (0, S_pad - S), (0, 0)))
        mask_b1s = jnp.pad(mask_b1s, ((0, 0), (0, 0), (0, S_pad - S)))
        bonus_b1s = jnp.pad(bonus_b1s, ((0, 0), (0, 0), (0, S_pad - S)))

    est = (2 * T * Hp * output_bth.dtype.itemsize
           + 2 * S_pad * E_ENC * enc_output.dtype.itemsize
           + (Hp * Hp + E_ENC * Hp + 2 * Hp) * wc_t.dtype.itemsize
           + 4 * 2 * S_pad * 4
           + 2 * T * S_pad * 4
           + 2 * (S_pad * Hp + T * S_pad) * 4)
    attn_pad = pl.pallas_call(
        attn_kernel,
        out_shape=jax.ShapeDtypeStruct((B, T, S_pad), jnp.float32),
        grid_spec=pltpu.PrefetchScalarGridSpec(
            num_scalar_prefetch=0,
            grid=(B,),
            in_specs=[
                pl.BlockSpec((1, T, Hp), lambda b: (b, 0, 0)),           # lstm output
                pl.BlockSpec((1, S_pad, E_ENC), lambda b: (b, 0, 0)),    # encoder out
                _const_spec((Hp, Hp), lambda b: (0, 0)),                 # copy W^T
                _const_spec((1, Hp), lambda b: (0, 0)),                  # copy b
                _const_spec((E_ENC, Hp), lambda b: (0, 0)),              # enc W^T
                _const_spec((1, Hp), lambda b: (0, 0)),                  # enc b
                pl.BlockSpec((1, 1, S_pad), lambda b: (b, 0, 0)),        # mask
                pl.BlockSpec((1, 1, S_pad), lambda b: (b, 0, 0)),        # bonus
            ],
            out_specs=pl.BlockSpec((1, T, S_pad), lambda b: (b, 0, 0))),
        compiler_params=pltpu.CompilerParams(
            dimension_semantics=("parallel",),
            vmem_limit_bytes=_vmem_limit(est)),
    )(output_bth, enc_output, wc_t, bc, we_t, be, mask_b1s, bonus_b1s)
    return attn_pad[:, :, :S]


# ----------------------------- module wrapper --------------------------------
class PointerDecoderPallas:
    def __init__(self, hidden_size, vocab_size, emb_size, vocab_dict, key,
                 param_dtype=jnp.bfloat16):
        # param_dtype=bfloat16 (default, per review) halves HBM/VMEM traffic for
        # the big weights on v5e/v6e/v7x; MXU accumulation, biases and all
        # gate/softmax element-wise math stay f32.
        self.hidden_size = hidden_size
        self.vocab_size = vocab_size
        self.emb_size = emb_size
        self.vocab_dict = vocab_dict
        self.param_dtype = param_dtype
        ks = jax.random.split(key, 10)
        s = 0.1
        H, V, E = hidden_size, vocab_size, emb_size
        # nn.Embedding(vocab_size, emb_size)
        self.emb = jax.random.normal(ks[0], (V, E), jnp.float32) * s
        # nn.LSTM(emb_size, hidden_size): W_ih (4H,E), W_hh (4H,H), biases (4H,)
        self.w_ih = jax.random.normal(ks[1], (4 * H, E), jnp.float32) * s
        self.w_hh = jax.random.normal(ks[2], (4 * H, H), jnp.float32) * s
        self.b_ih = jax.random.normal(ks[3], (4 * H,), jnp.float32) * s
        self.b_hh = jax.random.normal(ks[4], (4 * H,), jnp.float32) * s
        # nn.Linear(hidden, vocab)
        self.w_vocab = jax.random.normal(ks[5], (V, H), jnp.float32) * s
        self.b_vocab = jax.random.normal(ks[6], (V,), jnp.float32) * s
        # nn.Linear(hidden, hidden)
        self.w_copy = jax.random.normal(ks[7], (H, H), jnp.float32) * s
        self.b_copy = jnp.zeros((H,), jnp.float32)
        # nn.Linear(768, hidden)
        self.w_enc = jax.random.normal(ks[8], (H, 768), jnp.float32) * s
        self.b_enc = jax.random.normal(ks[9], (H,), jnp.float32) * s

        # --- kernel-layout parameters (precomputed once, not per call) -------
        # Hidden is padded to the 128-lane granule so the fused 4H gate block is
        # sliced lane-aligned; all padded rows/cols are zero => results exact.
        pd = param_dtype
        Hp = _round_up(H, 128)
        self.h_pad = Hp
        b_comb = self.b_ih + self.b_hh          # fold the two LSTM biases

        def pad_cols(w, cols):
            return jnp.pad(w, ((0, 0), (0, cols - w.shape[1])))

        def pad_rows(w, rows):
            return jnp.pad(w, ((0, rows - w.shape[0]), (0, 0)))

        # PyTorch LSTM gate order: i, f, g, o.  Packed transposed weights:
        self.wih_packed = jnp.concatenate(
            [pad_cols(jnp.transpose(self.w_ih[g * H:(g + 1) * H]), Hp)
             for g in range(4)], axis=1).astype(pd)                 # (E, 4Hp)
        self.whh_packed = jnp.concatenate(
            [pad_rows(pad_cols(jnp.transpose(self.w_hh[g * H:(g + 1) * H]), Hp), Hp)
             for g in range(4)], axis=1).astype(pd)                 # (Hp, 4Hp)
        self.b_packed = jnp.concatenate(
            [jnp.pad(b_comb[g * H:(g + 1) * H], (0, Hp - H)) for g in range(4)]
        ).reshape(1, 4 * Hp)                                        # f32

        # vocab projection padded to a multiple of the 512-lane vocab tile
        Vp = _round_up(V, 512)
        self.v_pad = Vp
        self.wv_t = pad_cols(pad_rows(jnp.transpose(self.w_vocab), Hp), Vp).astype(pd)
        self.bv = jnp.pad(self.b_vocab, (0, Vp - V)).reshape(1, Vp)
        # copy / enc projections padded to Hp on both hidden dims (zeros)
        self.wc_t = pad_cols(pad_rows(jnp.transpose(self.w_copy), Hp), Hp).astype(pd)
        self.bc = jnp.pad(self.b_copy, (0, Hp - H)).reshape(1, Hp)
        self.we_t = pad_cols(jnp.transpose(self.w_enc), Hp).astype(pd)   # (768, Hp)
        self.be = jnp.pad(self.b_enc, (0, Hp - H)).reshape(1, Hp)

    def _host_mask_and_bonus(self, input_tokens, input_mask):
        # TODO(synk): token-string inspection (special-token set / numeric regex)
        # has no Pallas equivalent; done on host exactly like the PyTorch loops.
        mask = np.array(input_mask, dtype=np.float32).copy()
        bonus = np.zeros_like(mask)
        for b in range(len(input_tokens)):
            for i, tok in enumerate(input_tokens[b]):
                if tok in SPECIAL_TOKENS:
                    mask[b, i] = 0.0
                if is_number(clean_token(tok)):
                    bonus[b, i] = 2.0
        return mask, bonus

    def _pick_t_chunk(self, T, B_pad):
        # budget-driven chunk length: weights (single-buffered) + gx scratch +
        # double-buffered x/out chunks must fit a conservative per-generation
        # VMEM budget (v7x has only 64 MiB physical per core).
        Hp, E = self.h_pad, self.emb_size
        budget = 24 << 20
        w_bytes = (self.wih_packed.size * self.wih_packed.dtype.itemsize
                   + self.whh_packed.size * self.whh_packed.dtype.itemsize)
        act_item = jnp.dtype(self.param_dtype).itemsize
        per_step = B_pad * (2 * E * 4 + 2 * Hp * act_item + 4 * Hp * 4)
        tt = 8
        for cand in (128, 64, 32, 16, 8):
            if w_bytes + cand * per_step <= budget:
                tt = cand
                break
        return max(1, min(tt, _round_up(T, 8)))

    def __call__(self, dec_input, enc_output, hidden, input_tokens, input_mask,
                 *, t_chunk=None, validate=False):
        if validate:
            # opt-in only: forces a device->host sync (kept off the hot path);
            # same semantics as the PyTorch ValueError check when enabled.
            if int(jnp.max(dec_input)) >= self.vocab_size:
                raise ValueError('Invalid index in dec_input')
        h0, c0 = hidden                                   # (1, B, H) each
        B, T = dec_input.shape
        H, Hp = self.hidden_size, self.h_pad

        # embedding gather directly in time-major layout: transpose the tiny
        # (B, T) int index array instead of the (B, T, E) activations.
        embedded_tbe = self.emb[jnp.transpose(dec_input)]            # (T, B, E)

        B_pad = _round_up(B, 8)                           # sublane granule
        # v7x: split the recurrence across 2 TensorCores via batch groups
        n_groups = 2 if (B_pad % 16 == 0) else 1
        TT = int(t_chunk) if t_chunk is not None else self._pick_t_chunk(T, B_pad)
        T_pad = _round_up(T, TT)
        pad_t, pad_b = T_pad - T, B_pad - B
        if pad_t or pad_b:
            embedded_tbe = jnp.pad(embedded_tbe, ((0, pad_t), (0, pad_b), (0, 0)))
        h0_p = jnp.pad(h0[0], ((0, pad_b), (0, Hp - H)))
        c0_p = jnp.pad(c0[0], ((0, pad_b), (0, Hp - H)))

        out_tbh, hT, cT = lstm_forward(
            embedded_tbe, self.wih_packed, self.whh_packed, self.b_packed,
            h0_p, c0_p, t_real=T, t_chunk=TT, n_groups=n_groups,
            out_dtype=self.param_dtype)

        # single small layout change on the (T,B,Hp) activations before both
        # consumers (batch-major); done once, in param_dtype.
        # TODO(synk): could be folded into the consumer BlockSpecs for very large B*T.
        output = jnp.transpose(out_tbh[:T, :B], (1, 0, 2))           # (B, T, Hp)
        hT = hT[:B, :H]
        cT = cT[:B, :H]

        # vocab projection: W_vocab streamed exactly once over (B*T, Hp) rows
        logits_flat = vocab_projection(output.reshape(B * T, Hp), self.wv_t, self.bv)
        vocab_logits = logits_flat[:, :self.vocab_size].reshape(B, T, self.vocab_size)

        mask_np, bonus_np = self._host_mask_and_bonus(input_tokens, input_mask)
        S = mask_np.shape[1]
        mask_b1s = jnp.asarray(mask_np).reshape(B, 1, S)
        bonus_b1s = jnp.asarray(bonus_np).reshape(B, 1, S)

        enc_in = enc_output
        if enc_in.dtype != self.we_t.dtype:
            enc_in = enc_in.astype(self.we_t.dtype)       # halve HBM stream w/ bf16
        attn_weights = pointer_attention(
            output, enc_in, self.wc_t, self.bc, self.we_t, self.be,
            mask_b1s, bonus_b1s)

        return vocab_logits, attn_weights, (hT[None], cT[None])

    # pure-JAX reference for verification
    def reference(self, dec_input, enc_output, hidden, input_tokens, input_mask):
        h0, c0 = hidden
        H = self.hidden_size
        emb = self.emb[dec_input]                         # (B, T, E)

        def step(carry, x_t):
            h, c = carry
            gates = (x_t @ self.w_ih.T + self.b_ih + h @ self.w_hh.T + self.b_hh)
            i = jax.nn.sigmoid(gates[:, 0:H])
            f = jax.nn.sigmoid(gates[:, H:2 * H])
            g = jnp.tanh(gates[:, 2 * H:3 * H])
            o = jax.nn.sigmoid(gates[:, 3 * H:4 * H])
            c_new = f * c + i * g
            h_new = o * jnp.tanh(c_new)
            return (h_new, c_new), h_new

        (h_fin, c_fin), outs = lax.scan(step, (h0[0], c0[0]),
                                        jnp.transpose(emb, (1, 0, 2)))
        output = jnp.transpose(outs, (1, 0, 2))           # (B, T, H)

        vocab_logits = output @ self.w_vocab.T + self.b_vocab
        enc_p = enc_output @ self.w_enc.T + self.b_enc
        copy = output @ self.w_copy.T + self.b_copy
        scores = jnp.einsum('bth,bsh->bts', copy, enc_p)

        mask_np, bonus_np = self._host_mask_and_bonus(input_tokens, input_mask)
        scores = jnp.where(jnp.asarray(mask_np)[:, None, :] == 0.0, -1e9, scores)
        scores = scores.at[:, 0, :].add(jnp.asarray(bonus_np))
        attn = jax.nn.softmax(scores, axis=-1)
        return vocab_logits, attn, (h_fin[None], c_fin[None])


# ----------------------------- demo / self-check -----------------------------
if __name__ == "__main__":
    B, T_DEC, S = 2, 10, 16
    HIDDEN, VOCAB, EMB = 32, 600, 32          # VOCAB=600 -> 2 vocab tiles of 512

    key = jax.random.PRNGKey(0)
    k_params, k_dec, k_enc = jax.random.split(key, 3)

    # f32 weights for the tight numerical self-check
    model = PointerDecoderPallas(HIDDEN, VOCAB, EMB, vocab_dict={}, key=k_params,
                                 param_dtype=jnp.float32)

    dec_input = jax.random.randint(k_dec, (B, T_DEC), 0, VOCAB, dtype=jnp.int32)
    enc_output = jax.random.normal(k_enc, (B, S, 768), jnp.float32)
    h0 = jnp.zeros((1, B, HIDDEN), jnp.float32)
    c0 = jnp.zeros((1, B, HIDDEN), jnp.float32)

    input_tokens = [
        ['[CLS]', 'revenue', 'was', '1,234.5', 'in', '2020', 'up', '12%',
         '[SEP]', '[PAD]', '[PAD]', '[PAD]', '[PAD]', '[PAD]', '[PAD]', '[PAD]'],
        ['[CLS]', 'the', 'cost', 'fell', 'to', '-7.5', 'million', 'by', 'q3',
         '[SEP]', '[PAD]', '[PAD]', '[PAD]', '[PAD]', '[PAD]', '[PAD]'],
    ]
    input_mask = np.zeros((B, S), dtype=np.float32)
    input_mask[0, :9] = 1.0
    input_mask[1, :10] = 1.0

    # t_chunk=4 -> 3 time chunks: exercises the chunked recurrence, the masked
    # final chunk (T_pad=12 > T=10), and the multi-tile vocab grid.
    def run_f32():
        return model(dec_input, enc_output, (h0, c0), input_tokens, input_mask,
                     t_chunk=4)

    try:
        vocab_logits, attn_weights, hidden_out = run_f32()
        jax.block_until_ready((vocab_logits, attn_weights, hidden_out))
    except Exception:
        if not _SINGLE_BUFFER_WEIGHTS[0]:
            raise
        # single-buffered constant blocks unsupported on this jax build;
        # fall back to default double buffering and retry once.
        _SINGLE_BUFFER_WEIGHTS[0] = False
        vocab_logits, attn_weights, hidden_out = run_f32()
        jax.block_until_ready((vocab_logits, attn_weights, hidden_out))

    ref_logits, ref_attn, ref_hidden = model.reference(
        dec_input, enc_output, (h0, c0), input_tokens, input_mask)

    assert np.allclose(np.asarray(vocab_logits), np.asarray(ref_logits),
                       atol=2e-3, rtol=2e-3)
    # tolerance slightly relaxed for the approx-reciprocal softmax
    assert np.allclose(np.asarray(attn_weights), np.asarray(ref_attn),
                       atol=2e-3, rtol=2e-3)
    assert np.allclose(np.asarray(hidden_out[0]), np.asarray(ref_hidden[0]),
                       atol=2e-3, rtol=2e-3)
    assert np.allclose(np.asarray(hidden_out[1]), np.asarray(ref_hidden[1]),
                       atol=2e-3, rtol=2e-3)
    assert vocab_logits.shape == (B, T_DEC, VOCAB)
    assert attn_weights.shape == (B, T_DEC, S)
    assert hidden_out[0].shape == (1, B, HIDDEN)
    assert hidden_out[1].shape == (1, B, HIDDEN)

    # bf16 default-parameter smoke run (recommended weight storage on v6e/v7x):
    # exercises the default param_dtype path and the budget-driven t_chunk.
    model_bf16 = PointerDecoderPallas(HIDDEN, VOCAB, EMB, vocab_dict={}, key=k_params)
    bl, ba, bh = model_bf16(dec_input, enc_output, (h0, c0),
                            input_tokens, input_mask)
    jax.block_until_ready((bl, ba, bh))
    assert bl.shape == (B, T_DEC, VOCAB) and ba.shape == (B, T_DEC, S)
    assert np.isfinite(np.asarray(bl)).all() and np.isfinite(np.asarray(ba)).all()
    assert np.allclose(np.asarray(ba).sum(-1), 1.0, atol=5e-2)

    print("KERNEL_OK")
</pallas_src>

<mosaic_0001>
module attributes {stable_mosaic.version = 11 : i64} {
  func.func @kernel(%arg0: i32, %arg1: i32, %arg2: memref<4x8x32xf32, #tpu.memory_space<vmem>>, %arg3: memref<32x512xf32, #tpu.memory_space<vmem>>, %arg4: memref<128x512xf32, #tpu.memory_space<vmem>>, %arg5: memref<1x512xf32, #tpu.memory_space<vmem>>, %arg6: memref<8x128xf32, #tpu.memory_space<vmem>>, %arg7: memref<8x128xf32, #tpu.memory_space<vmem>>, %arg8: memref<4x8x128xf32, #tpu.memory_space<vmem>>, %arg9: memref<8x128xf32, #tpu.memory_space<vmem>>, %arg10: memref<8x128xf32, #tpu.memory_space<vmem>>, %arg11: memref<8x128xf32, #tpu.memory_space<vmem>>, %arg12: memref<8x128xf32, #tpu.memory_space<vmem>>, %arg13: memref<32x512xf32, #tpu.memory_space<vmem>>) attributes {dimension_semantics = [#tpu.dimension_semantics<parallel>, #tpu.dimension_semantics<arbitrary>], iteration_bounds = array<i64: 1, 3>, scalar_prefetch = 0 : i64, scratch_operands = 3 : i64, tpu.core_type = #tpu.core_type<tc>, window_params = [{transform_indices = @transform_0, window_bounds = array<i64: 4, 8, 32>}, {pipeline_mode = #tpu.pipeline_mode<synchronous>, transform_indices = @transform_1, window_bounds = array<i64: 32, 512>}, {pipeline_mode = #tpu.pipeline_mode<synchronous>, transform_indices = @transform_2, window_bounds = array<i64: 128, 512>}, {pipeline_mode = #tpu.pipeline_mode<synchronous>, transform_indices = @transform_3, window_bounds = array<i64: 1, 512>}, {transform_indices = @transform_4, window_bounds = array<i64: 8, 128>}, {transform_indices = @transform_5, window_bounds = array<i64: 8, 128>}, {transform_indices = @transform_6, window_bounds = array<i64: 4, 8, 128>}, {transform_indices = @transform_7, window_bounds = array<i64: 8, 128>}, {transform_indices = @transform_8, window_bounds = array<i64: 8, 128>}]} {
    %c0_i32 = arith.constant 0 : i32
    %0 = arith.cmpi eq, %arg1, %c0_i32 : i32
    %1 = arith.extui %0 : i1 to i32
    %c0_i32_0 = arith.constant 0 : i32
    %2 = arith.cmpi ne, %1, %c0_i32_0 : i32
    scf.if %2 {
      %c0_16 = arith.constant 0 : index
      %c0_17 = arith.constant 0 : index
      %21 = vector.load %arg6[%c0_16, %c0_17] : memref<8x128xf32, #tpu.memory_space<vmem>>, vector<8x128xf32>
      %c0_18 = arith.constant 0 : index
      %c0_19 = arith.constant 0 : index
      %22 = vector.load %arg11[%c0_18, %c0_19] : memref<8x128xf32, #tpu.memory_space<vmem>>, vector<8x128xf32>
      tpu.vector_store %arg11[%c0_18, %c0_19], %21 {strides = array<i32>} : memref<8x128xf32, #tpu.memory_space<vmem>>, vector<8x128xf32>,
      %c0_20 = arith.constant 0 : index
      %c0_21 = arith.constant 0 : index
      %23 = vector.load %arg7[%c0_20, %c0_21] : memref<8x128xf32, #tpu.memory_space<vmem>>, vector<8x128xf32>
      %c0_22 = arith.constant 0 : index
      %c0_23 = arith.constant 0 : index
      %24 = vector.load %arg12[%c0_22, %c0_23] : memref<8x128xf32, #tpu.memory_space<vmem>>, vector<8x128xf32>
      tpu.vector_store %arg12[%c0_22, %c0_23], %23 {strides = array<i32>} : memref<8x128xf32, #tpu.memory_space<vmem>>, vector<8x128xf32>,
    } else {
    }
    %c0 = arith.constant 0 : index
    %c0_1 = arith.constant 0 : index
    %c0_2 = arith.constant 0 : index
    %3 = vector.load %arg2[%c0, %c0_1, %c0_2] : memref<4x8x32xf32, #tpu.memory_space<vmem>>, vector<4x8x32xf32>
    %4 = vector.shape_cast %3 : vector<4x8x32xf32> to vector<32x32xf32>
    %c0_3 = arith.constant 0 : index
    %c0_4 = arith.constant 0 : index
    %5 = vector.load %arg3[%c0_3, %c0_4] : memref<32x512xf32, #tpu.memory_space<vmem>>, vector<32x512xf32>
    %cst = arith.constant dense<0.000000e+00> : vector<32x512xf32>
    %6 = tpu.matmul %4, %5, %cst {dimension_numbers = #tpu.dot_dimension_numbers<[1], [0], [0], [1], [0, 0, 1, 1], [], []>} : vector<32x32xf32>, vector<32x512xf32>, vector<32x512xf32> -> vector<32x512xf32>
    %c0_5 = arith.constant 0 : index
    %c0_6 = arith.constant 0 : index
    %7 = vector.load %arg5[%c0_5, %c0_6] : memref<1x512xf32, #tpu.memory_space<vmem>>, vector<1x512xf32>
    %8 = vector.broadcast %7 : vector<1x512xf32> to vector<32x512xf32>
    %9 = arith.addf %6, %8 : vector<32x512xf32>
    %c0_7 = arith.constant 0 : index
    %c0_8 = arith.constant 0 : index
    %10 = vector.load %arg13[%c0_7, %c0_8] : memref<32x512xf32, #tpu.memory_space<vmem>>, vector<32x512xf32>
    tpu.vector_store %arg13[%c0_7, %c0_8], %9 {strides = array<i32>} : memref<32x512xf32, #tpu.memory_space<vmem>>, vector<32x512xf32>,
    %c0_9 = arith.constant 0 : index
    %c0_10 = arith.constant 0 : index
    %11 = vector.load %arg4[%c0_9, %c0_10] : memref<128x512xf32, #tpu.memory_space<vmem>>, vector<128x512xf32>
    %c2_i32 = arith.constant 2 : i32
    %12 = arith.cmpi ne, %arg1, %c2_i32 : i32
    %13 = arith.extui %12 : i1 to i32
    %c0_i32_11 = arith.constant 0 : i32
    %14 = arith.cmpi ne, %13, %c0_i32_11 : i32
    scf.if %14 {
      %c0_i32_16 = arith.constant 0 : i32
      %c8_i32 = arith.constant 8 : i32
      %21 = arith.muli %c0_i32_16, %c8_i32 : i32
      %22 = tpu.assume_multiple %21, 8 : i32
      %c0_17 = arith.constant 0 : index
      %c0_18 = arith.constant 0 : index
      %23 = vector.load %arg11[%c0_17, %c0_18] : memref<8x128xf32, #tpu.memory_space<vmem>>, vector<8x128xf32>
      %c0_19 = arith.constant 0 : index
      %c0_20 = arith.constant 0 : index
      %24 = vector.load %arg12[%c0_19, %c0_20] : memref<8x128xf32, #tpu.memory_space<vmem>>, vector<8x128xf32>
      %25 = arith.index_cast %22 : i32 to index
      %c0_21 = arith.constant 0 : index
      %26 = vector.load %arg13[%25, %c0_21] : memref<32x512xf32, #tpu.memory_space<vmem>>, vector<8x512xf32>
      %cst_22 = arith.constant dense<0.000000e+00> : vector<8x512xf32>
      %27 = tpu.matmul %23, %11, %cst_22 {dimension_numbers = #tpu.dot_dimension_numbers<[1], [0], [0], [1], [0, 0, 1, 1], [], []>} : vector<8x128xf32>, vector<128x512xf32>, vector<8x512xf32> -> vector<8x512xf32>
      %28 = arith.addf %26, %27 : vector<8x512xf32>
      %29 = vector.extract_strided_slice %28 {offsets = [0, 0], sizes = [8, 128], strides = [1, 1]} : vector<8x512xf32> to vector<8x128xf32>
      %30 = arith.negf %29 : vector<8x128xf32>
      %31 = math.exp %30 : vector<8x128xf32>
      %cst_23 = arith.constant 1.000000e+00 : f32
      %32 = vector.broadcast %cst_23 : f32 to vector<8x128xf32>
      %33 = arith.addf %32, %31 : vector<8x128xf32>
      %34 = arith.divf %32, %33 : vector<8x128xf32>
      %35 = vector.extract_strided_slice %28 {offsets = [0, 128], sizes = [8, 128], strides = [1, 1]} : vector<8x512xf32> to vector<8x128xf32>
      %36 = arith.negf %35 : vector<8x128xf32>
      %37 = math.exp %36 : vector<8x128xf32>
      %cst_24 = arith.constant 1.000000e+00 : f32
      %38 = vector.broadcast %cst_24 : f32 to vector<8x128xf32>
      %39 = arith.addf %38, %37 : vector<8x128xf32>
      %40 = arith.divf %38, %39 : vector<8x128xf32>
      %41 = vector.extract_strided_slice %28 {offsets = [0, 256], sizes = [8, 128], strides = [1, 1]} : vector<8x512xf32> to vector<8x128xf32>
      %42 = math.tanh %41 : vector<8x128xf32>
      %43 = vector.extract_strided_slice %28 {offsets = [0, 384], sizes = [8, 128], strides = [1, 1]} : vector<8x512xf32> to vector<8x128xf32>
      %44 = arith.negf %43 : vector<8x128xf32>
      %45 = math.exp %44 : vector<8x128xf32>
      %cst_25 = arith.constant 1.000000e+00 : f32
      %46 = vector.broadcast %cst_25 : f32 to vector<8x128xf32>
      %47 = arith.addf %46, %45 : vector<8x128xf32>
      %48 = arith.divf %46, %47 : vector<8x128xf32>
      %49 = arith.mulf %40, %24 : vector<8x128xf32>
      %50 = arith.mulf %34, %42 : vector<8x128xf32>
      %51 = arith.addf %49, %50 : vector<8x128xf32>
      %52 = math.tanh %51 : vector<8x128xf32>
      %53 = arith.mulf %48, %52 : vector<8x128xf32>
      %c0_26 = arith.constant 0 : index
      %c0_27 = arith.constant 0 : index
      %54 = vector.load %arg11[%c0_26, %c0_27] : memref<8x128xf32, #tpu.memory_space<vmem>>, vector<8x128xf32>
      tpu.vector_store %arg11[%c0_26, %c0_27], %53 {strides = array<i32>} : memref<8x128xf32, #tpu.memory_space<vmem>>, vector<8x128xf32>,
      %c0_28 = arith.constant 0 : index
      %c0_29 = arith.constant 0 : index
      %55 = vector.load %arg12[%c0_28, %c0_29] : memref<8x128xf32, #tpu.memory_space<vmem>>, vector<8x128xf32>
      tpu.vector_store %arg12[%c0_28, %c0_29], %51 {strides = array<i32>} : memref<8x128xf32, #tpu.memory_space<vmem>>, vector<8x128xf32>,
      %56 = arith.index_cast %c0_i32_16 : i32 to index
      %c0_30 = arith.constant 0 : index
      %c0_31 = arith.constant 0 : index
      %57 = vector.load %arg8[%56, %c0_30, %c0_31] : memref<4x8x128xf32, #tpu.memory_space<vmem>>, vector<1x8x128xf32>
      %58 = vector.shape_cast %57 : vector<1x8x128xf32> to vector<8x128xf32>
      %59 = vector.shape_cast %53 : vector<8x128xf32> to vector<1x8x128xf32>
      tpu.vector_store %arg8[%56, %c0_30, %c0_31], %59 {strides = array<i32>} : memref<4x8x128xf32, #tpu.memory_space<vmem>>, vector<1x8x128xf32>,
      %c1_i32 = arith.constant 1 : i32
      %c8_i32_32 = arith.constant 8 : i32
      %60 = arith.muli %c1_i32, %c8_i32_32 : i32
      %61 = tpu.assume_multiple %60, 8 : i32
      %c0_33 = arith.constant 0 : index
      %c0_34 = arith.constant 0 : index
      %62 = vector.load %arg11[%c0_33, %c0_34] : memref<8x128xf32, #tpu.memory_space<vmem>>, vector<8x128xf32>
      %c0_35 = arith.constant 0 : index
      %c0_36 = arith.constant 0 : index
      %63 = vector.load %arg12[%c0_35, %c0_36] : memref<8x128xf32, #tpu.memory_space<vmem>>, vector<8x128xf32>
      %64 = arith.index_cast %61 : i32 to index
      %c0_37 = arith.constant 0 : index
      %65 = vector.load %arg13[%64, %c0_37] : memref<32x512xf32, #tpu.memory_space<vmem>>, vector<8x512xf32>
      %cst_38 = arith.constant dense<0.000000e+00> : vector<8x512xf32>
      %66 = tpu.matmul %62, %11, %cst_38 {dimension_numbers = #tpu.dot_dimension_numbers<[1], [0], [0], [1], [0, 0, 1, 1], [], []>} : vector<8x128xf32>, vector<128x512xf32>, vector<8x512xf32> -> vector<8x512xf32>
      %67 = arith.addf %65, %66 : vector<8x512xf32>
      %68 = vector.extract_strided_slice %67 {offsets = [0, 0], sizes = [8, 128], strides = [1, 1]} : vector<8x512xf32> to vector<8x128xf32>
      %69 = arith.negf %68 : vector<8x128xf32>
      %70 = math.exp %69 : vector<8x128xf32>
      %cst_39 = arith.constant 1.000000e+00 : f32
      %71 = vector.broadcast %cst_39 : f32 to vector<8x128xf32>
      %72 = arith.addf %71, %70 : vector<8x128xf32>
      %73 = arith.divf %71, %72 : vector<8x128xf32>
      %74 = vector.extract_strided_slice %67 {offsets = [0, 128], sizes = [8, 128], strides = [1, 1]} : vector<8x512xf32> to vector<8x128xf32>
      %75 = arith.negf %74 : vector<8x128xf32>
      %76 = math.exp %75 : vector<8x128xf32>
      %cst_40 = arith.constant 1.000000e+00 : f32
      %77 = vector.broadcast %cst_40 : f32 to vector<8x128xf32>
      %78 = arith.addf %77, %76 : vector<8x128xf32>
      %79 = arith.divf %77, %78 : vector<8x128xf32>
      %80 = vector.extract_strided_slice %67 {offsets = [0, 256], sizes = [8, 128], strides = [1, 1]} : vector<8x512xf32> to vector<8x128xf32>
      %81 = math.tanh %80 : vector<8x128xf32>
      %82 = vector.extract_strided_slice %67 {offsets = [0, 384], sizes = [8, 128], strides = [1, 1]} : vector<8x512xf32> to vector<8x128xf32>
      %83 = arith.negf %82 : vector<8x128xf32>
      %84 = math.exp %83 : vector<8x128xf32>
      %cst_41 = arith.constant 1.000000e+00 : f32
      %85 = vector.broadcast %cst_41 : f32 to vector<8x128xf32>
      %86 = arith.addf %85, %84 : vector<8x128xf32>
      %87 = arith.divf %85, %86 : vector<8x128xf32>
      %88 = arith.mulf %79, %63 : vector<8x128xf32>
      %89 = arith.mulf %73, %81 : vector<8x128xf32>
      %90 = arith.addf %88, %89 : vector<8x128xf32>
      %91 = math.tanh %90 : vector<8x128xf32>
      %92 = arith.mulf %87, %91 : vector<8x128xf32>
      %c0_42 = arith.constant 0 : index
      %c0_43 = arith.constant 0 : index
      %93 = vector.load %arg11[%c0_42, %c0_43] : memref<8x128xf32, #tpu.memory_space<vmem>>, vector<8x128xf32>
      tpu.vector_store %arg11[%c0_42, %c0_43], %92 {strides = array<i32>} : memref<8x128xf32, #tpu.memory_space<vmem>>, vector<8x128xf32>,
      %c0_44 = arith.constant 0 : index
      %c0_45 = arith.constant 0 : index
      %94 = vector.load %arg12[%c0_44, %c0_45] : memref<8x128xf32, #tpu.memory_space<vmem>>, vector<8x128xf32>
      tpu.vector_store %arg12[%c0_44, %c0_45], %90 {strides = array<i32>} : memref<8x128xf32, #tpu.memory_space<vmem>>, vector<8x128xf32>,
      %95 = arith.index_cast %c1_i32 : i32 to index
      %c0_46 = arith.constant 0 : index
      %c0_47 = arith.constant 0 : index
      %96 = vector.load %arg8[%95, %c0_46, %c0_47] : memref<4x8x128xf32, #tpu.memory_space<vmem>>, vector<1x8x128xf32>
      %97 = vector.shape_cast %96 : vector<1x8x128xf32> to vector<8x128xf32>
      %98 = vector.shape_cast %92 : vector<8x128xf32> to vector<1x8x128xf32>
      tpu.vector_store %arg8[%95, %c0_46, %c0_47], %98 {strides = array<i32>} : memref<4x8x128xf32, #tpu.memory_space<vmem>>, vector<1x8x128xf32>,
      %c2_i32_48 = arith.constant 2 : i32
      %c8_i32_49 = arith.constant 8 : i32
      %99 = arith.muli %c2_i32_48, %c8_i32_49 : i32
      %100 = tpu.assume_multiple %99, 8 : i32
      %c0_50 = arith.constant 0 : index
      %c0_51 = arith.constant 0 : index
      %101 = vector.load %arg11[%c0_50, %c0_51] : memref<8x128xf32, #tpu.memory_space<vmem>>, vector<8x128xf32>
      %c0_52 = arith.constant 0 : index
      %c0_53 = arith.constant 0 : index
      %102 = vector.load %arg12[%c0_52, %c0_53] : memref<8x128xf32, #tpu.memory_space<vmem>>, vector<8x128xf32>
      %103 = arith.index_cast %100 : i32 to index
      %c0_54 = arith.constant 0 : index
      %104 = vector.load %arg13[%103, %c0_54] : memref<32x512xf32, #tpu.memory_space<vmem>>, vector<8x512xf32>
      %cst_55 = arith.constant dense<0.000000e+00> : vector<8x512xf32>
      %105 = tpu.matmul %101, %11, %cst_55 {dimension_numbers = #tpu.dot_dimension_numbers<[1], [0], [0], [1], [0, 0, 1, 1], [], []>} : vector<8x128xf32>, vector<128x512xf32>, vector<8x512xf32> -> vector<8x512xf32>
      %106 = arith.addf %104, %105 : vector<8x512xf32>
      %107 = vector.extract_strided_slice %106 {offsets = [0, 0], sizes = [8, 128], strides = [1, 1]} : vector<8x512xf32> to vector<8x128xf32>
      %108 = arith.negf %107 : vector<8x128xf32>
      %109 = math.exp %108 : vector<8x128xf32>
      %cst_56 = arith.constant 1.000000e+00 : f32
      %110 = vector.broadcast %cst_56 : f32 to vector<8x128xf32>
      %111 = arith.addf %110, %109 : vector<8x128xf32>
      %112 = arith.divf %110, %111 : vector<8x128xf32>
      %113 = vector.extract_strided_slice %106 {offsets = [0, 128], sizes = [8, 128], strides = [1, 1]} : vector<8x512xf32> to vector<8x128xf32>
      %114 = arith.negf %113 : vector<8x128xf32>
      %115 = math.exp %114 : vector<8x128xf32>
      %cst_57 = arith.constant 1.000000e+00 : f32
      %116 = vector.broadcast %cst_57 : f32 to vector<8x128xf32>
      %117 = arith.addf %116, %115 : vector<8x128xf32>
      %118 = arith.divf %116, %117 : vector<8x128xf32>
      %119 = vector.extract_strided_slice %106 {offsets = [0, 256], sizes = [8, 128], strides = [1, 1]} : vector<8x512xf32> to vector<8x128xf32>
      %120 = math.tanh %119 : vector<8x128xf32>
      %121 = vector.extract_strided_slice %106 {offsets = [0, 384], sizes = [8, 128], strides = [1, 1]} : vector<8x512xf32> to vector<8x128xf32>
      %122 = arith.negf %121 : vector<8x128xf32>
      %123 = math.exp %122 : vector<8x128xf32>
      %cst_58 = arith.constant 1.000000e+00 : f32
      %124 = vector.broadcast %cst_58 : f32 to vector<8x128xf32>
      %125 = arith.addf %124, %123 : vector<8x128xf32>
      %126 = arith.divf %124, %125 : vector<8x128xf32>
      %127 = arith.mulf %118, %102 : vector<8x128xf32>
      %128 = arith.mulf %112, %120 : vector<8x128xf32>
      %129 = arith.addf %127, %128 : vector<8x128xf32>
      %130 = math.tanh %129 : vector<8x128xf32>
      %131 = arith.mulf %126, %130 : vector<8x128xf32>
      %c0_59 = arith.constant 0 : index
      %c0_60 = arith.constant 0 : index
      %132 = vector.load %arg11[%c0_59, %c0_60] : memref<8x128xf32, #tpu.memory_space<vmem>>, vector<8x128xf32>
      tpu.vector_store %arg11[%c0_59, %c0_60], %131 {strides = array<i32>} : memref<8x128xf32, #tpu.memory_space<vmem>>, vector<8x128xf32>,
      %c0_61 = arith.constant 0 : index
      %c0_62 = arith.constant 0 : index
      %133 = vector.load %arg12[%c0_61, %c0_62] : memref<8x128xf32, #tpu.memory_space<vmem>>, vector<8x128xf32>
      tpu.vector_store %arg12[%c0_61, %c0_62], %129 {strides = array<i32>} : memref<8x128xf32, #tpu.memory_space<vmem>>, vector<8x128xf32>,
      %134 = arith.index_cast %c2_i32_48 : i32 to index
      %c0_63 = arith.constant 0 : index
      %c0_64 = arith.constant 0 : index
      %135 = vector.load %arg8[%134, %c0_63, %c0_64] : memref<4x8x128xf32, #tpu.memory_space<vmem>>, vector<1x8x128xf32>
      %136 = vector.shape_cast %135 : vector<1x8x128xf32> to vector<8x128xf32>
      %137 = vector.shape_cast %131 : vector<8x128xf32> to vector<1x8x128xf32>
      tpu.vector_store %arg8[%134, %c0_63, %c0_64], %137 {strides = array<i32>} : memref<4x8x128xf32, #tpu.memory_space<vmem>>, vector<1x8x128xf32>,
      %c3_i32 = arith.constant 3 : i32
      %c8_i32_65 = arith.constant 8 : i32
      %138 = arith.muli %c3_i32, %c8_i32_65 : i32
      %139 = tpu.assume_multiple %138, 8 : i32
      %c0_66 = arith.constant 0 : index
      %c0_67 = arith.constant 0 : index
      %140 = vector.load %arg11[%c0_66, %c0_67] : memref<8x128xf32, #tpu.memory_space<vmem>>, vector<8x128xf32>
      %c0_68 = arith.constant 0 : index
      %c0_69 = arith.constant 0 : index
      %141 = vector.load %arg12[%c0_68, %c0_69] : memref<8x128xf32, #tpu.memory_space<vmem>>, vector<8x128xf32>
      %142 = arith.index_cast %139 : i32 to index
      %c0_70 = arith.constant 0 : index
      %143 = vector.load %arg13[%142, %c0_70] : memref<32x512xf32, #tpu.memory_space<vmem>>, vector<8x512xf32>
      %cst_71 = arith.constant dense<0.000000e+00> : vector<8x512xf32>
      %144 = tpu.matmul %140, %11, %cst_71 {dimension_numbers = #tpu.dot_dimension_numbers<[1], [0], [0], [1], [0, 0, 1, 1], [], []>} : vector<8x128xf32>, vector<128x512xf32>, vector<8x512xf32> -> vector<8x512xf32>
      %145 = arith.addf %143, %144 : vector<8x512xf32>
      %146 = vector.extract_strided_slice %145 {offsets = [0, 0], sizes = [8, 128], strides = [1, 1]} : vector<8x512xf32> to vector<8x128xf32>
      %147 = arith.negf %146 : vector<8x128xf32>
      %148 = math.exp %147 : vector<8x128xf32>
      %cst_72 = arith.constant 1.000000e+00 : f32
      %149 = vector.broadcast %cst_72 : f32 to vector<8x128xf32>
      %150 = arith.addf %149, %148 : vector<8x128xf32>
      %151 = arith.divf %149, %150 : vector<8x128xf32>
      %152 = vector.extract_strided_slice %145 {offsets = [0, 128], sizes = [8, 128], strides = [1, 1]} : vector<8x512xf32> to vector<8x128xf32>
      %153 = arith.negf %152 : vector<8x128xf32>
      %154 = math.exp %153 : vector<8x128xf32>
      %cst_73 = arith.constant 1.000000e+00 : f32
      %155 = vector.broadcast %cst_73 : f32 to vector<8x128xf32>
      %156 = arith.addf %155, %154 : vector<8x128xf32>
      %157 = arith.divf %155, %156 : vector<8x128xf32>
      %158 = vector.extract_strided_slice %145 {offsets = [0, 256], sizes = [8, 128], strides = [1, 1]} : vector<8x512xf32> to vector<8x128xf32>
      %159 = math.tanh %158 : vector<8x128xf32>
      %160 = vector.extract_strided_slice %145 {offsets = [0, 384], sizes = [8, 128], strides = [1, 1]} : vector<8x512xf32> to vector<8x128xf32>
      %161 = arith.negf %160 : vector<8x128xf32>
      %162 = math.exp %161 : vector<8x128xf32>
      %cst_74 = arith.constant 1.000000e+00 : f32
      %163 = vector.broadcast %cst_74 : f32 to vector<8x128xf32>
      %164 = arith.addf %163, %162 : vector<8x128xf32>
      %165 = arith.divf %163, %164 : vector<8x128xf32>
      %166 = arith.mulf %157, %141 : vector<8x128xf32>
      %167 = arith.mulf %151, %159 : vector<8x128xf32>
      %168 = arith.addf %166, %167 : vector<8x128xf32>
      %169 = math.tanh %168 : vector<8x128xf32>
      %170 = arith.mulf %165, %169 : vector<8x128xf32>
      %c0_75 = arith.constant 0 : index
      %c0_76 = arith.constant 0 : index
      %171 = vector.load %arg11[%c0_75, %c0_76] : memref<8x128xf32, #tpu.memory_space<vmem>>, vector<8x128xf32>
      tpu.vector_store %arg11[%c0_75, %c0_76], %170 {strides = array<i32>} : memref<8x128xf32, #tpu.memory_space<vmem>>, vector<8x128xf32>,
      %c0_77 = arith.constant 0 : index
      %c0_78 = arith.constant 0 : index
      %172 = vector.load %arg12[%c0_77, %c0_78] : memref<8x128xf32, #tpu.memory_space<vmem>>, vector<8x128xf32>
      tpu.vector_store %arg12[%c0_77, %c0_78], %168 {strides = array<i32>} : memref<8x128xf32, #tpu.memory_space<vmem>>, vector<8x128xf32>,
      %173 = arith.index_cast %c3_i32 : i32 to index
      %c0_79 = arith.constant 0 : index
      %c0_80 = arith.constant 0 : index
      %174 = vector.load %arg8[%173, %c0_79, %c0_80] : memref<4x8x128xf32, #tpu.memory_space<vmem>>, vector<1x8x128xf32>
      %175 = vector.shape_cast %174 : vector<1x8x128xf32> to vector<8x128xf32>
      %176 = vector.shape_cast %170 : vector<8x128xf32> to vector<1x8x128xf32>
      tpu.vector_store %arg8[%173, %c0_79, %c0_80], %176 {strides = array<i32>} : memref<4x8x128xf32, #tpu.memory_space<vmem>>, vector<1x8x128xf32>,
      %c4_i32 = arith.constant 4 : i32
    } else {
    }
    %c2_i32_12 = arith.constant 2 : i32
    %15 = arith.cmpi eq, %arg1, %c2_i32_12 : i32
    %16 = arith.extui %15 : i1 to i32
    %c0_i32_13 = arith.constant 0 : i32
    %17 = arith.cmpi ne, %16, %c0_i32_13 : i32
    scf.if %17 {
      %c0_i32_16 = arith.constant 0 : i32
      %c8_i32 = arith.constant 8 : i32
      %21 = arith.muli %c0_i32_16, %c8_i32 : i32
      %22 = tpu.assume_multiple %21, 8 : i32
      %c0_17 = arith.constant 0 : index
      %c0_18 = arith.constant 0 : index
      %23 = vector.load %arg11[%c0_17, %c0_18] : memref<8x128xf32, #tpu.memory_space<vmem>>, vector<8x128xf32>
      %c0_19 = arith.constant 0 : index
      %c0_20 = arith.constant 0 : index
      %24 = vector.load %arg12[%c0_19, %c0_20] : memref<8x128xf32, #tpu.memory_space<vmem>>, vector<8x128xf32>
      %25 = arith.index_cast %22 : i32 to index
      %c0_21 = arith.constant 0 : index
      %26 = vector.load %arg13[%25, %c0_21] : memref<32x512xf32, #tpu.memory_space<vmem>>, vector<8x512xf32>
      %cst_22 = arith.constant dense<0.000000e+00> : vector<8x512xf32>
      %27 = tpu.matmul %23, %11, %cst_22 {dimension_numbers = #tpu.dot_dimension_numbers<[1], [0], [0], [1], [0, 0, 1, 1], [], []>} : vector<8x128xf32>, vector<128x512xf32>, vector<8x512xf32> -> vector<8x512xf32>
      %28 = arith.addf %26, %27 : vector<8x512xf32>
      %29 = vector.extract_strided_slice %28 {offsets = [0, 0], sizes = [8, 128], strides = [1, 1]} : vector<8x512xf32> to vector<8x128xf32>
      %30 = arith.negf %29 : vector<8x128xf32>
      %31 = math.exp %30 : vector<8x128xf32>
      %cst_23 = arith.constant 1.000000e+00 : f32
      %32 = vector.broadcast %cst_23 : f32 to vector<8x128xf32>
      %33 = arith.addf %32, %31 : vector<8x128xf32>
      %34 = arith.divf %32, %33 : vector<8x128xf32>
      %35 = vector.extract_strided_slice %28 {offsets = [0, 128], sizes = [8, 128], strides = [1, 1]} : vector<8x512xf32> to vector<8x128xf32>
      %36 = arith.negf %35 : vector<8x128xf32>
      %37 = math.exp %36 : vector<8x128xf32>
      %cst_24 = arith.constant 1.000000e+00 : f32
      %38 = vector.broadcast %cst_24 : f32 to vector<8x128xf32>
      %39 = arith.addf %38, %37 : vector<8x128xf32>
      %40 = arith.divf %38, %39 : vector<8x128xf32>
      %41 = vector.extract_strided_slice %28 {offsets = [0, 256], sizes = [8, 128], strides = [1, 1]} : vector<8x512xf32> to vector<8x128xf32>
      %42 = math.tanh %41 : vector<8x128xf32>
      %43 = vector.extract_strided_slice %28 {offsets = [0, 384], sizes = [8, 128], strides = [1, 1]} : vector<8x512xf32> to vector<8x128xf32>
      %44 = arith.negf %43 : vector<8x128xf32>
      %45 = math.exp %44 : vector<8x128xf32>
      %cst_25 = arith.constant 1.000000e+00 : f32
      %46 = vector.broadcast %cst_25 : f32 to vector<8x128xf32>
      %47 = arith.addf %46, %45 : vector<8x128xf32>
      %48 = arith.divf %46, %47 : vector<8x128xf32>
      %49 = arith.mulf %40, %24 : vector<8x128xf32>
      %50 = arith.mulf %34, %42 : vector<8x128xf32>
      %51 = arith.addf %49, %50 : vector<8x128xf32>
      %52 = math.tanh %51 : vector<8x128xf32>
      %53 = arith.mulf %48, %52 : vector<8x128xf32>
      %c4_i32 = arith.constant 4 : i32
      %54 = arith.muli %arg1, %c4_i32 : i32
      %55 = arith.addi %54, %c0_i32_16 : i32
      %c10_i32 = arith.constant 10 : i32
      %56 = arith.cmpi slt, %55, %c10_i32 : i32
      %57 = arith.select %56, %51, %24 : vector<8x128xf32>
      %58 = arith.select %56, %53, %23 : vector<8x128xf32>
      %c0_26 = arith.constant 0 : index
      %c0_27 = arith.constant 0 : index
      %59 = vector.load %arg11[%c0_26, %c0_27] : memref<8x128xf32, #tpu.memory_space<vmem>>, vector<8x128xf32>
      tpu.vector_store %arg11[%c0_26, %c0_27], %58 {strides = array<i32>} : memref<8x128xf32, #tpu.memory_space<vmem>>, vector<8x128xf32>,
      %c0_28 = arith.constant 0 : index
      %c0_29 = arith.constant 0 : index
      %60 = vector.load %arg12[%c0_28, %c0_29] : memref<8x128xf32, #tpu.memory_space<vmem>>, vector<8x128xf32>
      tpu.vector_store %arg12[%c0_28, %c0_29], %57 {strides = array<i32>} : memref<8x128xf32, #tpu.memory_space<vmem>>, vector<8x128xf32>,
      %61 = arith.index_cast %c0_i32_16 : i32 to index
      %c0_30 = arith.constant 0 : index
      %c0_31 = arith.constant 0 : index
      %62 = vector.load %arg8[%61, %c0_30, %c0_31] : memref<4x8x128xf32, #tpu.memory_space<vmem>>, vector<1x8x128xf32>
      %63 = vector.shape_cast %62 : vector<1x8x128xf32> to vector<8x128xf32>
      %64 = vector.shape_cast %58 : vector<8x128xf32> to vector<1x8x128xf32>
      tpu.vector_store %arg8[%61, %c0_30, %c0_31], %64 {strides = array<i32>} : memref<4x8x128xf32, #tpu.memory_space<vmem>>, vector<1x8x128xf32>,
      %c1_i32 = arith.constant 1 : i32
      %c8_i32_32 = arith.constant 8 : i32
      %65 = arith.muli %c1_i32, %c8_i32_32 : i32
      %66 = tpu.assume_multiple %65, 8 : i32
      %c0_33 = arith.constant 0 : index
      %c0_34 = arith.constant 0 : index
      %67 = vector.load %arg11[%c0_33, %c0_34] : memref<8x128xf32, #tpu.memory_space<vmem>>, vector<8x128xf32>
      %c0_35 = arith.constant 0 : index
      %c0_36 = arith.constant 0 : index
      %68 = vector.load %arg12[%c0_35, %c0_36] : memref<8x128xf32, #tpu.memory_space<vmem>>, vector<8x128xf32>
      %69 = arith.index_cast %66 : i32 to index
      %c0_37 = arith.constant 0 : index
      %70 = vector.load %arg13[%69, %c0_37] : memref<32x512xf32, #tpu.memory_space<vmem>>, vector<8x512xf32>
      %cst_38 = arith.constant dense<0.000000e+00> : vector<8x512xf32>
      %71 = tpu.matmul %67, %11, %cst_38 {dimension_numbers = #tpu.dot_dimension_numbers<[1], [0], [0], [1], [0, 0, 1, 1], [], []>} : vector<8x128xf32>, vector<128x512xf32>, vector<8x512xf32> -> vector<8x512xf32>
      %72 = arith.addf %70, %71 : vector<8x512xf32>
      %73 = vector.extract_strided_slice %72 {offsets = [0, 0], sizes = [8, 128], strides = [1, 1]} : vector<8x512xf32> to vector<8x128xf32>
      %74 = arith.negf %73 : vector<8x128xf32>
      %75 = math.exp %74 : vector<8x128xf32>
      %cst_39 = arith.constant 1.000000e+00 : f32
      %76 = vector.broadcast %cst_39 : f32 to vector<8x128xf32>
      %77 = arith.addf %76, %75 : vector<8x128xf32>
      %78 = arith.divf %76, %77 : vector<8x128xf32>
      %79 = vector.extract_strided_slice %72 {offsets = [0, 128], sizes = [8, 128], strides = [1, 1]} : vector<8x512xf32> to vector<8x128xf32>
      %80 = arith.negf %79 : vector<8x128xf32>
      %81 = math.exp %80 : vector<8x128xf32>
      %cst_40 = arith.constant 1.000000e+00 : f32
      %82 = vector.broadcast %cst_40 : f32 to vector<8x128xf32>
      %83 = arith.addf %82, %81 : vector<8x128xf32>
      %84 = arith.divf %82, %83 : vector<8x128xf32>
      %85 = vector.extract_strided_slice %72 {offsets = [0, 256], sizes = [8, 128], strides = [1, 1]} : vector<8x512xf32> to vector<8x128xf32>
      %86 = math.tanh %85 : vector<8x128xf32>
      %87 = vector.extract_strided_slice %72 {offsets = [0, 384], sizes = [8, 128], strides = [1, 1]} : vector<8x512xf32> to vector<8x128xf32>
      %88 = arith.negf %87 : vector<8x128xf32>
      %89 = math.exp %88 : vector<8x128xf32>
      %cst_41 = arith.constant 1.000000e+00 : f32
      %90 = vector.broadcast %cst_41 : f32 to vector<8x128xf32>
      %91 = arith.addf %90, %89 : vector<8x128xf32>
      %92 = arith.divf %90, %91 : vector<8x128xf32>
      %93 = arith.mulf %84, %68 : vector<8x128xf32>
      %94 = arith.mulf %78, %86 : vector<8x128xf32>
      %95 = arith.addf %93, %94 : vector<8x128xf32>
      %96 = math.tanh %95 : vector<8x128xf32>
      %97 = arith.mulf %92, %96 : vector<8x128xf32>
      %c4_i32_42 = arith.constant 4 : i32
      %98 = arith.muli %arg1, %c4_i32_42 : i32
      %99 = arith.addi %98, %c1_i32 : i32
      %c10_i32_43 = arith.constant 10 : i32
      %100 = arith.cmpi slt, %99, %c10_i32_43 : i32
      %101 = arith.select %100, %95, %68 : vector<8x128xf32>
      %102 = arith.select %100, %97, %67 : vector<8x128xf32>
      %c0_44 = arith.constant 0 : index
      %c0_45 = arith.constant 0 : index
      %103 = vector.load %arg11[%c0_44, %c0_45] : memref<8x128xf32, #tpu.memory_space<vmem>>, vector<8x128xf32>
      tpu.vector_store %arg11[%c0_44, %c0_45], %102 {strides = array<i32>} : memref<8x128xf32, #tpu.memory_space<vmem>>, vector<8x128xf32>,
      %c0_46 = arith.constant 0 : index
      %c0_47 = arith.constant 0 : index
      %104 = vector.load %arg12[%c0_46, %c0_47] : memref<8x128xf32, #tpu.memory_space<vmem>>, vector<8x128xf32>
      tpu.vector_store %arg12[%c0_46, %c0_47], %101 {strides = array<i32>} : memref<8x128xf32, #tpu.memory_space<vmem>>, vector<8x128xf32>,
      %105 = arith.index_cast %c1_i32 : i32 to index
      %c0_48 = arith.constant 0 : index
      %c0_49 = arith.constant 0 : index
      %106 = vector.load %arg8[%105, %c0_48, %c0_49] : memref<4x8x128xf32, #tpu.memory_space<vmem>>, vector<1x8x128xf32>
      %107 = vector.shape_cast %106 : vector<1x8x128xf32> to vector<8x128xf32>
      %108 = vector.shape_cast %102 : vector<8x128xf32> to vector<1x8x128xf32>
      tpu.vector_store %arg8[%105, %c0_48, %c0_49], %108 {strides = array<i32>} : memref<4x8x128xf32, #tpu.memory_space<vmem>>, vector<1x8x128xf32>,
      %c2_i32_50 = arith.constant 2 : i32
      %c8_i32_51 = arith.constant 8 : i32
      %109 = arith.muli %c2_i32_50, %c8_i32_51 : i32
      %110 = tpu.assume_multiple %109, 8 : i32
      %c0_52 = arith.constant 0 : index
      %c0_53 = arith.constant 0 : index
      %111 = vector.load %arg11[%c0_52, %c0_53] : memref<8x128xf32, #tpu.memory_space<vmem>>, vector<8x128xf32>
      %c0_54 = arith.constant 0 : index
      %c0_55 = arith.constant 0 : index
      %112 = vector.load %arg12[%c0_54, %c0_55] : memref<8x128xf32, #tpu.memory_space<vmem>>, vector<8x128xf32>
      %113 = arith.index_cast %110 : i32 to index
      %c0_56 = arith.constant 0 : index
      %114 = vector.load %arg13[%113, %c0_56] : memref<32x512xf32, #tpu.memory_space<vmem>>, vector<8x512xf32>
      %cst_57 = arith.constant dense<0.000000e+00> : vector<8x512xf32>
      %115 = tpu.matmul %111, %11, %cst_57 {dimension_numbers = #tpu.dot_dimension_numbers<[1], [0], [0], [1], [0, 0, 1, 1], [], []>} : vector<8x128xf32>, vector<128x512xf32>, vector<8x512xf32> -> vector<8x512xf32>
      %116 = arith.addf %114, %115 : vector<8x512xf32>
      %117 = vector.extract_strided_slice %116 {offsets = [0, 0], sizes = [8, 128], strides = [1, 1]} : vector<8x512xf32> to vector<8x128xf32>
      %118 = arith.negf %117 : vector<8x128xf32>
      %119 = math.exp %118 : vector<8x128xf32>
      %cst_58 = arith.constant 1.000000e+00 : f32
      %120 = vector.broadcast %cst_58 : f32 to vector<8x128xf32>
      %121 = arith.addf %120, %119 : vector<8x128xf32>
      %122 = arith.divf %120, %121 : vector<8x128xf32>
      %123 = vector.extract_strided_slice %116 {offsets = [0, 128], sizes = [8, 128], strides = [1, 1]} : vector<8x512xf32> to vector<8x128xf32>
      %124 = arith.negf %123 : vector<8x128xf32>
      %125 = math.exp %124 : vector<8x128xf32>
      %cst_59 = arith.constant 1.000000e+00 : f32
      %126 = vector.broadcast %cst_59 : f32 to vector<8x128xf32>
      %127 = arith.addf %126, %125 : vector<8x128xf32>
      %128 = arith.divf %126, %127 : vector<8x128xf32>
      %129 = vector.extract_strided_slice %116 {offsets = [0, 256], sizes = [8, 128], strides = [1, 1]} : vector<8x512xf32> to vector<8x128xf32>
      %130 = math.tanh %129 : vector<8x128xf32>
      %131 = vector.extract_strided_slice %116 {offsets = [0, 384], sizes = [8, 128], strides = [1, 1]} : vector<8x512xf32> to vector<8x128xf32>
      %132 = arith.negf %131 : vector<8x128xf32>
      %133 = math.exp %132 : vector<8x128xf32>
      %cst_60 = arith.constant 1.000000e+00 : f32
      %134 = vector.broadcast %cst_60 : f32 to vector<8x128xf32>
      %135 = arith.addf %134, %133 : vector<8x128xf32>
      %136 = arith.divf %134, %135 : vector<8x128xf32>
      %137 = arith.mulf %128, %112 : vector<8x128xf32>
      %138 = arith.mulf %122, %130 : vector<8x128xf32>
      %139 = arith.addf %137, %138 : vector<8x128xf32>
      %140 = math.tanh %139 : vector<8x128xf32>
      %141 = arith.mulf %136, %140 : vector<8x128xf32>
      %c4_i32_61 = arith.constant 4 : i32
      %142 = arith.muli %arg1, %c4_i32_61 : i32
      %143 = arith.addi %142, %c2_i32_50 : i32
      %c10_i32_62 = arith.constant 10 : i32
      %144 = arith.cmpi slt, %143, %c10_i32_62 : i32
      %145 = arith.select %144, %139, %112 : vector<8x128xf32>
      %146 = arith.select %144, %141, %111 : vector<8x128xf32>
      %c0_63 = arith.constant 0 : index
      %c0_64 = arith.constant 0 : index
      %147 = vector.load %arg11[%c0_63, %c0_64] : memref<8x128xf32, #tpu.memory_space<vmem>>, vector<8x128xf32>
      tpu.vector_store %arg11[%c0_63, %c0_64], %146 {strides = array<i32>} : memref<8x128xf32, #tpu.memory_space<vmem>>, vector<8x128xf32>,
      %c0_65 = arith.constant 0 : index
      %c0_66 = arith.constant 0 : index
      %148 = vector.load %arg12[%c0_65, %c0_66] : memref<8x128xf32, #tpu.memory_space<vmem>>, vector<8x128xf32>
      tpu.vector_store %arg12[%c0_65, %c0_66], %145 {strides = array<i32>} : memref<8x128xf32, #tpu.memory_space<vmem>>, vector<8x128xf32>,
      %149 = arith.index_cast %c2_i32_50 : i32 to index
      %c0_67 = arith.constant 0 : index
      %c0_68 = arith.constant 0 : index
      %150 = vector.load %arg8[%149, %c0_67, %c0_68] : memref<4x8x128xf32, #tpu.memory_space<vmem>>, vector<1x8x128xf32>
      %151 = vector.shape_cast %150 : vector<1x8x128xf32> to vector<8x128xf32>
      %152 = vector.shape_cast %146 : vector<8x128xf32> to vector<1x8x128xf32>
      tpu.vector_store %arg8[%149, %c0_67, %c0_68], %152 {strides = array<i32>} : memref<4x8x128xf32, #tpu.memory_space<vmem>>, vector<1x8x128xf32>,
      %c3_i32 = arith.constant 3 : i32
      %c8_i32_69 = arith.constant 8 : i32
      %153 = arith.muli %c3_i32, %c8_i32_69 : i32
      %154 = tpu.assume_multiple %153, 8 : i32
      %c0_70 = arith.constant 0 : index
      %c0_71 = arith.constant 0 : index
      %155 = vector.load %arg11[%c0_70, %c0_71] : memref<8x128xf32, #tpu.memory_space<vmem>>, vector<8x128xf32>
      %c0_72 = arith.constant 0 : index
      %c0_73 = arith.constant 0 : index
      %156 = vector.load %arg12[%c0_72, %c0_73] : memref<8x128xf32, #tpu.memory_space<vmem>>, vector<8x128xf32>
      %157 = arith.index_cast %154 : i32 to index
      %c0_74 = arith.constant 0 : index
      %158 = vector.load %arg13[%157, %c0_74] : memref<32x512xf32, #tpu.memory_space<vmem>>, vector<8x512xf32>
      %cst_75 = arith.constant dense<0.000000e+00> : vector<8x512xf32>
      %159 = tpu.matmul %155, %11, %cst_75 {dimension_numbers = #tpu.dot_dimension_numbers<[1], [0], [0], [1], [0, 0, 1, 1], [], []>} : vector<8x128xf32>, vector<128x512xf32>, vector<8x512xf32> -> vector<8x512xf32>
      %160 = arith.addf %158, %159 : vector<8x512xf32>
      %161 = vector.extract_strided_slice %160 {offsets = [0, 0], sizes = [8, 128], strides = [1, 1]} : vector<8x512xf32> to vector<8x128xf32>
      %162 = arith.negf %161 : vector<8x128xf32>
      %163 = math.exp %162 : vector<8x128xf32>
      %cst_76 = arith.constant 1.000000e+00 : f32
      %164 = vector.broadcast %cst_76 : f32 to vector<8x128xf32>
      %165 = arith.addf %164, %163 : vector<8x128xf32>
      %166 = arith.divf %164, %165 : vector<8x128xf32>
      %167 = vector.extract_strided_slice %160 {offsets = [0, 128], sizes = [8, 128], strides = [1, 1]} : vector<8x512xf32> to vector<8x128xf32>
      %168 = arith.negf %167 : vector<8x128xf32>
      %169 = math.exp %168 : vector<8x128xf32>
      %cst_77 = arith.constant 1.000000e+00 : f32
      %170 = vector.broadcast %cst_77 : f32 to vector<8x128xf32>
      %171 = arith.addf %170, %169 : vector<8x128xf32>
      %172 = arith.divf %170, %171 : vector<8x128xf32>
      %173 = vector.extract_strided_slice %160 {offsets = [0, 256], sizes = [8, 128], strides = [1, 1]} : vector<8x512xf32> to vector<8x128xf32>
      %174 = math.tanh %173 : vector<8x128xf32>
      %175 = vector.extract_strided_slice %160 {offsets = [0, 384], sizes = [8, 128], strides = [1, 1]} : vector<8x512xf32> to vector<8x128xf32>
      %176 = arith.negf %175 : vector<8x128xf32>
      %177 = math.exp %176 : vector<8x128xf32>
      %cst_78 = arith.constant 1.000000e+00 : f32
      %178 = vector.broadcast %cst_78 : f32 to vector<8x128xf32>
      %179 = arith.addf %178, %177 : vector<8x128xf32>
      %180 = arith.divf %178, %179 : vector<8x128xf32>
      %181 = arith.mulf %172, %156 : vector<8x128xf32>
      %182 = arith.mulf %166, %174 : vector<8x128xf32>
      %183 = arith.addf %181, %182 : vector<8x128xf32>
      %184 = math.tanh %183 : vector<8x128xf32>
      %185 = arith.mulf %180, %184 : vector<8x128xf32>
      %c4_i32_79 = arith.constant 4 : i32
      %186 = arith.muli %arg1, %c4_i32_79 : i32
      %187 = arith.addi %186, %c3_i32 : i32
      %c10_i32_80 = arith.constant 10 : i32
      %188 = arith.cmpi slt, %187, %c10_i32_80 : i32
      %189 = arith.select %188, %183, %156 : vector<8x128xf32>
      %190 = arith.select %188, %185, %155 : vector<8x128xf32>
      %c0_81 = arith.constant 0 : index
      %c0_82 = arith.constant 0 : index
      %191 = vector.load %arg11[%c0_81, %c0_82] : memref<8x128xf32, #tpu.memory_space<vmem>>, vector<8x128xf32>
      tpu.vector_store %arg11[%c0_81, %c0_82], %190 {strides = array<i32>} : memref<8x128xf32, #tpu.memory_space<vmem>>, vector<8x128xf32>,
      %c0_83 = arith.constant 0 : index
      %c0_84 = arith.constant 0 : index
      %192 = vector.load %arg12[%c0_83, %c0_84] : memref<8x128xf32, #tpu.memory_space<vmem>>, vector<8x128xf32>
      tpu.vector_store %arg12[%c0_83, %c0_84], %189 {strides = array<i32>} : memref<8x128xf32, #tpu.memory_space<vmem>>, vector<8x128xf32>,
      %193 = arith.index_cast %c3_i32 : i32 to index
      %c0_85 = arith.constant 0 : index
      %c0_86 = arith.constant 0 : index
      %194 = vector.load %arg8[%193, %c0_85, %c0_86] : memref<4x8x128xf32, #tpu.memory_space<vmem>>, vector<1x8x128xf32>
      %195 = vector.shape_cast %194 : vector<1x8x128xf32> to vector<8x128xf32>
      %196 = vector.shape_cast %190 : vector<8x128xf32> to vector<1x8x128xf32>
      tpu.vector_store %arg8[%193, %c0_85, %c0_86], %196 {strides = array<i32>} : memref<4x8x128xf32, #tpu.memory_space<vmem>>, vector<1x8x128xf32>,
      %c4_i32_87 = arith.constant 4 : i32
    } else {
    }
    %c2_i32_14 = arith.constant 2 : i32
    %18 = arith.cmpi eq, %arg1, %c2_i32_14 : i32
    %19 = arith.extui %18 : i1 to i32
    %c0_i32_15 = arith.constant 0 : i32
    %20 = arith.cmpi ne, %19, %c0_i32_15 : i32
    scf.if %20 {
      %c0_16 = arith.constant 0 : index
      %c0_17 = arith.constant 0 : index
      %21 = vector.load %arg11[%c0_16, %c0_17] : memref<8x128xf32, #tpu.memory_space<vmem>>, vector<8x128xf32>
      %c0_18 = arith.constant 0 : index
      %c0_19 = arith.constant 0 : index
      %22 = vector.load %arg9[%c0_18, %c0_19] : memref<8x128xf32, #tpu.memory_space<vmem>>, vector<8x128xf32>
      tpu.vector_store %arg9[%c0_18, %c0_19], %21 {strides = array<i32>} : memref<8x128xf32, #tpu.memory_space<vmem>>, vector<8x128xf32>,
      %c0_20 = arith.constant 0 : index
      %c0_21 = arith.constant 0 : index
      %23 = vector.load %arg12[%c0_20, %c0_21] : memref<8x128xf32, #tpu.memory_space<vmem>>, vector<8x128xf32>
      %c0_22 = arith.constant 0 : index
      %c0_23 = arith.constant 0 : index
      %24 = vector.load %arg10[%c0_22, %c0_23] : memref<8x128xf32, #tpu.memory_space<vmem>>, vector<8x128xf32>
      tpu.vector_store %arg10[%c0_22, %c0_23], %23 {strides = array<i32>} : memref<8x128xf32, #tpu.memory_space<vmem>>, vector<8x128xf32>,
    } else {
    }
    return
  }
  func.func @transform_0(%arg0: i32, %arg1: i32) -> (i32, i32, i32) {
    %c0_i32 = arith.constant 0 : i32
    %c0_i32_0 = arith.constant 0 : i32
    return %arg1, %arg0, %c0_i32 : i32, i32, i32
  }
  func.func @transform_1(%arg0: i32, %arg1: i32) -> (i32, i32) {
    %c0_i32 = arith.constant 0 : i32
    %c0_i32_0 = arith.constant 0 : i32
    %c0_i32_1 = arith.constant 0 : i32
    return %c0_i32, %c0_i32_0 : i32, i32
  }
  func.func @transform_2(%arg0: i32, %arg1: i32) -> (i32, i32) {
    %c0_i32 = arith.constant 0 : i32
    %c0_i32_0 = arith.constant 0 : i32
    %c0_i32_1 = arith.constant 0 : i32
    return %c0_i32, %c0_i32_0 : i32, i32
  }
  func.func @transform_3(%arg0: i32, %arg1: i32) -> (i32, i32) {
    %c0_i32 = arith.constant 0 : i32
    %c0_i32_0 = arith.constant 0 : i32
    %c0_i32_1 = arith.constant 0 : i32
    return %c0_i32, %c0_i32_0 : i32, i32
  }
  func.func @transform_4(%arg0: i32, %arg1: i32) -> (i32, i32) {
    %c0_i32 = arith.constant 0 : i32
    %c0_i32_0 = arith.constant 0 : i32
    return %arg0, %c0_i32 : i32, i32
  }
  func.func @transform_5(%arg0: i32, %arg1: i32) -> (i32, i32) {
    %c0_i32 = arith.constant 0 : i32
    %c0_i32_0 = arith.constant 0 : i32
    return %arg0, %c0_i32 : i32, i32
  }
  func.func @transform_6(%arg0: i32, %arg1: i32) -> (i32, i32, i32) {
    %c0_i32 = arith.constant 0 : i32
    %c0_i32_0 = arith.constant 0 : i32
    return %arg1, %arg0, %c0_i32 : i32, i32, i32
  }
  func.func @transform_7(%arg0: i32, %arg1: i32) -> (i32, i32) {
    %c0_i32 = arith.constant 0 : i32
    %c0_i32_0 = arith.constant 0 : i32
    return %arg0, %c0_i32 : i32, i32
  }
  func.func @transform_8(%arg0: i32, %arg1: i32) -> (i32, i32) {
    %c0_i32 = arith.constant 0 : i32
    %c0_i32_0 = arith.constant 0 : i32
    return %arg0, %c0_i32 : i32, i32
  }
}

module attributes {stable_mosaic.version = 11 : i64} {
  func.func @kernel(%arg0: i32, %arg1: i32, %arg2: memref<4x8x32xf32, #tpu.memory_space<vmem>>, %arg3: memref<32x512xf32, #tpu.memory_space<vmem>>, %arg4: memref<128x512xf32, #tpu.memory_space<vmem>>, %arg5: memref<1x512xf32, #tpu.memory_space<vmem>>, %arg6: memref<8x128xf32, #tpu.memory_space<vmem>>, %arg7: memref<8x128xf32, #tpu.memory_space<vmem>>, %arg8: memref<4x8x128xf32, #tpu.memory_space<vmem>>, %arg9: memref<8x128xf32, #tpu.memory_space<vmem>>, %arg10: memref<8x128xf32, #tpu.memory_space<vmem>>, %arg11: memref<8x128xf32, #tpu.memory_space<vmem>>, %arg12: memref<8x128xf32, #tpu.memory_space<vmem>>, %arg13: memref<32x512xf32, #tpu.memory_space<vmem>>) attributes {dimension_semantics = [#tpu.dimension_semantics<parallel>, #tpu.dimension_semantics<arbitrary>], iteration_bounds = array<i64: 1, 3>, scalar_prefetch = 0 : i64, scratch_operands = 3 : i64, tpu.core_type = #tpu.core_type<tc>, window_params = [{transform_indices = @transform_0, window_bounds = array<i64: 4, 8, 32>}, {pipeline_mode = #tpu.pipeline_mode<synchronous>, transform_indices = @transform_1, window_bounds = array<i64: 32, 512>}, {pipeline_mode = #tpu.pipeline_mode<synchronous>, transform_indices = @transform_2, window_bounds = array<i64: 128, 512>}, {pipeline_mode = #tpu.pipeline_mode<synchronous>, transform_indices = @transform_3, window_bounds = array<i64: 1, 512>}, {transform_indices = @transform_4, window_bounds = array<i64: 8, 128>}, {transform_indices = @transform_5, window_bounds = array<i64: 8, 128>}, {transform_indices = @transform_6, window_bounds = array<i64: 4, 8, 128>}, {transform_indices = @transform_7, window_bounds = array<i64: 8, 128>}, {transform_indices = @transform_8, window_bounds = array<i64: 8, 128>}]} {
    %c0_i32 = arith.constant 0 : i32
    %0 = arith.cmpi eq, %arg1, %c0_i32 : i32
    %1 = arith.extui %0 : i1 to i32
    %c0_i32_0 = arith.constant 0 : i32
    %2 = arith.cmpi ne, %1, %c0_i32_0 : i32
    scf.if %2 {
      %c0_16 = arith.constant 0 : index
      %c0_17 = arith.constant 0 : index
      %21 = vector.load %arg6[%c0_16, %c0_17] : memref<8x128xf32, #tpu.memory_space<vmem>>, vector<8x128xf32>
      %c0_18 = arith.constant 0 : index
      %c0_19 = arith.constant 0 : index
      %22 = vector.load %arg11[%c0_18, %c0_19] : memref<8x128xf32, #tpu.memory_space<vmem>>, vector<8x128xf32>
      tpu.vector_store %arg11[%c0_18, %c0_19], %21 {strides = array<i32>} : memref<8x128xf32, #tpu.memory_space<vmem>>, vector<8x128xf32>,
      %c0_20 = arith.constant 0 : index
      %c0_21 = arith.constant 0 : index
      %23 = vector.load %arg7[%c0_20, %c0_21] : memref<8x128xf32, #tpu.memory_space<vmem>>, vector<8x128xf32>
      %c0_22 = arith.constant 0 : index
      %c0_23 = arith.constant 0 : index
      %24 = vector.load %arg12[%c0_22, %c0_23] : memref<8x128xf32, #tpu.memory_space<vmem>>, vector<8x128xf32>
      tpu.vector_store %arg12[%c0_22, %c0_23], %23 {strides = array<i32>} : memref<8x128xf32, #tpu.memory_space<vmem>>, vector<8x128xf32>,
    } else {
    }
    %c0 = arith.constant 0 : index
    %c0_1 = arith.constant 0 : index
    %c0_2 = arith.constant 0 : index
    %3 = vector.load %arg2[%c0, %c0_1, %c0_2] : memref<4x8x32xf32, #tpu.memory_space<vmem>>, vector<4x8x32xf32>
    %4 = vector.shape_cast %3 : vector<4x8x32xf32> to vector<32x32xf32>
    %c0_3 = arith.constant 0 : index
    %c0_4 = arith.constant 0 : index
    %5 = vector.load %arg3[%c0_3, %c0_4] : memref<32x512xf32, #tpu.memory_space<vmem>>, vector<32x512xf32>
    %cst = arith.constant dense<0.000000e+00> : vector<32x512xf32>
    %6 = tpu.matmul %4, %5, %cst {dimension_numbers = #tpu.dot_dimension_numbers<[1], [0], [0], [1], [0, 0, 1, 1], [], []>} : vector<32x32xf32>, vector<32x512xf32>, vector<32x512xf32> -> vector<32x512xf32>
    %c0_5 = arith.constant 0 : index
    %c0_6 = arith.constant 0 : index
    %7 = vector.load %arg5[%c0_5, %c0_6] : memref<1x512xf32, #tpu.memory_space<vmem>>, vector<1x512xf32>
    %8 = vector.broadcast %7 : vector<1x512xf32> to vector<32x512xf32>
    %9 = arith.addf %6, %8 : vector<32x512xf32>
    %c0_7 = arith.constant 0 : index
    %c0_8 = arith.constant 0 : index
    %10 = vector.load %arg13[%c0_7, %c0_8] : memref<32x512xf32, #tpu.memory_space<vmem>>, vector<32x512xf32>
    tpu.vector_store %arg13[%c0_7, %c0_8], %9 {strides = array<i32>} : memref<32x512xf32, #tpu.memory_space<vmem>>, vector<32x512xf32>,
    %c0_9 = arith.constant 0 : index
    %c0_10 = arith.constant 0 : index
    %11 = vector.load %arg4[%c0_9, %c0_10] : memref<128x512xf32, #tpu.memory_space<vmem>>, vector<128x512xf32>
    %c2_i32 = arith.constant 2 : i32
    %12 = arith.cmpi ne, %arg1, %c2_i32 : i32
    %13 = arith.extui %12 : i1 to i32
    %c0_i32_11 = arith.constant 0 : i32
    %14 = arith.cmpi ne, %13, %c0_i32_11 : i32
    scf.if %14 {
      %c0_i32_16 = arith.constant 0 : i32
      %c8_i32 = arith.constant 8 : i32
      %21 = arith.muli %c0_i32_16, %c8_i32 : i32
      %22 = tpu.assume_multiple %21, 8 : i32
      %c0_17 = arith.constant 0 : index
      %c0_18 = arith.constant 0 : index
      %23 = vector.load %arg11[%c0_17, %c0_18] : memref<8x128xf32, #tpu.memory_space<vmem>>, vector<8x128xf32>
      %c0_19 = arith.constant 0 : index
      %c0_20 = arith.constant 0 : index
      %24 = vector.load %arg12[%c0_19, %c0_20] : memref<8x128xf32, #tpu.memory_space<vmem>>, vector<8x128xf32>
      %25 = arith.index_cast %22 : i32 to index
      %c0_21 = arith.constant 0 : index
      %26 = vector.load %arg13[%25, %c0_21] : memref<32x512xf32, #tpu.memory_space<vmem>>, vector<8x512xf32>
      %cst_22 = arith.constant dense<0.000000e+00> : vector<8x512xf32>
      %27 = tpu.matmul %23, %11, %cst_22 {dimension_numbers = #tpu.dot_dimension_numbers<[1], [0], [0], [1], [0, 0, 1, 1], [], []>} : vector<8x128xf32>, vector<128x512xf32>, vector<8x512xf32> -> vector<8x512xf32>
      %28 = arith.addf %26, %27 : vector<8x512xf32>
      %29 = vector.extract_strided_slice %28 {offsets = [0, 0], sizes = [8, 128], strides = [1, 1]} : vector<8x512xf32> to vector<8x128xf32>
      %30 = arith.negf %29 : vector<8x128xf32>
      %31 = math.exp %30 : vector<8x128xf32>
      %cst_23 = arith.constant 1.000000e+00 : f32
      %32 = vector.broadcast %cst_23 : f32 to vector<8x128xf32>
      %33 = arith.addf %32, %31 : vector<8x128xf32>
      %34 = arith.divf %32, %33 : vector<8x128xf32>
      %35 = vector.extract_strided_slice %28 {offsets = [0, 128], sizes = [8, 128], strides = [1, 1]} : vector<8x512xf32> to vector<8x128xf32>
      %36 = arith.negf %35 : vector<8x128xf32>
      %37 = math.exp %36 : vector<8x128xf32>
      %cst_24 = arith.constant 1.000000e+00 : f32
      %38 = vector.broadcast %cst_24 : f32 to vector<8x128xf32>
      %39 = arith.addf %38, %37 : vector<8x128xf32>
      %40 = arith.divf %38, %39 : vector<8x128xf32>
      %41 = vector.extract_strided_slice %28 {offsets = [0, 256], sizes = [8, 128], strides = [1, 1]} : vector<8x512xf32> to vector<8x128xf32>
      %42 = math.tanh %41 : vector<8x128xf32>
      %43 = vector.extract_strided_slice %28 {offsets = [0, 384], sizes = [8, 128], strides = [1, 1]} : vector<8x512xf32> to vector<8x128xf32>
      %44 = arith.negf %43 : vector<8x128xf32>
      %45 = math.exp %44 : vector<8x128xf32>
      %cst_25 = arith.constant 1.000000e+00 : f32
      %46 = vector.broadcast %cst_25 : f32 to vector<8x128xf32>
      %47 = arith.addf %46, %45 : vector<8x128xf32>
      %48 = arith.divf %46, %47 : vector<8x128xf32>
      %49 = arith.mulf %40, %24 : vector<8x128xf32>
      %50 = arith.mulf %34, %42 : vector<8x128xf32>
      %51 = arith.addf %49, %50 : vector<8x128xf32>
      %52 = math.tanh %51 : vector<8x128xf32>
      %53 = arith.mulf %48, %52 : vector<8x128xf32>
      %c0_26 = arith.constant 0 : index
      %c0_27 = arith.constant 0 : index
      %54 = vector.load %arg11[%c0_26, %c0_27] : memref<8x128xf32, #tpu.memory_space<vmem>>, vector<8x128xf32>
      tpu.vector_store %arg11[%c0_26, %c0_27], %53 {strides = array<i32>} : memref<8x128xf32, #tpu.memory_space<vmem>>, vector<8x128xf32>,
      %c0_28 = arith.constant 0 : index
      %c0_29 = arith.constant 0 : index
      %55 = vector.load %arg12[%c0_28, %c0_29] : memref<8x128xf32, #tpu.memory_space<vmem>>, vector<8x128xf32>
      tpu.vector_store %arg12[%c0_28, %c0_29], %51 {strides = array<i32>} : memref<8x128xf32, #tpu.memory_space<vmem>>, vector<8x128xf32>,
      %56 = arith.index_cast %c0_i32_16 : i32 to index
      %c0_30 = arith.constant 0 : index
      %c0_31 = arith.constant 0 : index
      %57 = vector.load %arg8[%56, %c0_30, %c0_31] : memref<4x8x128xf32, #tpu.memory_space<vmem>>, vector<1x8x128xf32>
      %58 = vector.shape_cast %57 : vector<1x8x128xf32> to vector<8x128xf32>
      %59 = vector.shape_cast %53 : vector<8x128xf32> to vector<1x8x128xf32>
      tpu.vector_store %arg8[%56, %c0_30, %c0_31], %59 {strides = array<i32>} : memref<4x8x128xf32, #tpu.memory_space<vmem>>, vector<1x8x128xf32>,
      %c1_i32 = arith.constant 1 : i32
      %c8_i32_32 = arith.constant 8 : i32
      %60 = arith.muli %c1_i32, %c8_i32_32 : i32
      %61 = tpu.assume_multiple %60, 8 : i32
      %c0_33 = arith.constant 0 : index
      %c0_34 = arith.constant 0 : index
      %62 = vector.load %arg11[%c0_33, %c0_34] : memref<8x128xf32, #tpu.memory_space<vmem>>, vector<8x128xf32>
      %c0_35 = arith.constant 0 : index
      %c0_36 = arith.constant 0 : index
      %63 = vector.load %arg12[%c0_35, %c0_36] : memref<8x128xf32, #tpu.memory_space<vmem>>, vector<8x128xf32>
      %64 = arith.index_cast %61 : i32 to index
      %c0_37 = arith.constant 0 : index
      %65 = vector.load %arg13[%64, %c0_37] : memref<32x512xf32, #tpu.memory_space<vmem>>, vector<8x512xf32>
      %cst_38 = arith.constant dense<0.000000e+00> : vector<8x512xf32>
      %66 = tpu.matmul %62, %11, %cst_38 {dimension_numbers = #tpu.dot_dimension_numbers<[1], [0], [0], [1], [0, 0, 1, 1], [], []>} : vector<8x128xf32>, vector<128x512xf32>, vector<8x512xf32> -> vector<8x512xf32>
      %67 = arith.addf %65, %66 : vector<8x512xf32>
      %68 = vector.extract_strided_slice %67 {offsets = [0, 0], sizes = [8, 128], strides = [1, 1]} : vector<8x512xf32> to vector<8x128xf32>
      %69 = arith.negf %68 : vector<8x128xf32>
      %70 = math.exp %69 : vector<8x128xf32>
      %cst_39 = arith.constant 1.000000e+00 : f32
      %71 = vector.broadcast %cst_39 : f32 to vector<8x128xf32>
      %72 = arith.addf %71, %70 : vector<8x128xf32>
      %73 = arith.divf %71, %72 : vector<8x128xf32>
      %74 = vector.extract_strided_slice %67 {offsets = [0, 128], sizes = [8, 128], strides = [1, 1]} : vector<8x512xf32> to vector<8x128xf32>
      %75 = arith.negf %74 : vector<8x128xf32>
      %76 = math.exp %75 : vector<8x128xf32>
      %cst_40 = arith.constant 1.000000e+00 : f32
      %77 = vector.broadcast %cst_40 : f32 to vector<8x128xf32>
      %78 = arith.addf %77, %76 : vector<8x128xf32>
      %79 = arith.divf %77, %78 : vector<8x128xf32>
      %80 = vector.extract_strided_slice %67 {offsets = [0, 256], sizes = [8, 128], strides = [1, 1]} : vector<8x512xf32> to vector<8x128xf32>
      %81 = math.tanh %80 : vector<8x128xf32>
      %82 = vector.extract_strided_slice %67 {offsets = [0, 384], sizes = [8, 128], strides = [1, 1]} : vector<8x512xf32> to vector<8x128xf32>
      %83 = arith.negf %82 : vector<8x128xf32>
      %84 = math.exp %83 : vector<8x128xf32>
      %cst_41 = arith.constant 1.000000e+00 : f32
      %85 = vector.broadcast %cst_41 : f32 to vector<8x128xf32>
      %86 = arith.addf %85, %84 : vector<8x128xf32>
      %87 = arith.divf %85, %86 : vector<8x128xf32>
      %88 = arith.mulf %79, %63 : vector<8x128xf32>
      %89 = arith.mulf %73, %81 : vector<8x128xf32>
      %90 = arith.addf %88, %89 : vector<8x128xf32>
      %91 = math.tanh %90 : vector<8x128xf32>
      %92 = arith.mulf %87, %91 : vector<8x128xf32>
      %c0_42 = arith.constant 0 : index
      %c0_43 = arith.constant 0 : index
      %93 = vector.load %arg11[%c0_42, %c0_43] : memref<8x128xf32, #tpu.memory_space<vmem>>, vector<8x128xf32>
      tpu.vector_store %arg11[%c0_42, %c0_43], %92 {strides = array<i32>} : memref<8x128xf32, #tpu.memory_space<vmem>>, vector<8x128xf32>,
      %c0_44 = arith.constant 0 : index
      %c0_45 = arith.constant 0 : index
      %94 = vector.load %arg12[%c0_44, %c0_45] : memref<8x128xf32, #tpu.memory_space<vmem>>, vector<8x128xf32>
      tpu.vector_store %arg12[%c0_44, %c0_45], %90 {strides = array<i32>} : memref<8x128xf32, #tpu.memory_space<vmem>>, vector<8x128xf32>,
      %95 = arith.index_cast %c1_i32 : i32 to index
      %c0_46 = arith.constant 0 : index
      %c0_47 = arith.constant 0 : index
      %96 = vector.load %arg8[%95, %c0_46, %c0_47] : memref<4x8x128xf32, #tpu.memory_space<vmem>>, vector<1x8x128xf32>
      %97 = vector.shape_cast %96 : vector<1x8x128xf32> to vector<8x128xf32>
      %98 = vector.shape_cast %92 : vector<8x128xf32> to vector<1x8x128xf32>
      tpu.vector_store %arg8[%95, %c0_46, %c0_47], %98 {strides = array<i32>} : memref<4x8x128xf32, #tpu.memory_space<vmem>>, vector<1x8x128xf32>,
      %c2_i32_48 = arith.constant 2 : i32
      %c8_i32_49 = arith.constant 8 : i32
      %99 = arith.muli %c2_i32_48, %c8_i32_49 : i32
      %100 = tpu.assume_multiple %99, 8 : i32
      %c0_50 = arith.constant 0 : index
      %c0_51 = arith.constant 0 : index
      %101 = vector.load %arg11[%c0_50, %c0_51] : memref<8x128xf32, #tpu.memory_space<vmem>>, vector<8x128xf32>
      %c0_52 = arith.constant 0 : index
      %c0_53 = arith.constant 0 : index
      %102 = vector.load %arg12[%c0_52, %c0_53] : memref<8x128xf32, #tpu.memory_space<vmem>>, vector<8x128xf32>
      %103 = arith.index_cast %100 : i32 to index
      %c0_54 = arith.constant 0 : index
      %104 = vector.load %arg13[%103, %c0_54] : memref<32x512xf32, #tpu.memory_space<vmem>>, vector<8x512xf32>
      %cst_55 = arith.constant dense<0.000000e+00> : vector<8x512xf32>
      %105 = tpu.matmul %101, %11, %cst_55 {dimension_numbers = #tpu.dot_dimension_numbers<[1], [0], [0], [1], [0, 0, 1, 1], [], []>} : vector<8x128xf32>, vector<128x512xf32>, vector<8x512xf32> -> vector<8x512xf32>
      %106 = arith.addf %104, %105 : vector<8x512xf32>
      %107 = vector.extract_strided_slice %106 {offsets = [0, 0], sizes = [8, 128], strides = [1, 1]} : vector<8x512xf32> to vector<8x128xf32>
      %108 = arith.negf %107 : vector<8x128xf32>
      %109 = math.exp %108 : vector<8x128xf32>
      %cst_56 = arith.constant 1.000000e+00 : f32
      %110 = vector.broadcast %cst_56 : f32 to vector<8x128xf32>
      %111 = arith.addf %110, %109 : vector<8x128xf32>
      %112 = arith.divf %110, %111 : vector<8x128xf32>
      %113 = vector.extract_strided_slice %106 {offsets = [0, 128], sizes = [8, 128], strides = [1, 1]} : vector<8x512xf32> to vector<8x128xf32>
      %114 = arith.negf %113 : vector<8x128xf32>
      %115 = math.exp %114 : vector<8x128xf32>
      %cst_57 = arith.constant 1.000000e+00 : f32
      %116 = vector.broadcast %cst_57 : f32 to vector<8x128xf32>
      %117 = arith.addf %116, %115 : vector<8x128xf32>
      %118 = arith.divf %116, %117 : vector<8x128xf32>
      %119 = vector.extract_strided_slice %106 {offsets = [0, 256], sizes = [8, 128], strides = [1, 1]} : vector<8x512xf32> to vector<8x128xf32>
      %120 = math.tanh %119 : vector<8x128xf32>
      %121 = vector.extract_strided_slice %106 {offsets = [0, 384], sizes = [8, 128], strides = [1, 1]} : vector<8x512xf32> to vector<8x128xf32>
      %122 = arith.negf %121 : vector<8x128xf32>
      %123 = math.exp %122 : vector<8x128xf32>
      %cst_58 = arith.constant 1.000000e+00 : f32
      %124 = vector.broadcast %cst_58 : f32 to vector<8x128xf32>
      %125 = arith.addf %124, %123 : vector<8x128xf32>
      %126 = arith.divf %124, %125 : vector<8x128xf32>
      %127 = arith.mulf %118, %102 : vector<8x128xf32>
      %128 = arith.mulf %112, %120 : vector<8x128xf32>
      %129 = arith.addf %127, %128 : vector<8x128xf32>
      %130 = math.tanh %129 : vector<8x128xf32>
      %131 = arith.mulf %126, %130 : vector<8x128xf32>
      %c0_59 = arith.constant 0 : index
      %c0_60 = arith.constant 0 : index
      %132 = vector.load %arg11[%c0_59, %c0_60] : memref<8x128xf32, #tpu.memory_space<vmem>>, vector<8x128xf32>
      tpu.vector_store %arg11[%c0_59, %c0_60], %131 {strides = array<i32>} : memref<8x128xf32, #tpu.memory_space<vmem>>, vector<8x128xf32>,
      %c0_61 = arith.constant 0 : index
      %c0_62 = arith.constant 0 : index
      %133 = vector.load %arg12[%c0_61, %c0_62] : memref<8x128xf32, #tpu.memory_space<vmem>>, vector<8x128xf32>
      tpu.vector_store %arg12[%c0_61, %c0_62], %129 {strides = array<i32>} : memref<8x128xf32, #tpu.memory_space<vmem>>, vector<8x128xf32>,
      %134 = arith.index_cast %c2_i32_48 : i32 to index
      %c0_63 = arith.constant 0 : index
      %c0_64 = arith.constant 0 : index
      %135 = vector.load %arg8[%134, %c0_63, %c0_64] : memref<4x8x128xf32, #tpu.memory_space<vmem>>, vector<1x8x128xf32>
      %136 = vector.shape_cast %135 : vector<1x8x128xf32> to vector<8x128xf32>
      %137 = vector.shape_cast %131 : vector<8x128xf32> to vector<1x8x128xf32>
      tpu.vector_store %arg8[%134, %c0_63, %c0_64], %137 {strides = array<i32>} : memref<4x8x128xf32, #tpu.memory_space<vmem>>, vector<1x8x128xf32>,
      %c3_i32 = arith.constant 3 : i32
      %c8_i32_65 = arith.constant 8 : i32
      %138 = arith.muli %c3_i32, %c8_i32_65 : i32
      %139 = tpu.assume_multiple %138, 8 : i32
      %c0_66 = arith.constant 0 : index
      %c0_67 = arith.constant 0 : index
      %140 = vector.load %arg11[%c0_66, %c0_67] : memref<8x128xf32, #tpu.memory_space<vmem>>, vector<8x128xf32>
      %c0_68 = arith.constant 0 : index
      %c0_69 = arith.constant 0 : index
      %141 = vector.load %arg12[%c0_68, %c0_69] : memref<8x128xf32, #tpu.memory_space<vmem>>, vector<8x128xf32>
      %142 = arith.index_cast %139 : i32 to index
      %c0_70 = arith.constant 0 : index
      %143 = vector.load %arg13[%142, %c0_70] : memref<32x512xf32, #tpu.memory_space<vmem>>, vector<8x512xf32>
      %cst_71 = arith.constant dense<0.000000e+00> : vector<8x512xf32>
      %144 = tpu.matmul %140, %11, %cst_71 {dimension_numbers = #tpu.dot_dimension_numbers<[1], [0], [0], [1], [0, 0, 1, 1], [], []>} : vector<8x128xf32>, vector<128x512xf32>, vector<8x512xf32> -> vector<8x512xf32>
      %145 = arith.addf %143, %144 : vector<8x512xf32>
      %146 = vector.extract_strided_slice %145 {offsets = [0, 0], sizes = [8, 128], strides = [1, 1]} : vector<8x512xf32> to vector<8x128xf32>
      %147 = arith.negf %146 : vector<8x128xf32>
      %148 = math.exp %147 : vector<8x128xf32>
      %cst_72 = arith.constant 1.000000e+00 : f32
      %149 = vector.broadcast %cst_72 : f32 to vector<8x128xf32>
      %150 = arith.addf %149, %148 : vector<8x128xf32>
      %151 = arith.divf %149, %150 : vector<8x128xf32>
      %152 = vector.extract_strided_slice %145 {offsets = [0, 128], sizes = [8, 128], strides = [1, 1]} : vector<8x512xf32> to vector<8x128xf32>
      %153 = arith.negf %152 : vector<8x128xf32>
      %154 = math.exp %153 : vector<8x128xf32>
      %cst_73 = arith.constant 1.000000e+00 : f32
      %155 = vector.broadcast %cst_73 : f32 to vector<8x128xf32>
      %156 = arith.addf %155, %154 : vector<8x128xf32>
      %157 = arith.divf %155, %156 : vector<8x128xf32>
      %158 = vector.extract_strided_slice %145 {offsets = [0, 256], sizes = [8, 128], strides = [1, 1]} : vector<8x512xf32> to vector<8x128xf32>
      %159 = math.tanh %158 : vector<8x128xf32>
      %160 = vector.extract_strided_slice %145 {offsets = [0, 384], sizes = [8, 128], strides = [1, 1]} : vector<8x512xf32> to vector<8x128xf32>
      %161 = arith.negf %160 : vector<8x128xf32>
      %162 = math.exp %161 : vector<8x128xf32>
      %cst_74 = arith.constant 1.000000e+00 : f32
      %163 = vector.broadcast %cst_74 : f32 to vector<8x128xf32>
      %164 = arith.addf %163, %162 : vector<8x128xf32>
      %165 = arith.divf %163, %164 : vector<8x128xf32>
      %166 = arith.mulf %157, %141 : vector<8x128xf32>
      %167 = arith.mulf %151, %159 : vector<8x128xf32>
      %168 = arith.addf %166, %167 : vector<8x128xf32>
      %169 = math.tanh %168 : vector<8x128xf32>
      %170 = arith.mulf %165, %169 : vector<8x128xf32>
      %c0_75 = arith.constant 0 : index
      %c0_76 = arith.constant 0 : index
      %171 = vector.load %arg11[%c0_75, %c0_76] : memref<8x128xf32, #tpu.memory_space<vmem>>, vector<8x128xf32>
      tpu.vector_store %arg11[%c0_75, %c0_76], %170 {strides = array<i32>} : memref<8x128xf32, #tpu.memory_space<vmem>>, vector<8x128xf32>,
      %c0_77 = arith.constant 0 : index
      %c0_78 = arith.constant 0 : index
      %172 = vector.load %arg12[%c0_77, %c0_78] : memref<8x128xf32, #tpu.memory_space<vmem>>, vector<8x128xf32>
      tpu.vector_store %arg12[%c0_77, %c0_78], %168 {strides = array<i32>} : memref<8x128xf32, #tpu.memory_space<vmem>>, vector<8x128xf32>,
      %173 = arith.index_cast %c3_i32 : i32 to index
      %c0_79 = arith.constant 0 : index
      %c0_80 = arith.constant 0 : index
      %174 = vector.load %arg8[%173, %c0_79, %c0_80] : memref<4x8x128xf32, #tpu.memory_space<vmem>>, vector<1x8x128xf32>
      %175 = vector.shape_cast %174 : vector<1x8x128xf32> to vector<8x128xf32>
      %176 = vector.shape_cast %170 : vector<8x128xf32> to vector<1x8x128xf32>
      tpu.vector_store %arg8[%173, %c0_79, %c0_80], %176 {strides = array<i32>} : memref<4x8x128xf32, #tpu.memory_space<vmem>>, vector<1x8x128xf32>,
      %c4_i32 = arith.constant 4 : i32
    } else {
    }
    %c2_i32_12 = arith.constant 2 : i32
    %15 = arith.cmpi eq, %arg1, %c2_i32_12 : i32
    %16 = arith.extui %15 : i1 to i32
    %c0_i32_13 = arith.constant 0 : i32
    %17 = arith.cmpi ne, %16, %c0_i32_13 : i32
    scf.if %17 {
      %c0_i32_16 = arith.constant 0 : i32
      %c8_i32 = arith.constant 8 : i32
      %21 = arith.muli %c0_i32_16, %c8_i32 : i32
      %22 = tpu.assume_multiple %21, 8 : i32
      %c0_17 = arith.constant 0 : index
      %c0_18 = arith.constant 0 : index
      %23 = vector.load %arg11[%c0_17, %c0_18] : memref<8x128xf32, #tpu.memory_space<vmem>>, vector<8x128xf32>
      %c0_19 = arith.constant 0 : index
      %c0_20 = arith.constant 0 : index
      %24 = vector.load %arg12[%c0_19, %c0_20] : memref<8x128xf32, #tpu.memory_space<vmem>>, vector<8x128xf32>
      %25 = arith.index_cast %22 : i32 to index
      %c0_21 = arith.constant 0 : index
      %26 = vector.load %arg13[%25, %c0_21] : memref<32x512xf32, #tpu.memory_space<vmem>>, vector<8x512xf32>
      %cst_22 = arith.constant dense<0.000000e+00> : vector<8x512xf32>
      %27 = tpu.matmul %23, %11, %cst_22 {dimension_numbers = #tpu.dot_dimension_numbers<[1], [0], [0], [1], [0, 0, 1, 1], [], []>} : vector<8x128xf32>, vector<128x512xf32>, vector<8x512xf32> -> vector<8x512xf32>
      %28 = arith.addf %26, %27 : vector<8x512xf32>
      %29 = vector.extract_strided_slice %28 {offsets = [0, 0], sizes = [8, 128], strides = [1, 1]} : vector<8x512xf32> to vector<8x128xf32>
      %30 = arith.negf %29 : vector<8x128xf32>
      %31 = math.exp %30 : vector<8x128xf32>
      %cst_23 = arith.constant 1.000000e+00 : f32
      %32 = vector.broadcast %cst_23 : f32 to vector<8x128xf32>
      %33 = arith.addf %32, %31 : vector<8x128xf32>
      %34 = arith.divf %32, %33 : vector<8x128xf32>
      %35 = vector.extract_strided_slice %28 {offsets = [0, 128], sizes = [8, 128], strides = [1, 1]} : vector<8x512xf32> to vector<8x128xf32>
      %36 = arith.negf %35 : vector<8x128xf32>
      %37 = math.exp %36 : vector<8x128xf32>
      %cst_24 = arith.constant 1.000000e+00 : f32
      %38 = vector.broadcast %cst_24 : f32 to vector<8x128xf32>
      %39 = arith.addf %38, %37 : vector<8x128xf32>
      %40 = arith.divf %38, %39 : vector<8x128xf32>
      %41 = vector.extract_strided_slice %28 {offsets = [0, 256], sizes = [8, 128], strides = [1, 1]} : vector<8x512xf32> to vector<8x128xf32>
      %42 = math.tanh %41 : vector<8x128xf32>
      %43 = vector.extract_strided_slice %28 {offsets = [0, 384], sizes = [8, 128], strides = [1, 1]} : vector<8x512xf32> to vector<8x128xf32>
      %44 = arith.negf %43 : vector<8x128xf32>
      %45 = math.exp %44 : vector<8x128xf32>
      %cst_25 = arith.constant 1.000000e+00 : f32
      %46 = vector.broadcast %cst_25 : f32 to vector<8x128xf32>
      %47 = arith.addf %46, %45 : vector<8x128xf32>
      %48 = arith.divf %46, %47 : vector<8x128xf32>
      %49 = arith.mulf %40, %24 : vector<8x128xf32>
      %50 = arith.mulf %34, %42 : vector<8x128xf32>
      %51 = arith.addf %49, %50 : vector<8x128xf32>
      %52 = math.tanh %51 : vector<8x128xf32>
      %53 = arith.mulf %48, %52 : vector<8x128xf32>
      %c4_i32 = arith.constant 4 : i32
      %54 = arith.muli %arg1, %c4_i32 : i32
      %55 = arith.addi %54, %c0_i32_16 : i32
      %c10_i32 = arith.constant 10 : i32
      %56 = arith.cmpi slt, %55, %c10_i32 : i32
      %57 = arith.select %56, %51, %24 : vector<8x128xf32>
      %58 = arith.select %56, %53, %23 : vector<8x128xf32>
      %c0_26 = arith.constant 0 : index
      %c0_27 = arith.constant 0 : index
      %59 = vector.load %arg11[%c0_26, %c0_27] : memref<8x128xf32, #tpu.memory_space<vmem>>, vector<8x128xf32>
      tpu.vector_store %arg11[%c0_26, %c0_27], %58 {strides = array<i32>} : memref<8x128xf32, #tpu.memory_space<vmem>>, vector<8x128xf32>,
      %c0_28 = arith.constant 0 : index
      %c0_29 = arith.constant 0 : index
      %60 = vector.load %arg12[%c0_28, %c0_29] : memref<8x128xf32, #tpu.memory_space<vmem>>, vector<8x128xf32>
      tpu.vector_store %arg12[%c0_28, %c0_29], %57 {strides = array<i32>} : memref<8x128xf32, #tpu.memory_space<vmem>>, vector<8x128xf32>,
      %61 = arith.index_cast %c0_i32_16 : i32 to index
      %c0_30 = arith.constant 0 : index
      %c0_31 = arith.constant 0 : index
      %62 = vector.load %arg8[%61, %c0_30, %c0_31] : memref<4x8x128xf32, #tpu.memory_space<vmem>>, vector<1x8x128xf32>
      %63 = vector.shape_cast %62 : vector<1x8x128xf32> to vector<8x128xf32>
      %64 = vector.shape_cast %58 : vector<8x128xf32> to vector<1x8x128xf32>
      tpu.vector_store %arg8[%61, %c0_30, %c0_31], %64 {strides = array<i32>} : memref<4x8x128xf32, #tpu.memory_space<vmem>>, vector<1x8x128xf32>,
      %c1_i32 = arith.constant 1 : i32
      %c8_i32_32 = arith.constant 8 : i32
      %65 = arith.muli %c1_i32, %c8_i32_32 : i32
      %66 = tpu.assume_multiple %65, 8 : i32
      %c0_33 = arith.constant 0 : index
      %c0_34 = arith.constant 0 : index
      %67 = vector.load %arg11[%c0_33, %c0_34] : memref<8x128xf32, #tpu.memory_space<vmem>>, vector<8x128xf32>
      %c0_35 = arith.constant 0 : index
      %c0_36 = arith.constant 0 : index
      %68 = vector.load %arg12[%c0_35, %c0_36] : memref<8x128xf32, #tpu.memory_space<vmem>>, vector<8x128xf32>
      %69 = arith.index_cast %66 : i32 to index
      %c0_37 = arith.constant 0 : index
      %70 = vector.load %arg13[%69, %c0_37] : memref<32x512xf32, #tpu.memory_space<vmem>>, vector<8x512xf32>
      %cst_38 = arith.constant dense<0.000000e+00> : vector<8x512xf32>
      %71 = tpu.matmul %67, %11, %cst_38 {dimension_numbers = #tpu.dot_dimension_numbers<[1], [0], [0], [1], [0, 0, 1, 1], [], []>} : vector<8x128xf32>, vector<128x512xf32>, vector<8x512xf32> -> vector<8x512xf32>
      %72 = arith.addf %70, %71 : vector<8x512xf32>
      %73 = vector.extract_strided_slice %72 {offsets = [0, 0], sizes = [8, 128], strides = [1, 1]} : vector<8x512xf32> to vector<8x128xf32>
      %74 = arith.negf %73 : vector<8x128xf32>
      %75 = math.exp %74 : vector<8x128xf32>
      %cst_39 = arith.constant 1.000000e+00 : f32
      %76 = vector.broadcast %cst_39 : f32 to vector<8x128xf32>
      %77 = arith.addf %76, %75 : vector<8x128xf32>
      %78 = arith.divf %76, %77 : vector<8x128xf32>
      %79 = vector.extract_strided_slice %72 {offsets = [0, 128], sizes = [8, 128], strides = [1, 1]} : vector<8x512xf32> to vector<8x128xf32>
      %80 = arith.negf %79 : vector<8x128xf32>
      %81 = math.exp %80 : vector<8x128xf32>
      %cst_40 = arith.constant 1.000000e+00 : f32
      %82 = vector.broadcast %cst_40 : f32 to vector<8x128xf32>
      %83 = arith.addf %82, %81 : vector<8x128xf32>
      %84 = arith.divf %82, %83 : vector<8x128xf32>
      %85 = vector.extract_strided_slice %72 {offsets = [0, 256], sizes = [8, 128], strides = [1, 1]} : vector<8x512xf32> to vector<8x128xf32>
      %86 = math.tanh %85 : vector<8x128xf32>
      %87 = vector.extract_strided_slice %72 {offsets = [0, 384], sizes = [8, 128], strides = [1, 1]} : vector<8x512xf32> to vector<8x128xf32>
      %88 = arith.negf %87 : vector<8x128xf32>
      %89 = math.exp %88 : vector<8x128xf32>
      %cst_41 = arith.constant 1.000000e+00 : f32
      %90 = vector.broadcast %cst_41 : f32 to vector<8x128xf32>
      %91 = arith.addf %90, %89 : vector<8x128xf32>
      %92 = arith.divf %90, %91 : vector<8x128xf32>
      %93 = arith.mulf %84, %68 : vector<8x128xf32>
      %94 = arith.mulf %78, %86 : vector<8x128xf32>
      %95 = arith.addf %93, %94 : vector<8x128xf32>
      %96 = math.tanh %95 : vector<8x128xf32>
      %97 = arith.mulf %92, %96 : vector<8x128xf32>
      %c4_i32_42 = arith.constant 4 : i32
      %98 = arith.muli %arg1, %c4_i32_42 : i32
      %99 = arith.addi %98, %c1_i32 : i32
      %c10_i32_43 = arith.constant 10 : i32
      %100 = arith.cmpi slt, %99, %c10_i32_43 : i32
      %101 = arith.select %100, %95, %68 : vector<8x128xf32>
      %102 = arith.select %100, %97, %67 : vector<8x128xf32>
      %c0_44 = arith.constant 0 : index
      %c0_45 = arith.constant 0 : index
      %103 = vector.load %arg11[%c0_44, %c0_45] : memref<8x128xf32, #tpu.memory_space<vmem>>, vector<8x128xf32>
      tpu.vector_store %arg11[%c0_44, %c0_45], %102 {strides = array<i32>} : memref<8x128xf32, #tpu.memory_space<vmem>>, vector<8x128xf32>,
      %c0_46 = arith.constant 0 : index
      %c0_47 = arith.constant 0 : index
      %104 = vector.load %arg12[%c0_46, %c0_47] : memref<8x128xf32, #tpu.memory_space<vmem>>, vector<8x128xf32>
      tpu.vector_store %arg12[%c0_46, %c0_47], %101 {strides = array<i32>} : memref<8x128xf32, #tpu.memory_space<vmem>>, vector<8x128xf32>,
      %105 = arith.index_cast %c1_i32 : i32 to index
      %c0_48 = arith.constant 0 : index
      %c0_49 = arith.constant 0 : index
      %106 = vector.load %arg8[%105, %c0_48, %c0_49] : memref<4x8x128xf32, #tpu.memory_space<vmem>>, vector<1x8x128xf32>
      %107 = vector.shape_cast %106 : vector<1x8x128xf32> to vector<8x128xf32>
      %108 = vector.shape_cast %102 : vector<8x128xf32> to vector<1x8x128xf32>
      tpu.vector_store %arg8[%105, %c0_48, %c0_49], %108 {strides = array<i32>} : memref<4x8x128xf32, #tpu.memory_space<vmem>>, vector<1x8x128xf32>,
      %c2_i32_50 = arith.constant 2 : i32
      %c8_i32_51 = arith.constant 8 : i32
      %109 = arith.muli %c2_i32_50, %c8_i32_51 : i32
      %110 = tpu.assume_multiple %109, 8 : i32
      %c0_52 = arith.constant 0 : index
      %c0_53 = arith.constant 0 : index
      %111 = vector.load %arg11[%c0_52, %c0_53] : memref<8x128xf32, #tpu.memory_space<vmem>>, vector<8x128xf32>
      %c0_54 = arith.constant 0 : index
      %c0_55 = arith.constant 0 : index
      %112 = vector.load %arg12[%c0_54, %c0_55] : memref<8x128xf32, #tpu.memory_space<vmem>>, vector<8x128xf32>
      %113 = arith.index_cast %110 : i32 to index
      %c0_56 = arith.constant 0 : index
      %114 = vector.load %arg13[%113, %c0_56] : memref<32x512xf32, #tpu.memory_space<vmem>>, vector<8x512xf32>
      %cst_57 = arith.constant dense<0.000000e+00> : vector<8x512xf32>
      %115 = tpu.matmul %111, %11, %cst_57 {dimension_numbers = #tpu.dot_dimension_numbers<[1], [0], [0], [1], [0, 0, 1, 1], [], []>} : vector<8x128xf32>, vector<128x512xf32>, vector<8x512xf32> -> vector<8x512xf32>
      %116 = arith.addf %114, %115 : vector<8x512xf32>
      %117 = vector.extract_strided_slice %116 {offsets = [0, 0], sizes = [8, 128], strides = [1, 1]} : vector<8x512xf32> to vector<8x128xf32>
      %118 = arith.negf %117 : vector<8x128xf32>
      %119 = math.exp %118 : vector<8x128xf32>
      %cst_58 = arith.constant 1.000000e+00 : f32
      %120 = vector.broadcast %cst_58 : f32 to vector<8x128xf32>
      %121 = arith.addf %120, %119 : vector<8x128xf32>
      %122 = arith.divf %120, %121 : vector<8x128xf32>
      %123 = vector.extract_strided_slice %116 {offsets = [0, 128], sizes = [8, 128], strides = [1, 1]} : vector<8x512xf32> to vector<8x128xf32>
      %124 = arith.negf %123 : vector<8x128xf32>
      %125 = math.exp %124 : vector<8x128xf32>
      %cst_59 = arith.constant 1.000000e+00 : f32
      %126 = vector.broadcast %cst_59 : f32 to vector<8x128xf32>
      %127 = arith.addf %126, %125 : vector<8x128xf32>
      %128 = arith.divf %126, %127 : vector<8x128xf32>
      %129 = vector.extract_strided_slice %116 {offsets = [0, 256], sizes = [8, 128], strides = [1, 1]} : vector<8x512xf32> to vector<8x128xf32>
      %130 = math.tanh %129 : vector<8x128xf32>
      %131 = vector.extract_strided_slice %116 {offsets = [0, 384], sizes = [8, 128], strides = [1, 1]} : vector<8x512xf32> to vector<8x128xf32>
      %132 = arith.negf %131 : vector<8x128xf32>
      %133 = math.exp %132 : vector<8x128xf32>
      %cst_60 = arith.constant 1.000000e+00 : f32
      %134 = vector.broadcast %cst_60 : f32 to vector<8x128xf32>
      %135 = arith.addf %134, %133 : vector<8x128xf32>
      %136 = arith.divf %134, %135 : vector<8x128xf32>
      %137 = arith.mulf %128, %112 : vector<8x128xf32>
      %138 = arith.mulf %122, %130 : vector<8x128xf32>
      %139 = arith.addf %137, %138 : vector<8x128xf32>
      %140 = math.tanh %139 : vector<8x128xf32>
      %141 = arith.mulf %136, %140 : vector<8x128xf32>
      %c4_i32_61 = arith.constant 4 : i32
      %142 = arith.muli %arg1, %c4_i32_61 : i32
      %143 = arith.addi %142, %c2_i32_50 : i32
      %c10_i32_62 = arith.constant 10 : i32
      %144 = arith.cmpi slt, %143, %c10_i32_62 : i32
      %145 = arith.select %144, %139, %112 : vector<8x128xf32>
      %146 = arith.select %144, %141, %111 : vector<8x128xf32>
      %c0_63 = arith.constant 0 : index
      %c0_64 = arith.constant 0 : index
      %147 = vector.load %arg11[%c0_63, %c0_64] : memref<8x128xf32, #tpu.memory_space<vmem>>, vector<8x128xf32>
      tpu.vector_store %arg11[%c0_63, %c0_64], %146 {strides = array<i32>} : memref<8x128xf32, #tpu.memory_space<vmem>>, vector<8x128xf32>,
      %c0_65 = arith.constant 0 : index
      %c0_66 = arith.constant 0 : index
      %148 = vector.load %arg12[%c0_65, %c0_66] : memref<8x128xf32, #tpu.memory_space<vmem>>, vector<8x128xf32>
      tpu.vector_store %arg12[%c0_65, %c0_66], %145 {strides = array<i32>} : memref<8x128xf32, #tpu.memory_space<vmem>>, vector<8x128xf32>,
      %149 = arith.index_cast %c2_i32_50 : i32 to index
      %c0_67 = arith.constant 0 : index
      %c0_68 = arith.constant 0 : index
      %150 = vector.load %arg8[%149, %c0_67, %c0_68] : memref<4x8x128xf32, #tpu.memory_space<vmem>>, vector<1x8x128xf32>
      %151 = vector.shape_cast %150 : vector<1x8x128xf32> to vector<8x128xf32>
      %152 = vector.shape_cast %146 : vector<8x128xf32> to vector<1x8x128xf32>
      tpu.vector_store %arg8[%149, %c0_67, %c0_68], %152 {strides = array<i32>} : memref<4x8x128xf32, #tpu.memory_space<vmem>>, vector<1x8x128xf32>,
      %c3_i32 = arith.constant 3 : i32
      %c8_i32_69 = arith.constant 8 : i32
      %153 = arith.muli %c3_i32, %c8_i32_69 : i32
      %154 = tpu.assume_multiple %153, 8 : i32
      %c0_70 = arith.constant 0 : index
      %c0_71 = arith.constant 0 : index
      %155 = vector.load %arg11[%c0_70, %c0_71] : memref<8x128xf32, #tpu.memory_space<vmem>>, vector<8x128xf32>
      %c0_72 = arith.constant 0 : index
      %c0_73 = arith.constant 0 : index
      %156 = vector.load %arg12[%c0_72, %c0_73] : memref<8x128xf32, #tpu.memory_space<vmem>>, vector<8x128xf32>
      %157 = arith.index_cast %154 : i32 to index
      %c0_74 = arith.constant 0 : index
      %158 = vector.load %arg13[%157, %c0_74] : memref<32x512xf32, #tpu.memory_space<vmem>>, vector<8x512xf32>
      %cst_75 = arith.constant dense<0.000000e+00> : vector<8x512xf32>
      %159 = tpu.matmul %155, %11, %cst_75 {dimension_numbers = #tpu.dot_dimension_numbers<[1], [0], [0], [1], [0, 0, 1, 1], [], []>} : vector<8x128xf32>, vector<128x512xf32>, vector<8x512xf32> -> vector<8x512xf32>
      %160 = arith.addf %158, %159 : vector<8x512xf32>
      %161 = vector.extract_strided_slice %160 {offsets = [0, 0], sizes = [8, 128], strides = [1, 1]} : vector<8x512xf32> to vector<8x128xf32>
      %162 = arith.negf %161 : vector<8x128xf32>
      %163 = math.exp %162 : vector<8x128xf32>
      %cst_76 = arith.constant 1.000000e+00 : f32
      %164 = vector.broadcast %cst_76 : f32 to vector<8x128xf32>
      %165 = arith.addf %164, %163 : vector<8x128xf32>
      %166 = arith.divf %164, %165 : vector<8x128xf32>
      %167 = vector.extract_strided_slice %160 {offsets = [0, 128], sizes = [8, 128], strides = [1, 1]} : vector<8x512xf32> to vector<8x128xf32>
      %168 = arith.negf %167 : vector<8x128xf32>
      %169 = math.exp %168 : vector<8x128xf32>
      %cst_77 = arith.constant 1.000000e+00 : f32
      %170 = vector.broadcast %cst_77 : f32 to vector<8x128xf32>
      %171 = arith.addf %170, %169 : vector<8x128xf32>
      %172 = arith.divf %170, %171 : vector<8x128xf32>
      %173 = vector.extract_strided_slice %160 {offsets = [0, 256], sizes = [8, 128], strides = [1, 1]} : vector<8x512xf32> to vector<8x128xf32>
      %174 = math.tanh %173 : vector<8x128xf32>
      %175 = vector.extract_strided_slice %160 {offsets = [0, 384], sizes = [8, 128], strides = [1, 1]} : vector<8x512xf32> to vector<8x128xf32>
      %176 = arith.negf %175 : vector<8x128xf32>
      %177 = math.exp %176 : vector<8x128xf32>
      %cst_78 = arith.constant 1.000000e+00 : f32
      %178 = vector.broadcast %cst_78 : f32 to vector<8x128xf32>
      %179 = arith.addf %178, %177 : vector<8x128xf32>
      %180 = arith.divf %178, %179 : vector<8x128xf32>
      %181 = arith.mulf %172, %156 : vector<8x128xf32>
      %182 = arith.mulf %166, %174 : vector<8x128xf32>
      %183 = arith.addf %181, %182 : vector<8x128xf32>
      %184 = math.tanh %183 : vector<8x128xf32>
      %185 = arith.mulf %180, %184 : vector<8x128xf32>
      %c4_i32_79 = arith.constant 4 : i32
      %186 = arith.muli %arg1, %c4_i32_79 : i32
      %187 = arith.addi %186, %c3_i32 : i32
      %c10_i32_80 = arith.constant 10 : i32
      %188 = arith.cmpi slt, %187, %c10_i32_80 : i32
      %189 = arith.select %188, %183, %156 : vector<8x128xf32>
      %190 = arith.select %188, %185, %155 : vector<8x128xf32>
      %c0_81 = arith.constant 0 : index
      %c0_82 = arith.constant 0 : index
      %191 = vector.load %arg11[%c0_81, %c0_82] : memref<8x128xf32, #tpu.memory_space<vmem>>, vector<8x128xf32>
      tpu.vector_store %arg11[%c0_81, %c0_82], %190 {strides = array<i32>} : memref<8x128xf32, #tpu.memory_space<vmem>>, vector<8x128xf32>,
      %c0_83 = arith.constant 0 : index
      %c0_84 = arith.constant 0 : index
      %192 = vector.load %arg12[%c0_83, %c0_84] : memref<8x128xf32, #tpu.memory_space<vmem>>, vector<8x128xf32>
      tpu.vector_store %arg12[%c0_83, %c0_84], %189 {strides = array<i32>} : memref<8x128xf32, #tpu.memory_space<vmem>>, vector<8x128xf32>,
      %193 = arith.index_cast %c3_i32 : i32 to index
      %c0_85 = arith.constant 0 : index
      %c0_86 = arith.constant 0 : index
      %194 = vector.load %arg8[%193, %c0_85, %c0_86] : memref<4x8x128xf32, #tpu.memory_space<vmem>>, vector<1x8x128xf32>
      %195 = vector.shape_cast %194 : vector<1x8x128xf32> to vector<8x128xf32>
      %196 = vector.shape_cast %190 : vector<8x128xf32> to vector<1x8x128xf32>
      tpu.vector_store %arg8[%193, %c0_85, %c0_86], %196 {strides = array<i32>} : memref<4x8x128xf32, #tpu.memory_space<vmem>>, vector<1x8x128xf32>,
      %c4_i32_87 = arith.constant 4 : i32
    } else {
    }
    %c2_i32_14 = arith.constant 2 : i32
    %18 = arith.cmpi eq, %arg1, %c2_i32_14 : i32
    %19 = arith.extui %18 : i1 to i32
    %c0_i32_15 = arith.constant 0 : i32
    %20 = arith.cmpi ne, %19, %c0_i32_15 : i32
    scf.if %20 {
      %c0_16 = arith.constant 0 : index
      %c0_17 = arith.constant 0 : index
      %21 = vector.load %arg11[%c0_16, %c0_17] : memref<8x128xf32, #tpu.memory_space<vmem>>, vector<8x128xf32>
      %c0_18 = arith.constant 0 : index
      %c0_19 = arith.constant 0 : index
      %22 = vector.load %arg9[%c0_18, %c0_19] : memref<8x128xf32, #tpu.memory_space<vmem>>, vector<8x128xf32>
      tpu.vector_store %arg9[%c0_18, %c0_19], %21 {strides = array<i32>} : memref<8x128xf32, #tpu.memory_space<vmem>>, vector<8x128xf32>,
      %c0_20 = arith.constant 0 : index
      %c0_21 = arith.constant 0 : index
      %23 = vector.load %arg12[%c0_20, %c0_21] : memref<8x128xf32, #tpu.memory_space<vmem>>, vector<8x128xf32>
      %c0_22 = arith.constant 0 : index
      %c0_23 = arith.constant 0 : index
      %24 = vector.load %arg10[%c0_22, %c0_23] : memref<8x128xf32, #tpu.memory_space<vmem>>, vector<8x128xf32>
      tpu.vector_store %arg10[%c0_22, %c0_23], %23 {strides = array<i32>} : memref<8x128xf32, #tpu.memory_space<vmem>>, vector<8x128xf32>,
    } else {
    }
    return
  }
  func.func @transform_0(%arg0: i32, %arg1: i32) -> (i32, i32, i32) {
    %c0_i32 = arith.constant 0 : i32
    %c0_i32_0 = arith.constant 0 : i32
    return %arg1, %arg0, %c0_i32 : i32, i32, i32
  }
  func.func @transform_1(%arg0: i32, %arg1: i32) -> (i32, i32) {
    %c0_i32 = arith.constant 0 : i32
    %c0_i32_0 = arith.constant 0 : i32
    %c0_i32_1 = arith.constant 0 : i32
    return %c0_i32, %c0_i32_0 : i32, i32
  }
  func.func @transform_2(%arg0: i32, %arg1: i32) -> (i32, i32) {
    %c0_i32 = arith.constant 0 : i32
    %c0_i32_0 = arith.constant 0 : i32
    %c0_i32_1 = arith.constant 0 : i32
    return %c0_i32, %c0_i32_0 : i32, i32
  }
  func.func @transform_3(%arg0: i32, %arg1: i32) -> (i32, i32) {
    %c0_i32 = arith.constant 0 : i32
    %c0_i32_0 = arith.constant 0 : i32
    %c0_i32_1 = arith.constant 0 : i32
    return %c0_i32, %c0_i32_0 : i32, i32
  }
  func.func @transform_4(%arg0: i32, %arg1: i32) -> (i32, i32) {
    %c0_i32 = arith.constant 0 : i32
    %c0_i32_0 = arith.constant 0 : i32
    return %arg0, %c0_i32 : i32, i32
  }
  func.func @transform_5(%arg0: i32, %arg1: i32) -> (i32, i32) {
    %c0_i32 = arith.constant 0 : i32
    %c0_i32_0 = arith.constant 0 : i32
    return %arg0, %c0_i32 : i32, i32
  }
  func.func @transform_6(%arg0: i32, %arg1: i32) -> (i32, i32, i32) {
    %c0_i32 = arith.constant 0 : i32
    %c0_i32_0 = arith.constant 0 : i32
    return %arg1, %arg0, %c0_i32 : i32, i32, i32
  }
  func.func @transform_7(%arg0: i32, %arg1: i32) -> (i32, i32) {
    %c0_i32 = arith.constant 0 : i32
    %c0_i32_0 = arith.constant 0 : i32
    return %arg0, %c0_i32 : i32, i32
  }
  func.func @transform_8(%arg0: i32, %arg1: i32) -> (i32, i32) {
    %c0_i32 = arith.constant 0 : i32
    %c0_i32_0 = arith.constant 0 : i32
    return %arg0, %c0_i32 : i32, i32
  }
}

</mosaic_0001>

<llo_original>
// kernel: tpu_custom_call.1
$region0: #{tpu_custom_call.1}
  #allocation0 [shape = 'u32[]', space=smem, size = 0x4, offset = 0x4, fixed_abs, tag = 'smem constant byte address 0x4 - core index']
  #allocation1 [shape = 'u32[144,128]{1,0:T(1,128)}', space=vmem, size = 0x12000, scoped, tag = 'internal scratch']
  #allocation2 [shape = 'f32[8,128]{1,0:T(8,128)}', space=vmem, size = 0x1000, scoped, tag = 'scratch operand']
  #allocation3 [shape = 'f32[8,128]{1,0:T(8,128)}', space=vmem, size = 0x1000, scoped, tag = 'scratch operand']
  #allocation4 [shape = 'f32[32,512]{1,0:T(8,128)}', space=vmem, size = 0x10000, scoped, tag = 'scratch operand']
  %s0 = inlined_call_operand.hbm [shape: f32[12,8,32], index: 0, kind: input, shape index: {}]
  %s1 = inlined_call_operand.hbm [shape: f32[32,512], index: 1, kind: input, shape index: {}]
  %s2 = inlined_call_operand.hbm [shape: f32[128,512], index: 2, kind: input, shape index: {}]
  %s3 = inlined_call_operand.hbm [shape: f32[1,512], index: 3, kind: input, shape index: {}]
  %s4 = inlined_call_operand.hbm [shape: f32[8,128], index: 4, kind: input, shape index: {}]
  %s5 = inlined_call_operand.vmem [shape: f32[8,128], index: 5, kind: input, shape index: {}]
  %s6 = inlined_call_operand.hbm [shape: f32[12,8,128], index: 6, kind: output, shape index: {0}]
  %s7 = inlined_call_operand.hbm [shape: f32[8,128], index: 7, kind: output, shape index: {1}]
  %s8 = inlined_call_operand.hbm [shape: f32[8,128], index: 8, kind: output, shape index: {2}]
  %9 = xla_tuple %s6, %s7, %s8
  %s10 = sld [smem:[#allocation0]]
  $region105: #{tpu_custom_call.1} parent=0
    _
  %s12 = ssub.s32 1, %s10
  %s13 = scalar_select 0, %s12, %s10
  $region1: #{tpu_custom_call.1} parent=0
    #allocation5 [shape = 'u8[32768]{0}', space=vmem, size = 0x8000, scoped, tag = 'input window, operand 0']
    #allocation6 [shape = 's32[2]{0}', space=sflag, size = 0x8, scoped, tag = 'scoped memory for tpu_custom_call.1']
    #allocation7 [shape = 's32[2]{0}', space=sflag, size = 0x8, scoped, tag = 'scoped memory for tpu_custom_call.1']
    #allocation8 [shape = 'u8[65536]{0}', space=vmem, size = 0x10000, scoped, tag = 'input window, operand 1, single buffered']
    #allocation9 [shape = 's32[1]{0}', space=sflag, size = 0x4, scoped, tag = 'scoped memory for tpu_custom_call.1']
    #allocation10 [shape = 'u8[262144]{0}', space=vmem, size = 0x40000, scoped, tag = 'input window, operand 2, single buffered']
    #allocation11 [shape = 'u8[2048]{0}', space=vmem, size = 0x800, scoped, tag = 'input window, operand 3, single buffered']
    #allocation12 [shape = 's32[1]{0}', space=sflag, size = 0x4, scoped, tag = 'scoped memory for tpu_custom_call.1']
    #allocation13 [shape = 'u8[4096]{0}', space=vmem, size = 0x1000, scoped, tag = 'input window, operand 4, single buffered']
    #allocation14 [shape = 'u8[32768]{0}', space=vmem, size = 0x8000, scoped, tag = 'output window, operand 0']
    #allocation15 [shape = 'u8[4096]{0}', space=vmem, size = 0x1000, scoped, tag = 'output window, operand 1, single buffered']
    #allocation16 [shape = 's32[1]{0}', space=sflag, size = 0x4, scoped, tag = 'scoped memory for tpu_custom_call.1']
    #allocation17 [shape = 'u8[4096]{0}', space=vmem, size = 0x1000, scoped, tag = 'output window, operand 2, single buffered']
    %14 = vsyncpa [#allocation6], 0
    %s15 = scalar_lea.sflag [#allocation6], 1
    %16 = vsyncpa %s15, 0
    %17 = vsyncpa [#allocation9], 0
    %18 = vsyncpa [#allocation12], 0
    %19 = vsyncpa [#allocation7], 0
    %s20 = scalar_lea.sflag [#allocation7], 1
    %21 = vsyncpa %s20, 0
    %22 = vsyncpa [#allocation16], 0
    loop: start=0, step=1, limit=5
    $region2: #{tpu_custom_call.1} parent=1 // loop_pre_header
      _
    $region3: #{tpu_custom_call.1} parent=1 // loop_header
      %s24 = sphi 0, %s28
      %p25 = scmp.ge.s32.totalorder %s24, 5
      %s31 = sphi 0, %s43
      %s32 = sphi 0, %s39
      %s33 = sphi 0, %s31
      %s34 = sphi 0, %s32
      %s35 = sphi 0, %s33
      %s36 = sphi 0, %s34
      %s48 = sphi 0, %s50
      %s51 = sphi 0, %s48
      %s52 = sphi 0, %s51
      %s68 = sphi 0, %s52
      %s72 = sphi 0, %s72
      %s74 = sphi 0, %s72
      %s75 = sphi 0, %s74
      %s89 = sphi 0, %s75
      %s93 = sphi 0, %s93
      %s95 = sphi 0, %s93
      %s96 = sphi 0, %s95
      %s110 = sphi 0, %s96
      %s114 = sphi 0, %s114
      %s116 = sphi 0, %s114
      %s117 = sphi 0, %s116
      %s131 = sphi 0, %s117
      %s137 = sphi 0, %s139
      %s140 = sphi 0, %s137
      %s141 = sphi 0, %s140
      %s157 = sphi 0, %s141
      %s163 = sphi 0, %s165
      %s166 = sphi 0, %s163
      %s167 = sphi 0, %s166
      %s183 = sphi 0, %s167
      %s191 = sphi 0, %s193
      %s194 = sphi 0, %s191
      %s195 = sphi 0, %s194
      %s211 = sphi 0, %s195
      %s217 = sphi 0, %s219
      %s220 = sphi 0, %s217
      %s221 = sphi 0, %s220
      %s237 = sphi 0, %s221
      %s243 = sphi 0, %s245
      %s246 = sphi 0, %s243
      %s247 = sphi 0, %s246
      %s263 = sphi 0, %s247
    $region4: #{tpu_custom_call.1} parent=1 // loop_header_branch
      %27 = sbr.rel (%p25) target = $region8
    $region5: #{tpu_custom_call.1} parent=1 // loop_body
      %s29 = ssub.s32 %s24, 1
      %s30 = ssub.s32 %s24, 2
      %s37 = sadd.s32 1, %s32
      %p38 = scmp.ge.s32.totalorder %s37, 3
      %s39 = scalar_select %p38, 0, %s37
      %s40 = sadd.s32 1, %s31
      %s41 = scalar_select %p38, %s40, %s31
      %p42 = scmp.ge.s32.totalorder %s41, 1
      %s43 = scalar_select %p42, 0, %s41
      %s44 = ssub.s32 %s32, %s39
      %s45 = ssub.s32 %s31, %s43
      %s46 = sor.u32 %s44, %s45
      %p47 = scmp.eq.s32.totalorder %s46, 0
      %s49 = sadd.s32 %s48, 1
      %s50 = scalar_select %p47, %s48, %s49
      %p53 = pneg %p47
      %p54 = scmp.eq.s32.totalorder %s24, 2
      %p55 = por %p53, %p54
      %p56 = scmp.ne.s32.totalorder %s48, %s51
      %p57 = scmp.eq.s32.totalorder %s24, 0
      %p58 = por %p56, %p57
      %p59 = scmp.ne.s32.totalorder %s48, %s51
      %p60 = scmp.eq.s32.totalorder %s29, 2
      %p61 = por %p59, %p60
      %p62 = scmp.ne.s32.totalorder %s51, %s52
      %p63 = scmp.eq.s32.totalorder %s29, 0
      %p64 = por %p62, %p63
      %p65 = scmp.ne.s32.totalorder %s51, %s52
      %p66 = scmp.eq.s32.totalorder %s30, 2
      %p67 = por %p65, %p66
      %p69 = scmp.ne.s32.totalorder %s52, %s68
      %p70 = scmp.eq.s32.totalorder %s30, 0
      %p71 = por %p69, %p70
      %s73 = sadd.s32 %s72, 1
      %p76 = scmp.eq.s32.totalorder %s24, 2
      %p77 = scmp.ne.s32.totalorder %s72, %s74
      %p78 = scmp.eq.s32.totalorder %s24, 0
      %p79 = por %p77, %p78
      %p80 = scmp.ne.s32.totalorder %s72, %s74
      %p81 = scmp.eq.s32.totalorder %s29, 2
      %p82 = por %p80, %p81
      %p83 = scmp.ne.s32.totalorder %s74, %s75
      %p84 = scmp.eq.s32.totalorder %s29, 0
      %p85 = por %p83, %p84
      %p86 = scmp.ne.s32.totalorder %s74, %s75
      %p87 = scmp.eq.s32.totalorder %s30, 2
      %p88 = por %p86, %p87
      %p90 = scmp.ne.s32.totalorder %s75, %s89
      %p91 = scmp.eq.s32.totalorder %s30, 0
      %p92 = por %p90, %p91
      %s94 = sadd.s32 %s93, 1
      %p97 = scmp.eq.s32.totalorder %s24, 2
      %p98 = scmp.ne.s32.totalorder %s93, %s95
      %p99 = scmp.eq.s32.totalorder %s24, 0
      %p100 = por %p98, %p99
      %p101 = scmp.ne.s32.totalorder %s93, %s95
      %p102 = scmp.eq.s32.totalorder %s29, 2
      %p103 = por %p101, %p102
      %p104 = scmp.ne.s32.totalorder %s95, %s96
      %p105 = scmp.eq.s32.totalorder %s29, 0
      %p106 = por %p104, %p105
      %p107 = scmp.ne.s32.totalorder %s95, %s96
      %p108 = scmp.eq.s32.totalorder %s30, 2
      %p109 = por %p107, %p108
      %p111 = scmp.ne.s32.totalorder %s96, %s110
      %p112 = scmp.eq.s32.totalorder %s30, 0
      %p113 = por %p111, %p112
      %s115 = sadd.s32 %s114, 1
      %p118 = scmp.eq.s32.totalorder %s24, 2
      %p119 = scmp.ne.s32.totalorder %s114, %s116
      %p120 = scmp.eq.s32.totalorder %s24, 0
      %p121 = por %p119, %p120
      %p122 = scmp.ne.s32.totalorder %s114, %s116
      %p123 = scmp.eq.s32.totalorder %s29, 2
      %p124 = por %p122, %p123
      %p125 = scmp.ne.s32.totalorder %s116, %s117
      %p126 = scmp.eq.s32.totalorder %s29, 0
      %p127 = por %p125, %p126
      %p128 = scmp.ne.s32.totalorder %s116, %s117
      %p129 = scmp.eq.s32.totalorder %s30, 2
      %p130 = por %p128, %p129
      %p132 = scmp.ne.s32.totalorder %s117, %s131
      %p133 = scmp.eq.s32.totalorder %s30, 0
      %p134 = por %p132, %p133
      %s135 = ssub.s32 %s31, %s43
      %p136 = scmp.eq.s32.totalorder %s135, 0
      %s138 = sadd.s32 %s137, 1
      %s139 = scalar_select %p136, %s137, %s138
      %p142 = pneg %p136
      %p143 = scmp.eq.s32.totalorder %s24, 2
      %p144 = por %p142, %p143
      %p145 = scmp.ne.s32.totalorder %s137, %s140
      %p146 = scmp.eq.s32.totalorder %s24, 0
      %p147 = por %p145, %p146
      %p148 = scmp.ne.s32.totalorder %s137, %s140
      %p149 = scmp.eq.s32.totalorder %s29, 2
      %p150 = por %p148, %p149
      %p151 = scmp.ne.s32.totalorder %s140, %s141
      %p152 = scmp.eq.s32.totalorder %s29, 0
      %p153 = por %p151, %p152
      %p154 = scmp.ne.s32.totalorder %s140, %s141
      %p155 = scmp.eq.s32.totalorder %s30, 2
      %p156 = por %p154, %p155
      %p158 = scmp.ne.s32.totalorder %s141, %s157
      %p159 = scmp.eq.s32.totalorder %s30, 0
      %p160 = por %p158, %p159
      %s161 = ssub.s32 %s31, %s43
      %p162 = scmp.eq.s32.totalorder %s161, 0
      %s164 = sadd.s32 %s163, 1
      %s165 = scalar_select %p162, %s163, %s164
      %p168 = pneg %p162
      %p169 = scmp.eq.s32.totalorder %s24, 2
      %p170 = por %p168, %p169
      %p171 = scmp.ne.s32.totalorder %s163, %s166
      %p172 = scmp.eq.s32.totalorder %s24, 0
      %p173 = por %p171, %p172
      %p174 = scmp.ne.s32.totalorder %s163, %s166
      %p175 = scmp.eq.s32.totalorder %s29, 2
      %p176 = por %p174, %p175
      %p177 = scmp.ne.s32.totalorder %s166, %s167
      %p178 = scmp.eq.s32.totalorder %s29, 0
      %p179 = por %p177, %p178
      %p180 = scmp.ne.s32.totalorder %s166, %s167
      %p181 = scmp.eq.s32.totalorder %s30, 2
      %p182 = por %p180, %p181
      %p184 = scmp.ne.s32.totalorder %s167, %s183
      %p185 = scmp.eq.s32.totalorder %s30, 0
      %p186 = por %p184, %p185
      %s187 = ssub.s32 %s32, %s39
      %s188 = ssub.s32 %s31, %s43
      %s189 = sor.u32 %s187, %s188
      %p190 = scmp.eq.s32.totalorder %s189, 0
      %s192 = sadd.s32 %s191, 1
      %s193 = scalar_select %p190, %s191, %s192
      %p196 = pneg %p190
      %p197 = scmp.eq.s32.totalorder %s24, 2
      %p198 = por %p196, %p197
      %p199 = scmp.ne.s32.totalorder %s191, %s194
      %p200 = scmp.eq.s32.totalorder %s24, 0
      %p201 = por %p199, %p200
      %p202 = scmp.ne.s32.totalorder %s191, %s194
      %p203 = scmp.eq.s32.totalorder %s29, 2
      %p204 = por %p202, %p203
      %p205 = scmp.ne.s32.totalorder %s194, %s195
      %p206 = scmp.eq.s32.totalorder %s29, 0
      %p207 = por %p205, %p206
      %p208 = scmp.ne.s32.totalorder %s194, %s195
      %p209 = scmp.eq.s32.totalorder %s30, 2
      %p210 = por %p208, %p209
      %p212 = scmp.ne.s32.totalorder %s195, %s211
      %p213 = scmp.eq.s32.totalorder %s30, 0
      %p214 = por %p212, %p213
      %s215 = ssub.s32 %s31, %s43
      %p216 = scmp.eq.s32.totalorder %s215, 0
      %s218 = sadd.s32 %s217, 1
      %s219 = scalar_select %p216, %s217, %s218
      %p222 = pneg %p216
      %p223 = scmp.eq.s32.totalorder %s24, 2
      %p224 = por %p222, %p223
      %p225 = scmp.ne.s32.totalorder %s217, %s220
      %p226 = scmp.eq.s32.totalorder %s24, 0
      %p227 = por %p225, %p226
      %p228 = scmp.ne.s32.totalorder %s217, %s220
      %p229 = scmp.eq.s32.totalorder %s29, 2
      %p230 = por %p228, %p229
      %p231 = scmp.ne.s32.totalorder %s220, %s221
      %p232 = scmp.eq.s32.totalorder %s29, 0
      %p233 = por %p231, %p232
      %p234 = scmp.ne.s32.totalorder %s220, %s221
      %p235 = scmp.eq.s32.totalorder %s30, 2
      %p236 = por %p234, %p235
      %p238 = scmp.ne.s32.totalorder %s221, %s237
      %p239 = scmp.eq.s32.totalorder %s30, 0
      %p240 = por %p238, %p239
      %s241 = ssub.s32 %s31, %s43
      %p242 = scmp.eq.s32.totalorder %s241, 0
      %s244 = sadd.s32 %s243, 1
      %s245 = scalar_select %p242, %s243, %s244
      %p248 = pneg %p242
      %p249 = scmp.eq.s32.totalorder %s24, 2
      %p250 = por %p248, %p249
      %p251 = scmp.ne.s32.totalorder %s243, %s246
      %p252 = scmp.eq.s32.totalorder %s24, 0
      %p253 = por %p251, %p252
      %p254 = scmp.ne.s32.totalorder %s243, %s246
      %p255 = scmp.eq.s32.totalorder %s29, 2
      %p256 = por %p254, %p255
      %p257 = scmp.ne.s32.totalorder %s246, %s247
      %p258 = scmp.eq.s32.totalorder %s29, 0
      %p259 = por %p257, %p258
      %p260 = scmp.ne.s32.totalorder %s246, %s247
      %p261 = scmp.eq.s32.totalorder %s30, 2
      %p262 = por %p260, %p261
      %p264 = scmp.ne.s32.totalorder %s247, %s263
      %p265 = scmp.eq.s32.totalorder %s30, 0
      %p266 = por %p264, %p265
      %p267 = scmp.le.s32.totalorder 1, %s24
      %p268 = scmp.lt.s32.totalorder %s24, 4
      %p269 = pnand %p267, %p268
      %p270 = pneg %p269
      // Predicated region
      $region9: #{tpu_custom_call.1} parent=5 // pred_check
        _
      $region10: #{tpu_custom_call.1} parent=5 // pred_check_branch
        %272 = sbr.rel (%p269) target = $region12
      $region11: #{tpu_custom_call.1} parent=5 // pred_region
        %s273 = ssub.s32 %s24, 1
        // Predicated region
        $region13: #{tpu_custom_call.1} parent=11 // pred_check
          %p274 = pneg %p85
        $region14: #{tpu_custom_call.1} parent=11 // pred_check_branch
          %276 = sbr.rel (%p274) target = $region16
        $region15: #{tpu_custom_call.1} parent=11 // pred_region
          %s278 = ssub.s32 2048, 2048
          %279 = vsyncadd [#allocation9], %s278
          %s280 = sshll.u32 [#allocation8], 4
          %s281 = int_to_ptr.vmem [resolvable:$true] %s280
          %286 = dma.hbm_to_vmem [thread:$0]  %s1, 2048, %s281, [#allocation9], 512, 512, 32
        $region16: #{tpu_custom_call.1} parent=11 // pred_fallthru
          _
        // Predicated region
        $region17: #{tpu_custom_call.1} parent=11 // pred_check
          %p287 = pneg %p106
        $region18: #{tpu_custom_call.1} parent=11 // pred_check_branch
          %289 = sbr.rel (%p287) target = $region20
        $region19: #{tpu_custom_call.1} parent=11 // pred_region
          %s291 = ssub.s32 8192, 8192
          %292 = vsyncadd [#allocation9], %s291
          %s293 = sshll.u32 [#allocation10], 4
          %s294 = int_to_ptr.vmem [resolvable:$true] %s293
          %299 = dma.hbm_to_vmem [thread:$0]  %s2, 8192, %s294, [#allocation9], 512, 512, 32
        $region20: #{tpu_custom_call.1} parent=11 // pred_fallthru
          _
        // Predicated region
        $region21: #{tpu_custom_call.1} parent=11 // pred_check
          %p300 = pneg %p127
        $region22: #{tpu_custom_call.1} parent=11 // pred_check_branch
          %302 = sbr.rel (%p300) target = $region24
        $region23: #{tpu_custom_call.1} parent=11 // pred_region
          %s304 = ssub.s32 64, 64
          %305 = vsyncadd [#allocation12], %s304
          %s307 = sshll.u32 [#allocation11], 4
          %s308 = int_to_ptr.vmem [resolvable:$true] %s307
          %310 = dma.hbm_to_vmem [thread:$0]  %s3, 64, %s308, [#allocation12]
        $region24: #{tpu_custom_call.1} parent=11 // pred_fallthru
          _
        // Predicated region
        $region25: #{tpu_custom_call.1} parent=11 // pred_check
          %p311 = pneg %p153
        $region26: #{tpu_custom_call.1} parent=11 // pred_check_branch
          %313 = sbr.rel (%p311) target = $region28
        $region27: #{tpu_custom_call.1} parent=11 // pred_region
          %s315 = ssub.s32 128, 128
          %316 = vsyncadd [#allocation12], %s315
          %s317 = smul.addr %s33, 128
          %s318 = scalar_lea.hbm %s4, %s317
          %s320 = sshll.u32 [#allocation13], 4
          %s321 = int_to_ptr.vmem [resolvable:$true] %s320
          %323 = dma.hbm_to_vmem [thread:$0]  %s318, 128, %s321, [#allocation12]
        $region28: #{tpu_custom_call.1} parent=11 // pred_fallthru
          _
        // Predicated region
        $region29: #{tpu_custom_call.1} parent=11 // pred_check
          %p324 = pneg %p179
        $region30: #{tpu_custom_call.1} parent=11 // pred_check_branch
          %326 = sbr.rel (%p324) target = $region32
        $region31: #{tpu_custom_call.1} parent=11 // pred_region
          %p327 = scmp.lt.s32.totalorder %s33, 0
          %s328 = scalar_select %p327, %s33, 0
          %s329 = smul.addr %s328, 8
          %s330 = scalar_lea.vmem %s5, %s329
        $region32: #{tpu_custom_call.1} parent=11 // pred_fallthru
          _
      $region12: #{tpu_custom_call.1} parent=5 // pred_fallthru
        _
      %p331 = scmp.lt.s32.totalorder %s24, 3
      // Predicated region
      $region33: #{tpu_custom_call.1} parent=5 // pred_check
        %p332 = pneg %p331
      $region34: #{tpu_custom_call.1} parent=5 // pred_check_branch
        %334 = sbr.rel (%p332) target = $region36
      $region35: #{tpu_custom_call.1} parent=5 // pred_region
        // Predicated region
        $region37: #{tpu_custom_call.1} parent=35 // pred_check
          %p335 = pneg %p58
        $region38: #{tpu_custom_call.1} parent=35 // pred_check_branch
          %337 = sbr.rel (%p335) target = $region40
        $region39: #{tpu_custom_call.1} parent=35 // pred_region
          %s338 = sand.u32 %s48, 1
          %s339 = scalar_lea.sflag [#allocation6], %s338
          %s340 = sand.u32 %s48, 1
          %s341 = smul.addr %s340, 32
          %s342 = scalar_lea.vmem [#allocation5], %s341
          %s343 = smul.u32 4, %s32
          %s345 = ssub.s32 512, 512
          %346 = vsyncadd %s339, %s345
          %s347 = sadd.s32 %s31, %s343
          %s348 = smul.addr %s347, 128
          %s349 = scalar_lea.hbm %s0, %s348
          %s350 = sshll.u32 %s342, 4
          %s351 = int_to_ptr.vmem [resolvable:$true] %s350
          %356 = dma.hbm_to_vmem [thread:$0]  %s349, 512, %s351, %s339, 128, 128, 8
        $region40: #{tpu_custom_call.1} parent=35 // pred_fallthru
          _
      $region36: #{tpu_custom_call.1} parent=5 // pred_fallthru
        _
      %p357 = scmp.le.s32.totalorder 1, %s24
      %p358 = scmp.lt.s32.totalorder %s24, 4
      %p359 = pnand %p357, %p358
      %p360 = pneg %p359
      // Predicated region
      $region41: #{tpu_custom_call.1} parent=5 // pred_check
        _
      $region42: #{tpu_custom_call.1} parent=5 // pred_check_branch
        %362 = sbr.rel (%p359) target = $region44
      $region43: #{tpu_custom_call.1} parent=5 // pred_region
        %s363 = ssub.s32 %s24, 1
        %s364 = sand.u32 %s51, 1
        %s365 = scalar_lea.sflag [#allocation6], %s364
        %s366 = sand.u32 %s51, 1
        %s367 = smul.addr %s366, 32
        %s368 = scalar_lea.vmem [#allocation5], %s367
        // Predicated region
        $region45: #{tpu_custom_call.1} parent=43 // pred_check
          %p369 = pneg %p64
        $region46: #{tpu_custom_call.1} parent=43 // pred_check_branch
          %371 = sbr.rel (%p369) target = $region48
        $region47: #{tpu_custom_call.1} parent=43 // pred_region
          %372 = dma.done %s365, 512
        $region48: #{tpu_custom_call.1} parent=43 // pred_fallthru
          _
        // Predicated region
        $region49: #{tpu_custom_call.1} parent=43 // pred_check
          %p373 = pneg %p85
        $region50: #{tpu_custom_call.1} parent=43 // pred_check_branch
          %375 = sbr.rel (%p373) target = $region52
        $region51: #{tpu_custom_call.1} parent=43 // pred_region
          %376 = dma.done [#allocation9], 2048
        $region52: #{tpu_custom_call.1} parent=43 // pred_fallthru
          _
        // Predicated region
        $region53: #{tpu_custom_call.1} parent=43 // pred_check
          %p377 = pneg %p106
        $region54: #{tpu_custom_call.1} parent=43 // pred_check_branch
          %379 = sbr.rel (%p377) target = $region56
        $region55: #{tpu_custom_call.1} parent=43 // pred_region
          %380 = dma.done [#allocation9], 8192
        $region56: #{tpu_custom_call.1} parent=43 // pred_fallthru
          _
        // Predicated region
        $region57: #{tpu_custom_call.1} parent=43 // pred_check
          %p381 = pneg %p127
        $region58: #{tpu_custom_call.1} parent=43 // pred_check_branch
          %383 = sbr.rel (%p381) target = $region60
        $region59: #{tpu_custom_call.1} parent=43 // pred_region
          %384 = dma.done [#allocation12], 64
        $region60: #{tpu_custom_call.1} parent=43 // pred_fallthru
          _
        // Predicated region
        $region61: #{tpu_custom_call.1} parent=43 // pred_check
          %p385 = pneg %p153
        $region62: #{tpu_custom_call.1} parent=43 // pred_check_branch
          %387 = sbr.rel (%p385) target = $region64
        $region63: #{tpu_custom_call.1} parent=43 // pred_region
          %388 = dma.done [#allocation12], 128
        $region64: #{tpu_custom_call.1} parent=43 // pred_fallthru
          _
        %s389 = sand.u32 %s51, 1
        %s390 = scalar_lea.sflag [#allocation6], %s389
        %s391 = sand.u32 %s51, 1
        %s392 = smul.addr %s391, 32
        %s393 = scalar_lea.vmem [#allocation5], %s392
        %p394 = pneg %p64
        %p395 = pneg %p61
        %p396 = pneg %p85
        %p397 = pneg %p82
        %p398 = pneg %p106
        %p399 = pneg %p103
        %p400 = pneg %p127
        %p401 = pneg %p124
        %p402 = pneg %p153
        %p403 = pneg %p150
        %p404 = scmp.lt.s32.totalorder %s33, 0
        %s405 = scalar_select %p404, %s33, 0
        %s406 = smul.addr %s405, 8
        %s407 = scalar_lea.vmem %s5, %s406
        %p408 = pneg %p179
        %p409 = pneg %p176
        %p410 = pneg %p207
        %p411 = pneg %p204
        %s412 = sand.u32 %s194, 1
        %s413 = scalar_lea.sflag [#allocation7], %s412
        %s414 = sand.u32 %s194, 1
        %s415 = smul.addr %s414, 32
        %s416 = scalar_lea.vmem [#allocation14], %s415
        %p417 = pneg %p233
        %p418 = pneg %p230
        %p419 = pneg %p259
        %p420 = pneg %p256
        %s421 = smul.u32 4, %s34
        %p422 = scmp.lt.s32.totalorder %s33, 0
        %s423 = scalar_select %p422, %s33, 0
        %s424 = smul.addr %s423, 8
        %s425 = scalar_lea.vmem %s5, %s424
        %s426 = smul.u32 4, %s34
        %p427 = scmp.eq.s32.totalorder %s34, 0
        // Predicated region
        $region65: #{tpu_custom_call.1} parent=43 // pred_check
          %p428 = pneg %p427
        $region66: #{tpu_custom_call.1} parent=43 // pred_check_branch
          %430 = sbr.rel (%p428) target = $region68
        $region67: #{tpu_custom_call.1} parent=43 // pred_region
          %v431 = vld [vmem:[#allocation13] sm:$0xff]
          %432 = vst [vmem:[#allocation2] sm:$0xff] %v431
          %v433 = vld [vmem:[%s425] sm:$0xff]
          %434 = vst [vmem:[#allocation3] sm:$0xff] %v433
        $region68: #{tpu_custom_call.1} parent=43 // pred_fallthru
          _
        %v435 = vld [vmem:[%s368] sm:$0xff]
        %v436 = vld [vmem:[%s368 + $0x8] sm:$0xff]
        %v437 = vld [vmem:[%s368 + $0x10] sm:$0xff]
        %v438 = vld [vmem:[%s368 + $0x18] sm:$0xff]
        %v439 = vld [vmem:[#allocation8] sm:$0xff]
        %v440 = vld [vmem:[#allocation8 + $0x8] sm:$0xff]
        %v441 = vld [vmem:[#allocation8 + $0x10] sm:$0xff]
        %v442 = vld [vmem:[#allocation8 + $0x18] sm:$0xff]
        %v443 = vld [vmem:[#allocation8 + $0x20] sm:$0xff]
        %v444 = vld [vmem:[#allocation8 + $0x28] sm:$0xff]
        %v445 = vld [vmem:[#allocation8 + $0x30] sm:$0xff]
        %v446 = vld [vmem:[#allocation8 + $0x38] sm:$0xff]
        %v447 = vld [vmem:[#allocation8 + $0x40] sm:$0xff]
        %v448 = vld [vmem:[#allocation8 + $0x48] sm:$0xff]
        %v449 = vld [vmem:[#allocation8 + $0x50] sm:$0xff]
        %v450 = vld [vmem:[#allocation8 + $0x58] sm:$0xff]
        %v451 = vld [vmem:[#allocation8 + $0x60] sm:$0xff]
        %v452 = vld [vmem:[#allocation8 + $0x68] sm:$0xff]
        %v453 = vld [vmem:[#allocation8 + $0x70] sm:$0xff]
        %v454 = vld [vmem:[#allocation8 + $0x78] sm:$0xff]
        %v455 = vld [vmem:[#allocation11] sm:$0xf]
        %v457 = vlaneseq
        %v458 = vshrl.u32 %v457, 7
        %v459 = vsub.s32 0, %v458
        %v460 = vrot.slane %v455, %v459
        %v461 = vlaneseq
        %v462 = vshrl.u32 %v461, 7
        %v463 = vsub.s32 1, %v462
        %v464 = vrot.slane %v455, %v463
        %v465 = vlaneseq
        %v466 = vshrl.u32 %v465, 7
        %v467 = vsub.s32 2, %v466
        %v468 = vrot.slane %v455, %v467
        %v469 = vlaneseq
        %v470 = vshrl.u32 %v469, 7
        %v471 = vsub.s32 3, %v470
        %v472 = vrot.slane %v455, %v471
        %vm477 = vcmask 261120
        %v479 = vsel %vm477, %v435, 0
        %v482 = vsel %vm477, %v436, 0
        %v485 = vsel %vm477, %v437, 0
        %v488 = vsel %vm477, %v438, 0
        %490 = vmatprep.subr.mxu0 0.0
        %491 = vmatpush1.msra.mxu0 0.0
        %492 = vmatprep.subr.mxu0 0.0
        %493 = vmatpush1.msra.mxu0 0.0
        %494 = vmatprep.subr.mxu0 0.0
        %495 = vmatpush1.msra.mxu0 0.0
        %496 = vmatprep.subr.mxu0 0.0
        %497 = vmatpush1.msra.mxu0 0.0
        %498 = vmatprep.subr.mxu0 0.0
        %499 = vmatpush1.msra.mxu0 0.0
        %500 = vmatprep.subr.mxu0 0.0
        %501 = vmatpush1.msra.mxu0 0.0
        %502 = vmatprep.subr.mxu0 0.0
        %503 = vmatpush1.msra.mxu0 0.0
        %504 = vmatprep.subr.mxu0 0.0
        %505 = vmatpush1.msra.mxu0 0.0
        %506 = vmatprep.subr.mxu0 0.0
        %507 = vmatpush1.msra.mxu0 0.0
        %508 = vmatprep.subr.mxu0 0.0
        %509 = vmatpush1.msra.mxu0 0.0
        %510 = vmatprep.subr.mxu0 0.0
        %511 = vmatpush1.msra.mxu0 0.0
        %512 = vmatprep.subr.mxu0 0.0
        %513 = vmatpush1.msra.mxu0 0.0
        %514 = vmatprep.subr.mxu0 %v452
        %515 = vmatpush1.msra.mxu0 %v451
        %516 = vmatprep.subr.mxu0 %v448
        %517 = vmatpush1.msra.mxu0 %v447
        %518 = vmatprep.subr.mxu0 %v444
        %519 = vmatpush1.msra.mxu0 %v443
        %520 = vmatprep.subr.mxu0 %v440
        %521 = vmatpush1.msra.mxu0 %v439
        %522 = vmatprep.subr.mxu0 0.0
        %523 = vmatpush2.msra.mxu0 0.0
        %524 = vmatprep.subr.mxu0 0.0
        %525 = vmatpush2.msra.mxu0 0.0
        %526 = vmatprep.subr.mxu0 0.0
        %527 = vmatpush2.msra.mxu0 0.0
        %528 = vmatprep.subr.mxu0 0.0
        %529 = vmatpush2.msra.mxu0 0.0
        %530 = vmatprep.subr.mxu0 0.0
        %531 = vmatpush2.msra.mxu0 0.0
        %532 = vmatprep.subr.mxu0 0.0
        %533 = vmatpush2.msra.mxu0 0.0
        %534 = vmatprep.subr.mxu0 0.0
        %535 = vmatpush2.msra.mxu0 0.0
        %536 = vmatprep.subr.mxu0 0.0
        %537 = vmatpush2.msra.mxu0 0.0
        %538 = vmatprep.subr.mxu0 0.0
        %539 = vmatpush2.msra.mxu0 0.0
        %540 = vmatprep.subr.mxu0 0.0
        %541 = vmatpush2.msra.mxu0 0.0
        %542 = vmatprep.subr.mxu0 0.0
        %543 = vmatpush2.msra.mxu0 0.0
        %544 = vmatprep.subr.mxu0 0.0
        %545 = vmatpush2.msra.mxu0 0.0
        %546 = vmatprep.subr.mxu0 0.0
        %547 = vmatpush2.msra.mxu0 0.0
        %548 = vmatprep.subr.mxu0 0.0
        %549 = vmatpush2.msra.mxu0 0.0
        %550 = vmatprep.subr.mxu0 0.0
        %551 = vmatpush2.msra.mxu0 0.0
        %552 = vmatprep.subr.mxu0 0.0
        %553 = vmatpush2.msra.mxu0 0.0
        %554 = vmatprep.mubr.f32.mxu0 0.0
        %555 = vmatmul.mubr.f32.gmra.mxu0 %v479
        %v556 = vpop.f32.mrf.mxu0
        %v557 = vadd.f32 %v460, %v556
        %v558 = vpop.f32.mrf.mxu0
        %v559 = vadd.f32 %v464, %v558
        %560 = vmatprep.mubr.f32.mxu0 0.0
        %561 = vmatmul.mubr.f32.gmra.mxu0 %v482
        %v562 = vpop.f32.mrf.mxu0
        %v563 = vadd.f32 %v460, %v562
        %v564 = vpop.f32.mrf.mxu0
        %v565 = vadd.f32 %v464, %v564
        %566 = vmatprep.mubr.f32.mxu0 0.0
        %567 = vmatmul.mubr.f32.gmra.mxu0 %v485
        %v568 = vpop.f32.mrf.mxu0
        %v569 = vadd.f32 %v460, %v568
        %v570 = vpop.f32.mrf.mxu0
        %v571 = vadd.f32 %v464, %v570
        %572 = vmatprep.mubr.f32.mxu0 0.0
        %573 = vmatmul.mubr.f32.gmra.mxu0 %v488
        %v574 = vpop.f32.mrf.mxu0
        %v575 = vadd.f32 %v460, %v574
        %v576 = vpop.f32.mrf.mxu0
        %v577 = vadd.f32 %v464, %v576
        %578 = vdwg.mxu0
        %579 = vmatprep.subr.mxu0 0.0
        %580 = vmatpush1.msra.mxu0 0.0
        %581 = vmatprep.subr.mxu0 0.0
        %582 = vmatpush1.msra.mxu0 0.0
        %583 = vmatprep.subr.mxu0 0.0
        %584 = vmatpush1.msra.mxu0 0.0
        %585 = vmatprep.subr.mxu0 0.0
        %586 = vmatpush1.msra.mxu0 0.0
        %587 = vmatprep.subr.mxu0 0.0
        %588 = vmatpush1.msra.mxu0 0.0
        %589 = vmatprep.subr.mxu0 0.0
        %590 = vmatpush1.msra.mxu0 0.0
        %591 = vmatprep.subr.mxu0 0.0
        %592 = vmatpush1.msra.mxu0 0.0
        %593 = vmatprep.subr.mxu0 0.0
        %594 = vmatpush1.msra.mxu0 0.0
        %595 = vmatprep.subr.mxu0 0.0
        %596 = vmatpush1.msra.mxu0 0.0
        %597 = vmatprep.subr.mxu0 0.0
        %598 = vmatpush1.msra.mxu0 0.0
        %599 = vmatprep.subr.mxu0 0.0
        %600 = vmatpush1.msra.mxu0 0.0
        %601 = vmatprep.subr.mxu0 0.0
        %602 = vmatpush1.msra.mxu0 0.0
        %603 = vmatprep.subr.mxu0 %v454
        %604 = vmatpush1.msra.mxu0 %v453
        %605 = vmatprep.subr.mxu0 %v450
        %606 = vmatpush1.msra.mxu0 %v449
        %607 = vmatprep.subr.mxu0 %v446
        %608 = vmatpush1.msra.mxu0 %v445
        %609 = vmatprep.subr.mxu0 %v442
        %610 = vmatpush1.msra.mxu0 %v441
        %611 = vmatprep.subr.mxu0 0.0
        %612 = vmatpush2.msra.mxu0 0.0
        %613 = vmatprep.subr.mxu0 0.0
        %614 = vmatpush2.msra.mxu0 0.0
        %615 = vmatprep.subr.mxu0 0.0
        %616 = vmatpush2.msra.mxu0 0.0
        %617 = vmatprep.subr.mxu0 0.0
        %618 = vmatpush2.msra.mxu0 0.0
        %619 = vmatprep.subr.mxu0 0.0
        %620 = vmatpush2.msra.mxu0 0.0
        %621 = vmatprep.subr.mxu0 0.0
        %622 = vmatpush2.msra.mxu0 0.0
        %623 = vmatprep.subr.mxu0 0.0
        %624 = vmatpush2.msra.mxu0 0.0
        %625 = vmatprep.subr.mxu0 0.0
        %626 = vmatpush2.msra.mxu0 0.0
        %627 = vmatprep.subr.mxu0 0.0
        %628 = vmatpush2.msra.mxu0 0.0
        %629 = vmatprep.subr.mxu0 0.0
        %630 = vmatpush2.msra.mxu0 0.0
        %631 = vmatprep.subr.mxu0 0.0
        %632 = vmatpush2.msra.mxu0 0.0
        %633 = vmatprep.subr.mxu0 0.0
        %634 = vmatpush2.msra.mxu0 0.0
        %635 = vmatprep.subr.mxu0 0.0
        %636 = vmatpush2.msra.mxu0 0.0
        %637 = vmatprep.subr.mxu0 0.0
        %638 = vmatpush2.msra.mxu0 0.0
        %639 = vmatprep.subr.mxu0 0.0
        %640 = vmatpush2.msra.mxu0 0.0
        %641 = vmatprep.subr.mxu0 0.0
        %642 = vmatpush2.msra.mxu0 0.0
        %643 = vmatprep.mubr.f32.mxu0 0.0
        %644 = vmatmul.mubr.f32.gmra.mxu0 %v479
        %v645 = vpop.f32.mrf.mxu0
        %v646 = vadd.f32 %v468, %v645
        %v647 = vpop.f32.mrf.mxu0
        %v648 = vadd.f32 %v472, %v647
        %649 = vmatprep.mubr.f32.mxu0 0.0
        %650 = vmatmul.mubr.f32.gmra.mxu0 %v482
        %v651 = vpop.f32.mrf.mxu0
        %v652 = vadd.f32 %v468, %v651
        %v653 = vpop.f32.mrf.mxu0
        %v654 = vadd.f32 %v472, %v653
        %655 = vmatprep.mubr.f32.mxu0 0.0
        %656 = vmatmul.mubr.f32.gmra.mxu0 %v485
        %v657 = vpop.f32.mrf.mxu0
        %v658 = vadd.f32 %v468, %v657
        %v659 = vpop.f32.mrf.mxu0
        %v660 = vadd.f32 %v472, %v659
        %661 = vmatprep.mubr.f32.mxu0 0.0
        %662 = vmatmul.mubr.f32.gmra.mxu0 %v488
        %v663 = vpop.f32.mrf.mxu0
        %v664 = vadd.f32 %v468, %v663
        %v665 = vpop.f32.mrf.mxu0
        %v666 = vadd.f32 %v472, %v665
        %667 = vdwg.mxu0
        %668 = vst [vmem:[#allocation4] sm:$0xff] %v557
        %669 = vst [vmem:[#allocation4 + $0x8] sm:$0xff] %v559
        %670 = vst [vmem:[#allocation4 + $0x10] sm:$0xff] %v646
        %671 = vst [vmem:[#allocation4 + $0x18] sm:$0xff] %v648
        %672 = vst [vmem:[#allocation4 + $0x20] sm:$0xff] %v563
        %673 = vst [vmem:[#allocation4 + $0x28] sm:$0xff] %v565
        %674 = vst [vmem:[#allocation4 + $0x30] sm:$0xff] %v652
        %675 = vst [vmem:[#allocation4 + $0x38] sm:$0xff] %v654
        %676 = vst [vmem:[#allocation4 + $0x40] sm:$0xff] %v569
        %677 = vst [vmem:[#allocation4 + $0x48] sm:$0xff] %v571
        %678 = vst [vmem:[#allocation4 + $0x50] sm:$0xff] %v658
        %679 = vst [vmem:[#allocation4 + $0x58] sm:$0xff] %v660
        %680 = vst [vmem:[#allocation4 + $0x60] sm:$0xff] %v575
        %681 = vst [vmem:[#allocation4 + $0x68] sm:$0xff] %v577
        %682 = vst [vmem:[#allocation4 + $0x70] sm:$0xff] %v664
        %683 = vst [vmem:[#allocation4 + $0x78] sm:$0xff] %v666
        %v684 = vld [vmem:[#allocation10] sm:$0xff]
        %v685 = vld [vmem:[#allocation10 + $0x8] sm:$0xff]
        %v686 = vld [vmem:[#allocation10 + $0x10] sm:$0xff]
        %v687 = vld [vmem:[#allocation10 + $0x18] sm:$0xff]
        %v688 = vld [vmem:[#allocation10 + $0x20] sm:$0xff]
        %v689 = vld [vmem:[#allocation10 + $0x28] sm:$0xff]
        %v690 = vld [vmem:[#allocation10 + $0x30] sm:$0xff]
        %v691 = vld [vmem:[#allocation10 + $0x38] sm:$0xff]
        %v692 = vld [vmem:[#allocation10 + $0x40] sm:$0xff]
        %v693 = vld [vmem:[#allocation10 + $0x48] sm:$0xff]
        %v694 = vld [vmem:[#allocation10 + $0x50] sm:$0xff]
        %v695 = vld [vmem:[#allocation10 + $0x58] sm:$0xff]
        %v696 = vld [vmem:[#allocation10 + $0x60] sm:$0xff]
        %v697 = vld [vmem:[#allocation10 + $0x68] sm:$0xff]
        %v698 = vld [vmem:[#allocation10 + $0x70] sm:$0xff]
        %v699 = vld [vmem:[#allocation10 + $0x78] sm:$0xff]
        %v700 = vld [vmem:[#allocation10 + $0x80] sm:$0xff]
        %v701 = vld [vmem:[#allocation10 + $0x88] sm:$0xff]
        %v702 = vld [vmem:[#allocation10 + $0x90] sm:$0xff]
        %v703 = vld [vmem:[#allocation10 + $0x98] sm:$0xff]
        %v704 = vld [vmem:[#allocation10 + $0xa0] sm:$0xff]
        %v705 = vld [vmem:[#allocation10 + $0xa8] sm:$0xff]
        %v706 = vld [vmem:[#allocation10 + $0xb0] sm:$0xff]
        %v707 = vld [vmem:[#allocation10 + $0xb8] sm:$0xff]
        %v708 = vld [vmem:[#allocation10 + $0xc0] sm:$0xff]
        %v709 = vld [vmem:[#allocation10 + $0xc8] sm:$0xff]
        %v710 = vld [vmem:[#allocation10 + $0xd0] sm:$0xff]
        %v711 = vld [vmem:[#allocation10 + $0xd8] sm:$0xff]
        %v712 = vld [vmem:[#allocation10 + $0xe0] sm:$0xff]
        %v713 = vld [vmem:[#allocation10 + $0xe8] sm:$0xff]
        %v714 = vld [vmem:[#allocation10 + $0xf0] sm:$0xff]
        %v715 = vld [vmem:[#allocation10 + $0xf8] sm:$0xff]
        %v716 = vld [vmem:[#allocation10 + $0x100] sm:$0xff]
        %v717 = vld [vmem:[#allocation10 + $0x108] sm:$0xff]
        %v718 = vld [vmem:[#allocation10 + $0x110] sm:$0xff]
        %v719 = vld [vmem:[#allocation10 + $0x118] sm:$0xff]
        %v720 = vld [vmem:[#allocation10 + $0x120] sm:$0xff]
        %v721 = vld [vmem:[#allocation10 + $0x128] sm:$0xff]
        %v722 = vld [vmem:[#allocation10 + $0x130] sm:$0xff]
        %v723 = vld [vmem:[#allocation10 + $0x138] sm:$0xff]
        %v724 = vld [vmem:[#allocation10 + $0x140] sm:$0xff]
        %v725 = vld [vmem:[#allocation10 + $0x148] sm:$0xff]
        %v726 = vld [vmem:[#allocation10 + $0x150] sm:$0xff]
        %v727 = vld [vmem:[#allocation10 + $0x158] sm:$0xff]
        %v728 = vld [vmem:[#allocation10 + $0x160] sm:$0xff]
        %v729 = vld [vmem:[#allocation10 + $0x168] sm:$0xff]
        %v730 = vld [vmem:[#allocation10 + $0x170] sm:$0xff]
        %v731 = vld [vmem:[#allocation10 + $0x178] sm:$0xff]
        %v732 = vld [vmem:[#allocation10 + $0x180] sm:$0xff]
        %v733 = vld [vmem:[#allocation10 + $0x188] sm:$0xff]
        %v734 = vld [vmem:[#allocation10 + $0x190] sm:$0xff]
        %v735 = vld [vmem:[#allocation10 + $0x198] sm:$0xff]
        %v736 = vld [vmem:[#allocation10 + $0x1a0] sm:$0xff]
        %v737 = vld [vmem:[#allocation10 + $0x1a8] sm:$0xff]
        %v738 = vld [vmem:[#allocation10 + $0x1b0] sm:$0xff]
        %v739 = vld [vmem:[#allocation10 + $0x1b8] sm:$0xff]
        %v740 = vld [vmem:[#allocation10 + $0x1c0] sm:$0xff]
        %v741 = vld [vmem:[#allocation10 + $0x1c8] sm:$0xff]
        %v742 = vld [vmem:[#allocation10 + $0x1d0] sm:$0xff]
        %v743 = vld [vmem:[#allocation10 + $0x1d8] sm:$0xff]
        %v744 = vld [vmem:[#allocation10 + $0x1e0] sm:$0xff]
        %v745 = vld [vmem:[#allocation10 + $0x1e8] sm:$0xff]
        %v746 = vld [vmem:[#allocation10 + $0x1f0] sm:$0xff]
        %v747 = vld [vmem:[#allocation10 + $0x1f8] sm:$0xff]
        %p748 = scmp.ne.s32.totalorder %s34, 2
        // Predicated region
        $region69: #{tpu_custom_call.1} parent=43 // pred_check
          %p749 = pneg %p748
        $region70: #{tpu_custom_call.1} parent=43 // pred_check_branch
          %751 = sbr.rel (%p749) target = $region72
        $region71: #{tpu_custom_call.1} parent=43 // pred_region
          %v752 = vld [vmem:[#allocation2] sm:$0xff]
          %v753 = vld [vmem:[#allocation3] sm:$0xff]
          %s754 = smul.u32 0, 4
          %s755 = smul.addr %s754, 8
          %s756 = scalar_lea.vmem [#allocation4], %s755
          %v757 = vld [vmem:[%s756] sm:$0xff]
          %v758 = vld [vmem:[%s756 + $0x8] sm:$0xff]
          %v759 = vld [vmem:[%s756 + $0x10] sm:$0xff]
          %v760 = vld [vmem:[%s756 + $0x18] sm:$0xff]
          %761 = vmatprep.subr.mxu0 %v745
          %762 = vmatpush1.msra.mxu0 %v744
          %763 = vmatprep.subr.mxu0 %v741
          %764 = vmatpush1.msra.mxu0 %v740
          %765 = vmatprep.subr.mxu0 %v737
          %766 = vmatpush1.msra.mxu0 %v736
          %767 = vmatprep.subr.mxu0 %v733
          %768 = vmatpush1.msra.mxu0 %v732
          %769 = vmatprep.subr.mxu0 %v729
          %770 = vmatpush1.msra.mxu0 %v728
          %771 = vmatprep.subr.mxu0 %v725
          %772 = vmatpush1.msra.mxu0 %v724
          %773 = vmatprep.subr.mxu0 %v721
          %774 = vmatpush1.msra.mxu0 %v720
          %775 = vmatprep.subr.mxu0 %v717
          %776 = vmatpush1.msra.mxu0 %v716
          %777 = vmatprep.subr.mxu0 %v713
          %778 = vmatpush1.msra.mxu0 %v712
          %779 = vmatprep.subr.mxu0 %v709
          %780 = vmatpush1.msra.mxu0 %v708
          %781 = vmatprep.subr.mxu0 %v705
          %782 = vmatpush1.msra.mxu0 %v704
          %783 = vmatprep.subr.mxu0 %v701
          %784 = vmatpush1.msra.mxu0 %v700
          %785 = vmatprep.subr.mxu0 %v697
          %786 = vmatpush1.msra.mxu0 %v696
          %787 = vmatprep.subr.mxu0 %v693
          %788 = vmatpush1.msra.mxu0 %v692
          %789 = vmatprep.subr.mxu0 %v689
          %790 = vmatpush1.msra.mxu0 %v688
          %791 = vmatprep.subr.mxu0 %v685
          %792 = vmatpush1.msra.mxu0 %v684
          %793 = vmatprep.subr.mxu0 0.0
          %794 = vmatpush2.msra.mxu0 0.0
          %795 = vmatprep.subr.mxu0 0.0
          %796 = vmatpush2.msra.mxu0 0.0
          %797 = vmatprep.subr.mxu0 0.0
          %798 = vmatpush2.msra.mxu0 0.0
          %799 = vmatprep.subr.mxu0 0.0
          %800 = vmatpush2.msra.mxu0 0.0
          %801 = vmatprep.subr.mxu0 0.0
          %802 = vmatpush2.msra.mxu0 0.0
          %803 = vmatprep.subr.mxu0 0.0
          %804 = vmatpush2.msra.mxu0 0.0
          %805 = vmatprep.subr.mxu0 0.0
          %806 = vmatpush2.msra.mxu0 0.0
          %807 = vmatprep.subr.mxu0 0.0
          %808 = vmatpush2.msra.mxu0 0.0
          %809 = vmatprep.subr.mxu0 0.0
          %810 = vmatpush2.msra.mxu0 0.0
          %811 = vmatprep.subr.mxu0 0.0
          %812 = vmatpush2.msra.mxu0 0.0
          %813 = vmatprep.subr.mxu0 0.0
          %814 = vmatpush2.msra.mxu0 0.0
          %815 = vmatprep.subr.mxu0 0.0
          %816 = vmatpush2.msra.mxu0 0.0
          %817 = vmatprep.subr.mxu0 0.0
          %818 = vmatpush2.msra.mxu0 0.0
          %819 = vmatprep.subr.mxu0 0.0
          %820 = vmatpush2.msra.mxu0 0.0
          %821 = vmatprep.subr.mxu0 0.0
          %822 = vmatpush2.msra.mxu0 0.0
          %823 = vmatprep.subr.mxu0 0.0
          %824 = vmatpush2.msra.mxu0 0.0
          %825 = vmatprep.mubr.f32.mxu0 0.0
          %826 = vmatmul.mubr.f32.gmra.mxu0 %v752
          %v827 = vpop.f32.mrf.mxu0
          %v828 = vadd.f32 0.0, %v827
          %v829 = vpop.f32.mrf.mxu0
          %v830 = vadd.f32 0.0, %v829
          %831 = vdwg.mxu0
          %832 = vmatprep.subr.mxu0 %v747
          %833 = vmatpush1.msra.mxu0 %v746
          %834 = vmatprep.subr.mxu0 %v743
          %835 = vmatpush1.msra.mxu0 %v742
          %836 = vmatprep.subr.mxu0 %v739
          %837 = vmatpush1.msra.mxu0 %v738
          %838 = vmatprep.subr.mxu0 %v735
          %839 = vmatpush1.msra.mxu0 %v734
          %840 = vmatprep.subr.mxu0 %v731
          %841 = vmatpush1.msra.mxu0 %v730
          %842 = vmatprep.subr.mxu0 %v727
          %843 = vmatpush1.msra.mxu0 %v726
          %844 = vmatprep.subr.mxu0 %v723
          %845 = vmatpush1.msra.mxu0 %v722
          %846 = vmatprep.subr.mxu0 %v719
          %847 = vmatpush1.msra.mxu0 %v718
          %848 = vmatprep.subr.mxu0 %v715
          %849 = vmatpush1.msra.mxu0 %v714
          %850 = vmatprep.subr.mxu0 %v711
          %851 = vmatpush1.msra.mxu0 %v710
          %852 = vmatprep.subr.mxu0 %v707
          %853 = vmatpush1.msra.mxu0 %v706
          %854 = vmatprep.subr.mxu0 %v703
          %855 = vmatpush1.msra.mxu0 %v702
          %856 = vmatprep.subr.mxu0 %v699
          %857 = vmatpush1.msra.mxu0 %v698
          %858 = vmatprep.subr.mxu0 %v695
          %859 = vmatpush1.msra.mxu0 %v694
          %860 = vmatprep.subr.mxu0 %v691
          %861 = vmatpush1.msra.mxu0 %v690
          %862 = vmatprep.subr.mxu0 %v687
          %863 = vmatpush1.msra.mxu0 %v686
          %864 = vmatprep.subr.mxu0 0.0
          %865 = vmatpush2.msra.mxu0 0.0
          %866 = vmatprep.subr.mxu0 0.0
          %867 = vmatpush2.msra.mxu0 0.0
          %868 = vmatprep.subr.mxu0 0.0
          %869 = vmatpush2.msra.mxu0 0.0
          %870 = vmatprep.subr.mxu0 0.0
          %871 = vmatpush2.msra.mxu0 0.0
          %872 = vmatprep.subr.mxu0 0.0
          %873 = vmatpush2.msra.mxu0 0.0
          %874 = vmatprep.subr.mxu0 0.0
          %875 = vmatpush2.msra.mxu0 0.0
          %876 = vmatprep.subr.mxu0 0.0
          %877 = vmatpush2.msra.mxu0 0.0
          %878 = vmatprep.subr.mxu0 0.0
          %879 = vmatpush2.msra.mxu0 0.0
          %880 = vmatprep.subr.mxu0 0.0
          %881 = vmatpush2.msra.mxu0 0.0
          %882 = vmatprep.subr.mxu0 0.0
          %883 = vmatpush2.msra.mxu0 0.0
          %884 = vmatprep.subr.mxu0 0.0
          %885 = vmatpush2.msra.mxu0 0.0
          %886 = vmatprep.subr.mxu0 0.0
          %887 = vmatpush2.msra.mxu0 0.0
          %888 = vmatprep.subr.mxu0 0.0
          %889 = vmatpush2.msra.mxu0 0.0
          %890 = vmatprep.subr.mxu0 0.0
          %891 = vmatpush2.msra.mxu0 0.0
          %892 = vmatprep.subr.mxu0 0.0
          %893 = vmatpush2.msra.mxu0 0.0
          %894 = vmatprep.subr.mxu0 0.0
          %895 = vmatpush2.msra.mxu0 0.0
          %896 = vmatprep.mubr.f32.mxu0 0.0
          %897 = vmatmul.mubr.f32.gmra.mxu0 %v752
          %v898 = vpop.f32.mrf.mxu0
          %v899 = vadd.f32 0.0, %v898
          %v900 = vpop.f32.mrf.mxu0
          %v901 = vadd.f32 0.0, %v900
          %902 = vdwg.mxu0
          %v903 = vadd.f32 %v757, %v828
          %v904 = vadd.f32 %v758, %v830
          %v905 = vadd.f32 %v759, %v899
          %v906 = vadd.f32 %v760, %v901
          %v907 = vxor.u32 %v903, 2147483648
          %v908 = vmul.f32 %v907, 1.442695
          %v909 = vpow.pop %v908
          %v910 = vadd.f32 %v909, 1.0
          %v911 = vrcp.pop %v910
          %v912 = vmul.f32 1.0, %v911
          %v913 = vxor.u32 %v904, 2147483648
          %v914 = vmul.f32 %v913, 1.442695
          %v915 = vpow.pop %v914
          %v916 = vadd.f32 %v915, 1.0
          %v917 = vrcp.pop %v916
          %v918 = vmul.f32 1.0, %v917
          %v919 = vtanh.pop %v905
          %v920 = vxor.u32 %v906, 2147483648
          %v921 = vmul.f32 %v920, 1.442695
          %v922 = vpow.pop %v921
          %v923 = vadd.f32 %v922, 1.0
          %v924 = vrcp.pop %v923
          %v925 = vmul.f32 1.0, %v924
          %v926 = vmul.f32 %v918, %v753
          %v927 = vmul.f32 %v912, %v919
          %v928 = vadd.f32 %v926, %v927
          %v929 = vtanh.pop %v928
          %v930 = vmul.f32 %v925, %v929
          %931 = vst [vmem:[#allocation2] sm:$0xff] %v930
          %932 = vst [vmem:[#allocation3] sm:$0xff] %v928
          %933 = vst [vmem:[%s416] sm:$0xff] %v930
          %v934 = vld [vmem:[#allocation2] sm:$0xff]
          %v935 = vld [vmem:[#allocation3] sm:$0xff]
          %s936 = smul.u32 1, 4
          %s937 = smul.addr %s936, 8
          %s938 = scalar_lea.vmem [#allocation4], %s937
          %v939 = vld [vmem:[%s938] sm:$0xff]
          %v940 = vld [vmem:[%s938 + $0x8] sm:$0xff]
          %v941 = vld [vmem:[%s938 + $0x10] sm:$0xff]
          %v942 = vld [vmem:[%s938 + $0x18] sm:$0xff]
          %943 = vmatprep.subr.mxu0 %v745
          %944 = vmatpush1.msra.mxu0 %v744
          %945 = vmatprep.subr.mxu0 %v741
          %946 = vmatpush1.msra.mxu0 %v740
          %947 = vmatprep.subr.mxu0 %v737
          %948 = vmatpush1.msra.mxu0 %v736
          %949 = vmatprep.subr.mxu0 %v733
          %950 = vmatpush1.msra.mxu0 %v732
          %951 = vmatprep.subr.mxu0 %v729
          %952 = vmatpush1.msra.mxu0 %v728
          %953 = vmatprep.subr.mxu0 %v725
          %954 = vmatpush1.msra.mxu0 %v724
          %955 = vmatprep.subr.mxu0 %v721
          %956 = vmatpush1.msra.mxu0 %v720
          %957 = vmatprep.subr.mxu0 %v717
          %958 = vmatpush1.msra.mxu0 %v716
          %959 = vmatprep.subr.mxu0 %v713
          %960 = vmatpush1.msra.mxu0 %v712
          %961 = vmatprep.subr.mxu0 %v709
          %962 = vmatpush1.msra.mxu0 %v708
          %963 = vmatprep.subr.mxu0 %v705
          %964 = vmatpush1.msra.mxu0 %v704
          %965 = vmatprep.subr.mxu0 %v701
          %966 = vmatpush1.msra.mxu0 %v700
          %967 = vmatprep.subr.mxu0 %v697
          %968 = vmatpush1.msra.mxu0 %v696
          %969 = vmatprep.subr.mxu0 %v693
          %970 = vmatpush1.msra.mxu0 %v692
          %971 = vmatprep.subr.mxu0 %v689
          %972 = vmatpush1.msra.mxu0 %v688
          %973 = vmatprep.subr.mxu0 %v685
          %974 = vmatpush1.msra.mxu0 %v684
          %975 = vmatprep.subr.mxu0 0.0
          %976 = vmatpush2.msra.mxu0 0.0
          %977 = vmatprep.subr.mxu0 0.0
          %978 = vmatpush2.msra.mxu0 0.0
          %979 = vmatprep.subr.mxu0 0.0
          %980 = vmatpush2.msra.mxu0 0.0
          %981 = vmatprep.subr.mxu0 0.0
          %982 = vmatpush2.msra.mxu0 0.0
          %983 = vmatprep.subr.mxu0 0.0
          %984 = vmatpush2.msra.mxu0 0.0
          %985 = vmatprep.subr.mxu0 0.0
          %986 = vmatpush2.msra.mxu0 0.0
          %987 = vmatprep.subr.mxu0 0.0
          %988 = vmatpush2.msra.mxu0 0.0
          %989 = vmatprep.subr.mxu0 0.0
          %990 = vmatpush2.msra.mxu0 0.0
          %991 = vmatprep.subr.mxu0 0.0
          %992 = vmatpush2.msra.mxu0 0.0
          %993 = vmatprep.subr.mxu0 0.0
          %994 = vmatpush2.msra.mxu0 0.0
          %995 = vmatprep.subr.mxu0 0.0
          %996 = vmatpush2.msra.mxu0 0.0
          %997 = vmatprep.subr.mxu0 0.0
          %998 = vmatpush2.msra.mxu0 0.0
          %999 = vmatprep.subr.mxu0 0.0
          %1000 = vmatpush2.msra.mxu0 0.0
          %1001 = vmatprep.subr.mxu0 0.0
          %1002 = vmatpush2.msra.mxu0 0.0
          %1003 = vmatprep.subr.mxu0 0.0
          %1004 = vmatpush2.msra.mxu0 0.0
          %1005 = vmatprep.subr.mxu0 0.0
          %1006 = vmatpush2.msra.mxu0 0.0
          %1007 = vmatprep.mubr.f32.mxu0 0.0
          %1008 = vmatmul.mubr.f32.gmra.mxu0 %v934
          %v1009 = vpop.f32.mrf.mxu0
          %v1010 = vadd.f32 0.0, %v1009
          %v1011 = vpop.f32.mrf.mxu0
          %v1012 = vadd.f32 0.0, %v1011
          %1013 = vdwg.mxu0
          %1014 = vmatprep.subr.mxu0 %v747
          %1015 = vmatpush1.msra.mxu0 %v746
          %1016 = vmatprep.subr.mxu0 %v743
          %1017 = vmatpush1.msra.mxu0 %v742
          %1018 = vmatprep.subr.mxu0 %v739
          %1019 = vmatpush1.msra.mxu0 %v738
          %1020 = vmatprep.subr.mxu0 %v735
          %1021 = vmatpush1.msra.mxu0 %v734
          %1022 = vmatprep.subr.mxu0 %v731
          %1023 = vmatpush1.msra.mxu0 %v730
          %1024 = vmatprep.subr.mxu0 %v727
          %1025 = vmatpush1.msra.mxu0 %v726
          %1026 = vmatprep.subr.mxu0 %v723
          %1027 = vmatpush1.msra.mxu0 %v722
          %1028 = vmatprep.subr.mxu0 %v719
          %1029 = vmatpush1.msra.mxu0 %v718
          %1030 = vmatprep.subr.mxu0 %v715
          %1031 = vmatpush1.msra.mxu0 %v714
          %1032 = vmatprep.subr.mxu0 %v711
          %1033 = vmatpush1.msra.mxu0 %v710
          %1034 = vmatprep.subr.mxu0 %v707
          %1035 = vmatpush1.msra.mxu0 %v706
          %1036 = vmatprep.subr.mxu0 %v703
          %1037 = vmatpush1.msra.mxu0 %v702
          %1038 = vmatprep.subr.mxu0 %v699
          %1039 = vmatpush1.msra.mxu0 %v698
          %1040 = vmatprep.subr.mxu0 %v695
          %1041 = vmatpush1.msra.mxu0 %v694
          %1042 = vmatprep.subr.mxu0 %v691
          %1043 = vmatpush1.msra.mxu0 %v690
          %1044 = vmatprep.subr.mxu0 %v687
          %1045 = vmatpush1.msra.mxu0 %v686
          %1046 = vmatprep.subr.mxu0 0.0
          %1047 = vmatpush2.msra.mxu0 0.0
          %1048 = vmatprep.subr.mxu0 0.0
          %1049 = vmatpush2.msra.mxu0 0.0
          %1050 = vmatprep.subr.mxu0 0.0
          %1051 = vmatpush2.msra.mxu0 0.0
          %1052 = vmatprep.subr.mxu0 0.0
          %1053 = vmatpush2.msra.mxu0 0.0
          %1054 = vmatprep.subr.mxu0 0.0
          %1055 = vmatpush2.msra.mxu0 0.0
          %1056 = vmatprep.subr.mxu0 0.0
          %1057 = vmatpush2.msra.mxu0 0.0
          %1058 = vmatprep.subr.mxu0 0.0
          %1059 = vmatpush2.msra.mxu0 0.0
          %1060 = vmatprep.subr.mxu0 0.0
          %1061 = vmatpush2.msra.mxu0 0.0
          %1062 = vmatprep.subr.mxu0 0.0
          %1063 = vmatpush2.msra.mxu0 0.0
          %1064 = vmatprep.subr.mxu0 0.0
          %1065 = vmatpush2.msra.mxu0 0.0
          %1066 = vmatprep.subr.mxu0 0.0
          %1067 = vmatpush2.msra.mxu0 0.0
          %1068 = vmatprep.subr.mxu0 0.0
          %1069 = vmatpush2.msra.mxu0 0.0
          %1070 = vmatprep.subr.mxu0 0.0
          %1071 = vmatpush2.msra.mxu0 0.0
          %1072 = vmatprep.subr.mxu0 0.0
          %1073 = vmatpush2.msra.mxu0 0.0
          %1074 = vmatprep.subr.mxu0 0.0
          %1075 = vmatpush2.msra.mxu0 0.0
          %1076 = vmatprep.subr.mxu0 0.0
          %1077 = vmatpush2.msra.mxu0 0.0
          %1078 = vmatprep.mubr.f32.mxu0 0.0
          %1079 = vmatmul.mubr.f32.gmra.mxu0 %v934
          %v1080 = vpop.f32.mrf.mxu0
          %v1081 = vadd.f32 0.0, %v1080
          %v1082 = vpop.f32.mrf.mxu0
          %v1083 = vadd.f32 0.0, %v1082
          %1084 = vdwg.mxu0
          %v1085 = vadd.f32 %v939, %v1010
          %v1086 = vadd.f32 %v940, %v1012
          %v1087 = vadd.f32 %v941, %v1081
          %v1088 = vadd.f32 %v942, %v1083
          %v1089 = vxor.u32 %v1085, 2147483648
          %v1090 = vmul.f32 %v1089, 1.442695
          %v1091 = vpow.pop %v1090
          %v1092 = vadd.f32 %v1091, 1.0
          %v1093 = vrcp.pop %v1092
          %v1094 = vmul.f32 1.0, %v1093
          %v1095 = vxor.u32 %v1086, 2147483648
          %v1096 = vmul.f32 %v1095, 1.442695
          %v1097 = vpow.pop %v1096
          %v1098 = vadd.f32 %v1097, 1.0
          %v1099 = vrcp.pop %v1098
          %v1100 = vmul.f32 1.0, %v1099
          %v1101 = vtanh.pop %v1087
          %v1102 = vxor.u32 %v1088, 2147483648
          %v1103 = vmul.f32 %v1102, 1.442695
          %v1104 = vpow.pop %v1103
          %v1105 = vadd.f32 %v1104, 1.0
          %v1106 = vrcp.pop %v1105
          %v1107 = vmul.f32 1.0, %v1106
          %v1108 = vmul.f32 %v1100, %v935
          %v1109 = vmul.f32 %v1094, %v1101
          %v1110 = vadd.f32 %v1108, %v1109
          %v1111 = vtanh.pop %v1110
          %v1112 = vmul.f32 %v1107, %v1111
          %1113 = vst [vmem:[#allocation2] sm:$0xff] %v1112
          %1114 = vst [vmem:[#allocation3] sm:$0xff] %v1110
          %s1115 = scalar_lea.vmem %s416, 8 [#allocation14]
          %1116 = vst [vmem:[%s1115] sm:$0xff] %v1112
          %v1117 = vld [vmem:[#allocation2] sm:$0xff]
          %v1118 = vld [vmem:[#allocation3] sm:$0xff]
          %s1119 = smul.u32 2, 4
          %s1120 = smul.addr %s1119, 8
          %s1121 = scalar_lea.vmem [#allocation4], %s1120
          %v1122 = vld [vmem:[%s1121] sm:$0xff]
          %v1123 = vld [vmem:[%s1121 + $0x8] sm:$0xff]
          %v1124 = vld [vmem:[%s1121 + $0x10] sm:$0xff]
          %v1125 = vld [vmem:[%s1121 + $0x18] sm:$0xff]
          %1126 = vmatprep.subr.mxu0 %v745
          %1127 = vmatpush1.msra.mxu0 %v744
          %1128 = vmatprep.subr.mxu0 %v741
          %1129 = vmatpush1.msra.mxu0 %v740
          %1130 = vmatprep.subr.mxu0 %v737
          %1131 = vmatpush1.msra.mxu0 %v736
          %1132 = vmatprep.subr.mxu0 %v733
          %1133 = vmatpush1.msra.mxu0 %v732
          %1134 = vmatprep.subr.mxu0 %v729
          %1135 = vmatpush1.msra.mxu0 %v728
          %1136 = vmatprep.subr.mxu0 %v725
          %1137 = vmatpush1.msra.mxu0 %v724
          %1138 = vmatprep.subr.mxu0 %v721
          %1139 = vmatpush1.msra.mxu0 %v720
          %1140 = vmatprep.subr.mxu0 %v717
          %1141 = vmatpush1.msra.mxu0 %v716
          %1142 = vmatprep.subr.mxu0 %v713
          %1143 = vmatpush1.msra.mxu0 %v712
          %1144 = vmatprep.subr.mxu0 %v709
          %1145 = vmatpush1.msra.mxu0 %v708
          %1146 = vmatprep.subr.mxu0 %v705
          %1147 = vmatpush1.msra.mxu0 %v704
          %1148 = vmatprep.subr.mxu0 %v701
          %1149 = vmatpush1.msra.mxu0 %v700
          %1150 = vmatprep.subr.mxu0 %v697
          %1151 = vmatpush1.msra.mxu0 %v696
          %1152 = vmatprep.subr.mxu0 %v693
          %1153 = vmatpush1.msra.mxu0 %v692
          %1154 = vmatprep.subr.mxu0 %v689
          %1155 = vmatpush1.msra.mxu0 %v688
          %1156 = vmatprep.subr.mxu0 %v685
          %1157 = vmatpush1.msra.mxu0 %v684
          %1158 = vmatprep.subr.mxu0 0.0
          %1159 = vmatpush2.msra.mxu0 0.0
          %1160 = vmatprep.subr.mxu0 0.0
          %1161 = vmatpush2.msra.mxu0 0.0
          %1162 = vmatprep.subr.mxu0 0.0
          %1163 = vmatpush2.msra.mxu0 0.0
          %1164 = vmatprep.subr.mxu0 0.0
          %1165 = vmatpush2.msra.mxu0 0.0
          %1166 = vmatprep.subr.mxu0 0.0
          %1167 = vmatpush2.msra.mxu0 0.0
          %1168 = vmatprep.subr.mxu0 0.0
          %1169 = vmatpush2.msra.mxu0 0.0
          %1170 = vmatprep.subr.mxu0 0.0
          %1171 = vmatpush2.msra.mxu0 0.0
          %1172 = vmatprep.subr.mxu0 0.0
          %1173 = vmatpush2.msra.mxu0 0.0
          %1174 = vmatprep.subr.mxu0 0.0
          %1175 = vmatpush2.msra.mxu0 0.0
          %1176 = vmatprep.subr.mxu0 0.0
          %1177 = vmatpush2.msra.mxu0 0.0
          %1178 = vmatprep.subr.mxu0 0.0
          %1179 = vmatpush2.msra.mxu0 0.0
          %1180 = vmatprep.subr.mxu0 0.0
          %1181 = vmatpush2.msra.mxu0 0.0
          %1182 = vmatprep.subr.mxu0 0.0
          %1183 = vmatpush2.msra.mxu0 0.0
          %1184 = vmatprep.subr.mxu0 0.0
          %1185 = vmatpush2.msra.mxu0 0.0
          %1186 = vmatprep.subr.mxu0 0.0
          %1187 = vmatpush2.msra.mxu0 0.0
          %1188 = vmatprep.subr.mxu0 0.0
          %1189 = vmatpush2.msra.mxu0 0.0
          %1190 = vmatprep.mubr.f32.mxu0 0.0
          %1191 = vmatmul.mubr.f32.gmra.mxu0 %v1117
          %v1192 = vpop.f32.mrf.mxu0
          %v1193 = vadd.f32 0.0, %v1192
          %v1194 = vpop.f32.mrf.mxu0
          %v1195 = vadd.f32 0.0, %v1194
          %1196 = vdwg.mxu0
          %1197 = vmatprep.subr.mxu0 %v747
          %1198 = vmatpush1.msra.mxu0 %v746
          %1199 = vmatprep.subr.mxu0 %v743
          %1200 = vmatpush1.msra.mxu0 %v742
          %1201 = vmatprep.subr.mxu0 %v739
          %1202 = vmatpush1.msra.mxu0 %v738
          %1203 = vmatprep.subr.mxu0 %v735
          %1204 = vmatpush1.msra.mxu0 %v734
          %1205 = vmatprep.subr.mxu0 %v731
          %1206 = vmatpush1.msra.mxu0 %v730
          %1207 = vmatprep.subr.mxu0 %v727
          %1208 = vmatpush1.msra.mxu0 %v726
          %1209 = vmatprep.subr.mxu0 %v723
          %1210 = vmatpush1.msra.mxu0 %v722
          %1211 = vmatprep.subr.mxu0 %v719
          %1212 = vmatpush1.msra.mxu0 %v718
          %1213 = vmatprep.subr.mxu0 %v715
          %1214 = vmatpush1.msra.mxu0 %v714
          %1215 = vmatprep.subr.mxu0 %v711
          %1216 = vmatpush1.msra.mxu0 %v710
          %1217 = vmatprep.subr.mxu0 %v707
          %1218 = vmatpush1.msra.mxu0 %v706
          %1219 = vmatprep.subr.mxu0 %v703
          %1220 = vmatpush1.msra.mxu0 %v702
          %1221 = vmatprep.subr.mxu0 %v699
          %1222 = vmatpush1.msra.mxu0 %v698
          %1223 = vmatprep.subr.mxu0 %v695
          %1224 = vmatpush1.msra.mxu0 %v694
          %1225 = vmatprep.subr.mxu0 %v691
          %1226 = vmatpush1.msra.mxu0 %v690
          %1227 = vmatprep.subr.mxu0 %v687
          %1228 = vmatpush1.msra.mxu0 %v686
          %1229 = vmatprep.subr.mxu0 0.0
          %1230 = vmatpush2.msra.mxu0 0.0
          %1231 = vmatprep.subr.mxu0 0.0
          %1232 = vmatpush2.msra.mxu0 0.0
          %1233 = vmatprep.subr.mxu0 0.0
          %1234 = vmatpush2.msra.mxu0 0.0
          %1235 = vmatprep.subr.mxu0 0.0
          %1236 = vmatpush2.msra.mxu0 0.0
          %1237 = vmatprep.subr.mxu0 0.0
          %1238 = vmatpush2.msra.mxu0 0.0
          %1239 = vmatprep.subr.mxu0 0.0
          %1240 = vmatpush2.msra.mxu0 0.0
          %1241 = vmatprep.subr.mxu0 0.0
          %1242 = vmatpush2.msra.mxu0 0.0
          %1243 = vmatprep.subr.mxu0 0.0
          %1244 = vmatpush2.msra.mxu0 0.0
          %1245 = vmatprep.subr.mxu0 0.0
          %1246 = vmatpush2.msra.mxu0 0.0
          %1247 = vmatprep.subr.mxu0 0.0
          %1248 = vmatpush2.msra.mxu0 0.0
          %1249 = vmatprep.subr.mxu0 0.0
          %1250 = vmatpush2.msra.mxu0 0.0
          %1251 = vmatprep.subr.mxu0 0.0
          %1252 = vmatpush2.msra.mxu0 0.0
          %1253 = vmatprep.subr.mxu0 0.0
          %1254 = vmatpush2.msra.mxu0 0.0
          %1255 = vmatprep.subr.mxu0 0.0
          %1256 = vmatpush2.msra.mxu0 0.0
          %1257 = vmatprep.subr.mxu0 0.0
          %1258 = vmatpush2.msra.mxu0 0.0
          %1259 = vmatprep.subr.mxu0 0.0
          %1260 = vmatpush2.msra.mxu0 0.0
          %1261 = vmatprep.mubr.f32.mxu0 0.0
          %1262 = vmatmul.mubr.f32.gmra.mxu0 %v1117
          %v1263 = vpop.f32.mrf.mxu0
          %v1264 = vadd.f32 0.0, %v1263
          %v1265 = vpop.f32.mrf.mxu0
          %v1266 = vadd.f32 0.0, %v1265
          %1267 = vdwg.mxu0
          %v1268 = vadd.f32 %v1122, %v1193
          %v1269 = vadd.f32 %v1123, %v1195
          %v1270 = vadd.f32 %v1124, %v1264
          %v1271 = vadd.f32 %v1125, %v1266
          %v1272 = vxor.u32 %v1268, 2147483648
          %v1273 = vmul.f32 %v1272, 1.442695
          %v1274 = vpow.pop %v1273
          %v1275 = vadd.f32 %v1274, 1.0
          %v1276 = vrcp.pop %v1275
          %v1277 = vmul.f32 1.0, %v1276
          %v1278 = vxor.u32 %v1269, 2147483648
          %v1279 = vmul.f32 %v1278, 1.442695
          %v1280 = vpow.pop %v1279
          %v1281 = vadd.f32 %v1280, 1.0
          %v1282 = vrcp.pop %v1281
          %v1283 = vmul.f32 1.0, %v1282
          %v1284 = vtanh.pop %v1270
          %v1285 = vxor.u32 %v1271, 2147483648
          %v1286 = vmul.f32 %v1285, 1.442695
          %v1287 = vpow.pop %v1286
          %v1288 = vadd.f32 %v1287, 1.0
          %v1289 = vrcp.pop %v1288
          %v1290 = vmul.f32 1.0, %v1289
          %v1291 = vmul.f32 %v1283, %v1118
          %v1292 = vmul.f32 %v1277, %v1284
          %v1293 = vadd.f32 %v1291, %v1292
          %v1294 = vtanh.pop %v1293
          %v1295 = vmul.f32 %v1290, %v1294
          %1296 = vst [vmem:[#allocation2] sm:$0xff] %v1295
          %1297 = vst [vmem:[#allocation3] sm:$0xff] %v1293
          %s1298 = scalar_lea.vmem %s416, 16 [#allocation14]
          %1299 = vst [vmem:[%s1298] sm:$0xff] %v1295
          %v1300 = vld [vmem:[#allocation2] sm:$0xff]
          %v1301 = vld [vmem:[#allocation3] sm:$0xff]
          %s1302 = smul.u32 3, 4
          %s1303 = smul.addr %s1302, 8
          %s1304 = scalar_lea.vmem [#allocation4], %s1303
          %v1305 = vld [vmem:[%s1304] sm:$0xff]
          %v1306 = vld [vmem:[%s1304 + $0x8] sm:$0xff]
          %v1307 = vld [vmem:[%s1304 + $0x10] sm:$0xff]
          %v1308 = vld [vmem:[%s1304 + $0x18] sm:$0xff]
          %1309 = vmatprep.subr.mxu0 %v745
          %1310 = vmatpush1.msra.mxu0 %v744
          %1311 = vmatprep.subr.mxu0 %v741
          %1312 = vmatpush1.msra.mxu0 %v740
          %1313 = vmatprep.subr.mxu0 %v737
          %1314 = vmatpush1.msra.mxu0 %v736
          %1315 = vmatprep.subr.mxu0 %v733
          %1316 = vmatpush1.msra.mxu0 %v732
          %1317 = vmatprep.subr.mxu0 %v729
          %1318 = vmatpush1.msra.mxu0 %v728
          %1319 = vmatprep.subr.mxu0 %v725
          %1320 = vmatpush1.msra.mxu0 %v724
          %1321 = vmatprep.subr.mxu0 %v721
          %1322 = vmatpush1.msra.mxu0 %v720
          %1323 = vmatprep.subr.mxu0 %v717
          %1324 = vmatpush1.msra.mxu0 %v716
          %1325 = vmatprep.subr.mxu0 %v713
          %1326 = vmatpush1.msra.mxu0 %v712
          %1327 = vmatprep.subr.mxu0 %v709
          %1328 = vmatpush1.msra.mxu0 %v708
          %1329 = vmatprep.subr.mxu0 %v705
          %1330 = vmatpush1.msra.mxu0 %v704
          %1331 = vmatprep.subr.mxu0 %v701
          %1332 = vmatpush1.msra.mxu0 %v700
          %1333 = vmatprep.subr.mxu0 %v697
          %1334 = vmatpush1.msra.mxu0 %v696
          %1335 = vmatprep.subr.mxu0 %v693
          %1336 = vmatpush1.msra.mxu0 %v692
          %1337 = vmatprep.subr.mxu0 %v689
          %1338 = vmatpush1.msra.mxu0 %v688
          %1339 = vmatprep.subr.mxu0 %v685
          %1340 = vmatpush1.msra.mxu0 %v684
          %1341 = vmatprep.subr.mxu0 0.0
          %1342 = vmatpush2.msra.mxu0 0.0
          %1343 = vmatprep.subr.mxu0 0.0
          %1344 = vmatpush2.msra.mxu0 0.0
          %1345 = vmatprep.subr.mxu0 0.0
          %1346 = vmatpush2.msra.mxu0 0.0
          %1347 = vmatprep.subr.mxu0 0.0
          %1348 = vmatpush2.msra.mxu0 0.0
          %1349 = vmatprep.subr.mxu0 0.0
          %1350 = vmatpush2.msra.mxu0 0.0
          %1351 = vmatprep.subr.mxu0 0.0
          %1352 = vmatpush2.msra.mxu0 0.0
          %1353 = vmatprep.subr.mxu0 0.0
          %1354 = vmatpush2.msra.mxu0 0.0
          %1355 = vmatprep.subr.mxu0 0.0
          %1356 = vmatpush2.msra.mxu0 0.0
          %1357 = vmatprep.subr.mxu0 0.0
          %1358 = vmatpush2.msra.mxu0 0.0
          %1359 = vmatprep.subr.mxu0 0.0
          %1360 = vmatpush2.msra.mxu0 0.0
          %1361 = vmatprep.subr.mxu0 0.0
          %1362 = vmatpush2.msra.mxu0 0.0
          %1363 = vmatprep.subr.mxu0 0.0
          %1364 = vmatpush2.msra.mxu0 0.0
          %1365 = vmatprep.subr.mxu0 0.0
          %1366 = vmatpush2.msra.mxu0 0.0
          %1367 = vmatprep.subr.mxu0 0.0
          %1368 = vmatpush2.msra.mxu0 0.0
          %1369 = vmatprep.subr.mxu0 0.0
          %1370 = vmatpush2.msra.mxu0 0.0
          %1371 = vmatprep.subr.mxu0 0.0
          %1372 = vmatpush2.msra.mxu0 0.0
          %1373 = vmatprep.mubr.f32.mxu0 0.0
          %1374 = vmatmul.mubr.f32.gmra.mxu0 %v1300
          %v1375 = vpop.f32.mrf.mxu0
          %v1376 = vadd.f32 0.0, %v1375
          %v1377 = vpop.f32.mrf.mxu0
          %v1378 = vadd.f32 0.0, %v1377
          %1379 = vdwg.mxu0
          %1380 = vmatprep.subr.mxu0 %v747
          %1381 = vmatpush1.msra.mxu0 %v746
          %1382 = vmatprep.subr.mxu0 %v743
          %1383 = vmatpush1.msra.mxu0 %v742
          %1384 = vmatprep.subr.mxu0 %v739
          %1385 = vmatpush1.msra.mxu0 %v738
          %1386 = vmatprep.subr.mxu0 %v735
          %1387 = vmatpush1.msra.mxu0 %v734
          %1388 = vmatprep.subr.mxu0 %v731
          %1389 = vmatpush1.msra.mxu0 %v730
          %1390 = vmatprep.subr.mxu0 %v727
          %1391 = vmatpush1.msra.mxu0 %v726
          %1392 = vmatprep.subr.mxu0 %v723
          %1393 = vmatpush1.msra.mxu0 %v722
          %1394 = vmatprep.subr.mxu0 %v719
          %1395 = vmatpush1.msra.mxu0 %v718
          %1396 = vmatprep.subr.mxu0 %v715
          %1397 = vmatpush1.msra.mxu0 %v714
          %1398 = vmatprep.subr.mxu0 %v711
          %1399 = vmatpush1.msra.mxu0 %v710
          %1400 = vmatprep.subr.mxu0 %v707
          %1401 = vmatpush1.msra.mxu0 %v706
          %1402 = vmatprep.subr.mxu0 %v703
          %1403 = vmatpush1.msra.mxu0 %v702
          %1404 = vmatprep.subr.mxu0 %v699
          %1405 = vmatpush1.msra.mxu0 %v698
          %1406 = vmatprep.subr.mxu0 %v695
          %1407 = vmatpush1.msra.mxu0 %v694
          %1408 = vmatprep.subr.mxu0 %v691
          %1409 = vmatpush1.msra.mxu0 %v690
          %1410 = vmatprep.subr.mxu0 %v687
          %1411 = vmatpush1.msra.mxu0 %v686
          %1412 = vmatprep.subr.mxu0 0.0
          %1413 = vmatpush2.msra.mxu0 0.0
          %1414 = vmatprep.subr.mxu0 0.0
          %1415 = vmatpush2.msra.mxu0 0.0
          %1416 = vmatprep.subr.mxu0 0.0
          %1417 = vmatpush2.msra.mxu0 0.0
          %1418 = vmatprep.subr.mxu0 0.0
          %1419 = vmatpush2.msra.mxu0 0.0
          %1420 = vmatprep.subr.mxu0 0.0
          %1421 = vmatpush2.msra.mxu0 0.0
          %1422 = vmatprep.subr.mxu0 0.0
          %1423 = vmatpush2.msra.mxu0 0.0
          %1424 = vmatprep.subr.mxu0 0.0
          %1425 = vmatpush2.msra.mxu0 0.0
          %1426 = vmatprep.subr.mxu0 0.0
          %1427 = vmatpush2.msra.mxu0 0.0
          %1428 = vmatprep.subr.mxu0 0.0
          %1429 = vmatpush2.msra.mxu0 0.0
          %1430 = vmatprep.subr.mxu0 0.0
          %1431 = vmatpush2.msra.mxu0 0.0
          %1432 = vmatprep.subr.mxu0 0.0
          %1433 = vmatpush2.msra.mxu0 0.0
          %1434 = vmatprep.subr.mxu0 0.0
          %1435 = vmatpush2.msra.mxu0 0.0
          %1436 = vmatprep.subr.mxu0 0.0
          %1437 = vmatpush2.msra.mxu0 0.0
          %1438 = vmatprep.subr.mxu0 0.0
          %1439 = vmatpush2.msra.mxu0 0.0
          %1440 = vmatprep.subr.mxu0 0.0
          %1441 = vmatpush2.msra.mxu0 0.0
          %1442 = vmatprep.subr.mxu0 0.0
          %1443 = vmatpush2.msra.mxu0 0.0
          %1444 = vmatprep.mubr.f32.mxu0 0.0
          %1445 = vmatmul.mubr.f32.gmra.mxu0 %v1300
          %v1446 = vpop.f32.mrf.mxu0
          %v1447 = vadd.f32 0.0, %v1446
          %v1448 = vpop.f32.mrf.mxu0
          %v1449 = vadd.f32 0.0, %v1448
          %1450 = vdwg.mxu0
          %v1451 = vadd.f32 %v1305, %v1376
          %v1452 = vadd.f32 %v1306, %v1378
          %v1453 = vadd.f32 %v1307, %v1447
          %v1454 = vadd.f32 %v1308, %v1449
          %v1455 = vxor.u32 %v1451, 2147483648
          %v1456 = vmul.f32 %v1455, 1.442695
          %v1457 = vpow.pop %v1456
          %v1458 = vadd.f32 %v1457, 1.0
          %v1459 = vrcp.pop %v1458
          %v1460 = vmul.f32 1.0, %v1459
          %v1461 = vxor.u32 %v1452, 2147483648
          %v1462 = vmul.f32 %v1461, 1.442695
          %v1463 = vpow.pop %v1462
          %v1464 = vadd.f32 %v1463, 1.0
          %v1465 = vrcp.pop %v1464
          %v1466 = vmul.f32 1.0, %v1465
          %v1467 = vtanh.pop %v1453
          %v1468 = vxor.u32 %v1454, 2147483648
          %v1469 = vmul.f32 %v1468, 1.442695
          %v1470 = vpow.pop %v1469
          %v1471 = vadd.f32 %v1470, 1.0
          %v1472 = vrcp.pop %v1471
          %v1473 = vmul.f32 1.0, %v1472
          %v1474 = vmul.f32 %v1466, %v1301
          %v1475 = vmul.f32 %v1460, %v1467
          %v1476 = vadd.f32 %v1474, %v1475
          %v1477 = vtanh.pop %v1476
          %v1478 = vmul.f32 %v1473, %v1477
          %1479 = vst [vmem:[#allocation2] sm:$0xff] %v1478
          %1480 = vst [vmem:[#allocation3] sm:$0xff] %v1476
          %s1481 = scalar_lea.vmem %s416, 24 [#allocation14]
          %1482 = vst [vmem:[%s1481] sm:$0xff] %v1478
        $region72: #{tpu_custom_call.1} parent=43 // pred_fallthru
          _
        %p1483 = scmp.eq.s32.totalorder %s34, 2
        // Predicated region
        $region73: #{tpu_custom_call.1} parent=43 // pred_check
          %p1484 = pneg %p1483
        $region74: #{tpu_custom_call.1} parent=43 // pred_check_branch
          %1486 = sbr.rel (%p1484) target = $region76
        $region75: #{tpu_custom_call.1} parent=43 // pred_region
          %v1487 = vld [vmem:[#allocation2] sm:$0xff]
          %v1488 = vld [vmem:[#allocation3] sm:$0xff]
          %s1489 = smul.u32 0, 4
          %s1490 = smul.addr %s1489, 8
          %s1491 = scalar_lea.vmem [#allocation4], %s1490
          %v1492 = vld [vmem:[%s1491] sm:$0xff]
          %v1493 = vld [vmem:[%s1491 + $0x8] sm:$0xff]
          %v1494 = vld [vmem:[%s1491 + $0x10] sm:$0xff]
          %v1495 = vld [vmem:[%s1491 + $0x18] sm:$0xff]
          %1496 = vmatprep.subr.mxu0 %v745
          %1497 = vmatpush1.msra.mxu0 %v744
          %1498 = vmatprep.subr.mxu0 %v741
          %1499 = vmatpush1.msra.mxu0 %v740
          %1500 = vmatprep.subr.mxu0 %v737
          %1501 = vmatpush1.msra.mxu0 %v736
          %1502 = vmatprep.subr.mxu0 %v733
          %1503 = vmatpush1.msra.mxu0 %v732
          %1504 = vmatprep.subr.mxu0 %v729
          %1505 = vmatpush1.msra.mxu0 %v728
          %1506 = vmatprep.subr.mxu0 %v725
          %1507 = vmatpush1.msra.mxu0 %v724
          %1508 = vmatprep.subr.mxu0 %v721
          %1509 = vmatpush1.msra.mxu0 %v720
          %1510 = vmatprep.subr.mxu0 %v717
          %1511 = vmatpush1.msra.mxu0 %v716
          %1512 = vmatprep.subr.mxu0 %v713
          %1513 = vmatpush1.msra.mxu0 %v712
          %1514 = vmatprep.subr.mxu0 %v709
          %1515 = vmatpush1.msra.mxu0 %v708
          %1516 = vmatprep.subr.mxu0 %v705
          %1517 = vmatpush1.msra.mxu0 %v704
          %1518 = vmatprep.subr.mxu0 %v701
          %1519 = vmatpush1.msra.mxu0 %v700
          %1520 = vmatprep.subr.mxu0 %v697
          %1521 = vmatpush1.msra.mxu0 %v696
          %1522 = vmatprep.subr.mxu0 %v693
          %1523 = vmatpush1.msra.mxu0 %v692
          %1524 = vmatprep.subr.mxu0 %v689
          %1525 = vmatpush1.msra.mxu0 %v688
          %1526 = vmatprep.subr.mxu0 %v685
          %1527 = vmatpush1.msra.mxu0 %v684
          %1528 = vmatprep.subr.mxu0 0.0
          %1529 = vmatpush2.msra.mxu0 0.0
          %1530 = vmatprep.subr.mxu0 0.0
          %1531 = vmatpush2.msra.mxu0 0.0
          %1532 = vmatprep.subr.mxu0 0.0
          %1533 = vmatpush2.msra.mxu0 0.0
          %1534 = vmatprep.subr.mxu0 0.0
          %1535 = vmatpush2.msra.mxu0 0.0
          %1536 = vmatprep.subr.mxu0 0.0
          %1537 = vmatpush2.msra.mxu0 0.0
          %1538 = vmatprep.subr.mxu0 0.0
          %1539 = vmatpush2.msra.mxu0 0.0
          %1540 = vmatprep.subr.mxu0 0.0
          %1541 = vmatpush2.msra.mxu0 0.0
          %1542 = vmatprep.subr.mxu0 0.0
          %1543 = vmatpush2.msra.mxu0 0.0
          %1544 = vmatprep.subr.mxu0 0.0
          %1545 = vmatpush2.msra.mxu0 0.0
          %1546 = vmatprep.subr.mxu0 0.0
          %1547 = vmatpush2.msra.mxu0 0.0
          %1548 = vmatprep.subr.mxu0 0.0
          %1549 = vmatpush2.msra.mxu0 0.0
          %1550 = vmatprep.subr.mxu0 0.0
          %1551 = vmatpush2.msra.mxu0 0.0
          %1552 = vmatprep.subr.mxu0 0.0
          %1553 = vmatpush2.msra.mxu0 0.0
          %1554 = vmatprep.subr.mxu0 0.0
          %1555 = vmatpush2.msra.mxu0 0.0
          %1556 = vmatprep.subr.mxu0 0.0
          %1557 = vmatpush2.msra.mxu0 0.0
          %1558 = vmatprep.subr.mxu0 0.0
          %1559 = vmatpush2.msra.mxu0 0.0
          %1560 = vmatprep.mubr.f32.mxu0 0.0
          %1561 = vmatmul.mubr.f32.gmra.mxu0 %v1487
          %v1562 = vpop.f32.mrf.mxu0
          %v1563 = vadd.f32 0.0, %v1562
          %v1564 = vpop.f32.mrf.mxu0
          %v1565 = vadd.f32 0.0, %v1564
          %1566 = vdwg.mxu0
          %1567 = vmatprep.subr.mxu0 %v747
          %1568 = vmatpush1.msra.mxu0 %v746
          %1569 = vmatprep.subr.mxu0 %v743
          %1570 = vmatpush1.msra.mxu0 %v742
          %1571 = vmatprep.subr.mxu0 %v739
          %1572 = vmatpush1.msra.mxu0 %v738
          %1573 = vmatprep.subr.mxu0 %v735
          %1574 = vmatpush1.msra.mxu0 %v734
          %1575 = vmatprep.subr.mxu0 %v731
          %1576 = vmatpush1.msra.mxu0 %v730
          %1577 = vmatprep.subr.mxu0 %v727
          %1578 = vmatpush1.msra.mxu0 %v726
          %1579 = vmatprep.subr.mxu0 %v723
          %1580 = vmatpush1.msra.mxu0 %v722
          %1581 = vmatprep.subr.mxu0 %v719
          %1582 = vmatpush1.msra.mxu0 %v718
          %1583 = vmatprep.subr.mxu0 %v715
          %1584 = vmatpush1.msra.mxu0 %v714
          %1585 = vmatprep.subr.mxu0 %v711
          %1586 = vmatpush1.msra.mxu0 %v710
          %1587 = vmatprep.subr.mxu0 %v707
          %1588 = vmatpush1.msra.mxu0 %v706
          %1589 = vmatprep.subr.mxu0 %v703
          %1590 = vmatpush1.msra.mxu0 %v702
          %1591 = vmatprep.subr.mxu0 %v699
          %1592 = vmatpush1.msra.mxu0 %v698
          %1593 = vmatprep.subr.mxu0 %v695
          %1594 = vmatpush1.msra.mxu0 %v694
          %1595 = vmatprep.subr.mxu0 %v691
          %1596 = vmatpush1.msra.mxu0 %v690
          %1597 = vmatprep.subr.mxu0 %v687
          %1598 = vmatpush1.msra.mxu0 %v686
          %1599 = vmatprep.subr.mxu0 0.0
          %1600 = vmatpush2.msra.mxu0 0.0
          %1601 = vmatprep.subr.mxu0 0.0
          %1602 = vmatpush2.msra.mxu0 0.0
          %1603 = vmatprep.subr.mxu0 0.0
          %1604 = vmatpush2.msra.mxu0 0.0
          %1605 = vmatprep.subr.mxu0 0.0
          %1606 = vmatpush2.msra.mxu0 0.0
          %1607 = vmatprep.subr.mxu0 0.0
          %1608 = vmatpush2.msra.mxu0 0.0
          %1609 = vmatprep.subr.mxu0 0.0
          %1610 = vmatpush2.msra.mxu0 0.0
          %1611 = vmatprep.subr.mxu0 0.0
          %1612 = vmatpush2.msra.mxu0 0.0
          %1613 = vmatprep.subr.mxu0 0.0
          %1614 = vmatpush2.msra.mxu0 0.0
          %1615 = vmatprep.subr.mxu0 0.0
          %1616 = vmatpush2.msra.mxu0 0.0
          %1617 = vmatprep.subr.mxu0 0.0
          %1618 = vmatpush2.msra.mxu0 0.0
          %1619 = vmatprep.subr.mxu0 0.0
          %1620 = vmatpush2.msra.mxu0 0.0
          %1621 = vmatprep.subr.mxu0 0.0
          %1622 = vmatpush2.msra.mxu0 0.0
          %1623 = vmatprep.subr.mxu0 0.0
          %1624 = vmatpush2.msra.mxu0 0.0
          %1625 = vmatprep.subr.mxu0 0.0
          %1626 = vmatpush2.msra.mxu0 0.0
          %1627 = vmatprep.subr.mxu0 0.0
          %1628 = vmatpush2.msra.mxu0 0.0
          %1629 = vmatprep.subr.mxu0 0.0
          %1630 = vmatpush2.msra.mxu0 0.0
          %1631 = vmatprep.mubr.f32.mxu0 0.0
          %1632 = vmatmul.mubr.f32.gmra.mxu0 %v1487
          %v1633 = vpop.f32.mrf.mxu0
          %v1634 = vadd.f32 0.0, %v1633
          %v1635 = vpop.f32.mrf.mxu0
          %v1636 = vadd.f32 0.0, %v1635
          %1637 = vdwg.mxu0
          %v1638 = vadd.f32 %v1492, %v1563
          %v1639 = vadd.f32 %v1493, %v1565
          %v1640 = vadd.f32 %v1494, %v1634
          %v1641 = vadd.f32 %v1495, %v1636
          %v1642 = vxor.u32 %v1638, 2147483648
          %v1643 = vmul.f32 %v1642, 1.442695
          %v1644 = vpow.pop %v1643
          %v1645 = vadd.f32 %v1644, 1.0
          %v1646 = vrcp.pop %v1645
          %v1647 = vmul.f32 1.0, %v1646
          %v1648 = vxor.u32 %v1639, 2147483648
          %v1649 = vmul.f32 %v1648, 1.442695
          %v1650 = vpow.pop %v1649
          %v1651 = vadd.f32 %v1650, 1.0
          %v1652 = vrcp.pop %v1651
          %v1653 = vmul.f32 1.0, %v1652
          %v1654 = vtanh.pop %v1640
          %v1655 = vxor.u32 %v1641, 2147483648
          %v1656 = vmul.f32 %v1655, 1.442695
          %v1657 = vpow.pop %v1656
          %v1658 = vadd.f32 %v1657, 1.0
          %v1659 = vrcp.pop %v1658
          %v1660 = vmul.f32 1.0, %v1659
          %v1661 = vmul.f32 %v1653, %v1488
          %v1662 = vmul.f32 %v1647, %v1654
          %v1663 = vadd.f32 %v1661, %v1662
          %v1664 = vtanh.pop %v1663
          %v1665 = vmul.f32 %v1660, %v1664
          %s1666 = smul.u32 %s34, 4
          %p1667 = scmp.lt.s32.totalorder %s1666, 10
          %s1668 = scalar_select %p1667, 1, 0
          %v1669 = vstv %s1668
          %vm1670 = vcmp.eq.s32.totalorder %v1669, 1
          %v1671 = vsel %vm1670, %v1663, %v1488
          %v1672 = vsel %vm1670, %v1665, %v1487
          %1673 = vst [vmem:[#allocation2] sm:$0xff] %v1672
          %1674 = vst [vmem:[#allocation3] sm:$0xff] %v1671
          %1675 = vst [vmem:[%s416] sm:$0xff] %v1672
          %v1676 = vld [vmem:[#allocation2] sm:$0xff]
          %v1677 = vld [vmem:[#allocation3] sm:$0xff]
          %s1678 = smul.u32 1, 4
          %s1679 = smul.addr %s1678, 8
          %s1680 = scalar_lea.vmem [#allocation4], %s1679
          %v1681 = vld [vmem:[%s1680] sm:$0xff]
          %v1682 = vld [vmem:[%s1680 + $0x8] sm:$0xff]
          %v1683 = vld [vmem:[%s1680 + $0x10] sm:$0xff]
          %v1684 = vld [vmem:[%s1680 + $0x18] sm:$0xff]
          %1685 = vmatprep.subr.mxu0 %v745
          %1686 = vmatpush1.msra.mxu0 %v744
          %1687 = vmatprep.subr.mxu0 %v741
          %1688 = vmatpush1.msra.mxu0 %v740
          %1689 = vmatprep.subr.mxu0 %v737
          %1690 = vmatpush1.msra.mxu0 %v736
          %1691 = vmatprep.subr.mxu0 %v733
          %1692 = vmatpush1.msra.mxu0 %v732
          %1693 = vmatprep.subr.mxu0 %v729
          %1694 = vmatpush1.msra.mxu0 %v728
          %1695 = vmatprep.subr.mxu0 %v725
          %1696 = vmatpush1.msra.mxu0 %v724
          %1697 = vmatprep.subr.mxu0 %v721
          %1698 = vmatpush1.msra.mxu0 %v720
          %1699 = vmatprep.subr.mxu0 %v717
          %1700 = vmatpush1.msra.mxu0 %v716
          %1701 = vmatprep.subr.mxu0 %v713
          %1702 = vmatpush1.msra.mxu0 %v712
          %1703 = vmatprep.subr.mxu0 %v709
          %1704 = vmatpush1.msra.mxu0 %v708
          %1705 = vmatprep.subr.mxu0 %v705
          %1706 = vmatpush1.msra.mxu0 %v704
          %1707 = vmatprep.subr.mxu0 %v701
          %1708 = vmatpush1.msra.mxu0 %v700
          %1709 = vmatprep.subr.mxu0 %v697
          %1710 = vmatpush1.msra.mxu0 %v696
          %1711 = vmatprep.subr.mxu0 %v693
          %1712 = vmatpush1.msra.mxu0 %v692
          %1713 = vmatprep.subr.mxu0 %v689
          %1714 = vmatpush1.msra.mxu0 %v688
          %1715 = vmatprep.subr.mxu0 %v685
          %1716 = vmatpush1.msra.mxu0 %v684
          %1717 = vmatprep.subr.mxu0 0.0
          %1718 = vmatpush2.msra.mxu0 0.0
          %1719 = vmatprep.subr.mxu0 0.0
          %1720 = vmatpush2.msra.mxu0 0.0
          %1721 = vmatprep.subr.mxu0 0.0
          %1722 = vmatpush2.msra.mxu0 0.0
          %1723 = vmatprep.subr.mxu0 0.0
          %1724 = vmatpush2.msra.mxu0 0.0
          %1725 = vmatprep.subr.mxu0 0.0
          %1726 = vmatpush2.msra.mxu0 0.0
          %1727 = vmatprep.subr.mxu0 0.0
          %1728 = vmatpush2.msra.mxu0 0.0
          %1729 = vmatprep.subr.mxu0 0.0
          %1730 = vmatpush2.msra.mxu0 0.0
          %1731 = vmatprep.subr.mxu0 0.0
          %1732 = vmatpush2.msra.mxu0 0.0
          %1733 = vmatprep.subr.mxu0 0.0
          %1734 = vmatpush2.msra.mxu0 0.0
          %1735 = vmatprep.subr.mxu0 0.0
          %1736 = vmatpush2.msra.mxu0 0.0
          %1737 = vmatprep.subr.mxu0 0.0
          %1738 = vmatpush2.msra.mxu0 0.0
          %1739 = vmatprep.subr.mxu0 0.0
          %1740 = vmatpush2.msra.mxu0 0.0
          %1741 = vmatprep.subr.mxu0 0.0
          %1742 = vmatpush2.msra.mxu0 0.0
          %1743 = vmatprep.subr.mxu0 0.0
          %1744 = vmatpush2.msra.mxu0 0.0
          %1745 = vmatprep.subr.mxu0 0.0
          %1746 = vmatpush2.msra.mxu0 0.0
          %1747 = vmatprep.subr.mxu0 0.0
          %1748 = vmatpush2.msra.mxu0 0.0
          %1749 = vmatprep.mubr.f32.mxu0 0.0
          %1750 = vmatmul.mubr.f32.gmra.mxu0 %v1676
          %v1751 = vpop.f32.mrf.mxu0
          %v1752 = vadd.f32 0.0, %v1751
          %v1753 = vpop.f32.mrf.mxu0
          %v1754 = vadd.f32 0.0, %v1753
          %1755 = vdwg.mxu0
          %1756 = vmatprep.subr.mxu0 %v747
          %1757 = vmatpush1.msra.mxu0 %v746
          %1758 = vmatprep.subr.mxu0 %v743
          %1759 = vmatpush1.msra.mxu0 %v742
          %1760 = vmatprep.subr.mxu0 %v739
          %1761 = vmatpush1.msra.mxu0 %v738
          %1762 = vmatprep.subr.mxu0 %v735
          %1763 = vmatpush1.msra.mxu0 %v734
          %1764 = vmatprep.subr.mxu0 %v731
          %1765 = vmatpush1.msra.mxu0 %v730
          %1766 = vmatprep.subr.mxu0 %v727
          %1767 = vmatpush1.msra.mxu0 %v726
          %1768 = vmatprep.subr.mxu0 %v723
          %1769 = vmatpush1.msra.mxu0 %v722
          %1770 = vmatprep.subr.mxu0 %v719
          %1771 = vmatpush1.msra.mxu0 %v718
          %1772 = vmatprep.subr.mxu0 %v715
          %1773 = vmatpush1.msra.mxu0 %v714
          %1774 = vmatprep.subr.mxu0 %v711
          %1775 = vmatpush1.msra.mxu0 %v710
          %1776 = vmatprep.subr.mxu0 %v707
          %1777 = vmatpush1.msra.mxu0 %v706
          %1778 = vmatprep.subr.mxu0 %v703
          %1779 = vmatpush1.msra.mxu0 %v702
          %1780 = vmatprep.subr.mxu0 %v699
          %1781 = vmatpush1.msra.mxu0 %v698
          %1782 = vmatprep.subr.mxu0 %v695
          %1783 = vmatpush1.msra.mxu0 %v694
          %1784 = vmatprep.subr.mxu0 %v691
          %1785 = vmatpush1.msra.mxu0 %v690
          %1786 = vmatprep.subr.mxu0 %v687
          %1787 = vmatpush1.msra.mxu0 %v686
          %1788 = vmatprep.subr.mxu0 0.0
          %1789 = vmatpush2.msra.mxu0 0.0
          %1790 = vmatprep.subr.mxu0 0.0
          %1791 = vmatpush2.msra.mxu0 0.0
          %1792 = vmatprep.subr.mxu0 0.0
          %1793 = vmatpush2.msra.mxu0 0.0
          %1794 = vmatprep.subr.mxu0 0.0
          %1795 = vmatpush2.msra.mxu0 0.0
          %1796 = vmatprep.subr.mxu0 0.0
          %1797 = vmatpush2.msra.mxu0 0.0
          %1798 = vmatprep.subr.mxu0 0.0
          %1799 = vmatpush2.msra.mxu0 0.0
          %1800 = vmatprep.subr.mxu0 0.0
          %1801 = vmatpush2.msra.mxu0 0.0
          %1802 = vmatprep.subr.mxu0 0.0
          %1803 = vmatpush2.msra.mxu0 0.0
          %1804 = vmatprep.subr.mxu0 0.0
          %1805 = vmatpush2.msra.mxu0 0.0
          %1806 = vmatprep.subr.mxu0 0.0
          %1807 = vmatpush2.msra.mxu0 0.0
          %1808 = vmatprep.subr.mxu0 0.0
          %1809 = vmatpush2.msra.mxu0 0.0
          %1810 = vmatprep.subr.mxu0 0.0
          %1811 = vmatpush2.msra.mxu0 0.0
          %1812 = vmatprep.subr.mxu0 0.0
          %1813 = vmatpush2.msra.mxu0 0.0
          %1814 = vmatprep.subr.mxu0 0.0
          %1815 = vmatpush2.msra.mxu0 0.0
          %1816 = vmatprep.subr.mxu0 0.0
          %1817 = vmatpush2.msra.mxu0 0.0
          %1818 = vmatprep.subr.mxu0 0.0
          %1819 = vmatpush2.msra.mxu0 0.0
          %1820 = vmatprep.mubr.f32.mxu0 0.0
          %1821 = vmatmul.mubr.f32.gmra.mxu0 %v1676
          %v1822 = vpop.f32.mrf.mxu0
          %v1823 = vadd.f32 0.0, %v1822
          %v1824 = vpop.f32.mrf.mxu0
          %v1825 = vadd.f32 0.0, %v1824
          %1826 = vdwg.mxu0
          %v1827 = vadd.f32 %v1681, %v1752
          %v1828 = vadd.f32 %v1682, %v1754
          %v1829 = vadd.f32 %v1683, %v1823
          %v1830 = vadd.f32 %v1684, %v1825
          %v1831 = vxor.u32 %v1827, 2147483648
          %v1832 = vmul.f32 %v1831, 1.442695
          %v1833 = vpow.pop %v1832
          %v1834 = vadd.f32 %v1833, 1.0
          %v1835 = vrcp.pop %v1834
          %v1836 = vmul.f32 1.0, %v1835
          %v1837 = vxor.u32 %v1828, 2147483648
          %v1838 = vmul.f32 %v1837, 1.442695
          %v1839 = vpow.pop %v1838
          %v1840 = vadd.f32 %v1839, 1.0
          %v1841 = vrcp.pop %v1840
          %v1842 = vmul.f32 1.0, %v1841
          %v1843 = vtanh.pop %v1829
          %v1844 = vxor.u32 %v1830, 2147483648
          %v1845 = vmul.f32 %v1844, 1.442695
          %v1846 = vpow.pop %v1845
          %v1847 = vadd.f32 %v1846, 1.0
          %v1848 = vrcp.pop %v1847
          %v1849 = vmul.f32 1.0, %v1848
          %v1850 = vmul.f32 %v1842, %v1677
          %v1851 = vmul.f32 %v1836, %v1843
          %v1852 = vadd.f32 %v1850, %v1851
          %v1853 = vtanh.pop %v1852
          %v1854 = vmul.f32 %v1849, %v1853
          %s1855 = sadd.s32 %s1666, 1
          %p1856 = scmp.lt.s32.totalorder %s1855, 10
          %s1857 = scalar_select %p1856, 1, 0
          %v1858 = vstv %s1857
          %vm1859 = vcmp.eq.s32.totalorder %v1858, 1
          %v1860 = vsel %vm1859, %v1852, %v1677
          %v1861 = vsel %vm1859, %v1854, %v1676
          %1862 = vst [vmem:[#allocation2] sm:$0xff] %v1861
          %1863 = vst [vmem:[#allocation3] sm:$0xff] %v1860
          %s1864 = scalar_lea.vmem %s416, 8 [#allocation14]
          %1865 = vst [vmem:[%s1864] sm:$0xff] %v1861
          %v1866 = vld [vmem:[#allocation2] sm:$0xff]
          %v1867 = vld [vmem:[#allocation3] sm:$0xff]
          %s1868 = smul.u32 2, 4
          %s1869 = smul.addr %s1868, 8
          %s1870 = scalar_lea.vmem [#allocation4], %s1869
          %v1871 = vld [vmem:[%s1870] sm:$0xff]
          %v1872 = vld [vmem:[%s1870 + $0x8] sm:$0xff]
          %v1873 = vld [vmem:[%s1870 + $0x10] sm:$0xff]
          %v1874 = vld [vmem:[%s1870 + $0x18] sm:$0xff]
          %1875 = vmatprep.subr.mxu0 %v745
          %1876 = vmatpush1.msra.mxu0 %v744
          %1877 = vmatprep.subr.mxu0 %v741
          %1878 = vmatpush1.msra.mxu0 %v740
          %1879 = vmatprep.subr.mxu0 %v737
          %1880 = vmatpush1.msra.mxu0 %v736
          %1881 = vmatprep.subr.mxu0 %v733
          %1882 = vmatpush1.msra.mxu0 %v732
          %1883 = vmatprep.subr.mxu0 %v729
          %1884 = vmatpush1.msra.mxu0 %v728
          %1885 = vmatprep.subr.mxu0 %v725
          %1886 = vmatpush1.msra.mxu0 %v724
          %1887 = vmatprep.subr.mxu0 %v721
          %1888 = vmatpush1.msra.mxu0 %v720
          %1889 = vmatprep.subr.mxu0 %v717
          %1890 = vmatpush1.msra.mxu0 %v716
          %1891 = vmatprep.subr.mxu0 %v713
          %1892 = vmatpush1.msra.mxu0 %v712
          %1893 = vmatprep.subr.mxu0 %v709
          %1894 = vmatpush1.msra.mxu0 %v708
          %1895 = vmatprep.subr.mxu0 %v705
          %1896 = vmatpush1.msra.mxu0 %v704
          %1897 = vmatprep.subr.mxu0 %v701
          %1898 = vmatpush1.msra.mxu0 %v700
          %1899 = vmatprep.subr.mxu0 %v697
          %1900 = vmatpush1.msra.mxu0 %v696
          %1901 = vmatprep.subr.mxu0 %v693
          %1902 = vmatpush1.msra.mxu0 %v692
          %1903 = vmatprep.subr.mxu0 %v689
          %1904 = vmatpush1.msra.mxu0 %v688
          %1905 = vmatprep.subr.mxu0 %v685
          %1906 = vmatpush1.msra.mxu0 %v684
          %1907 = vmatprep.subr.mxu0 0.0
          %1908 = vmatpush2.msra.mxu0 0.0
          %1909 = vmatprep.subr.mxu0 0.0
          %1910 = vmatpush2.msra.mxu0 0.0
          %1911 = vmatprep.subr.mxu0 0.0
          %1912 = vmatpush2.msra.mxu0 0.0
          %1913 = vmatprep.subr.mxu0 0.0
          %1914 = vmatpush2.msra.mxu0 0.0
          %1915 = vmatprep.subr.mxu0 0.0
          %1916 = vmatpush2.msra.mxu0 0.0
          %1917 = vmatprep.subr.mxu0 0.0
          %1918 = vmatpush2.msra.mxu0 0.0
          %1919 = vmatprep.subr.mxu0 0.0
          %1920 = vmatpush2.msra.mxu0 0.0
          %1921 = vmatprep.subr.mxu0 0.0
          %1922 = vmatpush2.msra.mxu0 0.0
          %1923 = vmatprep.subr.mxu0 0.0
          %1924 = vmatpush2.msra.mxu0 0.0
          %1925 = vmatprep.subr.mxu0 0.0
          %1926 = vmatpush2.msra.mxu0 0.0
          %1927 = vmatprep.subr.mxu0 0.0
          %1928 = vmatpush2.msra.mxu0 0.0
          %1929 = vmatprep.subr.mxu0 0.0
          %1930 = vmatpush2.msra.mxu0 0.0
          %1931 = vmatprep.subr.mxu0 0.0
          %1932 = vmatpush2.msra.mxu0 0.0
          %1933 = vmatprep.subr.mxu0 0.0
          %1934 = vmatpush2.msra.mxu0 0.0
          %1935 = vmatprep.subr.mxu0 0.0
          %1936 = vmatpush2.msra.mxu0 0.0
          %1937 = vmatprep.subr.mxu0 0.0
          %1938 = vmatpush2.msra.mxu0 0.0
          %1939 = vmatprep.mubr.f32.mxu0 0.0
          %1940 = vmatmul.mubr.f32.gmra.mxu0 %v1866
          %v1941 = vpop.f32.mrf.mxu0
          %v1942 = vadd.f32 0.0, %v1941
          %v1943 = vpop.f32.mrf.mxu0
          %v1944 = vadd.f32 0.0, %v1943
          %1945 = vdwg.mxu0
          %1946 = vmatprep.subr.mxu0 %v747
          %1947 = vmatpush1.msra.mxu0 %v746
          %1948 = vmatprep.subr.mxu0 %v743
          %1949 = vmatpush1.msra.mxu0 %v742
          %1950 = vmatprep.subr.mxu0 %v739
          %1951 = vmatpush1.msra.mxu0 %v738
          %1952 = vmatprep.subr.mxu0 %v735
          %1953 = vmatpush1.msra.mxu0 %v734
          %1954 = vmatprep.subr.mxu0 %v731
          %1955 = vmatpush1.msra.mxu0 %v730
          %1956 = vmatprep.subr.mxu0 %v727
          %1957 = vmatpush1.msra.mxu0 %v726
          %1958 = vmatprep.subr.mxu0 %v723
          %1959 = vmatpush1.msra.mxu0 %v722
          %1960 = vmatprep.subr.mxu0 %v719
          %1961 = vmatpush1.msra.mxu0 %v718
          %1962 = vmatprep.subr.mxu0 %v715
          %1963 = vmatpush1.msra.mxu0 %v714
          %1964 = vmatprep.subr.mxu0 %v711
          %1965 = vmatpush1.msra.mxu0 %v710
          %1966 = vmatprep.subr.mxu0 %v707
          %1967 = vmatpush1.msra.mxu0 %v706
          %1968 = vmatprep.subr.mxu0 %v703
          %1969 = vmatpush1.msra.mxu0 %v702
          %1970 = vmatprep.subr.mxu0 %v699
          %1971 = vmatpush1.msra.mxu0 %v698
          %1972 = vmatprep.subr.mxu0 %v695
          %1973 = vmatpush1.msra.mxu0 %v694
          %1974 = vmatprep.subr.mxu0 %v691
          %1975 = vmatpush1.msra.mxu0 %v690
          %1976 = vmatprep.subr.mxu0 %v687
          %1977 = vmatpush1.msra.mxu0 %v686
          %1978 = vmatprep.subr.mxu0 0.0
          %1979 = vmatpush2.msra.mxu0 0.0
          %1980 = vmatprep.subr.mxu0 0.0
          %1981 = vmatpush2.msra.mxu0 0.0
          %1982 = vmatprep.subr.mxu0 0.0
          %1983 = vmatpush2.msra.mxu0 0.0
          %1984 = vmatprep.subr.mxu0 0.0
          %1985 = vmatpush2.msra.mxu0 0.0
          %1986 = vmatprep.subr.mxu0 0.0
          %1987 = vmatpush2.msra.mxu0 0.0
          %1988 = vmatprep.subr.mxu0 0.0
          %1989 = vmatpush2.msra.mxu0 0.0
          %1990 = vmatprep.subr.mxu0 0.0
          %1991 = vmatpush2.msra.mxu0 0.0
          %1992 = vmatprep.subr.mxu0 0.0
          %1993 = vmatpush2.msra.mxu0 0.0
          %1994 = vmatprep.subr.mxu0 0.0
          %1995 = vmatpush2.msra.mxu0 0.0
          %1996 = vmatprep.subr.mxu0 0.0
          %1997 = vmatpush2.msra.mxu0 0.0
          %1998 = vmatprep.subr.mxu0 0.0
          %1999 = vmatpush2.msra.mxu0 0.0
          %2000 = vmatprep.subr.mxu0 0.0
          %2001 = vmatpush2.msra.mxu0 0.0
          %2002 = vmatprep.subr.mxu0 0.0
          %2003 = vmatpush2.msra.mxu0 0.0
          %2004 = vmatprep.subr.mxu0 0.0
          %2005 = vmatpush2.msra.mxu0 0.0
          %2006 = vmatprep.subr.mxu0 0.0
          %2007 = vmatpush2.msra.mxu0 0.0
          %2008 = vmatprep.subr.mxu0 0.0
          %2009 = vmatpush2.msra.mxu0 0.0
          %2010 = vmatprep.mubr.f32.mxu0 0.0
          %2011 = vmatmul.mubr.f32.gmra.mxu0 %v1866
          %v2012 = vpop.f32.mrf.mxu0
          %v2013 = vadd.f32 0.0, %v2012
          %v2014 = vpop.f32.mrf.mxu0
          %v2015 = vadd.f32 0.0, %v2014
          %2016 = vdwg.mxu0
          %v2017 = vadd.f32 %v1871, %v1942
          %v2018 = vadd.f32 %v1872, %v1944
          %v2019 = vadd.f32 %v1873, %v2013
          %v2020 = vadd.f32 %v1874, %v2015
          %v2021 = vxor.u32 %v2017, 2147483648
          %v2022 = vmul.f32 %v2021, 1.442695
          %v2023 = vpow.pop %v2022
          %v2024 = vadd.f32 %v2023, 1.0
          %v2025 = vrcp.pop %v2024
          %v2026 = vmul.f32 1.0, %v2025
          %v2027 = vxor.u32 %v2018, 2147483648
          %v2028 = vmul.f32 %v2027, 1.442695
          %v2029 = vpow.pop %v2028
          %v2030 = vadd.f32 %v2029, 1.0
          %v2031 = vrcp.pop %v2030
          %v2032 = vmul.f32 1.0, %v2031
          %v2033 = vtanh.pop %v2019
          %v2034 = vxor.u32 %v2020, 2147483648
          %v2035 = vmul.f32 %v2034, 1.442695
          %v2036 = vpow.pop %v2035
          %v2037 = vadd.f32 %v2036, 1.0
          %v2038 = vrcp.pop %v2037
          %v2039 = vmul.f32 1.0, %v2038
          %v2040 = vmul.f32 %v2032, %v1867
          %v2041 = vmul.f32 %v2026, %v2033
          %v2042 = vadd.f32 %v2040, %v2041
          %v2043 = vtanh.pop %v2042
          %v2044 = vmul.f32 %v2039, %v2043
          %s2045 = sadd.s32 %s1666, 2
          %p2046 = scmp.lt.s32.totalorder %s2045, 10
          %s2047 = scalar_select %p2046, 1, 0
          %v2048 = vstv %s2047
          %vm2049 = vcmp.eq.s32.totalorder %v2048, 1
          %v2050 = vsel %vm2049, %v2042, %v1867
          %v2051 = vsel %vm2049, %v2044, %v1866
          %2052 = vst [vmem:[#allocation2] sm:$0xff] %v2051
          %2053 = vst [vmem:[#allocation3] sm:$0xff] %v2050
          %s2054 = scalar_lea.vmem %s416, 16 [#allocation14]
          %2055 = vst [vmem:[%s2054] sm:$0xff] %v2051
          %v2056 = vld [vmem:[#allocation2] sm:$0xff]
          %v2057 = vld [vmem:[#allocation3] sm:$0xff]
          %s2058 = smul.u32 3, 4
          %s2059 = smul.addr %s2058, 8
          %s2060 = scalar_lea.vmem [#allocation4], %s2059
          %v2061 = vld [vmem:[%s2060] sm:$0xff]
          %v2062 = vld [vmem:[%s2060 + $0x8] sm:$0xff]
          %v2063 = vld [vmem:[%s2060 + $0x10] sm:$0xff]
          %v2064 = vld [vmem:[%s2060 + $0x18] sm:$0xff]
          %2065 = vmatprep.subr.mxu0 %v745
          %2066 = vmatpush1.msra.mxu0 %v744
          %2067 = vmatprep.subr.mxu0 %v741
          %2068 = vmatpush1.msra.mxu0 %v740
          %2069 = vmatprep.subr.mxu0 %v737
          %2070 = vmatpush1.msra.mxu0 %v736
          %2071 = vmatprep.subr.mxu0 %v733
          %2072 = vmatpush1.msra.mxu0 %v732
          %2073 = vmatprep.subr.mxu0 %v729
          %2074 = vmatpush1.msra.mxu0 %v728
          %2075 = vmatprep.subr.mxu0 %v725
          %2076 = vmatpush1.msra.mxu0 %v724
          %2077 = vmatprep.subr.mxu0 %v721
          %2078 = vmatpush1.msra.mxu0 %v720
          %2079 = vmatprep.subr.mxu0 %v717
          %2080 = vmatpush1.msra.mxu0 %v716
          %2081 = vmatprep.subr.mxu0 %v713
          %2082 = vmatpush1.msra.mxu0 %v712
          %2083 = vmatprep.subr.mxu0 %v709
          %2084 = vmatpush1.msra.mxu0 %v708
          %2085 = vmatprep.subr.mxu0 %v705
          %2086 = vmatpush1.msra.mxu0 %v704
          %2087 = vmatprep.subr.mxu0 %v701
          %2088 = vmatpush1.msra.mxu0 %v700
          %2089 = vmatprep.subr.mxu0 %v697
          %2090 = vmatpush1.msra.mxu0 %v696
          %2091 = vmatprep.subr.mxu0 %v693
          %2092 = vmatpush1.msra.mxu0 %v692
          %2093 = vmatprep.subr.mxu0 %v689
          %2094 = vmatpush1.msra.mxu0 %v688
          %2095 = vmatprep.subr.mxu0 %v685
          %2096 = vmatpush1.msra.mxu0 %v684
          %2097 = vmatprep.subr.mxu0 0.0
          %2098 = vmatpush2.msra.mxu0 0.0
          %2099 = vmatprep.subr.mxu0 0.0
          %2100 = vmatpush2.msra.mxu0 0.0
          %2101 = vmatprep.subr.mxu0 0.0
          %2102 = vmatpush2.msra.mxu0 0.0
          %2103 = vmatprep.subr.mxu0 0.0
          %2104 = vmatpush2.msra.mxu0 0.0
          %2105 = vmatprep.subr.mxu0 0.0
          %2106 = vmatpush2.msra.mxu0 0.0
          %2107 = vmatprep.subr.mxu0 0.0
          %2108 = vmatpush2.msra.mxu0 0.0
          %2109 = vmatprep.subr.mxu0 0.0
          %2110 = vmatpush2.msra.mxu0 0.0
          %2111 = vmatprep.subr.mxu0 0.0
          %2112 = vmatpush2.msra.mxu0 0.0
          %2113 = vmatprep.subr.mxu0 0.0
          %2114 = vmatpush2.msra.mxu0 0.0
          %2115 = vmatprep.subr.mxu0 0.0
          %2116 = vmatpush2.msra.mxu0 0.0
          %2117 = vmatprep.subr.mxu0 0.0
          %2118 = vmatpush2.msra.mxu0 0.0
          %2119 = vmatprep.subr.mxu0 0.0
          %2120 = vmatpush2.msra.mxu0 0.0
          %2121 = vmatprep.subr.mxu0 0.0
          %2122 = vmatpush2.msra.mxu0 0.0
          %2123 = vmatprep.subr.mxu0 0.0
          %2124 = vmatpush2.msra.mxu0 0.0
          %2125 = vmatprep.subr.mxu0 0.0
          %2126 = vmatpush2.msra.mxu0 0.0
          %2127 = vmatprep.subr.mxu0 0.0
          %2128 = vmatpush2.msra.mxu0 0.0
          %2129 = vmatprep.mubr.f32.mxu0 0.0
          %2130 = vmatmul.mubr.f32.gmra.mxu0 %v2056
          %v2131 = vpop.f32.mrf.mxu0
          %v2132 = vadd.f32 0.0, %v2131
          %v2133 = vpop.f32.mrf.mxu0
          %v2134 = vadd.f32 0.0, %v2133
          %2135 = vdwg.mxu0
          %2136 = vmatprep.subr.mxu0 %v747
          %2137 = vmatpush1.msra.mxu0 %v746
          %2138 = vmatprep.subr.mxu0 %v743
          %2139 = vmatpush1.msra.mxu0 %v742
          %2140 = vmatprep.subr.mxu0 %v739
          %2141 = vmatpush1.msra.mxu0 %v738
          %2142 = vmatprep.subr.mxu0 %v735
          %2143 = vmatpush1.msra.mxu0 %v734
          %2144 = vmatprep.subr.mxu0 %v731
          %2145 = vmatpush1.msra.mxu0 %v730
          %2146 = vmatprep.subr.mxu0 %v727
          %2147 = vmatpush1.msra.mxu0 %v726
          %2148 = vmatprep.subr.mxu0 %v723
          %2149 = vmatpush1.msra.mxu0 %v722
          %2150 = vmatprep.subr.mxu0 %v719
          %2151 = vmatpush1.msra.mxu0 %v718
          %2152 = vmatprep.subr.mxu0 %v715
          %2153 = vmatpush1.msra.mxu0 %v714
          %2154 = vmatprep.subr.mxu0 %v711
          %2155 = vmatpush1.msra.mxu0 %v710
          %2156 = vmatprep.subr.mxu0 %v707
          %2157 = vmatpush1.msra.mxu0 %v706
          %2158 = vmatprep.subr.mxu0 %v703
          %2159 = vmatpush1.msra.mxu0 %v702
          %2160 = vmatprep.subr.mxu0 %v699
          %2161 = vmatpush1.msra.mxu0 %v698
          %2162 = vmatprep.subr.mxu0 %v695
          %2163 = vmatpush1.msra.mxu0 %v694
          %2164 = vmatprep.subr.mxu0 %v691
          %2165 = vmatpush1.msra.mxu0 %v690
          %2166 = vmatprep.subr.mxu0 %v687
          %2167 = vmatpush1.msra.mxu0 %v686
          %2168 = vmatprep.subr.mxu0 0.0
          %2169 = vmatpush2.msra.mxu0 0.0
          %2170 = vmatprep.subr.mxu0 0.0
          %2171 = vmatpush2.msra.mxu0 0.0
          %2172 = vmatprep.subr.mxu0 0.0
          %2173 = vmatpush2.msra.mxu0 0.0
          %2174 = vmatprep.subr.mxu0 0.0
          %2175 = vmatpush2.msra.mxu0 0.0
          %2176 = vmatprep.subr.mxu0 0.0
          %2177 = vmatpush2.msra.mxu0 0.0
          %2178 = vmatprep.subr.mxu0 0.0
          %2179 = vmatpush2.msra.mxu0 0.0
          %2180 = vmatprep.subr.mxu0 0.0
          %2181 = vmatpush2.msra.mxu0 0.0
          %2182 = vmatprep.subr.mxu0 0.0
          %2183 = vmatpush2.msra.mxu0 0.0
          %2184 = vmatprep.subr.mxu0 0.0
          %2185 = vmatpush2.msra.mxu0 0.0
          %2186 = vmatprep.subr.mxu0 0.0
          %2187 = vmatpush2.msra.mxu0 0.0
          %2188 = vmatprep.subr.mxu0 0.0
          %2189 = vmatpush2.msra.mxu0 0.0
          %2190 = vmatprep.subr.mxu0 0.0
          %2191 = vmatpush2.msra.mxu0 0.0
          %2192 = vmatprep.subr.mxu0 0.0
          %2193 = vmatpush2.msra.mxu0 0.0
          %2194 = vmatprep.subr.mxu0 0.0
          %2195 = vmatpush2.msra.mxu0 0.0
          %2196 = vmatprep.subr.mxu0 0.0
          %2197 = vmatpush2.msra.mxu0 0.0
          %2198 = vmatprep.subr.mxu0 0.0
          %2199 = vmatpush2.msra.mxu0 0.0
          %2200 = vmatprep.mubr.f32.mxu0 0.0
          %2201 = vmatmul.mubr.f32.gmra.mxu0 %v2056
          %v2202 = vpop.f32.mrf.mxu0
          %v2203 = vadd.f32 0.0, %v2202
          %v2204 = vpop.f32.mrf.mxu0
          %v2205 = vadd.f32 0.0, %v2204
          %2206 = vdwg.mxu0
          %v2207 = vadd.f32 %v2061, %v2132
          %v2208 = vadd.f32 %v2062, %v2134
          %v2209 = vadd.f32 %v2063, %v2203
          %v2210 = vadd.f32 %v2064, %v2205
          %v2211 = vxor.u32 %v2207, 2147483648
          %v2212 = vmul.f32 %v2211, 1.442695
          %v2213 = vpow.pop %v2212
          %v2214 = vadd.f32 %v2213, 1.0
          %v2215 = vrcp.pop %v2214
          %v2216 = vmul.f32 1.0, %v2215
          %v2217 = vxor.u32 %v2208, 2147483648
          %v2218 = vmul.f32 %v2217, 1.442695
          %v2219 = vpow.pop %v2218
          %v2220 = vadd.f32 %v2219, 1.0
          %v2221 = vrcp.pop %v2220
          %v2222 = vmul.f32 1.0, %v2221
          %v2223 = vtanh.pop %v2209
          %v2224 = vxor.u32 %v2210, 2147483648
          %v2225 = vmul.f32 %v2224, 1.442695
          %v2226 = vpow.pop %v2225
          %v2227 = vadd.f32 %v2226, 1.0
          %v2228 = vrcp.pop %v2227
          %v2229 = vmul.f32 1.0, %v2228
          %v2230 = vmul.f32 %v2222, %v2057
          %v2231 = vmul.f32 %v2216, %v2223
          %v2232 = vadd.f32 %v2230, %v2231
          %v2233 = vtanh.pop %v2232
          %v2234 = vmul.f32 %v2229, %v2233
          %s2235 = sadd.s32 %s1666, 3
          %p2236 = scmp.lt.s32.totalorder %s2235, 10
          %s2237 = scalar_select %p2236, 1, 0
          %v2238 = vstv %s2237
          %vm2239 = vcmp.eq.s32.totalorder %v2238, 1
          %v2240 = vsel %vm2239, %v2232, %v2057
          %v2241 = vsel %vm2239, %v2234, %v2056
          %2242 = vst [vmem:[#allocation2] sm:$0xff] %v2241
          %2243 = vst [vmem:[#allocation3] sm:$0xff] %v2240
          %s2244 = scalar_lea.vmem %s416, 24 [#allocation14]
          %2245 = vst [vmem:[%s2244] sm:$0xff] %v2241
          %v2246 = vld [vmem:[#allocation2] sm:$0xff]
          %2247 = vst [vmem:[#allocation15] sm:$0xff] %v2246
          %v2248 = vld [vmem:[#allocation3] sm:$0xff]
          %2249 = vst [vmem:[#allocation17] sm:$0xff] %v2248
        $region76: #{tpu_custom_call.1} parent=43 // pred_fallthru
          _
        %s2250 = sand.u32 %s194, 1
        %s2251 = scalar_lea.sflag [#allocation7], %s2250
        %s2252 = sand.u32 %s194, 1
        %s2253 = smul.addr %s2252, 32
        %s2254 = scalar_lea.vmem [#allocation14], %s2253
        // Predicated region
        $region77: #{tpu_custom_call.1} parent=43 // pred_check
          %p2255 = pneg %p204
        $region78: #{tpu_custom_call.1} parent=43 // pred_check_branch
          %2257 = sbr.rel (%p2255) target = $region80
        $region79: #{tpu_custom_call.1} parent=43 // pred_region
          %s2258 = smul.u32 4, %s34
          %s2260 = ssub.s32 512, 512
          %2261 = vsyncadd %s2251, %s2260
          %s2262 = sadd.s32 %s33, %s2258
          %s2263 = smul.addr %s2262, 128
          %s2264 = scalar_lea.hbm %s6, %s2263
          %s2265 = sshll.u32 %s2254, 4
          %s2266 = int_to_ptr.vmem [resolvable:$true] %s2265
          %2271 = dma.vmem_to_hbm [thread:$0]  %s2266, 512, %s2264, %s2251, 128, 128, 8
        $region80: #{tpu_custom_call.1} parent=43 // pred_fallthru
          _
        // Predicated region
        $region81: #{tpu_custom_call.1} parent=43 // pred_check
          %p2272 = pneg %p230
        $region82: #{tpu_custom_call.1} parent=43 // pred_check_branch
          %2274 = sbr.rel (%p2272) target = $region84
        $region83: #{tpu_custom_call.1} parent=43 // pred_region
          %s2276 = ssub.s32 128, 128
          %2277 = vsyncadd [#allocation16], %s2276
          %s2278 = smul.addr %s33, 128
          %s2279 = scalar_lea.hbm %s7, %s2278
          %s2281 = sshll.u32 [#allocation15], 4
          %s2282 = int_to_ptr.vmem [resolvable:$true] %s2281
          %2284 = dma.vmem_to_hbm [thread:$0]  %s2282, 128, %s2279, [#allocation16]
        $region84: #{tpu_custom_call.1} parent=43 // pred_fallthru
          _
        // Predicated region
        $region85: #{tpu_custom_call.1} parent=43 // pred_check
          %p2285 = pneg %p256
        $region86: #{tpu_custom_call.1} parent=43 // pred_check_branch
          %2287 = sbr.rel (%p2285) target = $region88
        $region87: #{tpu_custom_call.1} parent=43 // pred_region
          %s2289 = ssub.s32 128, 128
          %2290 = vsyncadd [#allocation16], %s2289
          %s2291 = smul.addr %s33, 128
          %s2292 = scalar_lea.hbm %s8, %s2291
          %s2294 = sshll.u32 [#allocation17], 4
          %s2295 = int_to_ptr.vmem [resolvable:$true] %s2294
          %2297 = dma.vmem_to_hbm [thread:$0]  %s2295, 128, %s2292, [#allocation16]
        $region88: #{tpu_custom_call.1} parent=43 // pred_fallthru
          _
        // Predicated region
        $region89: #{tpu_custom_call.1} parent=43 // pred_check
          %p2298 = pneg %p230
        $region90: #{tpu_custom_call.1} parent=43 // pred_check_branch
          %2300 = sbr.rel (%p2298) target = $region92
        $region91: #{tpu_custom_call.1} parent=43 // pred_region
          %2301 = dma.done [#allocation16], 128
        $region92: #{tpu_custom_call.1} parent=43 // pred_fallthru
          _
        // Predicated region
        $region93: #{tpu_custom_call.1} parent=43 // pred_check
          %p2302 = pneg %p256
        $region94: #{tpu_custom_call.1} parent=43 // pred_check_branch
          %2304 = sbr.rel (%p2302) target = $region96
        $region95: #{tpu_custom_call.1} parent=43 // pred_region
          %2305 = dma.done [#allocation16], 128
        $region96: #{tpu_custom_call.1} parent=43 // pred_fallthru
          _
      $region44: #{tpu_custom_call.1} parent=5 // pred_fallthru
        _
      %p2306 = scmp.le.s32.totalorder 2, %s24
      // Predicated region
      $region97: #{tpu_custom_call.1} parent=5 // pred_check
        %p2307 = pneg %p2306
      $region98: #{tpu_custom_call.1} parent=5 // pred_check_branch
        %2309 = sbr.rel (%p2307) target = $region100
      $region99: #{tpu_custom_call.1} parent=5 // pred_region
        %s2310 = ssub.s32 %s24, 2
        // Predicated region
        $region101: #{tpu_custom_call.1} parent=99 // pred_check
          %p2311 = pneg %p210
        $region102: #{tpu_custom_call.1} parent=99 // pred_check_branch
          %2313 = sbr.rel (%p2311) target = $region104
        $region103: #{tpu_custom_call.1} parent=99 // pred_region
          %s2314 = sand.u32 %s195, 1
          %s2315 = scalar_lea.sflag [#allocation7], %s2314
          %s2316 = sand.u32 %s195, 1
          %s2317 = smul.addr %s2316, 32
          %s2318 = scalar_lea.vmem [#allocation14], %s2317
          %2319 = dma.done %s2315, 512
        $region104: #{tpu_custom_call.1} parent=99 // pred_fallthru
          _
      $region100: #{tpu_custom_call.1} parent=5 // pred_fallthru
        _
    $region6: #{tpu_custom_call.1} parent=1 // loop_footer
      %s28 = sadd.s32 1, %s24
    $region7: #{tpu_custom_call.1} parent=1 // loop_footer_branch
      %23 = sbr.rel target = $region3
    $region8: #{tpu_custom_call.1} parent=1 // loop_exit
      _
    %2320 = vsyncpa [#allocation6], 1
    %s2321 = scalar_lea.sflag [#allocation6], 1
    %2322 = vsyncpa %s2321, 1
    %2323 = vsyncpa [#allocation9], 1
    %2324 = vsyncpa [#allocation12], 1
    %2325 = vsyncpa [#allocation7], 1
    %s2326 = scalar_lea.sflag [#allocation7], 1
    %2327 = vsyncpa %s2326, 1
    %2328 = vsyncpa [#allocation16], 1

// kernel: tpu_custom_call.1
$region0: #{tpu_custom_call.1}
  #allocation0 [shape = 'u32[]', space=smem, size = 0x4, offset = 0x4, fixed_abs, tag = 'smem constant byte address 0x4 - core index']
  #allocation1 [shape = 'u32[144,128]{1,0:T(1,128)}', space=vmem, size = 0x12000, scoped, tag = 'internal scratch']
  #allocation2 [shape = 'f32[8,128]{1,0:T(8,128)}', space=vmem, size = 0x1000, scoped, tag = 'scratch operand']
  #allocation3 [shape = 'f32[8,128]{1,0:T(8,128)}', space=vmem, size = 0x1000, scoped, tag = 'scratch operand']
  #allocation4 [shape = 'f32[32,512]{1,0:T(8,128)}', space=vmem, size = 0x10000, scoped, tag = 'scratch operand']
  %s0 = inlined_call_operand.hbm [shape: f32[12,8,32], index: 0, kind: input, shape index: {}]
  %s1 = inlined_call_operand.hbm [shape: f32[32,512], index: 1, kind: input, shape index: {}]
  %s2 = inlined_call_operand.hbm [shape: f32[128,512], index: 2, kind: input, shape index: {}]
  %s3 = inlined_call_operand.hbm [shape: f32[1,512], index: 3, kind: input, shape index: {}]
  %s4 = inlined_call_operand.hbm [shape: f32[8,128], index: 4, kind: input, shape index: {}]
  %s5 = inlined_call_operand.vmem [shape: f32[8,128], index: 5, kind: input, shape index: {}]
  %s6 = inlined_call_operand.hbm [shape: f32[12,8,128], index: 6, kind: output, shape index: {0}]
  %s7 = inlined_call_operand.hbm [shape: f32[8,128], index: 7, kind: output, shape index: {1}]
  %s8 = inlined_call_operand.hbm [shape: f32[8,128], index: 8, kind: output, shape index: {2}]
  %9 = xla_tuple %s6, %s7, %s8
  %s10 = sld [smem:[#allocation0]]
  $region105: #{tpu_custom_call.1} parent=0
    _
  %s12 = ssub.s32 1, %s10
  %s13 = scalar_select 0, %s12, %s10
  $region1: #{tpu_custom_call.1} parent=0
    #allocation5 [shape = 'u8[32768]{0}', space=vmem, size = 0x8000, scoped, tag = 'input window, operand 0']
    #allocation6 [shape = 's32[2]{0}', space=sflag, size = 0x8, scoped, tag = 'scoped memory for tpu_custom_call.1']
    #allocation7 [shape = 's32[2]{0}', space=sflag, size = 0x8, scoped, tag = 'scoped memory for tpu_custom_call.1']
    #allocation8 [shape = 'u8[65536]{0}', space=vmem, size = 0x10000, scoped, tag = 'input window, operand 1, single buffered']
    #allocation9 [shape = 's32[1]{0}', space=sflag, size = 0x4, scoped, tag = 'scoped memory for tpu_custom_call.1']
    #allocation10 [shape = 'u8[262144]{0}', space=vmem, size = 0x40000, scoped, tag = 'input window, operand 2, single buffered']
    #allocation11 [shape = 'u8[2048]{0}', space=vmem, size = 0x800, scoped, tag = 'input window, operand 3, single buffered']
    #allocation12 [shape = 's32[1]{0}', space=sflag, size = 0x4, scoped, tag = 'scoped memory for tpu_custom_call.1']
    #allocation13 [shape = 'u8[4096]{0}', space=vmem, size = 0x1000, scoped, tag = 'input window, operand 4, single buffered']
    #allocation14 [shape = 'u8[32768]{0}', space=vmem, size = 0x8000, scoped, tag = 'output window, operand 0']
    #allocation15 [shape = 'u8[4096]{0}', space=vmem, size = 0x1000, scoped, tag = 'output window, operand 1, single buffered']
    #allocation16 [shape = 's32[1]{0}', space=sflag, size = 0x4, scoped, tag = 'scoped memory for tpu_custom_call.1']
    #allocation17 [shape = 'u8[4096]{0}', space=vmem, size = 0x1000, scoped, tag = 'output window, operand 2, single buffered']
    %14 = vsyncpa [#allocation6], 0
    %s15 = scalar_lea.sflag [#allocation6], 1
    %16 = vsyncpa %s15, 0
    %17 = vsyncpa [#allocation9], 0
    %18 = vsyncpa [#allocation12], 0
    %19 = vsyncpa [#allocation7], 0
    %s20 = scalar_lea.sflag [#allocation7], 1
    %21 = vsyncpa %s20, 0
    %22 = vsyncpa [#allocation16], 0
    loop: start=0, step=1, limit=5
    $region2: #{tpu_custom_call.1} parent=1 // loop_pre_header
      _
    $region3: #{tpu_custom_call.1} parent=1 // loop_header
      %s24 = sphi 0, %s28
      %p25 = scmp.ge.s32.totalorder %s24, 5
      %s31 = sphi 0, %s43
      %s32 = sphi 0, %s39
      %s33 = sphi 0, %s31
      %s34 = sphi 0, %s32
      %s35 = sphi 0, %s33
      %s36 = sphi 0, %s34
      %s48 = sphi 0, %s50
      %s51 = sphi 0, %s48
      %s52 = sphi 0, %s51
      %s68 = sphi 0, %s52
      %s72 = sphi 0, %s72
      %s74 = sphi 0, %s72
      %s75 = sphi 0, %s74
      %s89 = sphi 0, %s75
      %s93 = sphi 0, %s93
      %s95 = sphi 0, %s93
      %s96 = sphi 0, %s95
      %s110 = sphi 0, %s96
      %s114 = sphi 0, %s114
      %s116 = sphi 0, %s114
      %s117 = sphi 0, %s116
      %s131 = sphi 0, %s117
      %s137 = sphi 0, %s139
      %s140 = sphi 0, %s137
      %s141 = sphi 0, %s140
      %s157 = sphi 0, %s141
      %s163 = sphi 0, %s165
      %s166 = sphi 0, %s163
      %s167 = sphi 0, %s166
      %s183 = sphi 0, %s167
      %s191 = sphi 0, %s193
      %s194 = sphi 0, %s191
      %s195 = sphi 0, %s194
      %s211 = sphi 0, %s195
      %s217 = sphi 0, %s219
      %s220 = sphi 0, %s217
      %s221 = sphi 0, %s220
      %s237 = sphi 0, %s221
      %s243 = sphi 0, %s245
      %s246 = sphi 0, %s243
      %s247 = sphi 0, %s246
      %s263 = sphi 0, %s247
    $region4: #{tpu_custom_call.1} parent=1 // loop_header_branch
      %27 = sbr.rel (%p25) target = $region8
    $region5: #{tpu_custom_call.1} parent=1 // loop_body
      %s29 = ssub.s32 %s24, 1
      %s30 = ssub.s32 %s24, 2
      %s37 = sadd.s32 1, %s32
      %p38 = scmp.ge.s32.totalorder %s37, 3
      %s39 = scalar_select %p38, 0, %s37
      %s40 = sadd.s32 1, %s31
      %s41 = scalar_select %p38, %s40, %s31
      %p42 = scmp.ge.s32.totalorder %s41, 1
      %s43 = scalar_select %p42, 0, %s41
      %s44 = ssub.s32 %s32, %s39
      %s45 = ssub.s32 %s31, %s43
      %s46 = sor.u32 %s44, %s45
      %p47 = scmp.eq.s32.totalorder %s46, 0
      %s49 = sadd.s32 %s48, 1
      %s50 = scalar_select %p47, %s48, %s49
      %p53 = pneg %p47
      %p54 = scmp.eq.s32.totalorder %s24, 2
      %p55 = por %p53, %p54
      %p56 = scmp.ne.s32.totalorder %s48, %s51
      %p57 = scmp.eq.s32.totalorder %s24, 0
      %p58 = por %p56, %p57
      %p59 = scmp.ne.s32.totalorder %s48, %s51
      %p60 = scmp.eq.s32.totalorder %s29, 2
      %p61 = por %p59, %p60
      %p62 = scmp.ne.s32.totalorder %s51, %s52
      %p63 = scmp.eq.s32.totalorder %s29, 0
      %p64 = por %p62, %p63
      %p65 = scmp.ne.s32.totalorder %s51, %s52
      %p66 = scmp.eq.s32.totalorder %s30, 2
      %p67 = por %p65, %p66
      %p69 = scmp.ne.s32.totalorder %s52, %s68
      %p70 = scmp.eq.s32.totalorder %s30, 0
      %p71 = por %p69, %p70
      %s73 = sadd.s32 %s72, 1
      %p76 = scmp.eq.s32.totalorder %s24, 2
      %p77 = scmp.ne.s32.totalorder %s72, %s74
      %p78 = scmp.eq.s32.totalorder %s24, 0
      %p79 = por %p77, %p78
      %p80 = scmp.ne.s32.totalorder %s72, %s74
      %p81 = scmp.eq.s32.totalorder %s29, 2
      %p82 = por %p80, %p81
      %p83 = scmp.ne.s32.totalorder %s74, %s75
      %p84 = scmp.eq.s32.totalorder %s29, 0
      %p85 = por %p83, %p84
      %p86 = scmp.ne.s32.totalorder %s74, %s75
      %p87 = scmp.eq.s32.totalorder %s30, 2
      %p88 = por %p86, %p87
      %p90 = scmp.ne.s32.totalorder %s75, %s89
      %p91 = scmp.eq.s32.totalorder %s30, 0
      %p92 = por %p90, %p91
      %s94 = sadd.s32 %s93, 1
      %p97 = scmp.eq.s32.totalorder %s24, 2
      %p98 = scmp.ne.s32.totalorder %s93, %s95
      %p99 = scmp.eq.s32.totalorder %s24, 0
      %p100 = por %p98, %p99
      %p101 = scmp.ne.s32.totalorder %s93, %s95
      %p102 = scmp.eq.s32.totalorder %s29, 2
      %p103 = por %p101, %p102
      %p104 = scmp.ne.s32.totalorder %s95, %s96
      %p105 = scmp.eq.s32.totalorder %s29, 0
      %p106 = por %p104, %p105
      %p107 = scmp.ne.s32.totalorder %s95, %s96
      %p108 = scmp.eq.s32.totalorder %s30, 2
      %p109 = por %p107, %p108
      %p111 = scmp.ne.s32.totalorder %s96, %s110
      %p112 = scmp.eq.s32.totalorder %s30, 0
      %p113 = por %p111, %p112
      %s115 = sadd.s32 %s114, 1
      %p118 = scmp.eq.s32.totalorder %s24, 2
      %p119 = scmp.ne.s32.totalorder %s114, %s116
      %p120 = scmp.eq.s32.totalorder %s24, 0
      %p121 = por %p119, %p120
      %p122 = scmp.ne.s32.totalorder %s114, %s116
      %p123 = scmp.eq.s32.totalorder %s29, 2
      %p124 = por %p122, %p123
      %p125 = scmp.ne.s32.totalorder %s116, %s117
      %p126 = scmp.eq.s32.totalorder %s29, 0
      %p127 = por %p125, %p126
      %p128 = scmp.ne.s32.totalorder %s116, %s117
      %p129 = scmp.eq.s32.totalorder %s30, 2
      %p130 = por %p128, %p129
      %p132 = scmp.ne.s32.totalorder %s117, %s131
      %p133 = scmp.eq.s32.totalorder %s30, 0
      %p134 = por %p132, %p133
      %s135 = ssub.s32 %s31, %s43
      %p136 = scmp.eq.s32.totalorder %s135, 0
      %s138 = sadd.s32 %s137, 1
      %s139 = scalar_select %p136, %s137, %s138
      %p142 = pneg %p136
      %p143 = scmp.eq.s32.totalorder %s24, 2
      %p144 = por %p142, %p143
      %p145 = scmp.ne.s32.totalorder %s137, %s140
      %p146 = scmp.eq.s32.totalorder %s24, 0
      %p147 = por %p145, %p146
      %p148 = scmp.ne.s32.totalorder %s137, %s140
      %p149 = scmp.eq.s32.totalorder %s29, 2
      %p150 = por %p148, %p149
      %p151 = scmp.ne.s32.totalorder %s140, %s141
      %p152 = scmp.eq.s32.totalorder %s29, 0
      %p153 = por %p151, %p152
      %p154 = scmp.ne.s32.totalorder %s140, %s141
      %p155 = scmp.eq.s32.totalorder %s30, 2
      %p156 = por %p154, %p155
      %p158 = scmp.ne.s32.totalorder %s141, %s157
      %p159 = scmp.eq.s32.totalorder %s30, 0
      %p160 = por %p158, %p159
      %s161 = ssub.s32 %s31, %s43
      %p162 = scmp.eq.s32.totalorder %s161, 0
      %s164 = sadd.s32 %s163, 1
      %s165 = scalar_select %p162, %s163, %s164
      %p168 = pneg %p162
      %p169 = scmp.eq.s32.totalorder %s24, 2
      %p170 = por %p168, %p169
      %p171 = scmp.ne.s32.totalorder %s163, %s166
      %p172 = scmp.eq.s32.totalorder %s24, 0
      %p173 = por %p171, %p172
      %p174 = scmp.ne.s32.totalorder %s163, %s166
      %p175 = scmp.eq.s32.totalorder %s29, 2
      %p176 = por %p174, %p175
      %p177 = scmp.ne.s32.totalorder %s166, %s167
      %p178 = scmp.eq.s32.totalorder %s29, 0
      %p179 = por %p177, %p178
      %p180 = scmp.ne.s32.totalorder %s166, %s167
      %p181 = scmp.eq.s32.totalorder %s30, 2
      %p182 = por %p180, %p181
      %p184 = scmp.ne.s32.totalorder %s167, %s183
      %p185 = scmp.eq.s32.totalorder %s30, 0
      %p186 = por %p184, %p185
      %s187 = ssub.s32 %s32, %s39
      %s188 = ssub.s32 %s31, %s43
      %s189 = sor.u32 %s187, %s188
      %p190 = scmp.eq.s32.totalorder %s189, 0
      %s192 = sadd.s32 %s191, 1
      %s193 = scalar_select %p190, %s191, %s192
      %p196 = pneg %p190
      %p197 = scmp.eq.s32.totalorder %s24, 2
      %p198 = por %p196, %p197
      %p199 = scmp.ne.s32.totalorder %s191, %s194
      %p200 = scmp.eq.s32.totalorder %s24, 0
      %p201 = por %p199, %p200
      %p202 = scmp.ne.s32.totalorder %s191, %s194
      %p203 = scmp.eq.s32.totalorder %s29, 2
      %p204 = por %p202, %p203
      %p205 = scmp.ne.s32.totalorder %s194, %s195
      %p206 = scmp.eq.s32.totalorder %s29, 0
      %p207 = por %p205, %p206
      %p208 = scmp.ne.s32.totalorder %s194, %s195
      %p209 = scmp.eq.s32.totalorder %s30, 2
      %p210 = por %p208, %p209
      %p212 = scmp.ne.s32.totalorder %s195, %s211
      %p213 = scmp.eq.s32.totalorder %s30, 0
      %p214 = por %p212, %p213
      %s215 = ssub.s32 %s31, %s43
      %p216 = scmp.eq.s32.totalorder %s215, 0
      %s218 = sadd.s32 %s217, 1
      %s219 = scalar_select %p216, %s217, %s218
      %p222 = pneg %p216
      %p223 = scmp.eq.s32.totalorder %s24, 2
      %p224 = por %p222, %p223
      %p225 = scmp.ne.s32.totalorder %s217, %s220
      %p226 = scmp.eq.s32.totalorder %s24, 0
      %p227 = por %p225, %p226
      %p228 = scmp.ne.s32.totalorder %s217, %s220
      %p229 = scmp.eq.s32.totalorder %s29, 2
      %p230 = por %p228, %p229
      %p231 = scmp.ne.s32.totalorder %s220, %s221
      %p232 = scmp.eq.s32.totalorder %s29, 0
      %p233 = por %p231, %p232
      %p234 = scmp.ne.s32.totalorder %s220, %s221
      %p235 = scmp.eq.s32.totalorder %s30, 2
      %p236 = por %p234, %p235
      %p238 = scmp.ne.s32.totalorder %s221, %s237
      %p239 = scmp.eq.s32.totalorder %s30, 0
      %p240 = por %p238, %p239
      %s241 = ssub.s32 %s31, %s43
      %p242 = scmp.eq.s32.totalorder %s241, 0
      %s244 = sadd.s32 %s243, 1
      %s245 = scalar_select %p242, %s243, %s244
      %p248 = pneg %p242
      %p249 = scmp.eq.s32.totalorder %s24, 2
      %p250 = por %p248, %p249
      %p251 = scmp.ne.s32.totalorder %s243, %s246
      %p252 = scmp.eq.s32.totalorder %s24, 0
      %p253 = por %p251, %p252
      %p254 = scmp.ne.s32.totalorder %s243, %s246
      %p255 = scmp.eq.s32.totalorder %s29, 2
      %p256 = por %p254, %p255
      %p257 = scmp.ne.s32.totalorder %s246, %s247
      %p258 = scmp.eq.s32.totalorder %s29, 0
      %p259 = por %p257, %p258
      %p260 = scmp.ne.s32.totalorder %s246, %s247
      %p261 = scmp.eq.s32.totalorder %s30, 2
      %p262 = por %p260, %p261
      %p264 = scmp.ne.s32.totalorder %s247, %s263
      %p265 = scmp.eq.s32.totalorder %s30, 0
      %p266 = por %p264, %p265
      %p267 = scmp.le.s32.totalorder 1, %s24
      %p268 = scmp.lt.s32.totalorder %s24, 4
      %p269 = pnand %p267, %p268
      %p270 = pneg %p269
      // Predicated region
      $region9: #{tpu_custom_call.1} parent=5 // pred_check
        _
      $region10: #{tpu_custom_call.1} parent=5 // pred_check_branch
        %272 = sbr.rel (%p269) target = $region12
      $region11: #{tpu_custom_call.1} parent=5 // pred_region
        %s273 = ssub.s32 %s24, 1
        // Predicated region
        $region13: #{tpu_custom_call.1} parent=11 // pred_check
          %p274 = pneg %p85
        $region14: #{tpu_custom_call.1} parent=11 // pred_check_branch
          %276 = sbr.rel (%p274) target = $region16
        $region15: #{tpu_custom_call.1} parent=11 // pred_region
          %s278 = ssub.s32 2048, 2048
          %279 = vsyncadd [#allocation9], %s278
          %s280 = sshll.u32 [#allocation8], 4
          %s281 = int_to_ptr.vmem [resolvable:$true] %s280
          %286 = dma.hbm_to_vmem [thread:$0]  %s1, 2048, %s281, [#allocation9], 512, 512, 32
        $region16: #{tpu_custom_call.1} parent=11 // pred_fallthru
          _
        // Predicated region
        $region17: #{tpu_custom_call.1} parent=11 // pred_check
          %p287 = pneg %p106
        $region18: #{tpu_custom_call.1} parent=11 // pred_check_branch
          %289 = sbr.rel (%p287) target = $region20
        $region19: #{tpu_custom_call.1} parent=11 // pred_region
          %s291 = ssub.s32 8192, 8192
          %292 = vsyncadd [#allocation9], %s291
          %s293 = sshll.u32 [#allocation10], 4
          %s294 = int_to_ptr.vmem [resolvable:$true] %s293
          %299 = dma.hbm_to_vmem [thread:$0]  %s2, 8192, %s294, [#allocation9], 512, 512, 32
        $region20: #{tpu_custom_call.1} parent=11 // pred_fallthru
          _
        // Predicated region
        $region21: #{tpu_custom_call.1} parent=11 // pred_check
          %p300 = pneg %p127
        $region22: #{tpu_custom_call.1} parent=11 // pred_check_branch
          %302 = sbr.rel (%p300) target = $region24
        $region23: #{tpu_custom_call.1} parent=11 // pred_region
          %s304 = ssub.s32 64, 64
          %305 = vsyncadd [#allocation12], %s304
          %s307 = sshll.u32 [#allocation11], 4
          %s308 = int_to_ptr.vmem [resolvable:$true] %s307
          %310 = dma.hbm_to_vmem [thread:$0]  %s3, 64, %s308, [#allocation12]
        $region24: #{tpu_custom_call.1} parent=11 // pred_fallthru
          _
        // Predicated region
        $region25: #{tpu_custom_call.1} parent=11 // pred_check
          %p311 = pneg %p153
        $region26: #{tpu_custom_call.1} parent=11 // pred_check_branch
          %313 = sbr.rel (%p311) target = $region28
        $region27: #{tpu_custom_call.1} parent=11 // pred_region
          %s315 = ssub.s32 128, 128
          %316 = vsyncadd [#allocation12], %s315
          %s317 = smul.addr %s33, 128
          %s318 = scalar_lea.hbm %s4, %s317
          %s320 = sshll.u32 [#allocation13], 4
          %s321 = int_to_ptr.vmem [resolvable:$true] %s320
          %323 = dma.hbm_to_vmem [thread:$0]  %s318, 128, %s321, [#allocation12]
        $region28: #{tpu_custom_call.1} parent=11 // pred_fallthru
          _
        // Predicated region
        $region29: #{tpu_custom_call.1} parent=11 // pred_check
          %p324 = pneg %p179
        $region30: #{tpu_custom_call.1} parent=11 // pred_check_branch
          %326 = sbr.rel (%p324) target = $region32
        $region31: #{tpu_custom_call.1} parent=11 // pred_region
          %p327 = scmp.lt.s32.totalorder %s33, 0
          %s328 = scalar_select %p327, %s33, 0
          %s329 = smul.addr %s328, 8
          %s330 = scalar_lea.vmem %s5, %s329
        $region32: #{tpu_custom_call.1} parent=11 // pred_fallthru
          _
      $region12: #{tpu_custom_call.1} parent=5 // pred_fallthru
        _
      %p331 = scmp.lt.s32.totalorder %s24, 3
      // Predicated region
      $region33: #{tpu_custom_call.1} parent=5 // pred_check
        %p332 = pneg %p331
      $region34: #{tpu_custom_call.1} parent=5 // pred_check_branch
        %334 = sbr.rel (%p332) target = $region36
      $region35: #{tpu_custom_call.1} parent=5 // pred_region
        // Predicated region
        $region37: #{tpu_custom_call.1} parent=35 // pred_check
          %p335 = pneg %p58
        $region38: #{tpu_custom_call.1} parent=35 // pred_check_branch
          %337 = sbr.rel (%p335) target = $region40
        $region39: #{tpu_custom_call.1} parent=35 // pred_region
          %s338 = sand.u32 %s48, 1
          %s339 = scalar_lea.sflag [#allocation6], %s338
          %s340 = sand.u32 %s48, 1
          %s341 = smul.addr %s340, 32
          %s342 = scalar_lea.vmem [#allocation5], %s341
          %s343 = smul.u32 4, %s32
          %s345 = ssub.s32 512, 512
          %346 = vsyncadd %s339, %s345
          %s347 = sadd.s32 %s31, %s343
          %s348 = smul.addr %s347, 128
          %s349 = scalar_lea.hbm %s0, %s348
          %s350 = sshll.u32 %s342, 4
          %s351 = int_to_ptr.vmem [resolvable:$true] %s350
          %356 = dma.hbm_to_vmem [thread:$0]  %s349, 512, %s351, %s339, 128, 128, 8
        $region40: #{tpu_custom_call.1} parent=35 // pred_fallthru
          _
      $region36: #{tpu_custom_call.1} parent=5 // pred_fallthru
        _
      %p357 = scmp.le.s32.totalorder 1, %s24
      %p358 = scmp.lt.s32.totalorder %s24, 4
      %p359 = pnand %p357, %p358
      %p360 = pneg %p359
      // Predicated region
      $region41: #{tpu_custom_call.1} parent=5 // pred_check
        _
      $region42: #{tpu_custom_call.1} parent=5 // pred_check_branch
        %362 = sbr.rel (%p359) target = $region44
      $region43: #{tpu_custom_call.1} parent=5 // pred_region
        %s363 = ssub.s32 %s24, 1
        %s364 = sand.u32 %s51, 1
        %s365 = scalar_lea.sflag [#allocation6], %s364
        %s366 = sand.u32 %s51, 1
        %s367 = smul.addr %s366, 32
        %s368 = scalar_lea.vmem [#allocation5], %s367
        // Predicated region
        $region45: #{tpu_custom_call.1} parent=43 // pred_check
          %p369 = pneg %p64
        $region46: #{tpu_custom_call.1} parent=43 // pred_check_branch
          %371 = sbr.rel (%p369) target = $region48
        $region47: #{tpu_custom_call.1} parent=43 // pred_region
          %372 = dma.done %s365, 512
        $region48: #{tpu_custom_call.1} parent=43 // pred_fallthru
          _
        // Predicated region
        $region49: #{tpu_custom_call.1} parent=43 // pred_check
          %p373 = pneg %p85
        $region50: #{tpu_custom_call.1} parent=43 // pred_check_branch
          %375 = sbr.rel (%p373) target = $region52
        $region51: #{tpu_custom_call.1} parent=43 // pred_region
          %376 = dma.done [#allocation9], 2048
        $region52: #{tpu_custom_call.1} parent=43 // pred_fallthru
          _
        // Predicated region
        $region53: #{tpu_custom_call.1} parent=43 // pred_check
          %p377 = pneg %p106
        $region54: #{tpu_custom_call.1} parent=43 // pred_check_branch
          %379 = sbr.rel (%p377) target = $region56
        $region55: #{tpu_custom_call.1} parent=43 // pred_region
          %380 = dma.done [#allocation9], 8192
        $region56: #{tpu_custom_call.1} parent=43 // pred_fallthru
          _
        // Predicated region
        $region57: #{tpu_custom_call.1} parent=43 // pred_check
          %p381 = pneg %p127
        $region58: #{tpu_custom_call.1} parent=43 // pred_check_branch
          %383 = sbr.rel (%p381) target = $region60
        $region59: #{tpu_custom_call.1} parent=43 // pred_region
          %384 = dma.done [#allocation12], 64
        $region60: #{tpu_custom_call.1} parent=43 // pred_fallthru
          _
        // Predicated region
        $region61: #{tpu_custom_call.1} parent=43 // pred_check
          %p385 = pneg %p153
        $region62: #{tpu_custom_call.1} parent=43 // pred_check_branch
          %387 = sbr.rel (%p385) target = $region64
        $region63: #{tpu_custom_call.1} parent=43 // pred_region
          %388 = dma.done [#allocation12], 128
        $region64: #{tpu_custom_call.1} parent=43 // pred_fallthru
          _
        %s389 = sand.u32 %s51, 1
        %s390 = scalar_lea.sflag [#allocation6], %s389
        %s391 = sand.u32 %s51, 1
        %s392 = smul.addr %s391, 32
        %s393 = scalar_lea.vmem [#allocation5], %s392
        %p394 = pneg %p64
        %p395 = pneg %p61
        %p396 = pneg %p85
        %p397 = pneg %p82
        %p398 = pneg %p106
        %p399 = pneg %p103
        %p400 = pneg %p127
        %p401 = pneg %p124
        %p402 = pneg %p153
        %p403 = pneg %p150
        %p404 = scmp.lt.s32.totalorder %s33, 0
        %s405 = scalar_select %p404, %s33, 0
        %s406 = smul.addr %s405, 8
        %s407 = scalar_lea.vmem %s5, %s406
        %p408 = pneg %p179
        %p409 = pneg %p176
        %p410 = pneg %p207
        %p411 = pneg %p204
        %s412 = sand.u32 %s194, 1
        %s413 = scalar_lea.sflag [#allocation7], %s412
        %s414 = sand.u32 %s194, 1
        %s415 = smul.addr %s414, 32
        %s416 = scalar_lea.vmem [#allocation14], %s415
        %p417 = pneg %p233
        %p418 = pneg %p230
        %p419 = pneg %p259
        %p420 = pneg %p256
        %s421 = smul.u32 4, %s34
        %p422 = scmp.lt.s32.totalorder %s33, 0
        %s423 = scalar_select %p422, %s33, 0
        %s424 = smul.addr %s423, 8
        %s425 = scalar_lea.vmem %s5, %s424
        %s426 = smul.u32 4, %s34
        %p427 = scmp.eq.s32.totalorder %s34, 0
        // Predicated region
        $region65: #{tpu_custom_call.1} parent=43 // pred_check
          %p428 = pneg %p427
        $region66: #{tpu_custom_call.1} parent=43 // pred_check_branch
          %430 = sbr.rel (%p428) target = $region68
        $region67: #{tpu_custom_call.1} parent=43 // pred_region
          %v431 = vld [vmem:[#allocation13] sm:$0xff]
          %432 = vst [vmem:[#allocation2] sm:$0xff] %v431
          %v433 = vld [vmem:[%s425] sm:$0xff]
          %434 = vst [vmem:[#allocation3] sm:$0xff] %v433
        $region68: #{tpu_custom_call.1} parent=43 // pred_fallthru
          _
        %v435 = vld [vmem:[%s368] sm:$0xff]
        %v436 = vld [vmem:[%s368 + $0x8] sm:$0xff]
        %v437 = vld [vmem:[%s368 + $0x10] sm:$0xff]
        %v438 = vld [vmem:[%s368 + $0x18] sm:$0xff]
        %v439 = vld [vmem:[#allocation8] sm:$0xff]
        %v440 = vld [vmem:[#allocation8 + $0x8] sm:$0xff]
        %v441 = vld [vmem:[#allocation8 + $0x10] sm:$0xff]
        %v442 = vld [vmem:[#allocation8 + $0x18] sm:$0xff]
        %v443 = vld [vmem:[#allocation8 + $0x20] sm:$0xff]
        %v444 = vld [vmem:[#allocation8 + $0x28] sm:$0xff]
        %v445 = vld [vmem:[#allocation8 + $0x30] sm:$0xff]
        %v446 = vld [vmem:[#allocation8 + $0x38] sm:$0xff]
        %v447 = vld [vmem:[#allocation8 + $0x40] sm:$0xff]
        %v448 = vld [vmem:[#allocation8 + $0x48] sm:$0xff]
        %v449 = vld [vmem:[#allocation8 + $0x50] sm:$0xff]
        %v450 = vld [vmem:[#allocation8 + $0x58] sm:$0xff]
        %v451 = vld [vmem:[#allocation8 + $0x60] sm:$0xff]
        %v452 = vld [vmem:[#allocation8 + $0x68] sm:$0xff]
        %v453 = vld [vmem:[#allocation8 + $0x70] sm:$0xff]
        %v454 = vld [vmem:[#allocation8 + $0x78] sm:$0xff]
        %v455 = vld [vmem:[#allocation11] sm:$0xf]
        %v457 = vlaneseq
        %v458 = vshrl.u32 %v457, 7
        %v459 = vsub.s32 0, %v458
        %v460 = vrot.slane %v455, %v459
        %v461 = vlaneseq
        %v462 = vshrl.u32 %v461, 7
        %v463 = vsub.s32 1, %v462
        %v464 = vrot.slane %v455, %v463
        %v465 = vlaneseq
        %v466 = vshrl.u32 %v465, 7
        %v467 = vsub.s32 2, %v466
        %v468 = vrot.slane %v455, %v467
        %v469 = vlaneseq
        %v470 = vshrl.u32 %v469, 7
        %v471 = vsub.s32 3, %v470
        %v472 = vrot.slane %v455, %v471
        %vm477 = vcmask 261120
        %v479 = vsel %vm477, %v435, 0
        %v482 = vsel %vm477, %v436, 0
        %v485 = vsel %vm477, %v437, 0
        %v488 = vsel %vm477, %v438, 0
        %490 = vmatprep.subr.mxu0 0.0
        %491 = vmatpush1.msra.mxu0 0.0
        %492 = vmatprep.subr.mxu0 0.0
        %493 = vmatpush1.msra.mxu0 0.0
        %494 = vmatprep.subr.mxu0 0.0
        %495 = vmatpush1.msra.mxu0 0.0
        %496 = vmatprep.subr.mxu0 0.0
        %497 = vmatpush1.msra.mxu0 0.0
        %498 = vmatprep.subr.mxu0 0.0
        %499 = vmatpush1.msra.mxu0 0.0
        %500 = vmatprep.subr.mxu0 0.0
        %501 = vmatpush1.msra.mxu0 0.0
        %502 = vmatprep.subr.mxu0 0.0
        %503 = vmatpush1.msra.mxu0 0.0
        %504 = vmatprep.subr.mxu0 0.0
        %505 = vmatpush1.msra.mxu0 0.0
        %506 = vmatprep.subr.mxu0 0.0
        %507 = vmatpush1.msra.mxu0 0.0
        %508 = vmatprep.subr.mxu0 0.0
        %509 = vmatpush1.msra.mxu0 0.0
        %510 = vmatprep.subr.mxu0 0.0
        %511 = vmatpush1.msra.mxu0 0.0
        %512 = vmatprep.subr.mxu0 0.0
        %513 = vmatpush1.msra.mxu0 0.0
        %514 = vmatprep.subr.mxu0 %v452
        %515 = vmatpush1.msra.mxu0 %v451
        %516 = vmatprep.subr.mxu0 %v448
        %517 = vmatpush1.msra.mxu0 %v447
        %518 = vmatprep.subr.mxu0 %v444
        %519 = vmatpush1.msra.mxu0 %v443
        %520 = vmatprep.subr.mxu0 %v440
        %521 = vmatpush1.msra.mxu0 %v439
        %522 = vmatprep.subr.mxu0 0.0
        %523 = vmatpush2.msra.mxu0 0.0
        %524 = vmatprep.subr.mxu0 0.0
        %525 = vmatpush2.msra.mxu0 0.0
        %526 = vmatprep.subr.mxu0 0.0
        %527 = vmatpush2.msra.mxu0 0.0
        %528 = vmatprep.subr.mxu0 0.0
        %529 = vmatpush2.msra.mxu0 0.0
        %530 = vmatprep.subr.mxu0 0.0
        %531 = vmatpush2.msra.mxu0 0.0
        %532 = vmatprep.subr.mxu0 0.0
        %533 = vmatpush2.msra.mxu0 0.0
        %534 = vmatprep.subr.mxu0 0.0
        %535 = vmatpush2.msra.mxu0 0.0
        %536 = vmatprep.subr.mxu0 0.0
        %537 = vmatpush2.msra.mxu0 0.0
        %538 = vmatprep.subr.mxu0 0.0
        %539 = vmatpush2.msra.mxu0 0.0
        %540 = vmatprep.subr.mxu0 0.0
        %541 = vmatpush2.msra.mxu0 0.0
        %542 = vmatprep.subr.mxu0 0.0
        %543 = vmatpush2.msra.mxu0 0.0
        %544 = vmatprep.subr.mxu0 0.0
        %545 = vmatpush2.msra.mxu0 0.0
        %546 = vmatprep.subr.mxu0 0.0
        %547 = vmatpush2.msra.mxu0 0.0
        %548 = vmatprep.subr.mxu0 0.0
        %549 = vmatpush2.msra.mxu0 0.0
        %550 = vmatprep.subr.mxu0 0.0
        %551 = vmatpush2.msra.mxu0 0.0
        %552 = vmatprep.subr.mxu0 0.0
        %553 = vmatpush2.msra.mxu0 0.0
        %554 = vmatprep.mubr.f32.mxu0 0.0
        %555 = vmatmul.mubr.f32.gmra.mxu0 %v479
        %v556 = vpop.f32.mrf.mxu0
        %v557 = vadd.f32 %v460, %v556
        %v558 = vpop.f32.mrf.mxu0
        %v559 = vadd.f32 %v464, %v558
        %560 = vmatprep.mubr.f32.mxu0 0.0
        %561 = vmatmul.mubr.f32.gmra.mxu0 %v482
        %v562 = vpop.f32.mrf.mxu0
        %v563 = vadd.f32 %v460, %v562
        %v564 = vpop.f32.mrf.mxu0
        %v565 = vadd.f32 %v464, %v564
        %566 = vmatprep.mubr.f32.mxu0 0.0
        %567 = vmatmul.mubr.f32.gmra.mxu0 %v485
        %v568 = vpop.f32.mrf.mxu0
        %v569 = vadd.f32 %v460, %v568
        %v570 = vpop.f32.mrf.mxu0
        %v571 = vadd.f32 %v464, %v570
        %572 = vmatprep.mubr.f32.mxu0 0.0
        %573 = vmatmul.mubr.f32.gmra.mxu0 %v488
        %v574 = vpop.f32.mrf.mxu0
        %v575 = vadd.f32 %v460, %v574
        %v576 = vpop.f32.mrf.mxu0
        %v577 = vadd.f32 %v464, %v576
        %578 = vdwg.mxu0
        %579 = vmatprep.subr.mxu0 0.0
        %580 = vmatpush1.msra.mxu0 0.0
        %581 = vmatprep.subr.mxu0 0.0
        %582 = vmatpush1.msra.mxu0 0.0
        %583 = vmatprep.subr.mxu0 0.0
        %584 = vmatpush1.msra.mxu0 0.0
        %585 = vmatprep.subr.mxu0 0.0
        %586 = vmatpush1.msra.mxu0 0.0
        %587 = vmatprep.subr.mxu0 0.0
        %588 = vmatpush1.msra.mxu0 0.0
        %589 = vmatprep.subr.mxu0 0.0
        %590 = vmatpush1.msra.mxu0 0.0
        %591 = vmatprep.subr.mxu0 0.0
        %592 = vmatpush1.msra.mxu0 0.0
        %593 = vmatprep.subr.mxu0 0.0
        %594 = vmatpush1.msra.mxu0 0.0
        %595 = vmatprep.subr.mxu0 0.0
        %596 = vmatpush1.msra.mxu0 0.0
        %597 = vmatprep.subr.mxu0 0.0
        %598 = vmatpush1.msra.mxu0 0.0
        %599 = vmatprep.subr.mxu0 0.0
        %600 = vmatpush1.msra.mxu0 0.0
        %601 = vmatprep.subr.mxu0 0.0
        %602 = vmatpush1.msra.mxu0 0.0
        %603 = vmatprep.subr.mxu0 %v454
        %604 = vmatpush1.msra.mxu0 %v453
        %605 = vmatprep.subr.mxu0 %v450
        %606 = vmatpush1.msra.mxu0 %v449
        %607 = vmatprep.subr.mxu0 %v446
        %608 = vmatpush1.msra.mxu0 %v445
        %609 = vmatprep.subr.mxu0 %v442
        %610 = vmatpush1.msra.mxu0 %v441
        %611 = vmatprep.subr.mxu0 0.0
        %612 = vmatpush2.msra.mxu0 0.0
        %613 = vmatprep.subr.mxu0 0.0
        %614 = vmatpush2.msra.mxu0 0.0
        %615 = vmatprep.subr.mxu0 0.0
        %616 = vmatpush2.msra.mxu0 0.0
        %617 = vmatprep.subr.mxu0 0.0
        %618 = vmatpush2.msra.mxu0 0.0
        %619 = vmatprep.subr.mxu0 0.0
        %620 = vmatpush2.msra.mxu0 0.0
        %621 = vmatprep.subr.mxu0 0.0
        %622 = vmatpush2.msra.mxu0 0.0
        %623 = vmatprep.subr.mxu0 0.0
        %624 = vmatpush2.msra.mxu0 0.0
        %625 = vmatprep.subr.mxu0 0.0
        %626 = vmatpush2.msra.mxu0 0.0
        %627 = vmatprep.subr.mxu0 0.0
        %628 = vmatpush2.msra.mxu0 0.0
        %629 = vmatprep.subr.mxu0 0.0
        %630 = vmatpush2.msra.mxu0 0.0
        %631 = vmatprep.subr.mxu0 0.0
        %632 = vmatpush2.msra.mxu0 0.0
        %633 = vmatprep.subr.mxu0 0.0
        %634 = vmatpush2.msra.mxu0 0.0
        %635 = vmatprep.subr.mxu0 0.0
        %636 = vmatpush2.msra.mxu0 0.0
        %637 = vmatprep.subr.mxu0 0.0
        %638 = vmatpush2.msra.mxu0 0.0
        %639 = vmatprep.subr.mxu0 0.0
        %640 = vmatpush2.msra.mxu0 0.0
        %641 = vmatprep.subr.mxu0 0.0
        %642 = vmatpush2.msra.mxu0 0.0
        %643 = vmatprep.mubr.f32.mxu0 0.0
        %644 = vmatmul.mubr.f32.gmra.mxu0 %v479
        %v645 = vpop.f32.mrf.mxu0
        %v646 = vadd.f32 %v468, %v645
        %v647 = vpop.f32.mrf.mxu0
        %v648 = vadd.f32 %v472, %v647
        %649 = vmatprep.mubr.f32.mxu0 0.0
        %650 = vmatmul.mubr.f32.gmra.mxu0 %v482
        %v651 = vpop.f32.mrf.mxu0
        %v652 = vadd.f32 %v468, %v651
        %v653 = vpop.f32.mrf.mxu0
        %v654 = vadd.f32 %v472, %v653
        %655 = vmatprep.mubr.f32.mxu0 0.0
        %656 = vmatmul.mubr.f32.gmra.mxu0 %v485
        %v657 = vpop.f32.mrf.mxu0
        %v658 = vadd.f32 %v468, %v657
        %v659 = vpop.f32.mrf.mxu0
        %v660 = vadd.f32 %v472, %v659
        %661 = vmatprep.mubr.f32.mxu0 0.0
        %662 = vmatmul.mubr.f32.gmra.mxu0 %v488
        %v663 = vpop.f32.mrf.mxu0
        %v664 = vadd.f32 %v468, %v663
        %v665 = vpop.f32.mrf.mxu0
        %v666 = vadd.f32 %v472, %v665
        %667 = vdwg.mxu0
        %668 = vst [vmem:[#allocation4] sm:$0xff] %v557
        %669 = vst [vmem:[#allocation4 + $0x8] sm:$0xff] %v559
        %670 = vst [vmem:[#allocation4 + $0x10] sm:$0xff] %v646
        %671 = vst [vmem:[#allocation4 + $0x18] sm:$0xff] %v648
        %672 = vst [vmem:[#allocation4 + $0x20] sm:$0xff] %v563
        %673 = vst [vmem:[#allocation4 + $0x28] sm:$0xff] %v565
        %674 = vst [vmem:[#allocation4 + $0x30] sm:$0xff] %v652
        %675 = vst [vmem:[#allocation4 + $0x38] sm:$0xff] %v654
        %676 = vst [vmem:[#allocation4 + $0x40] sm:$0xff] %v569
        %677 = vst [vmem:[#allocation4 + $0x48] sm:$0xff] %v571
        %678 = vst [vmem:[#allocation4 + $0x50] sm:$0xff] %v658
        %679 = vst [vmem:[#allocation4 + $0x58] sm:$0xff] %v660
        %680 = vst [vmem:[#allocation4 + $0x60] sm:$0xff] %v575
        %681 = vst [vmem:[#allocation4 + $0x68] sm:$0xff] %v577
        %682 = vst [vmem:[#allocation4 + $0x70] sm:$0xff] %v664
        %683 = vst [vmem:[#allocation4 + $0x78] sm:$0xff] %v666
        %v684 = vld [vmem:[#allocation10] sm:$0xff]
        %v685 = vld [vmem:[#allocation10 + $0x8] sm:$0xff]
        %v686 = vld [vmem:[#allocation10 + $0x10] sm:$0xff]
        %v687 = vld [vmem:[#allocation10 + $0x18] sm:$0xff]
        %v688 = vld [vmem:[#allocation10 + $0x20] sm:$0xff]
        %v689 = vld [vmem:[#allocation10 + $0x28] sm:$0xff]
        %v690 = vld [vmem:[#allocation10 + $0x30] sm:$0xff]
        %v691 = vld [vmem:[#allocation10 + $0x38] sm:$0xff]
        %v692 = vld [vmem:[#allocation10 + $0x40] sm:$0xff]
        %v693 = vld [vmem:[#allocation10 + $0x48] sm:$0xff]
        %v694 = vld [vmem:[#allocation10 + $0x50] sm:$0xff]
        %v695 = vld [vmem:[#allocation10 + $0x58] sm:$0xff]
        %v696 = vld [vmem:[#allocation10 + $0x60] sm:$0xff]
        %v697 = vld [vmem:[#allocation10 + $0x68] sm:$0xff]
        %v698 = vld [vmem:[#allocation10 + $0x70] sm:$0xff]
        %v699 = vld [vmem:[#allocation10 + $0x78] sm:$0xff]
        %v700 = vld [vmem:[#allocation10 + $0x80] sm:$0xff]
        %v701 = vld [vmem:[#allocation10 + $0x88] sm:$0xff]
        %v702 = vld [vmem:[#allocation10 + $0x90] sm:$0xff]
        %v703 = vld [vmem:[#allocation10 + $0x98] sm:$0xff]
        %v704 = vld [vmem:[#allocation10 + $0xa0] sm:$0xff]
        %v705 = vld [vmem:[#allocation10 + $0xa8] sm:$0xff]
        %v706 = vld [vmem:[#allocation10 + $0xb0] sm:$0xff]
        %v707 = vld [vmem:[#allocation10 + $0xb8] sm:$0xff]
        %v708 = vld [vmem:[#allocation10 + $0xc0] sm:$0xff]
        %v709 = vld [vmem:[#allocation10 + $0xc8] sm:$0xff]
        %v710 = vld [vmem:[#allocation10 + $0xd0] sm:$0xff]
        %v711 = vld [vmem:[#allocation10 + $0xd8] sm:$0xff]
        %v712 = vld [vmem:[#allocation10 + $0xe0] sm:$0xff]
        %v713 = vld [vmem:[#allocation10 + $0xe8] sm:$0xff]
        %v714 = vld [vmem:[#allocation10 + $0xf0] sm:$0xff]
        %v715 = vld [vmem:[#allocation10 + $0xf8] sm:$0xff]
        %v716 = vld [vmem:[#allocation10 + $0x100] sm:$0xff]
        %v717 = vld [vmem:[#allocation10 + $0x108] sm:$0xff]
        %v718 = vld [vmem:[#allocation10 + $0x110] sm:$0xff]
        %v719 = vld [vmem:[#allocation10 + $0x118] sm:$0xff]
        %v720 = vld [vmem:[#allocation10 + $0x120] sm:$0xff]
        %v721 = vld [vmem:[#allocation10 + $0x128] sm:$0xff]
        %v722 = vld [vmem:[#allocation10 + $0x130] sm:$0xff]
        %v723 = vld [vmem:[#allocation10 + $0x138] sm:$0xff]
        %v724 = vld [vmem:[#allocation10 + $0x140] sm:$0xff]
        %v725 = vld [vmem:[#allocation10 + $0x148] sm:$0xff]
        %v726 = vld [vmem:[#allocation10 + $0x150] sm:$0xff]
        %v727 = vld [vmem:[#allocation10 + $0x158] sm:$0xff]
        %v728 = vld [vmem:[#allocation10 + $0x160] sm:$0xff]
        %v729 = vld [vmem:[#allocation10 + $0x168] sm:$0xff]
        %v730 = vld [vmem:[#allocation10 + $0x170] sm:$0xff]
        %v731 = vld [vmem:[#allocation10 + $0x178] sm:$0xff]
        %v732 = vld [vmem:[#allocation10 + $0x180] sm:$0xff]
        %v733 = vld [vmem:[#allocation10 + $0x188] sm:$0xff]
        %v734 = vld [vmem:[#allocation10 + $0x190] sm:$0xff]
        %v735 = vld [vmem:[#allocation10 + $0x198] sm:$0xff]
        %v736 = vld [vmem:[#allocation10 + $0x1a0] sm:$0xff]
        %v737 = vld [vmem:[#allocation10 + $0x1a8] sm:$0xff]
        %v738 = vld [vmem:[#allocation10 + $0x1b0] sm:$0xff]
        %v739 = vld [vmem:[#allocation10 + $0x1b8] sm:$0xff]
        %v740 = vld [vmem:[#allocation10 + $0x1c0] sm:$0xff]
        %v741 = vld [vmem:[#allocation10 + $0x1c8] sm:$0xff]
        %v742 = vld [vmem:[#allocation10 + $0x1d0] sm:$0xff]
        %v743 = vld [vmem:[#allocation10 + $0x1d8] sm:$0xff]
        %v744 = vld [vmem:[#allocation10 + $0x1e0] sm:$0xff]
        %v745 = vld [vmem:[#allocation10 + $0x1e8] sm:$0xff]
        %v746 = vld [vmem:[#allocation10 + $0x1f0] sm:$0xff]
        %v747 = vld [vmem:[#allocation10 + $0x1f8] sm:$0xff]
        %p748 = scmp.ne.s32.totalorder %s34, 2
        // Predicated region
        $region69: #{tpu_custom_call.1} parent=43 // pred_check
          %p749 = pneg %p748
        $region70: #{tpu_custom_call.1} parent=43 // pred_check_branch
          %751 = sbr.rel (%p749) target = $region72
        $region71: #{tpu_custom_call.1} parent=43 // pred_region
          %v752 = vld [vmem:[#allocation2] sm:$0xff]
          %v753 = vld [vmem:[#allocation3] sm:$0xff]
          %s754 = smul.u32 0, 4
          %s755 = smul.addr %s754, 8
          %s756 = scalar_lea.vmem [#allocation4], %s755
          %v757 = vld [vmem:[%s756] sm:$0xff]
          %v758 = vld [vmem:[%s756 + $0x8] sm:$0xff]
          %v759 = vld [vmem:[%s756 + $0x10] sm:$0xff]
          %v760 = vld [vmem:[%s756 + $0x18] sm:$0xff]
          %761 = vmatprep.subr.mxu0 %v745
          %762 = vmatpush1.msra.mxu0 %v744
          %763 = vmatprep.subr.mxu0 %v741
          %764 = vmatpush1.msra.mxu0 %v740
          %765 = vmatprep.subr.mxu0 %v737
          %766 = vmatpush1.msra.mxu0 %v736
          %767 = vmatprep.subr.mxu0 %v733
          %768 = vmatpush1.msra.mxu0 %v732
          %769 = vmatprep.subr.mxu0 %v729
          %770 = vmatpush1.msra.mxu0 %v728
          %771 = vmatprep.subr.mxu0 %v725
          %772 = vmatpush1.msra.mxu0 %v724
          %773 = vmatprep.subr.mxu0 %v721
          %774 = vmatpush1.msra.mxu0 %v720
          %775 = vmatprep.subr.mxu0 %v717
          %776 = vmatpush1.msra.mxu0 %v716
          %777 = vmatprep.subr.mxu0 %v713
          %778 = vmatpush1.msra.mxu0 %v712
          %779 = vmatprep.subr.mxu0 %v709
          %780 = vmatpush1.msra.mxu0 %v708
          %781 = vmatprep.subr.mxu0 %v705
          %782 = vmatpush1.msra.mxu0 %v704
          %783 = vmatprep.subr.mxu0 %v701
          %784 = vmatpush1.msra.mxu0 %v700
          %785 = vmatprep.subr.mxu0 %v697
          %786 = vmatpush1.msra.mxu0 %v696
          %787 = vmatprep.subr.mxu0 %v693
          %788 = vmatpush1.msra.mxu0 %v692
          %789 = vmatprep.subr.mxu0 %v689
          %790 = vmatpush1.msra.mxu0 %v688
          %791 = vmatprep.subr.mxu0 %v685
          %792 = vmatpush1.msra.mxu0 %v684
          %793 = vmatprep.subr.mxu0 0.0
          %794 = vmatpush2.msra.mxu0 0.0
          %795 = vmatprep.subr.mxu0 0.0
          %796 = vmatpush2.msra.mxu0 0.0
          %797 = vmatprep.subr.mxu0 0.0
          %798 = vmatpush2.msra.mxu0 0.0
          %799 = vmatprep.subr.mxu0 0.0
          %800 = vmatpush2.msra.mxu0 0.0
          %801 = vmatprep.subr.mxu0 0.0
          %802 = vmatpush2.msra.mxu0 0.0
          %803 = vmatprep.subr.mxu0 0.0
          %804 = vmatpush2.msra.mxu0 0.0
          %805 = vmatprep.subr.mxu0 0.0
          %806 = vmatpush2.msra.mxu0 0.0
          %807 = vmatprep.subr.mxu0 0.0
          %808 = vmatpush2.msra.mxu0 0.0
          %809 = vmatprep.subr.mxu0 0.0
          %810 = vmatpush2.msra.mxu0 0.0
          %811 = vmatprep.subr.mxu0 0.0
          %812 = vmatpush2.msra.mxu0 0.0
          %813 = vmatprep.subr.mxu0 0.0
          %814 = vmatpush2.msra.mxu0 0.0
          %815 = vmatprep.subr.mxu0 0.0
          %816 = vmatpush2.msra.mxu0 0.0
          %817 = vmatprep.subr.mxu0 0.0
          %818 = vmatpush2.msra.mxu0 0.0
          %819 = vmatprep.subr.mxu0 0.0
          %820 = vmatpush2.msra.mxu0 0.0
          %821 = vmatprep.subr.mxu0 0.0
          %822 = vmatpush2.msra.mxu0 0.0
          %823 = vmatprep.subr.mxu0 0.0
          %824 = vmatpush2.msra.mxu0 0.0
          %825 = vmatprep.mubr.f32.mxu0 0.0
          %826 = vmatmul.mubr.f32.gmra.mxu0 %v752
          %v827 = vpop.f32.mrf.mxu0
          %v828 = vadd.f32 0.0, %v827
          %v829 = vpop.f32.mrf.mxu0
          %v830 = vadd.f32 0.0, %v829
          %831 = vdwg.mxu0
          %832 = vmatprep.subr.mxu0 %v747
          %833 = vmatpush1.msra.mxu0 %v746
          %834 = vmatprep.subr.mxu0 %v743
          %835 = vmatpush1.msra.mxu0 %v742
          %836 = vmatprep.subr.mxu0 %v739
          %837 = vmatpush1.msra.mxu0 %v738
          %838 = vmatprep.subr.mxu0 %v735
          %839 = vmatpush1.msra.mxu0 %v734
          %840 = vmatprep.subr.mxu0 %v731
          %841 = vmatpush1.msra.mxu0 %v730
          %842 = vmatprep.subr.mxu0 %v727
          %843 = vmatpush1.msra.mxu0 %v726
          %844 = vmatprep.subr.mxu0 %v723
          %845 = vmatpush1.msra.mxu0 %v722
          %846 = vmatprep.subr.mxu0 %v719
          %847 = vmatpush1.msra.mxu0 %v718
          %848 = vmatprep.subr.mxu0 %v715
          %849 = vmatpush1.msra.mxu0 %v714
          %850 = vmatprep.subr.mxu0 %v711
          %851 = vmatpush1.msra.mxu0 %v710
          %852 = vmatprep.subr.mxu0 %v707
          %853 = vmatpush1.msra.mxu0 %v706
          %854 = vmatprep.subr.mxu0 %v703
          %855 = vmatpush1.msra.mxu0 %v702
          %856 = vmatprep.subr.mxu0 %v699
          %857 = vmatpush1.msra.mxu0 %v698
          %858 = vmatprep.subr.mxu0 %v695
          %859 = vmatpush1.msra.mxu0 %v694
          %860 = vmatprep.subr.mxu0 %v691
          %861 = vmatpush1.msra.mxu0 %v690
          %862 = vmatprep.subr.mxu0 %v687
          %863 = vmatpush1.msra.mxu0 %v686
          %864 = vmatprep.subr.mxu0 0.0
          %865 = vmatpush2.msra.mxu0 0.0
          %866 = vmatprep.subr.mxu0 0.0
          %867 = vmatpush2.msra.mxu0 0.0
          %868 = vmatprep.subr.mxu0 0.0
          %869 = vmatpush2.msra.mxu0 0.0
          %870 = vmatprep.subr.mxu0 0.0
          %871 = vmatpush2.msra.mxu0 0.0
          %872 = vmatprep.subr.mxu0 0.0
          %873 = vmatpush2.msra.mxu0 0.0
          %874 = vmatprep.subr.mxu0 0.0
          %875 = vmatpush2.msra.mxu0 0.0
          %876 = vmatprep.subr.mxu0 0.0
          %877 = vmatpush2.msra.mxu0 0.0
          %878 = vmatprep.subr.mxu0 0.0
          %879 = vmatpush2.msra.mxu0 0.0
          %880 = vmatprep.subr.mxu0 0.0
          %881 = vmatpush2.msra.mxu0 0.0
          %882 = vmatprep.subr.mxu0 0.0
          %883 = vmatpush2.msra.mxu0 0.0
          %884 = vmatprep.subr.mxu0 0.0
          %885 = vmatpush2.msra.mxu0 0.0
          %886 = vmatprep.subr.mxu0 0.0
          %887 = vmatpush2.msra.mxu0 0.0
          %888 = vmatprep.subr.mxu0 0.0
          %889 = vmatpush2.msra.mxu0 0.0
          %890 = vmatprep.subr.mxu0 0.0
          %891 = vmatpush2.msra.mxu0 0.0
          %892 = vmatprep.subr.mxu0 0.0
          %893 = vmatpush2.msra.mxu0 0.0
          %894 = vmatprep.subr.mxu0 0.0
          %895 = vmatpush2.msra.mxu0 0.0
          %896 = vmatprep.mubr.f32.mxu0 0.0
          %897 = vmatmul.mubr.f32.gmra.mxu0 %v752
          %v898 = vpop.f32.mrf.mxu0
          %v899 = vadd.f32 0.0, %v898
          %v900 = vpop.f32.mrf.mxu0
          %v901 = vadd.f32 0.0, %v900
          %902 = vdwg.mxu0
          %v903 = vadd.f32 %v757, %v828
          %v904 = vadd.f32 %v758, %v830
          %v905 = vadd.f32 %v759, %v899
          %v906 = vadd.f32 %v760, %v901
          %v907 = vxor.u32 %v903, 2147483648
          %v908 = vmul.f32 %v907, 1.442695
          %v909 = vpow.pop %v908
          %v910 = vadd.f32 %v909, 1.0
          %v911 = vrcp.pop %v910
          %v912 = vmul.f32 1.0, %v911
          %v913 = vxor.u32 %v904, 2147483648
          %v914 = vmul.f32 %v913, 1.442695
          %v915 = vpow.pop %v914
          %v916 = vadd.f32 %v915, 1.0
          %v917 = vrcp.pop %v916
          %v918 = vmul.f32 1.0, %v917
          %v919 = vtanh.pop %v905
          %v920 = vxor.u32 %v906, 2147483648
          %v921 = vmul.f32 %v920, 1.442695
          %v922 = vpow.pop %v921
          %v923 = vadd.f32 %v922, 1.0
          %v924 = vrcp.pop %v923
          %v925 = vmul.f32 1.0, %v924
          %v926 = vmul.f32 %v918, %v753
          %v927 = vmul.f32 %v912, %v919
          %v928 = vadd.f32 %v926, %v927
          %v929 = vtanh.pop %v928
          %v930 = vmul.f32 %v925, %v929
          %931 = vst [vmem:[#allocation2] sm:$0xff] %v930
          %932 = vst [vmem:[#allocation3] sm:$0xff] %v928
          %933 = vst [vmem:[%s416] sm:$0xff] %v930
          %v934 = vld [vmem:[#allocation2] sm:$0xff]
          %v935 = vld [vmem:[#allocation3] sm:$0xff]
          %s936 = smul.u32 1, 4
          %s937 = smul.addr %s936, 8
          %s938 = scalar_lea.vmem [#allocation4], %s937
          %v939 = vld [vmem:[%s938] sm:$0xff]
          %v940 = vld [vmem:[%s938 + $0x8] sm:$0xff]
          %v941 = vld [vmem:[%s938 + $0x10] sm:$0xff]
          %v942 = vld [vmem:[%s938 + $0x18] sm:$0xff]
          %943 = vmatprep.subr.mxu0 %v745
          %944 = vmatpush1.msra.mxu0 %v744
          %945 = vmatprep.subr.mxu0 %v741
          %946 = vmatpush1.msra.mxu0 %v740
          %947 = vmatprep.subr.mxu0 %v737
          %948 = vmatpush1.msra.mxu0 %v736
          %949 = vmatprep.subr.mxu0 %v733
          %950 = vmatpush1.msra.mxu0 %v732
          %951 = vmatprep.subr.mxu0 %v729
          %952 = vmatpush1.msra.mxu0 %v728
          %953 = vmatprep.subr.mxu0 %v725
          %954 = vmatpush1.msra.mxu0 %v724
          %955 = vmatprep.subr.mxu0 %v721
          %956 = vmatpush1.msra.mxu0 %v720
          %957 = vmatprep.subr.mxu0 %v717
          %958 = vmatpush1.msra.mxu0 %v716
          %959 = vmatprep.subr.mxu0 %v713
          %960 = vmatpush1.msra.mxu0 %v712
          %961 = vmatprep.subr.mxu0 %v709
          %962 = vmatpush1.msra.mxu0 %v708
          %963 = vmatprep.subr.mxu0 %v705
          %964 = vmatpush1.msra.mxu0 %v704
          %965 = vmatprep.subr.mxu0 %v701
          %966 = vmatpush1.msra.mxu0 %v700
          %967 = vmatprep.subr.mxu0 %v697
          %968 = vmatpush1.msra.mxu0 %v696
          %969 = vmatprep.subr.mxu0 %v693
          %970 = vmatpush1.msra.mxu0 %v692
          %971 = vmatprep.subr.mxu0 %v689
          %972 = vmatpush1.msra.mxu0 %v688
          %973 = vmatprep.subr.mxu0 %v685
          %974 = vmatpush1.msra.mxu0 %v684
          %975 = vmatprep.subr.mxu0 0.0
          %976 = vmatpush2.msra.mxu0 0.0
          %977 = vmatprep.subr.mxu0 0.0
          %978 = vmatpush2.msra.mxu0 0.0
          %979 = vmatprep.subr.mxu0 0.0
          %980 = vmatpush2.msra.mxu0 0.0
          %981 = vmatprep.subr.mxu0 0.0
          %982 = vmatpush2.msra.mxu0 0.0
          %983 = vmatprep.subr.mxu0 0.0
          %984 = vmatpush2.msra.mxu0 0.0
          %985 = vmatprep.subr.mxu0 0.0
          %986 = vmatpush2.msra.mxu0 0.0
          %987 = vmatprep.subr.mxu0 0.0
          %988 = vmatpush2.msra.mxu0 0.0
          %989 = vmatprep.subr.mxu0 0.0
          %990 = vmatpush2.msra.mxu0 0.0
          %991 = vmatprep.subr.mxu0 0.0
          %992 = vmatpush2.msra.mxu0 0.0
          %993 = vmatprep.subr.mxu0 0.0
          %994 = vmatpush2.msra.mxu0 0.0
          %995 = vmatprep.subr.mxu0 0.0
          %996 = vmatpush2.msra.mxu0 0.0
          %997 = vmatprep.subr.mxu0 0.0
          %998 = vmatpush2.msra.mxu0 0.0
          %999 = vmatprep.subr.mxu0 0.0
          %1000 = vmatpush2.msra.mxu0 0.0
          %1001 = vmatprep.subr.mxu0 0.0
          %1002 = vmatpush2.msra.mxu0 0.0
          %1003 = vmatprep.subr.mxu0 0.0
          %1004 = vmatpush2.msra.mxu0 0.0
          %1005 = vmatprep.subr.mxu0 0.0
          %1006 = vmatpush2.msra.mxu0 0.0
          %1007 = vmatprep.mubr.f32.mxu0 0.0
          %1008 = vmatmul.mubr.f32.gmra.mxu0 %v934
          %v1009 = vpop.f32.mrf.mxu0
          %v1010 = vadd.f32 0.0, %v1009
          %v1011 = vpop.f32.mrf.mxu0
          %v1012 = vadd.f32 0.0, %v1011
          %1013 = vdwg.mxu0
          %1014 = vmatprep.subr.mxu0 %v747
          %1015 = vmatpush1.msra.mxu0 %v746
          %1016 = vmatprep.subr.mxu0 %v743
          %1017 = vmatpush1.msra.mxu0 %v742
          %1018 = vmatprep.subr.mxu0 %v739
          %1019 = vmatpush1.msra.mxu0 %v738
          %1020 = vmatprep.subr.mxu0 %v735
          %1021 = vmatpush1.msra.mxu0 %v734
          %1022 = vmatprep.subr.mxu0 %v731
          %1023 = vmatpush1.msra.mxu0 %v730
          %1024 = vmatprep.subr.mxu0 %v727
          %1025 = vmatpush1.msra.mxu0 %v726
          %1026 = vmatprep.subr.mxu0 %v723
          %1027 = vmatpush1.msra.mxu0 %v722
          %1028 = vmatprep.subr.mxu0 %v719
          %1029 = vmatpush1.msra.mxu0 %v718
          %1030 = vmatprep.subr.mxu0 %v715
          %1031 = vmatpush1.msra.mxu0 %v714
          %1032 = vmatprep.subr.mxu0 %v711
          %1033 = vmatpush1.msra.mxu0 %v710
          %1034 = vmatprep.subr.mxu0 %v707
          %1035 = vmatpush1.msra.mxu0 %v706
          %1036 = vmatprep.subr.mxu0 %v703
          %1037 = vmatpush1.msra.mxu0 %v702
          %1038 = vmatprep.subr.mxu0 %v699
          %1039 = vmatpush1.msra.mxu0 %v698
          %1040 = vmatprep.subr.mxu0 %v695
          %1041 = vmatpush1.msra.mxu0 %v694
          %1042 = vmatprep.subr.mxu0 %v691
          %1043 = vmatpush1.msra.mxu0 %v690
          %1044 = vmatprep.subr.mxu0 %v687
          %1045 = vmatpush1.msra.mxu0 %v686
          %1046 = vmatprep.subr.mxu0 0.0
          %1047 = vmatpush2.msra.mxu0 0.0
          %1048 = vmatprep.subr.mxu0 0.0
          %1049 = vmatpush2.msra.mxu0 0.0
          %1050 = vmatprep.subr.mxu0 0.0
          %1051 = vmatpush2.msra.mxu0 0.0
          %1052 = vmatprep.subr.mxu0 0.0
          %1053 = vmatpush2.msra.mxu0 0.0
          %1054 = vmatprep.subr.mxu0 0.0
          %1055 = vmatpush2.msra.mxu0 0.0
          %1056 = vmatprep.subr.mxu0 0.0
          %1057 = vmatpush2.msra.mxu0 0.0
          %1058 = vmatprep.subr.mxu0 0.0
          %1059 = vmatpush2.msra.mxu0 0.0
          %1060 = vmatprep.subr.mxu0 0.0
          %1061 = vmatpush2.msra.mxu0 0.0
          %1062 = vmatprep.subr.mxu0 0.0
          %1063 = vmatpush2.msra.mxu0 0.0
          %1064 = vmatprep.subr.mxu0 0.0
          %1065 = vmatpush2.msra.mxu0 0.0
          %1066 = vmatprep.subr.mxu0 0.0
          %1067 = vmatpush2.msra.mxu0 0.0
          %1068 = vmatprep.subr.mxu0 0.0
          %1069 = vmatpush2.msra.mxu0 0.0
          %1070 = vmatprep.subr.mxu0 0.0
          %1071 = vmatpush2.msra.mxu0 0.0
          %1072 = vmatprep.subr.mxu0 0.0
          %1073 = vmatpush2.msra.mxu0 0.0
          %1074 = vmatprep.subr.mxu0 0.0
          %1075 = vmatpush2.msra.mxu0 0.0
          %1076 = vmatprep.subr.mxu0 0.0
          %1077 = vmatpush2.msra.mxu0 0.0
          %1078 = vmatprep.mubr.f32.mxu0 0.0
          %1079 = vmatmul.mubr.f32.gmra.mxu0 %v934
          %v1080 = vpop.f32.mrf.mxu0
          %v1081 = vadd.f32 0.0, %v1080
          %v1082 = vpop.f32.mrf.mxu0
          %v1083 = vadd.f32 0.0, %v1082
          %1084 = vdwg.mxu0
          %v1085 = vadd.f32 %v939, %v1010
          %v1086 = vadd.f32 %v940, %v1012
          %v1087 = vadd.f32 %v941, %v1081
          %v1088 = vadd.f32 %v942, %v1083
          %v1089 = vxor.u32 %v1085, 2147483648
          %v1090 = vmul.f32 %v1089, 1.442695
          %v1091 = vpow.pop %v1090
          %v1092 = vadd.f32 %v1091, 1.0
          %v1093 = vrcp.pop %v1092
          %v1094 = vmul.f32 1.0, %v1093
          %v1095 = vxor.u32 %v1086, 2147483648
          %v1096 = vmul.f32 %v1095, 1.442695
          %v1097 = vpow.pop %v1096
          %v1098 = vadd.f32 %v1097, 1.0
          %v1099 = vrcp.pop %v1098
          %v1100 = vmul.f32 1.0, %v1099
          %v1101 = vtanh.pop %v1087
          %v1102 = vxor.u32 %v1088, 2147483648
          %v1103 = vmul.f32 %v1102, 1.442695
          %v1104 = vpow.pop %v1103
          %v1105 = vadd.f32 %v1104, 1.0
          %v1106 = vrcp.pop %v1105
          %v1107 = vmul.f32 1.0, %v1106
          %v1108 = vmul.f32 %v1100, %v935
          %v1109 = vmul.f32 %v1094, %v1101
          %v1110 = vadd.f32 %v1108, %v1109
          %v1111 = vtanh.pop %v1110
          %v1112 = vmul.f32 %v1107, %v1111
          %1113 = vst [vmem:[#allocation2] sm:$0xff] %v1112
          %1114 = vst [vmem:[#allocation3] sm:$0xff] %v1110
          %s1115 = scalar_lea.vmem %s416, 8 [#allocation14]
          %1116 = vst [vmem:[%s1115] sm:$0xff] %v1112
          %v1117 = vld [vmem:[#allocation2] sm:$0xff]
          %v1118 = vld [vmem:[#allocation3] sm:$0xff]
          %s1119 = smul.u32 2, 4
          %s1120 = smul.addr %s1119, 8
          %s1121 = scalar_lea.vmem [#allocation4], %s1120
          %v1122 = vld [vmem:[%s1121] sm:$0xff]
          %v1123 = vld [vmem:[%s1121 + $0x8] sm:$0xff]
          %v1124 = vld [vmem:[%s1121 + $0x10] sm:$0xff]
          %v1125 = vld [vmem:[%s1121 + $0x18] sm:$0xff]
          %1126 = vmatprep.subr.mxu0 %v745
          %1127 = vmatpush1.msra.mxu0 %v744
          %1128 = vmatprep.subr.mxu0 %v741
          %1129 = vmatpush1.msra.mxu0 %v740
          %1130 = vmatprep.subr.mxu0 %v737
          %1131 = vmatpush1.msra.mxu0 %v736
          %1132 = vmatprep.subr.mxu0 %v733
          %1133 = vmatpush1.msra.mxu0 %v732
          %1134 = vmatprep.subr.mxu0 %v729
          %1135 = vmatpush1.msra.mxu0 %v728
          %1136 = vmatprep.subr.mxu0 %v725
          %1137 = vmatpush1.msra.mxu0 %v724
          %1138 = vmatprep.subr.mxu0 %v721
          %1139 = vmatpush1.msra.mxu0 %v720
          %1140 = vmatprep.subr.mxu0 %v717
          %1141 = vmatpush1.msra.mxu0 %v716
          %1142 = vmatprep.subr.mxu0 %v713
          %1143 = vmatpush1.msra.mxu0 %v712
          %1144 = vmatprep.subr.mxu0 %v709
          %1145 = vmatpush1.msra.mxu0 %v708
          %1146 = vmatprep.subr.mxu0 %v705
          %1147 = vmatpush1.msra.mxu0 %v704
          %1148 = vmatprep.subr.mxu0 %v701
          %1149 = vmatpush1.msra.mxu0 %v700
          %1150 = vmatprep.subr.mxu0 %v697
          %1151 = vmatpush1.msra.mxu0 %v696
          %1152 = vmatprep.subr.mxu0 %v693
          %1153 = vmatpush1.msra.mxu0 %v692
          %1154 = vmatprep.subr.mxu0 %v689
          %1155 = vmatpush1.msra.mxu0 %v688
          %1156 = vmatprep.subr.mxu0 %v685
          %1157 = vmatpush1.msra.mxu0 %v684
          %1158 = vmatprep.subr.mxu0 0.0
          %1159 = vmatpush2.msra.mxu0 0.0
          %1160 = vmatprep.subr.mxu0 0.0
          %1161 = vmatpush2.msra.mxu0 0.0
          %1162 = vmatprep.subr.mxu0 0.0
          %1163 = vmatpush2.msra.mxu0 0.0
          %1164 = vmatprep.subr.mxu0 0.0
          %1165 = vmatpush2.msra.mxu0 0.0
          %1166 = vmatprep.subr.mxu0 0.0
          %1167 = vmatpush2.msra.mxu0 0.0
          %1168 = vmatprep.subr.mxu0 0.0
          %1169 = vmatpush2.msra.mxu0 0.0
          %1170 = vmatprep.subr.mxu0 0.0
          %1171 = vmatpush2.msra.mxu0 0.0
          %1172 = vmatprep.subr.mxu0 0.0
          %1173 = vmatpush2.msra.mxu0 0.0
          %1174 = vmatprep.subr.mxu0 0.0
          %1175 = vmatpush2.msra.mxu0 0.0
          %1176 = vmatprep.subr.mxu0 0.0
          %1177 = vmatpush2.msra.mxu0 0.0
          %1178 = vmatprep.subr.mxu0 0.0
          %1179 = vmatpush2.msra.mxu0 0.0
          %1180 = vmatprep.subr.mxu0 0.0
          %1181 = vmatpush2.msra.mxu0 0.0
          %1182 = vmatprep.subr.mxu0 0.0
          %1183 = vmatpush2.msra.mxu0 0.0
          %1184 = vmatprep.subr.mxu0 0.0
          %1185 = vmatpush2.msra.mxu0 0.0
          %1186 = vmatprep.subr.mxu0 0.0
          %1187 = vmatpush2.msra.mxu0 0.0
          %1188 = vmatprep.subr.mxu0 0.0
          %1189 = vmatpush2.msra.mxu0 0.0
          %1190 = vmatprep.mubr.f32.mxu0 0.0
          %1191 = vmatmul.mubr.f32.gmra.mxu0 %v1117
          %v1192 = vpop.f32.mrf.mxu0
          %v1193 = vadd.f32 0.0, %v1192
          %v1194 = vpop.f32.mrf.mxu0
          %v1195 = vadd.f32 0.0, %v1194
          %1196 = vdwg.mxu0
          %1197 = vmatprep.subr.mxu0 %v747
          %1198 = vmatpush1.msra.mxu0 %v746
          %1199 = vmatprep.subr.mxu0 %v743
          %1200 = vmatpush1.msra.mxu0 %v742
          %1201 = vmatprep.subr.mxu0 %v739
          %1202 = vmatpush1.msra.mxu0 %v738
          %1203 = vmatprep.subr.mxu0 %v735
          %1204 = vmatpush1.msra.mxu0 %v734
          %1205 = vmatprep.subr.mxu0 %v731
          %1206 = vmatpush1.msra.mxu0 %v730
          %1207 = vmatprep.subr.mxu0 %v727
          %1208 = vmatpush1.msra.mxu0 %v726
          %1209 = vmatprep.subr.mxu0 %v723
          %1210 = vmatpush1.msra.mxu0 %v722
          %1211 = vmatprep.subr.mxu0 %v719
          %1212 = vmatpush1.msra.mxu0 %v718
          %1213 = vmatprep.subr.mxu0 %v715
          %1214 = vmatpush1.msra.mxu0 %v714
          %1215 = vmatprep.subr.mxu0 %v711
          %1216 = vmatpush1.msra.mxu0 %v710
          %1217 = vmatprep.subr.mxu0 %v707
          %1218 = vmatpush1.msra.mxu0 %v706
          %1219 = vmatprep.subr.mxu0 %v703
          %1220 = vmatpush1.msra.mxu0 %v702
          %1221 = vmatprep.subr.mxu0 %v699
          %1222 = vmatpush1.msra.mxu0 %v698
          %1223 = vmatprep.subr.mxu0 %v695
          %1224 = vmatpush1.msra.mxu0 %v694
          %1225 = vmatprep.subr.mxu0 %v691
          %1226 = vmatpush1.msra.mxu0 %v690
          %1227 = vmatprep.subr.mxu0 %v687
          %1228 = vmatpush1.msra.mxu0 %v686
          %1229 = vmatprep.subr.mxu0 0.0
          %1230 = vmatpush2.msra.mxu0 0.0
          %1231 = vmatprep.subr.mxu0 0.0
          %1232 = vmatpush2.msra.mxu0 0.0
          %1233 = vmatprep.subr.mxu0 0.0
          %1234 = vmatpush2.msra.mxu0 0.0
          %1235 = vmatprep.subr.mxu0 0.0
          %1236 = vmatpush2.msra.mxu0 0.0
          %1237 = vmatprep.subr.mxu0 0.0
          %1238 = vmatpush2.msra.mxu0 0.0
          %1239 = vmatprep.subr.mxu0 0.0
          %1240 = vmatpush2.msra.mxu0 0.0
          %1241 = vmatprep.subr.mxu0 0.0
          %1242 = vmatpush2.msra.mxu0 0.0
          %1243 = vmatprep.subr.mxu0 0.0
          %1244 = vmatpush2.msra.mxu0 0.0
          %1245 = vmatprep.subr.mxu0 0.0
          %1246 = vmatpush2.msra.mxu0 0.0
          %1247 = vmatprep.subr.mxu0 0.0
          %1248 = vmatpush2.msra.mxu0 0.0
          %1249 = vmatprep.subr.mxu0 0.0
          %1250 = vmatpush2.msra.mxu0 0.0
          %1251 = vmatprep.subr.mxu0 0.0
          %1252 = vmatpush2.msra.mxu0 0.0
          %1253 = vmatprep.subr.mxu0 0.0
          %1254 = vmatpush2.msra.mxu0 0.0
          %1255 = vmatprep.subr.mxu0 0.0
          %1256 = vmatpush2.msra.mxu0 0.0
          %1257 = vmatprep.subr.mxu0 0.0
          %1258 = vmatpush2.msra.mxu0 0.0
          %1259 = vmatprep.subr.mxu0 0.0
          %1260 = vmatpush2.msra.mxu0 0.0
          %1261 = vmatprep.mubr.f32.mxu0 0.0
          %1262 = vmatmul.mubr.f32.gmra.mxu0 %v1117
          %v1263 = vpop.f32.mrf.mxu0
          %v1264 = vadd.f32 0.0, %v1263
          %v1265 = vpop.f32.mrf.mxu0
          %v1266 = vadd.f32 0.0, %v1265
          %1267 = vdwg.mxu0
          %v1268 = vadd.f32 %v1122, %v1193
          %v1269 = vadd.f32 %v1123, %v1195
          %v1270 = vadd.f32 %v1124, %v1264
          %v1271 = vadd.f32 %v1125, %v1266
          %v1272 = vxor.u32 %v1268, 2147483648
          %v1273 = vmul.f32 %v1272, 1.442695
          %v1274 = vpow.pop %v1273
          %v1275 = vadd.f32 %v1274, 1.0
          %v1276 = vrcp.pop %v1275
          %v1277 = vmul.f32 1.0, %v1276
          %v1278 = vxor.u32 %v1269, 2147483648
          %v1279 = vmul.f32 %v1278, 1.442695
          %v1280 = vpow.pop %v1279
          %v1281 = vadd.f32 %v1280, 1.0
          %v1282 = vrcp.pop %v1281
          %v1283 = vmul.f32 1.0, %v1282
          %v1284 = vtanh.pop %v1270
          %v1285 = vxor.u32 %v1271, 2147483648
          %v1286 = vmul.f32 %v1285, 1.442695
          %v1287 = vpow.pop %v1286
          %v1288 = vadd.f32 %v1287, 1.0
          %v1289 = vrcp.pop %v1288
          %v1290 = vmul.f32 1.0, %v1289
          %v1291 = vmul.f32 %v1283, %v1118
          %v1292 = vmul.f32 %v1277, %v1284
          %v1293 = vadd.f32 %v1291, %v1292
          %v1294 = vtanh.pop %v1293
          %v1295 = vmul.f32 %v1290, %v1294
          %1296 = vst [vmem:[#allocation2] sm:$0xff] %v1295
          %1297 = vst [vmem:[#allocation3] sm:$0xff] %v1293
          %s1298 = scalar_lea.vmem %s416, 16 [#allocation14]
          %1299 = vst [vmem:[%s1298] sm:$0xff] %v1295
          %v1300 = vld [vmem:[#allocation2] sm:$0xff]
          %v1301 = vld [vmem:[#allocation3] sm:$0xff]
          %s1302 = smul.u32 3, 4
          %s1303 = smul.addr %s1302, 8
          %s1304 = scalar_lea.vmem [#allocation4], %s1303
          %v1305 = vld [vmem:[%s1304] sm:$0xff]
          %v1306 = vld [vmem:[%s1304 + $0x8] sm:$0xff]
          %v1307 = vld [vmem:[%s1304 + $0x10] sm:$0xff]
          %v1308 = vld [vmem:[%s1304 + $0x18] sm:$0xff]
          %1309 = vmatprep.subr.mxu0 %v745
          %1310 = vmatpush1.msra.mxu0 %v744
          %1311 = vmatprep.subr.mxu0 %v741
          %1312 = vmatpush1.msra.mxu0 %v740
          %1313 = vmatprep.subr.mxu0 %v737
          %1314 = vmatpush1.msra.mxu0 %v736
          %1315 = vmatprep.subr.mxu0 %v733
          %1316 = vmatpush1.msra.mxu0 %v732
          %1317 = vmatprep.subr.mxu0 %v729
          %1318 = vmatpush1.msra.mxu0 %v728
          %1319 = vmatprep.subr.mxu0 %v725
          %1320 = vmatpush1.msra.mxu0 %v724
          %1321 = vmatprep.subr.mxu0 %v721
          %1322 = vmatpush1.msra.mxu0 %v720
          %1323 = vmatprep.subr.mxu0 %v717
          %1324 = vmatpush1.msra.mxu0 %v716
          %1325 = vmatprep.subr.mxu0 %v713
          %1326 = vmatpush1.msra.mxu0 %v712
          %1327 = vmatprep.subr.mxu0 %v709
          %1328 = vmatpush1.msra.mxu0 %v708
          %1329 = vmatprep.subr.mxu0 %v705
          %1330 = vmatpush1.msra.mxu0 %v704
          %1331 = vmatprep.subr.mxu0 %v701
          %1332 = vmatpush1.msra.mxu0 %v700
          %1333 = vmatprep.subr.mxu0 %v697
          %1334 = vmatpush1.msra.mxu0 %v696
          %1335 = vmatprep.subr.mxu0 %v693
          %1336 = vmatpush1.msra.mxu0 %v692
          %1337 = vmatprep.subr.mxu0 %v689
          %1338 = vmatpush1.msra.mxu0 %v688
          %1339 = vmatprep.subr.mxu0 %v685
          %1340 = vmatpush1.msra.mxu0 %v684
          %1341 = vmatprep.subr.mxu0 0.0
          %1342 = vmatpush2.msra.mxu0 0.0
          %1343 = vmatprep.subr.mxu0 0.0
          %1344 = vmatpush2.msra.mxu0 0.0
          %1345 = vmatprep.subr.mxu0 0.0
          %1346 = vmatpush2.msra.mxu0 0.0
          %1347 = vmatprep.subr.mxu0 0.0
          %1348 = vmatpush2.msra.mxu0 0.0
          %1349 = vmatprep.subr.mxu0 0.0
          %1350 = vmatpush2.msra.mxu0 0.0
          %1351 = vmatprep.subr.mxu0 0.0
          %1352 = vmatpush2.msra.mxu0 0.0
          %1353 = vmatprep.subr.mxu0 0.0
          %1354 = vmatpush2.msra.mxu0 0.0
          %1355 = vmatprep.subr.mxu0 0.0
          %1356 = vmatpush2.msra.mxu0 0.0
          %1357 = vmatprep.subr.mxu0 0.0
          %1358 = vmatpush2.msra.mxu0 0.0
          %1359 = vmatprep.subr.mxu0 0.0
          %1360 = vmatpush2.msra.mxu0 0.0
          %1361 = vmatprep.subr.mxu0 0.0
          %1362 = vmatpush2.msra.mxu0 0.0
          %1363 = vmatprep.subr.mxu0 0.0
          %1364 = vmatpush2.msra.mxu0 0.0
          %1365 = vmatprep.subr.mxu0 0.0
          %1366 = vmatpush2.msra.mxu0 0.0
          %1367 = vmatprep.subr.mxu0 0.0
          %1368 = vmatpush2.msra.mxu0 0.0
          %1369 = vmatprep.subr.mxu0 0.0
          %1370 = vmatpush2.msra.mxu0 0.0
          %1371 = vmatprep.subr.mxu0 0.0
          %1372 = vmatpush2.msra.mxu0 0.0
          %1373 = vmatprep.mubr.f32.mxu0 0.0
          %1374 = vmatmul.mubr.f32.gmra.mxu0 %v1300
          %v1375 = vpop.f32.mrf.mxu0
          %v1376 = vadd.f32 0.0, %v1375
          %v1377 = vpop.f32.mrf.mxu0
          %v1378 = vadd.f32 0.0, %v1377
          %1379 = vdwg.mxu0
          %1380 = vmatprep.subr.mxu0 %v747
          %1381 = vmatpush1.msra.mxu0 %v746
          %1382 = vmatprep.subr.mxu0 %v743
          %1383 = vmatpush1.msra.mxu0 %v742
          %1384 = vmatprep.subr.mxu0 %v739
          %1385 = vmatpush1.msra.mxu0 %v738
          %1386 = vmatprep.subr.mxu0 %v735
          %1387 = vmatpush1.msra.mxu0 %v734
          %1388 = vmatprep.subr.mxu0 %v731
          %1389 = vmatpush1.msra.mxu0 %v730
          %1390 = vmatprep.subr.mxu0 %v727
          %1391 = vmatpush1.msra.mxu0 %v726
          %1392 = vmatprep.subr.mxu0 %v723
          %1393 = vmatpush1.msra.mxu0 %v722
          %1394 = vmatprep.subr.mxu0 %v719
          %1395 = vmatpush1.msra.mxu0 %v718
          %1396 = vmatprep.subr.mxu0 %v715
          %1397 = vmatpush1.msra.mxu0 %v714
          %1398 = vmatprep.subr.mxu0 %v711
          %1399 = vmatpush1.msra.mxu0 %v710
          %1400 = vmatprep.subr.mxu0 %v707
          %1401 = vmatpush1.msra.mxu0 %v706
          %1402 = vmatprep.subr.mxu0 %v703
          %1403 = vmatpush1.msra.mxu0 %v702
          %1404 = vmatprep.subr.mxu0 %v699
          %1405 = vmatpush1.msra.mxu0 %v698
          %1406 = vmatprep.subr.mxu0 %v695
          %1407 = vmatpush1.msra.mxu0 %v694
          %1408 = vmatprep.subr.mxu0 %v691
          %1409 = vmatpush1.msra.mxu0 %v690
          %1410 = vmatprep.subr.mxu0 %v687
          %1411 = vmatpush1.msra.mxu0 %v686
          %1412 = vmatprep.subr.mxu0 0.0
          %1413 = vmatpush2.msra.mxu0 0.0
          %1414 = vmatprep.subr.mxu0 0.0
          %1415 = vmatpush2.msra.mxu0 0.0
          %1416 = vmatprep.subr.mxu0 0.0
          %1417 = vmatpush2.msra.mxu0 0.0
          %1418 = vmatprep.subr.mxu0 0.0
          %1419 = vmatpush2.msra.mxu0 0.0
          %1420 = vmatprep.subr.mxu0 0.0
          %1421 = vmatpush2.msra.mxu0 0.0
          %1422 = vmatprep.subr.mxu0 0.0
          %1423 = vmatpush2.msra.mxu0 0.0
          %1424 = vmatprep.subr.mxu0 0.0
          %1425 = vmatpush2.msra.mxu0 0.0
          %1426 = vmatprep.subr.mxu0 0.0
          %1427 = vmatpush2.msra.mxu0 0.0
          %1428 = vmatprep.subr.mxu0 0.0
          %1429 = vmatpush2.msra.mxu0 0.0
          %1430 = vmatprep.subr.mxu0 0.0
          %1431 = vmatpush2.msra.mxu0 0.0
          %1432 = vmatprep.subr.mxu0 0.0
          %1433 = vmatpush2.msra.mxu0 0.0
          %1434 = vmatprep.subr.mxu0 0.0
          %1435 = vmatpush2.msra.mxu0 0.0
          %1436 = vmatprep.subr.mxu0 0.0
          %1437 = vmatpush2.msra.mxu0 0.0
          %1438 = vmatprep.subr.mxu0 0.0
          %1439 = vmatpush2.msra.mxu0 0.0
          %1440 = vmatprep.subr.mxu0 0.0
          %1441 = vmatpush2.msra.mxu0 0.0
          %1442 = vmatprep.subr.mxu0 0.0
          %1443 = vmatpush2.msra.mxu0 0.0
          %1444 = vmatprep.mubr.f32.mxu0 0.0
          %1445 = vmatmul.mubr.f32.gmra.mxu0 %v1300
          %v1446 = vpop.f32.mrf.mxu0
          %v1447 = vadd.f32 0.0, %v1446
          %v1448 = vpop.f32.mrf.mxu0
          %v1449 = vadd.f32 0.0, %v1448
          %1450 = vdwg.mxu0
          %v1451 = vadd.f32 %v1305, %v1376
          %v1452 = vadd.f32 %v1306, %v1378
          %v1453 = vadd.f32 %v1307, %v1447
          %v1454 = vadd.f32 %v1308, %v1449
          %v1455 = vxor.u32 %v1451, 2147483648
          %v1456 = vmul.f32 %v1455, 1.442695
          %v1457 = vpow.pop %v1456
          %v1458 = vadd.f32 %v1457, 1.0
          %v1459 = vrcp.pop %v1458
          %v1460 = vmul.f32 1.0, %v1459
          %v1461 = vxor.u32 %v1452, 2147483648
          %v1462 = vmul.f32 %v1461, 1.442695
          %v1463 = vpow.pop %v1462
          %v1464 = vadd.f32 %v1463, 1.0
          %v1465 = vrcp.pop %v1464
          %v1466 = vmul.f32 1.0, %v1465
          %v1467 = vtanh.pop %v1453
          %v1468 = vxor.u32 %v1454, 2147483648
          %v1469 = vmul.f32 %v1468, 1.442695
          %v1470 = vpow.pop %v1469
          %v1471 = vadd.f32 %v1470, 1.0
          %v1472 = vrcp.pop %v1471
          %v1473 = vmul.f32 1.0, %v1472
          %v1474 = vmul.f32 %v1466, %v1301
          %v1475 = vmul.f32 %v1460, %v1467
          %v1476 = vadd.f32 %v1474, %v1475
          %v1477 = vtanh.pop %v1476
          %v1478 = vmul.f32 %v1473, %v1477
          %1479 = vst [vmem:[#allocation2] sm:$0xff] %v1478
          %1480 = vst [vmem:[#allocation3] sm:$0xff] %v1476
          %s1481 = scalar_lea.vmem %s416, 24 [#allocation14]
          %1482 = vst [vmem:[%s1481] sm:$0xff] %v1478
        $region72: #{tpu_custom_call.1} parent=43 // pred_fallthru
          _
        %p1483 = scmp.eq.s32.totalorder %s34, 2
        // Predicated region
        $region73: #{tpu_custom_call.1} parent=43 // pred_check
          %p1484 = pneg %p1483
        $region74: #{tpu_custom_call.1} parent=43 // pred_check_branch
          %1486 = sbr.rel (%p1484) target = $region76
        $region75: #{tpu_custom_call.1} parent=43 // pred_region
          %v1487 = vld [vmem:[#allocation2] sm:$0xff]
          %v1488 = vld [vmem:[#allocation3] sm:$0xff]
          %s1489 = smul.u32 0, 4
          %s1490 = smul.addr %s1489, 8
          %s1491 = scalar_lea.vmem [#allocation4], %s1490
          %v1492 = vld [vmem:[%s1491] sm:$0xff]
          %v1493 = vld [vmem:[%s1491 + $0x8] sm:$0xff]
          %v1494 = vld [vmem:[%s1491 + $0x10] sm:$0xff]
          %v1495 = vld [vmem:[%s1491 + $0x18] sm:$0xff]
          %1496 = vmatprep.subr.mxu0 %v745
          %1497 = vmatpush1.msra.mxu0 %v744
          %1498 = vmatprep.subr.mxu0 %v741
          %1499 = vmatpush1.msra.mxu0 %v740
          %1500 = vmatprep.subr.mxu0 %v737
          %1501 = vmatpush1.msra.mxu0 %v736
          %1502 = vmatprep.subr.mxu0 %v733
          %1503 = vmatpush1.msra.mxu0 %v732
          %1504 = vmatprep.subr.mxu0 %v729
          %1505 = vmatpush1.msra.mxu0 %v728
          %1506 = vmatprep.subr.mxu0 %v725
          %1507 = vmatpush1.msra.mxu0 %v724
          %1508 = vmatprep.subr.mxu0 %v721
          %1509 = vmatpush1.msra.mxu0 %v720
          %1510 = vmatprep.subr.mxu0 %v717
          %1511 = vmatpush1.msra.mxu0 %v716
          %1512 = vmatprep.subr.mxu0 %v713
          %1513 = vmatpush1.msra.mxu0 %v712
          %1514 = vmatprep.subr.mxu0 %v709
          %1515 = vmatpush1.msra.mxu0 %v708
          %1516 = vmatprep.subr.mxu0 %v705
          %1517 = vmatpush1.msra.mxu0 %v704
          %1518 = vmatprep.subr.mxu0 %v701
          %1519 = vmatpush1.msra.mxu0 %v700
          %1520 = vmatprep.subr.mxu0 %v697
          %1521 = vmatpush1.msra.mxu0 %v696
          %1522 = vmatprep.subr.mxu0 %v693
          %1523 = vmatpush1.msra.mxu0 %v692
          %1524 = vmatprep.subr.mxu0 %v689
          %1525 = vmatpush1.msra.mxu0 %v688
          %1526 = vmatprep.subr.mxu0 %v685
          %1527 = vmatpush1.msra.mxu0 %v684
          %1528 = vmatprep.subr.mxu0 0.0
          %1529 = vmatpush2.msra.mxu0 0.0
          %1530 = vmatprep.subr.mxu0 0.0
          %1531 = vmatpush2.msra.mxu0 0.0
          %1532 = vmatprep.subr.mxu0 0.0
          %1533 = vmatpush2.msra.mxu0 0.0
          %1534 = vmatprep.subr.mxu0 0.0
          %1535 = vmatpush2.msra.mxu0 0.0
          %1536 = vmatprep.subr.mxu0 0.0
          %1537 = vmatpush2.msra.mxu0 0.0
          %1538 = vmatprep.subr.mxu0 0.0
          %1539 = vmatpush2.msra.mxu0 0.0
          %1540 = vmatprep.subr.mxu0 0.0
          %1541 = vmatpush2.msra.mxu0 0.0
          %1542 = vmatprep.subr.mxu0 0.0
          %1543 = vmatpush2.msra.mxu0 0.0
          %1544 = vmatprep.subr.mxu0 0.0
          %1545 = vmatpush2.msra.mxu0 0.0
          %1546 = vmatprep.subr.mxu0 0.0
          %1547 = vmatpush2.msra.mxu0 0.0
          %1548 = vmatprep.subr.mxu0 0.0
          %1549 = vmatpush2.msra.mxu0 0.0
          %1550 = vmatprep.subr.mxu0 0.0
          %1551 = vmatpush2.msra.mxu0 0.0
          %1552 = vmatprep.subr.mxu0 0.0
          %1553 = vmatpush2.msra.mxu0 0.0
          %1554 = vmatprep.subr.mxu0 0.0
          %1555 = vmatpush2.msra.mxu0 0.0
          %1556 = vmatprep.subr.mxu0 0.0
          %1557 = vmatpush2.msra.mxu0 0.0
          %1558 = vmatprep.subr.mxu0 0.0
          %1559 = vmatpush2.msra.mxu0 0.0
          %1560 = vmatprep.mubr.f32.mxu0 0.0
          %1561 = vmatmul.mubr.f32.gmra.mxu0 %v1487
          %v1562 = vpop.f32.mrf.mxu0
          %v1563 = vadd.f32 0.0, %v1562
          %v1564 = vpop.f32.mrf.mxu0
          %v1565 = vadd.f32 0.0, %v1564
          %1566 = vdwg.mxu0
          %1567 = vmatprep.subr.mxu0 %v747
          %1568 = vmatpush1.msra.mxu0 %v746
          %1569 = vmatprep.subr.mxu0 %v743
          %1570 = vmatpush1.msra.mxu0 %v742
          %1571 = vmatprep.subr.mxu0 %v739
          %1572 = vmatpush1.msra.mxu0 %v738
          %1573 = vmatprep.subr.mxu0 %v735
          %1574 = vmatpush1.msra.mxu0 %v734
          %1575 = vmatprep.subr.mxu0 %v731
          %1576 = vmatpush1.msra.mxu0 %v730
          %1577 = vmatprep.subr.mxu0 %v727
          %1578 = vmatpush1.msra.mxu0 %v726
          %1579 = vmatprep.subr.mxu0 %v723
          %1580 = vmatpush1.msra.mxu0 %v722
          %1581 = vmatprep.subr.mxu0 %v719
          %1582 = vmatpush1.msra.mxu0 %v718
          %1583 = vmatprep.subr.mxu0 %v715
          %1584 = vmatpush1.msra.mxu0 %v714
          %1585 = vmatprep.subr.mxu0 %v711
          %1586 = vmatpush1.msra.mxu0 %v710
          %1587 = vmatprep.subr.mxu0 %v707
          %1588 = vmatpush1.msra.mxu0 %v706
          %1589 = vmatprep.subr.mxu0 %v703
          %1590 = vmatpush1.msra.mxu0 %v702
          %1591 = vmatprep.subr.mxu0 %v699
          %1592 = vmatpush1.msra.mxu0 %v698
          %1593 = vmatprep.subr.mxu0 %v695
          %1594 = vmatpush1.msra.mxu0 %v694
          %1595 = vmatprep.subr.mxu0 %v691
          %1596 = vmatpush1.msra.mxu0 %v690
          %1597 = vmatprep.subr.mxu0 %v687
          %1598 = vmatpush1.msra.mxu0 %v686
          %1599 = vmatprep.subr.mxu0 0.0
          %1600 = vmatpush2.msra.mxu0 0.0
          %1601 = vmatprep.subr.mxu0 0.0
          %1602 = vmatpush2.msra.mxu0 0.0
          %1603 = vmatprep.subr.mxu0 0.0
          %1604 = vmatpush2.msra.mxu0 0.0
          %1605 = vmatprep.subr.mxu0 0.0
          %1606 = vmatpush2.msra.mxu0 0.0
          %1607 = vmatprep.subr.mxu0 0.0
          %1608 = vmatpush2.msra.mxu0 0.0
          %1609 = vmatprep.subr.mxu0 0.0
          %1610 = vmatpush2.msra.mxu0 0.0
          %1611 = vmatprep.subr.mxu0 0.0
          %1612 = vmatpush2.msra.mxu0 0.0
          %1613 = vmatprep.subr.mxu0 0.0
          %1614 = vmatpush2.msra.mxu0 0.0
          %1615 = vmatprep.subr.mxu0 0.0
          %1616 = vmatpush2.msra.mxu0 0.0
          %1617 = vmatprep.subr.mxu0 0.0
          %1618 = vmatpush2.msra.mxu0 0.0
          %1619 = vmatprep.subr.mxu0 0.0
          %1620 = vmatpush2.msra.mxu0 0.0
          %1621 = vmatprep.subr.mxu0 0.0
          %1622 = vmatpush2.msra.mxu0 0.0
          %1623 = vmatprep.subr.mxu0 0.0
          %1624 = vmatpush2.msra.mxu0 0.0
          %1625 = vmatprep.subr.mxu0 0.0
          %1626 = vmatpush2.msra.mxu0 0.0
          %1627 = vmatprep.subr.mxu0 0.0
          %1628 = vmatpush2.msra.mxu0 0.0
          %1629 = vmatprep.subr.mxu0 0.0
          %1630 = vmatpush2.msra.mxu0 0.0
          %1631 = vmatprep.mubr.f32.mxu0 0.0
          %1632 = vmatmul.mubr.f32.gmra.mxu0 %v1487
          %v1633 = vpop.f32.mrf.mxu0
          %v1634 = vadd.f32 0.0, %v1633
          %v1635 = vpop.f32.mrf.mxu0
          %v1636 = vadd.f32 0.0, %v1635
          %1637 = vdwg.mxu0
          %v1638 = vadd.f32 %v1492, %v1563
          %v1639 = vadd.f32 %v1493, %v1565
          %v1640 = vadd.f32 %v1494, %v1634
          %v1641 = vadd.f32 %v1495, %v1636
          %v1642 = vxor.u32 %v1638, 2147483648
          %v1643 = vmul.f32 %v1642, 1.442695
          %v1644 = vpow.pop %v1643
          %v1645 = vadd.f32 %v1644, 1.0
          %v1646 = vrcp.pop %v1645
          %v1647 = vmul.f32 1.0, %v1646
          %v1648 = vxor.u32 %v1639, 2147483648
          %v1649 = vmul.f32 %v1648, 1.442695
          %v1650 = vpow.pop %v1649
          %v1651 = vadd.f32 %v1650, 1.0
          %v1652 = vrcp.pop %v1651
          %v1653 = vmul.f32 1.0, %v1652
          %v1654 = vtanh.pop %v1640
          %v1655 = vxor.u32 %v1641, 2147483648
          %v1656 = vmul.f32 %v1655, 1.442695
          %v1657 = vpow.pop %v1656
          %v1658 = vadd.f32 %v1657, 1.0
          %v1659 = vrcp.pop %v1658
          %v1660 = vmul.f32 1.0, %v1659
          %v1661 = vmul.f32 %v1653, %v1488
          %v1662 = vmul.f32 %v1647, %v1654
          %v1663 = vadd.f32 %v1661, %v1662
          %v1664 = vtanh.pop %v1663
          %v1665 = vmul.f32 %v1660, %v1664
          %s1666 = smul.u32 %s34, 4
          %p1667 = scmp.lt.s32.totalorder %s1666, 10
          %s1668 = scalar_select %p1667, 1, 0
          %v1669 = vstv %s1668
          %vm1670 = vcmp.eq.s32.totalorder %v1669, 1
          %v1671 = vsel %vm1670, %v1663, %v1488
          %v1672 = vsel %vm1670, %v1665, %v1487
          %1673 = vst [vmem:[#allocation2] sm:$0xff] %v1672
          %1674 = vst [vmem:[#allocation3] sm:$0xff] %v1671
          %1675 = vst [vmem:[%s416] sm:$0xff] %v1672
          %v1676 = vld [vmem:[#allocation2] sm:$0xff]
          %v1677 = vld [vmem:[#allocation3] sm:$0xff]
          %s1678 = smul.u32 1, 4
          %s1679 = smul.addr %s1678, 8
          %s1680 = scalar_lea.vmem [#allocation4], %s1679
          %v1681 = vld [vmem:[%s1680] sm:$0xff]
          %v1682 = vld [vmem:[%s1680 + $0x8] sm:$0xff]
          %v1683 = vld [vmem:[%s1680 + $0x10] sm:$0xff]
          %v1684 = vld [vmem:[%s1680 + $0x18] sm:$0xff]
          %1685 = vmatprep.subr.mxu0 %v745
          %1686 = vmatpush1.msra.mxu0 %v744
          %1687 = vmatprep.subr.mxu0 %v741
          %1688 = vmatpush1.msra.mxu0 %v740
          %1689 = vmatprep.subr.mxu0 %v737
          %1690 = vmatpush1.msra.mxu0 %v736
          %1691 = vmatprep.subr.mxu0 %v733
          %1692 = vmatpush1.msra.mxu0 %v732
          %1693 = vmatprep.subr.mxu0 %v729
          %1694 = vmatpush1.msra.mxu0 %v728
          %1695 = vmatprep.subr.mxu0 %v725
          %1696 = vmatpush1.msra.mxu0 %v724
          %1697 = vmatprep.subr.mxu0 %v721
          %1698 = vmatpush1.msra.mxu0 %v720
          %1699 = vmatprep.subr.mxu0 %v717
          %1700 = vmatpush1.msra.mxu0 %v716
          %1701 = vmatprep.subr.mxu0 %v713
          %1702 = vmatpush1.msra.mxu0 %v712
          %1703 = vmatprep.subr.mxu0 %v709
          %1704 = vmatpush1.msra.mxu0 %v708
          %1705 = vmatprep.subr.mxu0 %v705
          %1706 = vmatpush1.msra.mxu0 %v704
          %1707 = vmatprep.subr.mxu0 %v701
          %1708 = vmatpush1.msra.mxu0 %v700
          %1709 = vmatprep.subr.mxu0 %v697
          %1710 = vmatpush1.msra.mxu0 %v696
          %1711 = vmatprep.subr.mxu0 %v693
          %1712 = vmatpush1.msra.mxu0 %v692
          %1713 = vmatprep.subr.mxu0 %v689
          %1714 = vmatpush1.msra.mxu0 %v688
          %1715 = vmatprep.subr.mxu0 %v685
          %1716 = vmatpush1.msra.mxu0 %v684
          %1717 = vmatprep.subr.mxu0 0.0
          %1718 = vmatpush2.msra.mxu0 0.0
          %1719 = vmatprep.subr.mxu0 0.0
          %1720 = vmatpush2.msra.mxu0 0.0
          %1721 = vmatprep.subr.mxu0 0.0
          %1722 = vmatpush2.msra.mxu0 0.0
          %1723 = vmatprep.subr.mxu0 0.0
          %1724 = vmatpush2.msra.mxu0 0.0
          %1725 = vmatprep.subr.mxu0 0.0
          %1726 = vmatpush2.msra.mxu0 0.0
          %1727 = vmatprep.subr.mxu0 0.0
          %1728 = vmatpush2.msra.mxu0 0.0
          %1729 = vmatprep.subr.mxu0 0.0
          %1730 = vmatpush2.msra.mxu0 0.0
          %1731 = vmatprep.subr.mxu0 0.0
          %1732 = vmatpush2.msra.mxu0 0.0
          %1733 = vmatprep.subr.mxu0 0.0
          %1734 = vmatpush2.msra.mxu0 0.0
          %1735 = vmatprep.subr.mxu0 0.0
          %1736 = vmatpush2.msra.mxu0 0.0
          %1737 = vmatprep.subr.mxu0 0.0
          %1738 = vmatpush2.msra.mxu0 0.0
          %1739 = vmatprep.subr.mxu0 0.0
          %1740 = vmatpush2.msra.mxu0 0.0
          %1741 = vmatprep.subr.mxu0 0.0
          %1742 = vmatpush2.msra.mxu0 0.0
          %1743 = vmatprep.subr.mxu0 0.0
          %1744 = vmatpush2.msra.mxu0 0.0
          %1745 = vmatprep.subr.mxu0 0.0
          %1746 = vmatpush2.msra.mxu0 0.0
          %1747 = vmatprep.subr.mxu0 0.0
          %1748 = vmatpush2.msra.mxu0 0.0
          %1749 = vmatprep.mubr.f32.mxu0 0.0
          %1750 = vmatmul.mubr.f32.gmra.mxu0 %v1676
          %v1751 = vpop.f32.mrf.mxu0
          %v1752 = vadd.f32 0.0, %v1751
          %v1753 = vpop.f32.mrf.mxu0
          %v1754 = vadd.f32 0.0, %v1753
          %1755 = vdwg.mxu0
          %1756 = vmatprep.subr.mxu0 %v747
          %1757 = vmatpush1.msra.mxu0 %v746
          %1758 = vmatprep.subr.mxu0 %v743
          %1759 = vmatpush1.msra.mxu0 %v742
          %1760 = vmatprep.subr.mxu0 %v739
          %1761 = vmatpush1.msra.mxu0 %v738
          %1762 = vmatprep.subr.mxu0 %v735
          %1763 = vmatpush1.msra.mxu0 %v734
          %1764 = vmatprep.subr.mxu0 %v731
          %1765 = vmatpush1.msra.mxu0 %v730
          %1766 = vmatprep.subr.mxu0 %v727
          %1767 = vmatpush1.msra.mxu0 %v726
          %1768 = vmatprep.subr.mxu0 %v723
          %1769 = vmatpush1.msra.mxu0 %v722
          %1770 = vmatprep.subr.mxu0 %v719
          %1771 = vmatpush1.msra.mxu0 %v718
          %1772 = vmatprep.subr.mxu0 %v715
          %1773 = vmatpush1.msra.mxu0 %v714
          %1774 = vmatprep.subr.mxu0 %v711
          %1775 = vmatpush1.msra.mxu0 %v710
          %1776 = vmatprep.subr.mxu0 %v707
          %1777 = vmatpush1.msra.mxu0 %v706
          %1778 = vmatprep.subr.mxu0 %v703
          %1779 = vmatpush1.msra.mxu0 %v702
          %1780 = vmatprep.subr.mxu0 %v699
          %1781 = vmatpush1.msra.mxu0 %v698
          %1782 = vmatprep.subr.mxu0 %v695
          %1783 = vmatpush1.msra.mxu0 %v694
          %1784 = vmatprep.subr.mxu0 %v691
          %1785 = vmatpush1.msra.mxu0 %v690
          %1786 = vmatprep.subr.mxu0 %v687
          %1787 = vmatpush1.msra.mxu0 %v686
          %1788 = vmatprep.subr.mxu0 0.0
          %1789 = vmatpush2.msra.mxu0 0.0
          %1790 = vmatprep.subr.mxu0 0.0
          %1791 = vmatpush2.msra.mxu0 0.0
          %1792 = vmatprep.subr.mxu0 0.0
          %1793 = vmatpush2.msra.mxu0 0.0
          %1794 = vmatprep.subr.mxu0 0.0
          %1795 = vmatpush2.msra.mxu0 0.0
          %1796 = vmatprep.subr.mxu0 0.0
          %1797 = vmatpush2.msra.mxu0 0.0
          %1798 = vmatprep.subr.mxu0 0.0
          %1799 = vmatpush2.msra.mxu0 0.0
          %1800 = vmatprep.subr.mxu0 0.0
          %1801 = vmatpush2.msra.mxu0 0.0
          %1802 = vmatprep.subr.mxu0 0.0
          %1803 = vmatpush2.msra.mxu0 0.0
          %1804 = vmatprep.subr.mxu0 0.0
          %1805 = vmatpush2.msra.mxu0 0.0
          %1806 = vmatprep.subr.mxu0 0.0
          %1807 = vmatpush2.msra.mxu0 0.0
          %1808 = vmatprep.subr.mxu0 0.0
          %1809 = vmatpush2.msra.mxu0 0.0
          %1810 = vmatprep.subr.mxu0 0.0
          %1811 = vmatpush2.msra.mxu0 0.0
          %1812 = vmatprep.subr.mxu0 0.0
          %1813 = vmatpush2.msra.mxu0 0.0
          %1814 = vmatprep.subr.mxu0 0.0
          %1815 = vmatpush2.msra.mxu0 0.0
          %1816 = vmatprep.subr.mxu0 0.0
          %1817 = vmatpush2.msra.mxu0 0.0
          %1818 = vmatprep.subr.mxu0 0.0
          %1819 = vmatpush2.msra.mxu0 0.0
          %1820 = vmatprep.mubr.f32.mxu0 0.0
          %1821 = vmatmul.mubr.f32.gmra.mxu0 %v1676
          %v1822 = vpop.f32.mrf.mxu0
          %v1823 = vadd.f32 0.0, %v1822
          %v1824 = vpop.f32.mrf.mxu0
          %v1825 = vadd.f32 0.0, %v1824
          %1826 = vdwg.mxu0
          %v1827 = vadd.f32 %v1681, %v1752
          %v1828 = vadd.f32 %v1682, %v1754
          %v1829 = vadd.f32 %v1683, %v1823
          %v1830 = vadd.f32 %v1684, %v1825
          %v1831 = vxor.u32 %v1827, 2147483648
          %v1832 = vmul.f32 %v1831, 1.442695
          %v1833 = vpow.pop %v1832
          %v1834 = vadd.f32 %v1833, 1.0
          %v1835 = vrcp.pop %v1834
          %v1836 = vmul.f32 1.0, %v1835
          %v1837 = vxor.u32 %v1828, 2147483648
          %v1838 = vmul.f32 %v1837, 1.442695
          %v1839 = vpow.pop %v1838
          %v1840 = vadd.f32 %v1839, 1.0
          %v1841 = vrcp.pop %v1840
          %v1842 = vmul.f32 1.0, %v1841
          %v1843 = vtanh.pop %v1829
          %v1844 = vxor.u32 %v1830, 2147483648
          %v1845 = vmul.f32 %v1844, 1.442695
          %v1846 = vpow.pop %v1845
          %v1847 = vadd.f32 %v1846, 1.0
          %v1848 = vrcp.pop %v1847
          %v1849 = vmul.f32 1.0, %v1848
          %v1850 = vmul.f32 %v1842, %v1677
          %v1851 = vmul.f32 %v1836, %v1843
          %v1852 = vadd.f32 %v1850, %v1851
          %v1853 = vtanh.pop %v1852
          %v1854 = vmul.f32 %v1849, %v1853
          %s1855 = sadd.s32 %s1666, 1
          %p1856 = scmp.lt.s32.totalorder %s1855, 10
          %s1857 = scalar_select %p1856, 1, 0
          %v1858 = vstv %s1857
          %vm1859 = vcmp.eq.s32.totalorder %v1858, 1
          %v1860 = vsel %vm1859, %v1852, %v1677
          %v1861 = vsel %vm1859, %v1854, %v1676
          %1862 = vst [vmem:[#allocation2] sm:$0xff] %v1861
          %1863 = vst [vmem:[#allocation3] sm:$0xff] %v1860
          %s1864 = scalar_lea.vmem %s416, 8 [#allocation14]
          %1865 = vst [vmem:[%s1864] sm:$0xff] %v1861
          %v1866 = vld [vmem:[#allocation2] sm:$0xff]
          %v1867 = vld [vmem:[#allocation3] sm:$0xff]
          %s1868 = smul.u32 2, 4
          %s1869 = smul.addr %s1868, 8
          %s1870 = scalar_lea.vmem [#allocation4], %s1869
          %v1871 = vld [vmem:[%s1870] sm:$0xff]
          %v1872 = vld [vmem:[%s1870 + $0x8] sm:$0xff]
          %v1873 = vld [vmem:[%s1870 + $0x10] sm:$0xff]
          %v1874 = vld [vmem:[%s1870 + $0x18] sm:$0xff]
          %1875 = vmatprep.subr.mxu0 %v745
          %1876 = vmatpush1.msra.mxu0 %v744
          %1877 = vmatprep.subr.mxu0 %v741
          %1878 = vmatpush1.msra.mxu0 %v740
          %1879 = vmatprep.subr.mxu0 %v737
          %1880 = vmatpush1.msra.mxu0 %v736
          %1881 = vmatprep.subr.mxu0 %v733
          %1882 = vmatpush1.msra.mxu0 %v732
          %1883 = vmatprep.subr.mxu0 %v729
          %1884 = vmatpush1.msra.mxu0 %v728
          %1885 = vmatprep.subr.mxu0 %v725
          %1886 = vmatpush1.msra.mxu0 %v724
          %1887 = vmatprep.subr.mxu0 %v721
          %1888 = vmatpush1.msra.mxu0 %v720
          %1889 = vmatprep.subr.mxu0 %v717
          %1890 = vmatpush1.msra.mxu0 %v716
          %1891 = vmatprep.subr.mxu0 %v713
          %1892 = vmatpush1.msra.mxu0 %v712
          %1893 = vmatprep.subr.mxu0 %v709
          %1894 = vmatpush1.msra.mxu0 %v708
          %1895 = vmatprep.subr.mxu0 %v705
          %1896 = vmatpush1.msra.mxu0 %v704
          %1897 = vmatprep.subr.mxu0 %v701
          %1898 = vmatpush1.msra.mxu0 %v700
          %1899 = vmatprep.subr.mxu0 %v697
          %1900 = vmatpush1.msra.mxu0 %v696
          %1901 = vmatprep.subr.mxu0 %v693
          %1902 = vmatpush1.msra.mxu0 %v692
          %1903 = vmatprep.subr.mxu0 %v689
          %1904 = vmatpush1.msra.mxu0 %v688
          %1905 = vmatprep.subr.mxu0 %v685
          %1906 = vmatpush1.msra.mxu0 %v684
          %1907 = vmatprep.subr.mxu0 0.0
          %1908 = vmatpush2.msra.mxu0 0.0
          %1909 = vmatprep.subr.mxu0 0.0
          %1910 = vmatpush2.msra.mxu0 0.0
          %1911 = vmatprep.subr.mxu0 0.0
          %1912 = vmatpush2.msra.mxu0 0.0
          %1913 = vmatprep.subr.mxu0 0.0
          %1914 = vmatpush2.msra.mxu0 0.0
          %1915 = vmatprep.subr.mxu0 0.0
          %1916 = vmatpush2.msra.mxu0 0.0
          %1917 = vmatprep.subr.mxu0 0.0
          %1918 = vmatpush2.msra.mxu0 0.0
          %1919 = vmatprep.subr.mxu0 0.0
          %1920 = vmatpush2.msra.mxu0 0.0
          %1921 = vmatprep.subr.mxu0 0.0
          %1922 = vmatpush2.msra.mxu0 0.0
          %1923 = vmatprep.subr.mxu0 0.0
          %1924 = vmatpush2.msra.mxu0 0.0
          %1925 = vmatprep.subr.mxu0 0.0
          %1926 = vmatpush2.msra.mxu0 0.0
          %1927 = vmatprep.subr.mxu0 0.0
          %1928 = vmatpush2.msra.mxu0 0.0
          %1929 = vmatprep.subr.mxu0 0.0
          %1930 = vmatpush2.msra.mxu0 0.0
          %1931 = vmatprep.subr.mxu0 0.0
          %1932 = vmatpush2.msra.mxu0 0.0
          %1933 = vmatprep.subr.mxu0 0.0
          %1934 = vmatpush2.msra.mxu0 0.0
          %1935 = vmatprep.subr.mxu0 0.0
          %1936 = vmatpush2.msra.mxu0 0.0
          %1937 = vmatprep.subr.mxu0 0.0
          %1938 = vmatpush2.msra.mxu0 0.0
          %1939 = vmatprep.mubr.f32.mxu0 0.0
          %1940 = vmatmul.mubr.f32.gmra.mxu0 %v1866
          %v1941 = vpop.f32.mrf.mxu0
          %v1942 = vadd.f32 0.0, %v1941
          %v1943 = vpop.f32.mrf.mxu0
          %v1944 = vadd.f32 0.0, %v1943
          %1945 = vdwg.mxu0
          %1946 = vmatprep.subr.mxu0 %v747
          %1947 = vmatpush1.msra.mxu0 %v746
          %1948 = vmatprep.subr.mxu0 %v743
          %1949 = vmatpush1.msra.mxu0 %v742
          %1950 = vmatprep.subr.mxu0 %v739
          %1951 = vmatpush1.msra.mxu0 %v738
          %1952 = vmatprep.subr.mxu0 %v735
          %1953 = vmatpush1.msra.mxu0 %v734
          %1954 = vmatprep.subr.mxu0 %v731
          %1955 = vmatpush1.msra.mxu0 %v730
          %1956 = vmatprep.subr.mxu0 %v727
          %1957 = vmatpush1.msra.mxu0 %v726
          %1958 = vmatprep.subr.mxu0 %v723
          %1959 = vmatpush1.msra.mxu0 %v722
          %1960 = vmatprep.subr.mxu0 %v719
          %1961 = vmatpush1.msra.mxu0 %v718
          %1962 = vmatprep.subr.mxu0 %v715
          %1963 = vmatpush1.msra.mxu0 %v714
          %1964 = vmatprep.subr.mxu0 %v711
          %1965 = vmatpush1.msra.mxu0 %v710
          %1966 = vmatprep.subr.mxu0 %v707
          %1967 = vmatpush1.msra.mxu0 %v706
          %1968 = vmatprep.subr.mxu0 %v703
          %1969 = vmatpush1.msra.mxu0 %v702
          %1970 = vmatprep.subr.mxu0 %v699
          %1971 = vmatpush1.msra.mxu0 %v698
          %1972 = vmatprep.subr.mxu0 %v695
          %1973 = vmatpush1.msra.mxu0 %v694
          %1974 = vmatprep.subr.mxu0 %v691
          %1975 = vmatpush1.msra.mxu0 %v690
          %1976 = vmatprep.subr.mxu0 %v687
          %1977 = vmatpush1.msra.mxu0 %v686
          %1978 = vmatprep.subr.mxu0 0.0
          %1979 = vmatpush2.msra.mxu0 0.0
          %1980 = vmatprep.subr.mxu0 0.0
          %1981 = vmatpush2.msra.mxu0 0.0
          %1982 = vmatprep.subr.mxu0 0.0
          %1983 = vmatpush2.msra.mxu0 0.0
          %1984 = vmatprep.subr.mxu0 0.0
          %1985 = vmatpush2.msra.mxu0 0.0
          %1986 = vmatprep.subr.mxu0 0.0
          %1987 = vmatpush2.msra.mxu0 0.0
          %1988 = vmatprep.subr.mxu0 0.0
          %1989 = vmatpush2.msra.mxu0 0.0
          %1990 = vmatprep.subr.mxu0 0.0
          %1991 = vmatpush2.msra.mxu0 0.0
          %1992 = vmatprep.subr.mxu0 0.0
          %1993 = vmatpush2.msra.mxu0 0.0
          %1994 = vmatprep.subr.mxu0 0.0
          %1995 = vmatpush2.msra.mxu0 0.0
          %1996 = vmatprep.subr.mxu0 0.0
          %1997 = vmatpush2.msra.mxu0 0.0
          %1998 = vmatprep.subr.mxu0 0.0
          %1999 = vmatpush2.msra.mxu0 0.0
          %2000 = vmatprep.subr.mxu0 0.0
          %2001 = vmatpush2.msra.mxu0 0.0
          %2002 = vmatprep.subr.mxu0 0.0
          %2003 = vmatpush2.msra.mxu0 0.0
          %2004 = vmatprep.subr.mxu0 0.0
          %2005 = vmatpush2.msra.mxu0 0.0
          %2006 = vmatprep.subr.mxu0 0.0
          %2007 = vmatpush2.msra.mxu0 0.0
          %2008 = vmatprep.subr.mxu0 0.0
          %2009 = vmatpush2.msra.mxu0 0.0
          %2010 = vmatprep.mubr.f32.mxu0 0.0
          %2011 = vmatmul.mubr.f32.gmra.mxu0 %v1866
          %v2012 = vpop.f32.mrf.mxu0
          %v2013 = vadd.f32 0.0, %v2012
          %v2014 = vpop.f32.mrf.mxu0
          %v2015 = vadd.f32 0.0, %v2014
          %2016 = vdwg.mxu0
          %v2017 = vadd.f32 %v1871, %v1942
          %v2018 = vadd.f32 %v1872, %v1944
          %v2019 = vadd.f32 %v1873, %v2013
          %v2020 = vadd.f32 %v1874, %v2015
          %v2021 = vxor.u32 %v2017, 2147483648
          %v2022 = vmul.f32 %v2021, 1.442695
          %v2023 = vpow.pop %v2022
          %v2024 = vadd.f32 %v2023, 1.0
          %v2025 = vrcp.pop %v2024
          %v2026 = vmul.f32 1.0, %v2025
          %v2027 = vxor.u32 %v2018, 2147483648
          %v2028 = vmul.f32 %v2027, 1.442695
          %v2029 = vpow.pop %v2028
          %v2030 = vadd.f32 %v2029, 1.0
          %v2031 = vrcp.pop %v2030
          %v2032 = vmul.f32 1.0, %v2031
          %v2033 = vtanh.pop %v2019
          %v2034 = vxor.u32 %v2020, 2147483648
          %v2035 = vmul.f32 %v2034, 1.442695
          %v2036 = vpow.pop %v2035
          %v2037 = vadd.f32 %v2036, 1.0
          %v2038 = vrcp.pop %v2037
          %v2039 = vmul.f32 1.0, %v2038
          %v2040 = vmul.f32 %v2032, %v1867
          %v2041 = vmul.f32 %v2026, %v2033
          %v2042 = vadd.f32 %v2040, %v2041
          %v2043 = vtanh.pop %v2042
          %v2044 = vmul.f32 %v2039, %v2043
          %s2045 = sadd.s32 %s1666, 2
          %p2046 = scmp.lt.s32.totalorder %s2045, 10
          %s2047 = scalar_select %p2046, 1, 0
          %v2048 = vstv %s2047
          %vm2049 = vcmp.eq.s32.totalorder %v2048, 1
          %v2050 = vsel %vm2049, %v2042, %v1867
          %v2051 = vsel %vm2049, %v2044, %v1866
          %2052 = vst [vmem:[#allocation2] sm:$0xff] %v2051
          %2053 = vst [vmem:[#allocation3] sm:$0xff] %v2050
          %s2054 = scalar_lea.vmem %s416, 16 [#allocation14]
          %2055 = vst [vmem:[%s2054] sm:$0xff] %v2051
          %v2056 = vld [vmem:[#allocation2] sm:$0xff]
          %v2057 = vld [vmem:[#allocation3] sm:$0xff]
          %s2058 = smul.u32 3, 4
          %s2059 = smul.addr %s2058, 8
          %s2060 = scalar_lea.vmem [#allocation4], %s2059
          %v2061 = vld [vmem:[%s2060] sm:$0xff]
          %v2062 = vld [vmem:[%s2060 + $0x8] sm:$0xff]
          %v2063 = vld [vmem:[%s2060 + $0x10] sm:$0xff]
          %v2064 = vld [vmem:[%s2060 + $0x18] sm:$0xff]
          %2065 = vmatprep.subr.mxu0 %v745
          %2066 = vmatpush1.msra.mxu0 %v744
          %2067 = vmatprep.subr.mxu0 %v741
          %2068 = vmatpush1.msra.mxu0 %v740
          %2069 = vmatprep.subr.mxu0 %v737
          %2070 = vmatpush1.msra.mxu0 %v736
          %2071 = vmatprep.subr.mxu0 %v733
          %2072 = vmatpush1.msra.mxu0 %v732
          %2073 = vmatprep.subr.mxu0 %v729
          %2074 = vmatpush1.msra.mxu0 %v728
          %2075 = vmatprep.subr.mxu0 %v725
          %2076 = vmatpush1.msra.mxu0 %v724
          %2077 = vmatprep.subr.mxu0 %v721
          %2078 = vmatpush1.msra.mxu0 %v720
          %2079 = vmatprep.subr.mxu0 %v717
          %2080 = vmatpush1.msra.mxu0 %v716
          %2081 = vmatprep.subr.mxu0 %v713
          %2082 = vmatpush1.msra.mxu0 %v712
          %2083 = vmatprep.subr.mxu0 %v709
          %2084 = vmatpush1.msra.mxu0 %v708
          %2085 = vmatprep.subr.mxu0 %v705
          %2086 = vmatpush1.msra.mxu0 %v704
          %2087 = vmatprep.subr.mxu0 %v701
          %2088 = vmatpush1.msra.mxu0 %v700
          %2089 = vmatprep.subr.mxu0 %v697
          %2090 = vmatpush1.msra.mxu0 %v696
          %2091 = vmatprep.subr.mxu0 %v693
          %2092 = vmatpush1.msra.mxu0 %v692
          %2093 = vmatprep.subr.mxu0 %v689
          %2094 = vmatpush1.msra.mxu0 %v688
          %2095 = vmatprep.subr.mxu0 %v685
          %2096 = vmatpush1.msra.mxu0 %v684
          %2097 = vmatprep.subr.mxu0 0.0
          %2098 = vmatpush2.msra.mxu0 0.0
          %2099 = vmatprep.subr.mxu0 0.0
          %2100 = vmatpush2.msra.mxu0 0.0
          %2101 = vmatprep.subr.mxu0 0.0
          %2102 = vmatpush2.msra.mxu0 0.0
          %2103 = vmatprep.subr.mxu0 0.0
          %2104 = vmatpush2.msra.mxu0 0.0
          %2105 = vmatprep.subr.mxu0 0.0
          %2106 = vmatpush2.msra.mxu0 0.0
          %2107 = vmatprep.subr.mxu0 0.0
          %2108 = vmatpush2.msra.mxu0 0.0
          %2109 = vmatprep.subr.mxu0 0.0
          %2110 = vmatpush2.msra.mxu0 0.0
          %2111 = vmatprep.subr.mxu0 0.0
          %2112 = vmatpush2.msra.mxu0 0.0
          %2113 = vmatprep.subr.mxu0 0.0
          %2114 = vmatpush2.msra.mxu0 0.0
          %2115 = vmatprep.subr.mxu0 0.0
          %2116 = vmatpush2.msra.mxu0 0.0
          %2117 = vmatprep.subr.mxu0 0.0
          %2118 = vmatpush2.msra.mxu0 0.0
          %2119 = vmatprep.subr.mxu0 0.0
          %2120 = vmatpush2.msra.mxu0 0.0
          %2121 = vmatprep.subr.mxu0 0.0
          %2122 = vmatpush2.msra.mxu0 0.0
          %2123 = vmatprep.subr.mxu0 0.0
          %2124 = vmatpush2.msra.mxu0 0.0
          %2125 = vmatprep.subr.mxu0 0.0
          %2126 = vmatpush2.msra.mxu0 0.0
          %2127 = vmatprep.subr.mxu0 0.0
          %2128 = vmatpush2.msra.mxu0 0.0
          %2129 = vmatprep.mubr.f32.mxu0 0.0
          %2130 = vmatmul.mubr.f32.gmra.mxu0 %v2056
          %v2131 = vpop.f32.mrf.mxu0
          %v2132 = vadd.f32 0.0, %v2131
          %v2133 = vpop.f32.mrf.mxu0
          %v2134 = vadd.f32 0.0, %v2133
          %2135 = vdwg.mxu0
          %2136 = vmatprep.subr.mxu0 %v747
          %2137 = vmatpush1.msra.mxu0 %v746
          %2138 = vmatprep.subr.mxu0 %v743
          %2139 = vmatpush1.msra.mxu0 %v742
          %2140 = vmatprep.subr.mxu0 %v739
          %2141 = vmatpush1.msra.mxu0 %v738
          %2142 = vmatprep.subr.mxu0 %v735
          %2143 = vmatpush1.msra.mxu0 %v734
          %2144 = vmatprep.subr.mxu0 %v731
          %2145 = vmatpush1.msra.mxu0 %v730
          %2146 = vmatprep.subr.mxu0 %v727
          %2147 = vmatpush1.msra.mxu0 %v726
          %2148 = vmatprep.subr.mxu0 %v723
          %2149 = vmatpush1.msra.mxu0 %v722
          %2150 = vmatprep.subr.mxu0 %v719
          %2151 = vmatpush1.msra.mxu0 %v718
          %2152 = vmatprep.subr.mxu0 %v715
          %2153 = vmatpush1.msra.mxu0 %v714
          %2154 = vmatprep.subr.mxu0 %v711
          %2155 = vmatpush1.msra.mxu0 %v710
          %2156 = vmatprep.subr.mxu0 %v707
          %2157 = vmatpush1.msra.mxu0 %v706
          %2158 = vmatprep.subr.mxu0 %v703
          %2159 = vmatpush1.msra.mxu0 %v702
          %2160 = vmatprep.subr.mxu0 %v699
          %2161 = vmatpush1.msra.mxu0 %v698
          %2162 = vmatprep.subr.mxu0 %v695
          %2163 = vmatpush1.msra.mxu0 %v694
          %2164 = vmatprep.subr.mxu0 %v691
          %2165 = vmatpush1.msra.mxu0 %v690
          %2166 = vmatprep.subr.mxu0 %v687
          %2167 = vmatpush1.msra.mxu0 %v686
          %2168 = vmatprep.subr.mxu0 0.0
          %2169 = vmatpush2.msra.mxu0 0.0
          %2170 = vmatprep.subr.mxu0 0.0
          %2171 = vmatpush2.msra.mxu0 0.0
          %2172 = vmatprep.subr.mxu0 0.0
          %2173 = vmatpush2.msra.mxu0 0.0
          %2174 = vmatprep.subr.mxu0 0.0
          %2175 = vmatpush2.msra.mxu0 0.0
          %2176 = vmatprep.subr.mxu0 0.0
          %2177 = vmatpush2.msra.mxu0 0.0
          %2178 = vmatprep.subr.mxu0 0.0
          %2179 = vmatpush2.msra.mxu0 0.0
          %2180 = vmatprep.subr.mxu0 0.0
          %2181 = vmatpush2.msra.mxu0 0.0
          %2182 = vmatprep.subr.mxu0 0.0
          %2183 = vmatpush2.msra.mxu0 0.0
          %2184 = vmatprep.subr.mxu0 0.0
          %2185 = vmatpush2.msra.mxu0 0.0
          %2186 = vmatprep.subr.mxu0 0.0
          %2187 = vmatpush2.msra.mxu0 0.0
          %2188 = vmatprep.subr.mxu0 0.0
          %2189 = vmatpush2.msra.mxu0 0.0
          %2190 = vmatprep.subr.mxu0 0.0
          %2191 = vmatpush2.msra.mxu0 0.0
          %2192 = vmatprep.subr.mxu0 0.0
          %2193 = vmatpush2.msra.mxu0 0.0
          %2194 = vmatprep.subr.mxu0 0.0
          %2195 = vmatpush2.msra.mxu0 0.0
          %2196 = vmatprep.subr.mxu0 0.0
          %2197 = vmatpush2.msra.mxu0 0.0
          %2198 = vmatprep.subr.mxu0 0.0
          %2199 = vmatpush2.msra.mxu0 0.0
          %2200 = vmatprep.mubr.f32.mxu0 0.0
          %2201 = vmatmul.mubr.f32.gmra.mxu0 %v2056
          %v2202 = vpop.f32.mrf.mxu0
          %v2203 = vadd.f32 0.0, %v2202
          %v2204 = vpop.f32.mrf.mxu0
          %v2205 = vadd.f32 0.0, %v2204
          %2206 = vdwg.mxu0
          %v2207 = vadd.f32 %v2061, %v2132
          %v2208 = vadd.f32 %v2062, %v2134
          %v2209 = vadd.f32 %v2063, %v2203
          %v2210 = vadd.f32 %v2064, %v2205
          %v2211 = vxor.u32 %v2207, 2147483648
          %v2212 = vmul.f32 %v2211, 1.442695
          %v2213 = vpow.pop %v2212
          %v2214 = vadd.f32 %v2213, 1.0
          %v2215 = vrcp.pop %v2214
          %v2216 = vmul.f32 1.0, %v2215
          %v2217 = vxor.u32 %v2208, 2147483648
          %v2218 = vmul.f32 %v2217, 1.442695
          %v2219 = vpow.pop %v2218
          %v2220 = vadd.f32 %v2219, 1.0
          %v2221 = vrcp.pop %v2220
          %v2222 = vmul.f32 1.0, %v2221
          %v2223 = vtanh.pop %v2209
          %v2224 = vxor.u32 %v2210, 2147483648
          %v2225 = vmul.f32 %v2224, 1.442695
          %v2226 = vpow.pop %v2225
          %v2227 = vadd.f32 %v2226, 1.0
          %v2228 = vrcp.pop %v2227
          %v2229 = vmul.f32 1.0, %v2228
          %v2230 = vmul.f32 %v2222, %v2057
          %v2231 = vmul.f32 %v2216, %v2223
          %v2232 = vadd.f32 %v2230, %v2231
          %v2233 = vtanh.pop %v2232
          %v2234 = vmul.f32 %v2229, %v2233
          %s2235 = sadd.s32 %s1666, 3
          %p2236 = scmp.lt.s32.totalorder %s2235, 10
          %s2237 = scalar_select %p2236, 1, 0
          %v2238 = vstv %s2237
          %vm2239 = vcmp.eq.s32.totalorder %v2238, 1
          %v2240 = vsel %vm2239, %v2232, %v2057
          %v2241 = vsel %vm2239, %v2234, %v2056
          %2242 = vst [vmem:[#allocation2] sm:$0xff] %v2241
          %2243 = vst [vmem:[#allocation3] sm:$0xff] %v2240
          %s2244 = scalar_lea.vmem %s416, 24 [#allocation14]
          %2245 = vst [vmem:[%s2244] sm:$0xff] %v2241
          %v2246 = vld [vmem:[#allocation2] sm:$0xff]
          %2247 = vst [vmem:[#allocation15] sm:$0xff] %v2246
          %v2248 = vld [vmem:[#allocation3] sm:$0xff]
          %2249 = vst [vmem:[#allocation17] sm:$0xff] %v2248
        $region76: #{tpu_custom_call.1} parent=43 // pred_fallthru
          _
        %s2250 = sand.u32 %s194, 1
        %s2251 = scalar_lea.sflag [#allocation7], %s2250
        %s2252 = sand.u32 %s194, 1
        %s2253 = smul.addr %s2252, 32
        %s2254 = scalar_lea.vmem [#allocation14], %s2253
        // Predicated region
        $region77: #{tpu_custom_call.1} parent=43 // pred_check
          %p2255 = pneg %p204
        $region78: #{tpu_custom_call.1} parent=43 // pred_check_branch
          %2257 = sbr.rel (%p2255) target = $region80
        $region79: #{tpu_custom_call.1} parent=43 // pred_region
          %s2258 = smul.u32 4, %s34
          %s2260 = ssub.s32 512, 512
          %2261 = vsyncadd %s2251, %s2260
          %s2262 = sadd.s32 %s33, %s2258
          %s2263 = smul.addr %s2262, 128
          %s2264 = scalar_lea.hbm %s6, %s2263
          %s2265 = sshll.u32 %s2254, 4
          %s2266 = int_to_ptr.vmem [resolvable:$true] %s2265
          %2271 = dma.vmem_to_hbm [thread:$0]  %s2266, 512, %s2264, %s2251, 128, 128, 8
        $region80: #{tpu_custom_call.1} parent=43 // pred_fallthru
          _
        // Predicated region
        $region81: #{tpu_custom_call.1} parent=43 // pred_check
          %p2272 = pneg %p230
        $region82: #{tpu_custom_call.1} parent=43 // pred_check_branch
          %2274 = sbr.rel (%p2272) target = $region84
        $region83: #{tpu_custom_call.1} parent=43 // pred_region
          %s2276 = ssub.s32 128, 128
          %2277 = vsyncadd [#allocation16], %s2276
          %s2278 = smul.addr %s33, 128
          %s2279 = scalar_lea.hbm %s7, %s2278
          %s2281 = sshll.u32 [#allocation15], 4
          %s2282 = int_to_ptr.vmem [resolvable:$true] %s2281
          %2284 = dma.vmem_to_hbm [thread:$0]  %s2282, 128, %s2279, [#allocation16]
        $region84: #{tpu_custom_call.1} parent=43 // pred_fallthru
          _
        // Predicated region
        $region85: #{tpu_custom_call.1} parent=43 // pred_check
          %p2285 = pneg %p256
        $region86: #{tpu_custom_call.1} parent=43 // pred_check_branch
          %2287 = sbr.rel (%p2285) target = $region88
        $region87: #{tpu_custom_call.1} parent=43 // pred_region
          %s2289 = ssub.s32 128, 128
          %2290 = vsyncadd [#allocation16], %s2289
          %s2291 = smul.addr %s33, 128
          %s2292 = scalar_lea.hbm %s8, %s2291
          %s2294 = sshll.u32 [#allocation17], 4
          %s2295 = int_to_ptr.vmem [resolvable:$true] %s2294
          %2297 = dma.vmem_to_hbm [thread:$0]  %s2295, 128, %s2292, [#allocation16]
        $region88: #{tpu_custom_call.1} parent=43 // pred_fallthru
          _
        // Predicated region
        $region89: #{tpu_custom_call.1} parent=43 // pred_check
          %p2298 = pneg %p230
        $region90: #{tpu_custom_call.1} parent=43 // pred_check_branch
          %2300 = sbr.rel (%p2298) target = $region92
        $region91: #{tpu_custom_call.1} parent=43 // pred_region
          %2301 = dma.done [#allocation16], 128
        $region92: #{tpu_custom_call.1} parent=43 // pred_fallthru
          _
        // Predicated region
        $region93: #{tpu_custom_call.1} parent=43 // pred_check
          %p2302 = pneg %p256
        $region94: #{tpu_custom_call.1} parent=43 // pred_check_branch
          %2304 = sbr.rel (%p2302) target = $region96
        $region95: #{tpu_custom_call.1} parent=43 // pred_region
          %2305 = dma.done [#allocation16], 128
        $region96: #{tpu_custom_call.1} parent=43 // pred_fallthru
          _
      $region44: #{tpu_custom_call.1} parent=5 // pred_fallthru
        _
      %p2306 = scmp.le.s32.totalorder 2, %s24
      // Predicated region
      $region97: #{tpu_custom_call.1} parent=5 // pred_check
        %p2307 = pneg %p2306
      $region98: #{tpu_custom_call.1} parent=5 // pred_check_branch
        %2309 = sbr.rel (%p2307) target = $region100
      $region99: #{tpu_custom_call.1} parent=5 // pred_region
        %s2310 = ssub.s32 %s24, 2
        // Predicated region
        $region101: #{tpu_custom_call.1} parent=99 // pred_check
          %p2311 = pneg %p210
        $region102: #{tpu_custom_call.1} parent=99 // pred_check_branch
          %2313 = sbr.rel (%p2311) target = $region104
        $region103: #{tpu_custom_call.1} parent=99 // pred_region
          %s2314 = sand.u32 %s195, 1
          %s2315 = scalar_lea.sflag [#allocation7], %s2314
          %s2316 = sand.u32 %s195, 1
          %s2317 = smul.addr %s2316, 32
          %s2318 = scalar_lea.vmem [#allocation14], %s2317
          %2319 = dma.done %s2315, 512
        $region104: #{tpu_custom_call.1} parent=99 // pred_fallthru
          _
      $region100: #{tpu_custom_call.1} parent=5 // pred_fallthru
        _
    $region6: #{tpu_custom_call.1} parent=1 // loop_footer
      %s28 = sadd.s32 1, %s24
    $region7: #{tpu_custom_call.1} parent=1 // loop_footer_branch
      %23 = sbr.rel target = $region3
    $region8: #{tpu_custom_call.1} parent=1 // loop_exit
      _
    %2320 = vsyncpa [#allocation6], 1
    %s2321 = scalar_lea.sflag [#allocation6], 1
    %2322 = vsyncpa %s2321, 1
    %2323 = vsyncpa [#allocation9], 1
    %2324 = vsyncpa [#allocation12], 1
    %2325 = vsyncpa [#allocation7], 1
    %s2326 = scalar_lea.sflag [#allocation7], 1
    %2327 = vsyncpa %s2326, 1
    %2328 = vsyncpa [#allocation16], 1

</llo_original>
